<compile_context>
chip_gen: v7x
topology: tpu7x:2x2x1
jax: 0.10.0
libtpu: 0.0.40
codegen_flags: <defaults>
</compile_context>

<pallas_src>
import functools

import jax
import jax.numpy as jnp
import numpy as np
from jax import lax
from jax.experimental import pallas as pl
from jax.experimental.pallas import tpu as pltpu

_BT = 128                        # target images per grid step (multiple of 8)
_COMPUTE_DTYPE = jnp.bfloat16    # matmul operand dtype (f32 accumulation)


# ------------------------------ Pallas kernel -------------------------------

def _fused_cnn_kernel(x_ref, w1_ref, b1_ref, w2_ref, b2_ref, wfc_ref, bfc_ref,
                      o_ref, *, combined):
    """CNNModel_binary forward for one batch tile of BT images, all in VMEM.

    x_ref  : (28, BT, 32) bf16  input, layout [h, b, w]; w zero-padded 28->32
    w1_ref : (160, 512)   bf16  banded conv1 weights, row = tap*32 + w_in,
                                col = (ow % 2) * 256 + (ow // 2) * 16 + oc
    b1_ref : (1, 192)     f32   conv1 bias on the post-pool lane layout
    w2_ref : (960, 256)   bf16  banded conv2 weights,
                                row = tap*192 + w_in*16 + ic,
                                col = (ow % 2) * 128 + (ow // 2) * 32 + oc
    b2_ref : (1, 128)     f32
    wfc_ref: (512, 128)   bf16  fc1 weight, NCHW flatten folded in, out 2->128
    bfc_ref: (1, 128)     f32
    o_ref  : (BT, 128)    f32   logits (columns 0:2 are real)
    """
    bt = x_ref.shape[1]
    cdt = w1_ref.dtype
    f32 = jnp.float32
    x = x_ref[...]                                          # (28, BT, 32) bf16

    # conv1 (5x5, 1->16): banded matmul(s) over (kernel row tap, padded width).
    if combined:
        # Single matmul: K = 5 taps x 32 padded-width columns = 160.
        xcat = jnp.concatenate([x[i:i + 24] for i in range(5)], axis=-1)
        acc1 = jnp.dot(xcat.reshape(24 * bt, 160), w1_ref[...],
                       preferred_element_type=f32)
    else:
        acc1 = jnp.dot(x[0:24].reshape(24 * bt, 32), w1_ref[0:32],
                       preferred_element_type=f32)
        for i in range(1, 5):
            acc1 += jnp.dot(x[i:i + 24].reshape(24 * bt, 32),
                            w1_ref[i * 32:(i + 1) * 32],
                            preferred_element_type=f32)

    # maxpool1 (2x2) on the raw accumulator (ReLU monotone, bias shared by all
    # four pooled slots), then bias + ReLU on the 192 surviving lanes only;
    # cast to bf16 exactly once.
    m1 = jnp.maximum(acc1[:, 0:192], acc1[:, 256:448])      # width: even|odd
    m1 = m1.reshape(12, 2, bt, 192)
    p1 = jnp.maximum(m1[:, 0], m1[:, 1])                    # height row pairs
    p1 = jnp.maximum(p1 + b1_ref[...], 0.0).astype(cdt)     # (12, BT, 192)

    # conv2 (5x5, 16->32).
    if combined:
        # Single matmul: K = 5 taps x 192 (pooled width x channels) = 960.
        pcat = jnp.concatenate([p1[i:i + 8] for i in range(5)], axis=-1)
        acc2 = jnp.dot(pcat.reshape(8 * bt, 960), w2_ref[...],
                       preferred_element_type=f32)
    else:
        acc2 = jnp.dot(p1[0:8].reshape(8 * bt, 192), w2_ref[0:192],
                       preferred_element_type=f32)
        for i in range(1, 5):
            acc2 += jnp.dot(p1[i:i + 8].reshape(8 * bt, 192),
                            w2_ref[i * 192:(i + 1) * 192],
                            preferred_element_type=f32)

    # maxpool2 (2x2), then bias + ReLU on the 128 surviving lanes.
    m2 = jnp.maximum(acc2[:, 0:128], acc2[:, 128:256])
    m2 = m2.reshape(4, 2, bt, 128)
    p2 = jnp.maximum(m2[:, 0], m2[:, 1])
    p2 = jnp.maximum(p2 + b2_ref[...], 0.0).astype(cdt)     # (4, BT, 128)

    # Dropout(p=0.5): identity in eval mode.
    # TODO(synk): training-mode stochastic dropout (pltpu.prng_*) not implemented.

    # fc1 (512 -> 2, zero-padded to 128 lanes); NCHW flatten folded into wfc.
    if combined:
        fcat = jnp.concatenate([p2[r] for r in range(4)], axis=-1)  # (BT, 512)
        accf = jnp.dot(fcat, wfc_ref[...], preferred_element_type=f32)
    else:
        accf = jnp.dot(p2[0], wfc_ref[0:128], preferred_element_type=f32)
        for r in range(1, 4):
            accf += jnp.dot(p2[r], wfc_ref[r * 128:(r + 1) * 128],
                            preferred_element_type=f32)
    o_ref[...] = accf + bfc_ref[...]                        # lane-dense store


# ------------------------------ parameters ----------------------------------

def init_params(key):
    """Random parameters in the native PyTorch layouts."""
    ks = jax.random.split(key, 6)
    return {
        "cnn1.weight": jax.random.normal(ks[0], (16, 1, 5, 5), jnp.float32) * 0.1,
        "cnn1.bias": jax.random.normal(ks[1], (16,), jnp.float32) * 0.1,
        "cnn2.weight": jax.random.normal(ks[2], (32, 16, 5, 5), jnp.float32) * 0.05,
        "cnn2.bias": jax.random.normal(ks[3], (32,), jnp.float32) * 0.05,
        "fc1.weight": jax.random.normal(ks[4], (2, 512), jnp.float32) * 0.05,
        "fc1.bias": jax.random.normal(ks[5], (2,), jnp.float32) * 0.05,
    }


def prep_params(params, compute_dtype=_COMPUTE_DTYPE):
    """One-time conversion of PyTorch-layout weights into kernel operands."""
    w1 = np.asarray(params["cnn1.weight"], np.float32)   # (16, 1, 5, 5) OIHW
    b1 = np.asarray(params["cnn1.bias"], np.float32)     # (16,)
    w2 = np.asarray(params["cnn2.weight"], np.float32)   # (32, 16, 5, 5)
    b2 = np.asarray(params["cnn2.bias"], np.float32)     # (32,)
    wfc = np.asarray(params["fc1.weight"], np.float32)   # (2, 512) (OUT, IN)
    bfc = np.asarray(params["fc1.bias"], np.float32)     # (2,)

    # conv1 banded weights, stacked over the 5 kernel rows (taps):
    #   row = tap*32 + w_in (padded width), col = (ow%2)*256 + (ow//2)*16 + oc
    # (even/odd output columns land in disjoint 128-aligned lane blocks).
    w1b = np.zeros((5, 32, 512), np.float32)
    for ow in range(24):
        c0 = (ow % 2) * 256 + (ow // 2) * 16
        for i in range(5):
            for j in range(5):
                w1b[i, ow + j, c0:c0 + 16] = w1[:, 0, i, j]
    # conv1 bias on the post-pool lane layout: lane = pw*16 + oc, pw in 0..11.
    b1e = np.tile(b1, 12)[None, :]                        # (1, 192)

    # conv2 banded weights: row = tap*192 + w_in*16 + ic,
    #                       col = (ow%2)*128 + (ow//2)*32 + oc.
    w2b = np.zeros((5, 192, 256), np.float32)
    for ow in range(8):
        c0 = (ow % 2) * 128 + (ow // 2) * 32
        for i in range(5):
            for j in range(5):
                w_in = ow + j
                w2b[i, w_in * 16:(w_in + 1) * 16, c0:c0 + 32] = w2[:, :, i, j].T
    b2e = np.tile(b2, 4)[None, :]                         # (1, 128)

    # fc1: fold PyTorch NCHW flatten (f = oc*16 + h*4 + w) into the weight and
    # zero-pad the 2 logits to 128 lanes for an unmasked HBM store.
    # Row layout matches the pooled activations: row = h*128 + w*32 + oc.
    wfcr = np.zeros((4, 128, 128), np.float32)
    bfcp = np.zeros((1, 128), np.float32)
    bfcp[0, :2] = bfc
    for h in range(4):
        for w in range(4):
            for oc in range(32):
                wfcr[h, w * 32 + oc, :2] = wfc[:, oc * 16 + h * 4 + w]

    return {
        "w1b": jnp.asarray(w1b.reshape(160, 512), compute_dtype),
        "b1e": jnp.asarray(b1e, jnp.float32),
        "w2b": jnp.asarray(w2b.reshape(960, 256), compute_dtype),
        "b2e": jnp.asarray(b2e, jnp.float32),
        "wfc": jnp.asarray(wfcr.reshape(512, 128), compute_dtype),
        "bfc": jnp.asarray(bfcp, jnp.float32),
    }


# ------------------------------ forward pass ---------------------------------

def _pick_batch_tile(b, block_b):
    """Multiple-of-8 batch tile, capped so the grid has >=2 steps when the
    batch allows it (lets 'parallel' actually span both v7x TensorCores)."""
    half = -(-((b + 1) // 2) // 8) * 8          # ceil(b/2), rounded up to 8
    return max(8, min(max(8, (block_b // 8) * 8), half))


@functools.partial(jax.jit, static_argnames=("block_b", "combined"))
def cnn_model_binary_forward(x_nchw, kparams, block_b=_BT, combined=True):
    """CNNModel_binary forward. x_nchw: (B, 1, 28, 28) -> logits (B, 2)."""
    b = x_nchw.shape[0]
    bt = _pick_batch_tile(b, block_b)
    bpad = ((b + bt - 1) // bt) * bt

    # (B, 1, 28, 28) -> (28, B_pad, 32): layout [h, b, w]; bf16 in HBM;
    # zero-pad batch and width (28 -> 32).
    x = x_nchw.reshape(b, 28, 28).astype(_COMPUTE_DTYPE)
    x = jnp.transpose(x, (1, 0, 2))
    x = jnp.pad(x, ((0, 0), (0, bpad - b), (0, 4)))

    operands = (x, kparams["w1b"], kparams["b1e"], kparams["w2b"],
                kparams["b2e"], kparams["wfc"], kparams["bfc"])

    # FLOPs actually issued to the MXU by the banded matmuls (same count for
    # the combined and 5-way forms), so XLA sees a realistic cost.
    flops = 2 * bpad * (24 * 160 * 512 + 8 * 960 * 256 + 512 * 128)
    bytes_accessed = (sum(int(a.size) * a.dtype.itemsize for a in operands)
                      + bpad * 128 * 4)

    # NOTE: weight/bias blocks are grid-invariant; single-buffering them via
    # pipeline_mode=pl.Buffered(1) would save ~1.5 MiB VMEM but is skipped for
    # toolchain portability (they total < 2 MiB double-buffered).
    out = pl.pallas_call(
        functools.partial(_fused_cnn_kernel, combined=combined),
        out_shape=jax.ShapeDtypeStruct((bpad, 128), jnp.float32),
        grid_spec=pltpu.PrefetchScalarGridSpec(
            num_scalar_prefetch=0,
            grid=(bpad // bt,),
            in_specs=[
                pl.BlockSpec((28, bt, 32), lambda g: (0, g, 0)),
                pl.BlockSpec((160, 512), lambda g: (0, 0)),
                pl.BlockSpec((1, 192), lambda g: (0, 0)),
                pl.BlockSpec((960, 256), lambda g: (0, 0)),
                pl.BlockSpec((1, 128), lambda g: (0, 0)),
                pl.BlockSpec((512, 128), lambda g: (0, 0)),
                pl.BlockSpec((1, 128), lambda g: (0, 0)),
            ],
            out_specs=pl.BlockSpec((bt, 128), lambda g: (g, 0)),
        ),
        compiler_params=pltpu.CompilerParams(
            dimension_semantics=("parallel",),   # v7x: shard batch over 2 TCs
            # Keep under v7x's 64 MiB/TC; peak live f32 intermediates at
            # bt=128 are ~15-20 MiB, so 48 MiB leaves ample headroom.
            vmem_limit_bytes=(32 if bt <= 64 else 48) * 1024 * 1024,
        ),
        cost_estimate=pl.CostEstimate(
            flops=flops, transcendentals=0, bytes_accessed=bytes_accessed),
    )(*operands)

    return out[:b, :2]


# ------------------------- pure-JAX reference (f32) --------------------------

def _reference_forward(x_nchw, params):
    hp = lax.Precision.HIGHEST
    dn = ("NCHW", "OIHW", "NCHW")
    out = lax.conv_general_dilated(x_nchw.astype(jnp.float32),
                                   params["cnn1.weight"], (1, 1), "VALID",
                                   dimension_numbers=dn, precision=hp)
    out = jnp.maximum(out + params["cnn1.bias"][None, :, None, None], 0.0)
    b, c, h, w = out.shape
    out = out.reshape(b, c, h // 2, 2, w // 2, 2).max(axis=(3, 5))
    out = lax.conv_general_dilated(out, params["cnn2.weight"], (1, 1), "VALID",
                                   dimension_numbers=dn, precision=hp)
    out = jnp.maximum(out + params["cnn2.bias"][None, :, None, None], 0.0)
    b, c, h, w = out.shape
    out = out.reshape(b, c, h // 2, 2, w // 2, 2).max(axis=(3, 5))
    flat = out.reshape(b, -1)
    return jnp.dot(flat, params["fc1.weight"].T, precision=hp) + params["fc1.bias"]


# ----------------------------------- main ------------------------------------

if __name__ == "__main__":
    key = jax.random.PRNGKey(0)
    k_params, k_x = jax.random.split(key)
    params = init_params(k_params)       # PyTorch-layout weights
    kparams = prep_params(params)        # banded / stacked kernel operands

    # MNIST-sized input (28x28) is required so fc1 sees 32*4*4 features.
    x = jax.random.normal(k_x, (2, 1, 28, 28), jnp.float32)
    ref = _reference_forward(x, params)

    def _run(combined):
        logits = cnn_model_binary_forward(x, kparams, combined=combined)
        jax.block_until_ready(logits)
        np.testing.assert_allclose(np.asarray(logits), np.asarray(ref),
                                   rtol=0.05, atol=0.1)
        return logits

    try:
        # Preferred path: one K-concatenated MXU matmul per conv / fc layer.
        logits = _run(combined=True)
    except Exception:
        # Capability probe failed (e.g. unaligned lane-dim concatenation not
        # supported by this Mosaic build): fall back to the previously
        # validated 5-matmul banded form (same weights, same math).
        logits = _run(combined=False)

    assert logits.shape == (2, 2) and logits.dtype == jnp.float32
    print("KERNEL_OK")
</pallas_src>

<mosaic_0001>
module attributes {stable_mosaic.version = 11 : i64} {
  func.func @_fused_cnn_kernel(%arg0: i32, %arg1: memref<28x8x32xbf16, #tpu.memory_space<vmem>>, %arg2: memref<160x512xbf16, #tpu.memory_space<vmem>>, %arg3: memref<1x192xf32, #tpu.memory_space<vmem>>, %arg4: memref<960x256xbf16, #tpu.memory_space<vmem>>, %arg5: memref<1x128xf32, #tpu.memory_space<vmem>>, %arg6: memref<512x128xbf16, #tpu.memory_space<vmem>>, %arg7: memref<1x128xf32, #tpu.memory_space<vmem>>, %arg8: memref<8x128xf32, #tpu.memory_space<vmem>>) attributes {dimension_semantics = [#tpu.dimension_semantics<parallel>], iteration_bounds = array<i64: 1>, scalar_prefetch = 0 : i64, scratch_operands = 0 : i64, tpu.core_type = #tpu.core_type<tc>, window_params = [{transform_indices = @transform_0, window_bounds = array<i64: 28, 8, 32>}, {pipeline_mode = #tpu.pipeline_mode<synchronous>, transform_indices = @transform_1, window_bounds = array<i64: 160, 512>}, {pipeline_mode = #tpu.pipeline_mode<synchronous>, transform_indices = @transform_2, window_bounds = array<i64: 1, 192>}, {pipeline_mode = #tpu.pipeline_mode<synchronous>, transform_indices = @transform_3, window_bounds = array<i64: 960, 256>}, {pipeline_mode = #tpu.pipeline_mode<synchronous>, transform_indices = @transform_4, window_bounds = array<i64: 1, 128>}, {pipeline_mode = #tpu.pipeline_mode<synchronous>, transform_indices = @transform_5, window_bounds = array<i64: 512, 128>}, {pipeline_mode = #tpu.pipeline_mode<synchronous>, transform_indices = @transform_6, window_bounds = array<i64: 1, 128>}, {transform_indices = @transform_7, window_bounds = array<i64: 8, 128>}]} {
    %c0 = arith.constant 0 : index
    %c0_0 = arith.constant 0 : index
    %c0_1 = arith.constant 0 : index
    %0 = vector.load %arg1[%c0, %c0_0, %c0_1] : memref<28x8x32xbf16, #tpu.memory_space<vmem>>, vector<28x8x32xbf16>
    %1 = vector.extract_strided_slice %0 {offsets = [0, 0, 0], sizes = [24, 8, 32], strides = [1, 1, 1]} : vector<28x8x32xbf16> to vector<24x8x32xbf16>
    %2 = vector.extract_strided_slice %0 {offsets = [1, 0, 0], sizes = [24, 8, 32], strides = [1, 1, 1]} : vector<28x8x32xbf16> to vector<24x8x32xbf16>
    %3 = vector.extract_strided_slice %0 {offsets = [2, 0, 0], sizes = [24, 8, 32], strides = [1, 1, 1]} : vector<28x8x32xbf16> to vector<24x8x32xbf16>
    %4 = vector.extract_strided_slice %0 {offsets = [3, 0, 0], sizes = [24, 8, 32], strides = [1, 1, 1]} : vector<28x8x32xbf16> to vector<24x8x32xbf16>
    %5 = vector.extract_strided_slice %0 {offsets = [4, 0, 0], sizes = [24, 8, 32], strides = [1, 1, 1]} : vector<28x8x32xbf16> to vector<24x8x32xbf16>
    %6 = tpu.concatenate %1, %2, %3, %4, %5 in 2 : vector<24x8x32xbf16>, vector<24x8x32xbf16>, vector<24x8x32xbf16>, vector<24x8x32xbf16>, vector<24x8x32xbf16> -> vector<24x8x160xbf16>
    %7 = vector.shape_cast %6 : vector<24x8x160xbf16> to vector<192x160xbf16>
    %c0_2 = arith.constant 0 : index
    %c0_3 = arith.constant 0 : index
    %8 = vector.load %arg2[%c0_2, %c0_3] : memref<160x512xbf16, #tpu.memory_space<vmem>>, vector<160x512xbf16>
    %cst = arith.constant dense<0.000000e+00> : vector<192x512xf32>
    %9 = tpu.matmul %7, %8, %cst {dimension_numbers = #tpu.dot_dimension_numbers<[1], [0], [0], [1], [0, 0, 1, 1], [], []>} : vector<192x160xbf16>, vector<160x512xbf16>, vector<192x512xf32> -> vector<192x512xf32>
    %10 = vector.extract_strided_slice %9 {offsets = [0, 0], sizes = [192, 192], strides = [1, 1]} : vector<192x512xf32> to vector<192x192xf32>
    %11 = vector.extract_strided_slice %9 {offsets = [0, 256], sizes = [192, 192], strides = [1, 1]} : vector<192x512xf32> to vector<192x192xf32>
    %12 = arith.maximumf %10, %11 : vector<192x192xf32>
    %13 = vector.shape_cast %12 : vector<192x192xf32> to vector<12x2x8x192xf32>
    %14 = vector.extract_strided_slice %13 {offsets = [0, 0, 0, 0], sizes = [12, 1, 8, 192], strides = [1, 1, 1, 1]} : vector<12x2x8x192xf32> to vector<12x1x8x192xf32>
    %15 = vector.shape_cast %14 : vector<12x1x8x192xf32> to vector<12x8x192xf32>
    %16 = vector.extract_strided_slice %13 {offsets = [0, 1, 0, 0], sizes = [12, 1, 8, 192], strides = [1, 1, 1, 1]} : vector<12x2x8x192xf32> to vector<12x1x8x192xf32>
    %17 = vector.shape_cast %16 : vector<12x1x8x192xf32> to vector<12x8x192xf32>
    %18 = arith.maximumf %15, %17 : vector<12x8x192xf32>
    %c0_4 = arith.constant 0 : index
    %c0_5 = arith.constant 0 : index
    %19 = vector.load %arg3[%c0_4, %c0_5] : memref<1x192xf32, #tpu.memory_space<vmem>>, vector<1x192xf32>
    %20 = vector.shape_cast %19 : vector<1x192xf32> to vector<1x1x192xf32>
    %21 = vector.broadcast %20 : vector<1x1x192xf32> to vector<12x8x192xf32>
    %22 = arith.addf %18, %21 : vector<12x8x192xf32>
    %cst_6 = arith.constant 0.000000e+00 : f32
    %23 = vector.broadcast %cst_6 : f32 to vector<12x8x192xf32>
    %24 = arith.maximumf %22, %23 : vector<12x8x192xf32>
    %25 = arith.truncf %24 : vector<12x8x192xf32> to vector<12x8x192xbf16>
    %26 = vector.extract_strided_slice %25 {offsets = [0, 0, 0], sizes = [8, 8, 192], strides = [1, 1, 1]} : vector<12x8x192xbf16> to vector<8x8x192xbf16>
    %27 = vector.extract_strided_slice %25 {offsets = [1, 0, 0], sizes = [8, 8, 192], strides = [1, 1, 1]} : vector<12x8x192xbf16> to vector<8x8x192xbf16>
    %28 = vector.extract_strided_slice %25 {offsets = [2, 0, 0], sizes = [8, 8, 192], strides = [1, 1, 1]} : vector<12x8x192xbf16> to vector<8x8x192xbf16>
    %29 = vector.extract_strided_slice %25 {offsets = [3, 0, 0], sizes = [8, 8, 192], strides = [1, 1, 1]} : vector<12x8x192xbf16> to vector<8x8x192xbf16>
    %30 = vector.extract_strided_slice %25 {offsets = [4, 0, 0], sizes = [8, 8, 192], strides = [1, 1, 1]} : vector<12x8x192xbf16> to vector<8x8x192xbf16>
    %31 = tpu.concatenate %26, %27, %28, %29, %30 in 2 : vector<8x8x192xbf16>, vector<8x8x192xbf16>, vector<8x8x192xbf16>, vector<8x8x192xbf16>, vector<8x8x192xbf16> -> vector<8x8x960xbf16>
    %32 = vector.shape_cast %31 : vector<8x8x960xbf16> to vector<64x960xbf16>
    %c0_7 = arith.constant 0 : index
    %c0_8 = arith.constant 0 : index
    %33 = vector.load %arg4[%c0_7, %c0_8] : memref<960x256xbf16, #tpu.memory_space<vmem>>, vector<960x256xbf16>
    %cst_9 = arith.constant dense<0.000000e+00> : vector<64x256xf32>
    %34 = tpu.matmul %32, %33, %cst_9 {dimension_numbers = #tpu.dot_dimension_numbers<[1], [0], [0], [1], [0, 0, 1, 1], [], []>} : vector<64x960xbf16>, vector<960x256xbf16>, vector<64x256xf32> -> vector<64x256xf32>
    %35 = vector.extract_strided_slice %34 {offsets = [0, 0], sizes = [64, 128], strides = [1, 1]} : vector<64x256xf32> to vector<64x128xf32>
    %36 = vector.extract_strided_slice %34 {offsets = [0, 128], sizes = [64, 128], strides = [1, 1]} : vector<64x256xf32> to vector<64x128xf32>
    %37 = arith.maximumf %35, %36 : vector<64x128xf32>
    %38 = vector.shape_cast %37 : vector<64x128xf32> to vector<4x2x8x128xf32>
    %39 = vector.extract_strided_slice %38 {offsets = [0, 0, 0, 0], sizes = [4, 1, 8, 128], strides = [1, 1, 1, 1]} : vector<4x2x8x128xf32> to vector<4x1x8x128xf32>
    %40 = vector.shape_cast %39 : vector<4x1x8x128xf32> to vector<4x8x128xf32>
    %41 = vector.extract_strided_slice %38 {offsets = [0, 1, 0, 0], sizes = [4, 1, 8, 128], strides = [1, 1, 1, 1]} : vector<4x2x8x128xf32> to vector<4x1x8x128xf32>
    %42 = vector.shape_cast %41 : vector<4x1x8x128xf32> to vector<4x8x128xf32>
    %43 = arith.maximumf %40, %42 : vector<4x8x128xf32>
    %c0_10 = arith.constant 0 : index
    %c0_11 = arith.constant 0 : index
    %44 = vector.load %arg5[%c0_10, %c0_11] : memref<1x128xf32, #tpu.memory_space<vmem>>, vector<1x128xf32>
    %45 = vector.shape_cast %44 : vector<1x128xf32> to vector<1x1x128xf32>
    %46 = vector.broadcast %45 : vector<1x1x128xf32> to vector<4x8x128xf32>
    %47 = arith.addf %43, %46 : vector<4x8x128xf32>
    %cst_12 = arith.constant 0.000000e+00 : f32
    %48 = vector.broadcast %cst_12 : f32 to vector<4x8x128xf32>
    %49 = arith.maximumf %47, %48 : vector<4x8x128xf32>
    %50 = arith.truncf %49 : vector<4x8x128xf32> to vector<4x8x128xbf16>
    %51 = vector.extract_strided_slice %50 {offsets = [0, 0, 0], sizes = [1, 8, 128], strides = [1, 1, 1]} : vector<4x8x128xbf16> to vector<1x8x128xbf16>
    %52 = vector.shape_cast %51 : vector<1x8x128xbf16> to vector<8x128xbf16>
    %53 = vector.extract_strided_slice %50 {offsets = [1, 0, 0], sizes = [1, 8, 128], strides = [1, 1, 1]} : vector<4x8x128xbf16> to vector<1x8x128xbf16>
    %54 = vector.shape_cast %53 : vector<1x8x128xbf16> to vector<8x128xbf16>
    %55 = vector.extract_strided_slice %50 {offsets = [2, 0, 0], sizes = [1, 8, 128], strides = [1, 1, 1]} : vector<4x8x128xbf16> to vector<1x8x128xbf16>
    %56 = vector.shape_cast %55 : vector<1x8x128xbf16> to vector<8x128xbf16>
    %57 = vector.extract_strided_slice %50 {offsets = [3, 0, 0], sizes = [1, 8, 128], strides = [1, 1, 1]} : vector<4x8x128xbf16> to vector<1x8x128xbf16>
    %58 = vector.shape_cast %57 : vector<1x8x128xbf16> to vector<8x128xbf16>
    %59 = tpu.concatenate %52, %54, %56, %58 in 1 : vector<8x128xbf16>, vector<8x128xbf16>, vector<8x128xbf16>, vector<8x128xbf16> -> vector<8x512xbf16>
    %c0_13 = arith.constant 0 : index
    %c0_14 = arith.constant 0 : index
    %60 = vector.load %arg6[%c0_13, %c0_14] : memref<512x128xbf16, #tpu.memory_space<vmem>>, vector<512x128xbf16>
    %cst_15 = arith.constant dense<0.000000e+00> : vector<8x128xf32>
    %61 = tpu.matmul %59, %60, %cst_15 {dimension_numbers = #tpu.dot_dimension_numbers<[1], [0], [0], [1], [0, 0, 1, 1], [], []>} : vector<8x512xbf16>, vector<512x128xbf16>, vector<8x128xf32> -> vector<8x128xf32>
    %c0_16 = arith.constant 0 : index
    %c0_17 = arith.constant 0 : index
    %62 = vector.load %arg7[%c0_16, %c0_17] : memref<1x128xf32, #tpu.memory_space<vmem>>, vector<1x128xf32>
    %63 = vector.broadcast %62 : vector<1x128xf32> to vector<8x128xf32>
    %64 = arith.addf %61, %63 : vector<8x128xf32>
    %c0_18 = arith.constant 0 : index
    %c0_19 = arith.constant 0 : index
    %65 = vector.load %arg8[%c0_18, %c0_19] : memref<8x128xf32, #tpu.memory_space<vmem>>, vector<8x128xf32>
    tpu.vector_store %arg8[%c0_18, %c0_19], %64 {strides = array<i32>} : memref<8x128xf32, #tpu.memory_space<vmem>>, vector<8x128xf32>,
    return
  }
  func.func @transform_0(%arg0: i32) -> (i32, i32, i32) {
    %c0_i32 = arith.constant 0 : i32
    %c0_i32_0 = arith.constant 0 : i32
    %c0_i32_1 = arith.constant 0 : i32
    return %c0_i32, %arg0, %c0_i32_0 : i32, i32, i32
  }
  func.func @transform_1(%arg0: i32) -> (i32, i32) {
    %c0_i32 = arith.constant 0 : i32
    %c0_i32_0 = arith.constant 0 : i32
    %c0_i32_1 = arith.constant 0 : i32
    return %c0_i32, %c0_i32_0 : i32, i32
  }
  func.func @transform_2(%arg0: i32) -> (i32, i32) {
    %c0_i32 = arith.constant 0 : i32
    %c0_i32_0 = arith.constant 0 : i32
    %c0_i32_1 = arith.constant 0 : i32
    return %c0_i32, %c0_i32_0 : i32, i32
  }
  func.func @transform_3(%arg0: i32) -> (i32, i32) {
    %c0_i32 = arith.constant 0 : i32
    %c0_i32_0 = arith.constant 0 : i32
    %c0_i32_1 = arith.constant 0 : i32
    return %c0_i32, %c0_i32_0 : i32, i32
  }
  func.func @transform_4(%arg0: i32) -> (i32, i32) {
    %c0_i32 = arith.constant 0 : i32
    %c0_i32_0 = arith.constant 0 : i32
    %c0_i32_1 = arith.constant 0 : i32
    return %c0_i32, %c0_i32_0 : i32, i32
  }
  func.func @transform_5(%arg0: i32) -> (i32, i32) {
    %c0_i32 = arith.constant 0 : i32
    %c0_i32_0 = arith.constant 0 : i32
    %c0_i32_1 = arith.constant 0 : i32
    return %c0_i32, %c0_i32_0 : i32, i32
  }
  func.func @transform_6(%arg0: i32) -> (i32, i32) {
    %c0_i32 = arith.constant 0 : i32
    %c0_i32_0 = arith.constant 0 : i32
    %c0_i32_1 = arith.constant 0 : i32
    return %c0_i32, %c0_i32_0 : i32, i32
  }
  func.func @transform_7(%arg0: i32) -> (i32, i32) {
    %c0_i32 = arith.constant 0 : i32
    %c0_i32_0 = arith.constant 0 : i32
    return %arg0, %c0_i32 : i32, i32
  }
}

module attributes {stable_mosaic.version = 11 : i64} {
  func.func @_fused_cnn_kernel(%arg0: i32, %arg1: memref<28x8x32xbf16, #tpu.memory_space<vmem>>, %arg2: memref<160x512xbf16, #tpu.memory_space<vmem>>, %arg3: memref<1x192xf32, #tpu.memory_space<vmem>>, %arg4: memref<960x256xbf16, #tpu.memory_space<vmem>>, %arg5: memref<1x128xf32, #tpu.memory_space<vmem>>, %arg6: memref<512x128xbf16, #tpu.memory_space<vmem>>, %arg7: memref<1x128xf32, #tpu.memory_space<vmem>>, %arg8: memref<8x128xf32, #tpu.memory_space<vmem>>) attributes {dimension_semantics = [#tpu.dimension_semantics<parallel>], iteration_bounds = array<i64: 1>, scalar_prefetch = 0 : i64, scratch_operands = 0 : i64, tpu.core_type = #tpu.core_type<tc>, window_params = [{transform_indices = @transform_0, window_bounds = array<i64: 28, 8, 32>}, {pipeline_mode = #tpu.pipeline_mode<synchronous>, transform_indices = @transform_1, window_bounds = array<i64: 160, 512>}, {pipeline_mode = #tpu.pipeline_mode<synchronous>, transform_indices = @transform_2, window_bounds = array<i64: 1, 192>}, {pipeline_mode = #tpu.pipeline_mode<synchronous>, transform_indices = @transform_3, window_bounds = array<i64: 960, 256>}, {pipeline_mode = #tpu.pipeline_mode<synchronous>, transform_indices = @transform_4, window_bounds = array<i64: 1, 128>}, {pipeline_mode = #tpu.pipeline_mode<synchronous>, transform_indices = @transform_5, window_bounds = array<i64: 512, 128>}, {pipeline_mode = #tpu.pipeline_mode<synchronous>, transform_indices = @transform_6, window_bounds = array<i64: 1, 128>}, {transform_indices = @transform_7, window_bounds = array<i64: 8, 128>}]} {
    %c0 = arith.constant 0 : index
    %c0_0 = arith.constant 0 : index
    %c0_1 = arith.constant 0 : index
    %0 = vector.load %arg1[%c0, %c0_0, %c0_1] : memref<28x8x32xbf16, #tpu.memory_space<vmem>>, vector<28x8x32xbf16>
    %1 = vector.extract_strided_slice %0 {offsets = [0, 0, 0], sizes = [24, 8, 32], strides = [1, 1, 1]} : vector<28x8x32xbf16> to vector<24x8x32xbf16>
    %2 = vector.shape_cast %1 : vector<24x8x32xbf16> to vector<192x32xbf16>
    %c0_2 = arith.constant 0 : index
    %c0_3 = arith.constant 0 : index
    %3 = vector.load %arg2[%c0_2, %c0_3] : memref<160x512xbf16, #tpu.memory_space<vmem>>, vector<32x512xbf16>
    %cst = arith.constant dense<0.000000e+00> : vector<192x512xf32>
    %4 = tpu.matmul %2, %3, %cst {dimension_numbers = #tpu.dot_dimension_numbers<[1], [0], [0], [1], [0, 0, 1, 1], [], []>} : vector<192x32xbf16>, vector<32x512xbf16>, vector<192x512xf32> -> vector<192x512xf32>
    %5 = vector.extract_strided_slice %0 {offsets = [1, 0, 0], sizes = [24, 8, 32], strides = [1, 1, 1]} : vector<28x8x32xbf16> to vector<24x8x32xbf16>
    %6 = vector.shape_cast %5 : vector<24x8x32xbf16> to vector<192x32xbf16>
    %c32 = arith.constant 32 : index
    %c0_4 = arith.constant 0 : index
    %7 = vector.load %arg2[%c32, %c0_4] : memref<160x512xbf16, #tpu.memory_space<vmem>>, vector<32x512xbf16>
    %cst_5 = arith.constant dense<0.000000e+00> : vector<192x512xf32>
    %8 = tpu.matmul %6, %7, %cst_5 {dimension_numbers = #tpu.dot_dimension_numbers<[1], [0], [0], [1], [0, 0, 1, 1], [], []>} : vector<192x32xbf16>, vector<32x512xbf16>, vector<192x512xf32> -> vector<192x512xf32>
    %9 = arith.addf %4, %8 : vector<192x512xf32>
    %10 = vector.extract_strided_slice %0 {offsets = [2, 0, 0], sizes = [24, 8, 32], strides = [1, 1, 1]} : vector<28x8x32xbf16> to vector<24x8x32xbf16>
    %11 = vector.shape_cast %10 : vector<24x8x32xbf16> to vector<192x32xbf16>
    %c64 = arith.constant 64 : index
    %c0_6 = arith.constant 0 : index
    %12 = vector.load %arg2[%c64, %c0_6] : memref<160x512xbf16, #tpu.memory_space<vmem>>, vector<32x512xbf16>
    %cst_7 = arith.constant dense<0.000000e+00> : vector<192x512xf32>
    %13 = tpu.matmul %11, %12, %cst_7 {dimension_numbers = #tpu.dot_dimension_numbers<[1], [0], [0], [1], [0, 0, 1, 1], [], []>} : vector<192x32xbf16>, vector<32x512xbf16>, vector<192x512xf32> -> vector<192x512xf32>
    %14 = arith.addf %9, %13 : vector<192x512xf32>
    %15 = vector.extract_strided_slice %0 {offsets = [3, 0, 0], sizes = [24, 8, 32], strides = [1, 1, 1]} : vector<28x8x32xbf16> to vector<24x8x32xbf16>
    %16 = vector.shape_cast %15 : vector<24x8x32xbf16> to vector<192x32xbf16>
    %c96 = arith.constant 96 : index
    %c0_8 = arith.constant 0 : index
    %17 = vector.load %arg2[%c96, %c0_8] : memref<160x512xbf16, #tpu.memory_space<vmem>>, vector<32x512xbf16>
    %cst_9 = arith.constant dense<0.000000e+00> : vector<192x512xf32>
    %18 = tpu.matmul %16, %17, %cst_9 {dimension_numbers = #tpu.dot_dimension_numbers<[1], [0], [0], [1], [0, 0, 1, 1], [], []>} : vector<192x32xbf16>, vector<32x512xbf16>, vector<192x512xf32> -> vector<192x512xf32>
    %19 = arith.addf %14, %18 : vector<192x512xf32>
    %20 = vector.extract_strided_slice %0 {offsets = [4, 0, 0], sizes = [24, 8, 32], strides = [1, 1, 1]} : vector<28x8x32xbf16> to vector<24x8x32xbf16>
    %21 = vector.shape_cast %20 : vector<24x8x32xbf16> to vector<192x32xbf16>
    %c128 = arith.constant 128 : index
    %c0_10 = arith.constant 0 : index
    %22 = vector.load %arg2[%c128, %c0_10] : memref<160x512xbf16, #tpu.memory_space<vmem>>, vector<32x512xbf16>
    %cst_11 = arith.constant dense<0.000000e+00> : vector<192x512xf32>
    %23 = tpu.matmul %21, %22, %cst_11 {dimension_numbers = #tpu.dot_dimension_numbers<[1], [0], [0], [1], [0, 0, 1, 1], [], []>} : vector<192x32xbf16>, vector<32x512xbf16>, vector<192x512xf32> -> vector<192x512xf32>
    %24 = arith.addf %19, %23 : vector<192x512xf32>
    %25 = vector.extract_strided_slice %24 {offsets = [0, 0], sizes = [192, 192], strides = [1, 1]} : vector<192x512xf32> to vector<192x192xf32>
    %26 = vector.extract_strided_slice %24 {offsets = [0, 256], sizes = [192, 192], strides = [1, 1]} : vector<192x512xf32> to vector<192x192xf32>
    %27 = arith.maximumf %25, %26 : vector<192x192xf32>
    %28 = vector.shape_cast %27 : vector<192x192xf32> to vector<12x2x8x192xf32>
    %29 = vector.extract_strided_slice %28 {offsets = [0, 0, 0, 0], sizes = [12, 1, 8, 192], strides = [1, 1, 1, 1]} : vector<12x2x8x192xf32> to vector<12x1x8x192xf32>
    %30 = vector.shape_cast %29 : vector<12x1x8x192xf32> to vector<12x8x192xf32>
    %31 = vector.extract_strided_slice %28 {offsets = [0, 1, 0, 0], sizes = [12, 1, 8, 192], strides = [1, 1, 1, 1]} : vector<12x2x8x192xf32> to vector<12x1x8x192xf32>
    %32 = vector.shape_cast %31 : vector<12x1x8x192xf32> to vector<12x8x192xf32>
    %33 = arith.maximumf %30, %32 : vector<12x8x192xf32>
    %c0_12 = arith.constant 0 : index
    %c0_13 = arith.constant 0 : index
    %34 = vector.load %arg3[%c0_12, %c0_13] : memref<1x192xf32, #tpu.memory_space<vmem>>, vector<1x192xf32>
    %35 = vector.shape_cast %34 : vector<1x192xf32> to vector<1x1x192xf32>
    %36 = vector.broadcast %35 : vector<1x1x192xf32> to vector<12x8x192xf32>
    %37 = arith.addf %33, %36 : vector<12x8x192xf32>
    %cst_14 = arith.constant 0.000000e+00 : f32
    %38 = vector.broadcast %cst_14 : f32 to vector<12x8x192xf32>
    %39 = arith.maximumf %37, %38 : vector<12x8x192xf32>
    %40 = arith.truncf %39 : vector<12x8x192xf32> to vector<12x8x192xbf16>
    %41 = vector.extract_strided_slice %40 {offsets = [0, 0, 0], sizes = [8, 8, 192], strides = [1, 1, 1]} : vector<12x8x192xbf16> to vector<8x8x192xbf16>
    %42 = vector.shape_cast %41 : vector<8x8x192xbf16> to vector<64x192xbf16>
    %c0_15 = arith.constant 0 : index
    %c0_16 = arith.constant 0 : index
    %43 = vector.load %arg4[%c0_15, %c0_16] : memref<960x256xbf16, #tpu.memory_space<vmem>>, vector<192x256xbf16>
    %cst_17 = arith.constant dense<0.000000e+00> : vector<64x256xf32>
    %44 = tpu.matmul %42, %43, %cst_17 {dimension_numbers = #tpu.dot_dimension_numbers<[1], [0], [0], [1], [0, 0, 1, 1], [], []>} : vector<64x192xbf16>, vector<192x256xbf16>, vector<64x256xf32> -> vector<64x256xf32>
    %45 = vector.extract_strided_slice %40 {offsets = [1, 0, 0], sizes = [8, 8, 192], strides = [1, 1, 1]} : vector<12x8x192xbf16> to vector<8x8x192xbf16>
    %46 = vector.shape_cast %45 : vector<8x8x192xbf16> to vector<64x192xbf16>
    %c192 = arith.constant 192 : index
    %c0_18 = arith.constant 0 : index
    %47 = vector.load %arg4[%c192, %c0_18] : memref<960x256xbf16, #tpu.memory_space<vmem>>, vector<192x256xbf16>
    %cst_19 = arith.constant dense<0.000000e+00> : vector<64x256xf32>
    %48 = tpu.matmul %46, %47, %cst_19 {dimension_numbers = #tpu.dot_dimension_numbers<[1], [0], [0], [1], [0, 0, 1, 1], [], []>} : vector<64x192xbf16>, vector<192x256xbf16>, vector<64x256xf32> -> vector<64x256xf32>
    %49 = arith.addf %44, %48 : vector<64x256xf32>
    %50 = vector.extract_strided_slice %40 {offsets = [2, 0, 0], sizes = [8, 8, 192], strides = [1, 1, 1]} : vector<12x8x192xbf16> to vector<8x8x192xbf16>
    %51 = vector.shape_cast %50 : vector<8x8x192xbf16> to vector<64x192xbf16>
    %c384 = arith.constant 384 : index
    %c0_20 = arith.constant 0 : index
    %52 = vector.load %arg4[%c384, %c0_20] : memref<960x256xbf16, #tpu.memory_space<vmem>>, vector<192x256xbf16>
    %cst_21 = arith.constant dense<0.000000e+00> : vector<64x256xf32>
    %53 = tpu.matmul %51, %52, %cst_21 {dimension_numbers = #tpu.dot_dimension_numbers<[1], [0], [0], [1], [0, 0, 1, 1], [], []>} : vector<64x192xbf16>, vector<192x256xbf16>, vector<64x256xf32> -> vector<64x256xf32>
    %54 = arith.addf %49, %53 : vector<64x256xf32>
    %55 = vector.extract_strided_slice %40 {offsets = [3, 0, 0], sizes = [8, 8, 192], strides = [1, 1, 1]} : vector<12x8x192xbf16> to vector<8x8x192xbf16>
    %56 = vector.shape_cast %55 : vector<8x8x192xbf16> to vector<64x192xbf16>
    %c576 = arith.constant 576 : index
    %c0_22 = arith.constant 0 : index
    %57 = vector.load %arg4[%c576, %c0_22] : memref<960x256xbf16, #tpu.memory_space<vmem>>, vector<192x256xbf16>
    %cst_23 = arith.constant dense<0.000000e+00> : vector<64x256xf32>
    %58 = tpu.matmul %56, %57, %cst_23 {dimension_numbers = #tpu.dot_dimension_numbers<[1], [0], [0], [1], [0, 0, 1, 1], [], []>} : vector<64x192xbf16>, vector<192x256xbf16>, vector<64x256xf32> -> vector<64x256xf32>
    %59 = arith.addf %54, %58 : vector<64x256xf32>
    %60 = vector.extract_strided_slice %40 {offsets = [4, 0, 0], sizes = [8, 8, 192], strides = [1, 1, 1]} : vector<12x8x192xbf16> to vector<8x8x192xbf16>
    %61 = vector.shape_cast %60 : vector<8x8x192xbf16> to vector<64x192xbf16>
    %c768 = arith.constant 768 : index
    %c0_24 = arith.constant 0 : index
    %62 = vector.load %arg4[%c768, %c0_24] : memref<960x256xbf16, #tpu.memory_space<vmem>>, vector<192x256xbf16>
    %cst_25 = arith.constant dense<0.000000e+00> : vector<64x256xf32>
    %63 = tpu.matmul %61, %62, %cst_25 {dimension_numbers = #tpu.dot_dimension_numbers<[1], [0], [0], [1], [0, 0, 1, 1], [], []>} : vector<64x192xbf16>, vector<192x256xbf16>, vector<64x256xf32> -> vector<64x256xf32>
    %64 = arith.addf %59, %63 : vector<64x256xf32>
    %65 = vector.extract_strided_slice %64 {offsets = [0, 0], sizes = [64, 128], strides = [1, 1]} : vector<64x256xf32> to vector<64x128xf32>
    %66 = vector.extract_strided_slice %64 {offsets = [0, 128], sizes = [64, 128], strides = [1, 1]} : vector<64x256xf32> to vector<64x128xf32>
    %67 = arith.maximumf %65, %66 : vector<64x128xf32>
    %68 = vector.shape_cast %67 : vector<64x128xf32> to vector<4x2x8x128xf32>
    %69 = vector.extract_strided_slice %68 {offsets = [0, 0, 0, 0], sizes = [4, 1, 8, 128], strides = [1, 1, 1, 1]} : vector<4x2x8x128xf32> to vector<4x1x8x128xf32>
    %70 = vector.shape_cast %69 : vector<4x1x8x128xf32> to vector<4x8x128xf32>
    %71 = vector.extract_strided_slice %68 {offsets = [0, 1, 0, 0], sizes = [4, 1, 8, 128], strides = [1, 1, 1, 1]} : vector<4x2x8x128xf32> to vector<4x1x8x128xf32>
    %72 = vector.shape_cast %71 : vector<4x1x8x128xf32> to vector<4x8x128xf32>
    %73 = arith.maximumf %70, %72 : vector<4x8x128xf32>
    %c0_26 = arith.constant 0 : index
    %c0_27 = arith.constant 0 : index
    %74 = vector.load %arg5[%c0_26, %c0_27] : memref<1x128xf32, #tpu.memory_space<vmem>>, vector<1x128xf32>
    %75 = vector.shape_cast %74 : vector<1x128xf32> to vector<1x1x128xf32>
    %76 = vector.broadcast %75 : vector<1x1x128xf32> to vector<4x8x128xf32>
    %77 = arith.addf %73, %76 : vector<4x8x128xf32>
    %cst_28 = arith.constant 0.000000e+00 : f32
    %78 = vector.broadcast %cst_28 : f32 to vector<4x8x128xf32>
    %79 = arith.maximumf %77, %78 : vector<4x8x128xf32>
    %80 = arith.truncf %79 : vector<4x8x128xf32> to vector<4x8x128xbf16>
    %81 = vector.extract_strided_slice %80 {offsets = [0, 0, 0], sizes = [1, 8, 128], strides = [1, 1, 1]} : vector<4x8x128xbf16> to vector<1x8x128xbf16>
    %82 = vector.shape_cast %81 : vector<1x8x128xbf16> to vector<8x128xbf16>
    %c0_29 = arith.constant 0 : index
    %c0_30 = arith.constant 0 : index
    %83 = vector.load %arg6[%c0_29, %c0_30] : memref<512x128xbf16, #tpu.memory_space<vmem>>, vector<128x128xbf16>
    %cst_31 = arith.constant dense<0.000000e+00> : vector<8x128xf32>
    %84 = tpu.matmul %82, %83, %cst_31 {dimension_numbers = #tpu.dot_dimension_numbers<[1], [0], [0], [1], [0, 0, 1, 1], [], []>} : vector<8x128xbf16>, vector<128x128xbf16>, vector<8x128xf32> -> vector<8x128xf32>
    %85 = vector.extract_strided_slice %80 {offsets = [1, 0, 0], sizes = [1, 8, 128], strides = [1, 1, 1]} : vector<4x8x128xbf16> to vector<1x8x128xbf16>
    %86 = vector.shape_cast %85 : vector<1x8x128xbf16> to vector<8x128xbf16>
    %c128_32 = arith.constant 128 : index
    %c0_33 = arith.constant 0 : index
    %87 = vector.load %arg6[%c128_32, %c0_33] : memref<512x128xbf16, #tpu.memory_space<vmem>>, vector<128x128xbf16>
    %cst_34 = arith.constant dense<0.000000e+00> : vector<8x128xf32>
    %88 = tpu.matmul %86, %87, %cst_34 {dimension_numbers = #tpu.dot_dimension_numbers<[1], [0], [0], [1], [0, 0, 1, 1], [], []>} : vector<8x128xbf16>, vector<128x128xbf16>, vector<8x128xf32> -> vector<8x128xf32>
    %89 = arith.addf %84, %88 : vector<8x128xf32>
    %90 = vector.extract_strided_slice %80 {offsets = [2, 0, 0], sizes = [1, 8, 128], strides = [1, 1, 1]} : vector<4x8x128xbf16> to vector<1x8x128xbf16>
    %91 = vector.shape_cast %90 : vector<1x8x128xbf16> to vector<8x128xbf16>
    %c256 = arith.constant 256 : index
    %c0_35 = arith.constant 0 : index
    %92 = vector.load %arg6[%c256, %c0_35] : memref<512x128xbf16, #tpu.memory_space<vmem>>, vector<128x128xbf16>
    %cst_36 = arith.constant dense<0.000000e+00> : vector<8x128xf32>
    %93 = tpu.matmul %91, %92, %cst_36 {dimension_numbers = #tpu.dot_dimension_numbers<[1], [0], [0], [1], [0, 0, 1, 1], [], []>} : vector<8x128xbf16>, vector<128x128xbf16>, vector<8x128xf32> -> vector<8x128xf32>
    %94 = arith.addf %89, %93 : vector<8x128xf32>
    %95 = vector.extract_strided_slice %80 {offsets = [3, 0, 0], sizes = [1, 8, 128], strides = [1, 1, 1]} : vector<4x8x128xbf16> to vector<1x8x128xbf16>
    %96 = vector.shape_cast %95 : vector<1x8x128xbf16> to vector<8x128xbf16>
    %c384_37 = arith.constant 384 : index
    %c0_38 = arith.constant 0 : index
    %97 = vector.load %arg6[%c384_37, %c0_38] : memref<512x128xbf16, #tpu.memory_space<vmem>>, vector<128x128xbf16>
    %cst_39 = arith.constant dense<0.000000e+00> : vector<8x128xf32>
    %98 = tpu.matmul %96, %97, %cst_39 {dimension_numbers = #tpu.dot_dimension_numbers<[1], [0], [0], [1], [0, 0, 1, 1], [], []>} : vector<8x128xbf16>, vector<128x128xbf16>, vector<8x128xf32> -> vector<8x128xf32>
    %99 = arith.addf %94, %98 : vector<8x128xf32>
    %c0_40 = arith.constant 0 : index
    %c0_41 = arith.constant 0 : index
    %100 = vector.load %arg7[%c0_40, %c0_41] : memref<1x128xf32, #tpu.memory_space<vmem>>, vector<1x128xf32>
    %101 = vector.broadcast %100 : vector<1x128xf32> to vector<8x128xf32>
    %102 = arith.addf %99, %101 : vector<8x128xf32>
    %c0_42 = arith.constant 0 : index
    %c0_43 = arith.constant 0 : index
    %103 = vector.load %arg8[%c0_42, %c0_43] : memref<8x128xf32, #tpu.memory_space<vmem>>, vector<8x128xf32>
    tpu.vector_store %arg8[%c0_42, %c0_43], %102 {strides = array<i32>} : memref<8x128xf32, #tpu.memory_space<vmem>>, vector<8x128xf32>,
    return
  }
  func.func @transform_0(%arg0: i32) -> (i32, i32, i32) {
    %c0_i32 = arith.constant 0 : i32
    %c0_i32_0 = arith.constant 0 : i32
    %c0_i32_1 = arith.constant 0 : i32
    return %c0_i32, %arg0, %c0_i32_0 : i32, i32, i32
  }
  func.func @transform_1(%arg0: i32) -> (i32, i32) {
    %c0_i32 = arith.constant 0 : i32
    %c0_i32_0 = arith.constant 0 : i32
    %c0_i32_1 = arith.constant 0 : i32
    return %c0_i32, %c0_i32_0 : i32, i32
  }
  func.func @transform_2(%arg0: i32) -> (i32, i32) {
    %c0_i32 = arith.constant 0 : i32
    %c0_i32_0 = arith.constant 0 : i32
    %c0_i32_1 = arith.constant 0 : i32
    return %c0_i32, %c0_i32_0 : i32, i32
  }
  func.func @transform_3(%arg0: i32) -> (i32, i32) {
    %c0_i32 = arith.constant 0 : i32
    %c0_i32_0 = arith.constant 0 : i32
    %c0_i32_1 = arith.constant 0 : i32
    return %c0_i32, %c0_i32_0 : i32, i32
  }
  func.func @transform_4(%arg0: i32) -> (i32, i32) {
    %c0_i32 = arith.constant 0 : i32
    %c0_i32_0 = arith.constant 0 : i32
    %c0_i32_1 = arith.constant 0 : i32
    return %c0_i32, %c0_i32_0 : i32, i32
  }
  func.func @transform_5(%arg0: i32) -> (i32, i32) {
    %c0_i32 = arith.constant 0 : i32
    %c0_i32_0 = arith.constant 0 : i32
    %c0_i32_1 = arith.constant 0 : i32
    return %c0_i32, %c0_i32_0 : i32, i32
  }
  func.func @transform_6(%arg0: i32) -> (i32, i32) {
    %c0_i32 = arith.constant 0 : i32
    %c0_i32_0 = arith.constant 0 : i32
    %c0_i32_1 = arith.constant 0 : i32
    return %c0_i32, %c0_i32_0 : i32, i32
  }
  func.func @transform_7(%arg0: i32) -> (i32, i32) {
    %c0_i32 = arith.constant 0 : i32
    %c0_i32_0 = arith.constant 0 : i32
    return %arg0, %c0_i32 : i32, i32
  }
}

</mosaic_0001>

<llo_original>
// kernel: cnn_model_binary_forward.1
$region0: #{cnn_model_binary_forward.1}
  #allocation0 [shape = 'u32[]', space=smem, size = 0x4, offset = 0x4, fixed_abs, tag = 'smem constant byte address 0x4 - core index']
  #allocation1 [shape = 'u32[144,128]{1,0:T(1,128)}', space=vmem, size = 0x12000, scoped, tag = 'internal scratch']
  %s0 = inlined_call_operand.vmem [shape: bf16[28,8,32], index: 0, kind: input, shape index: {}]
  %s1 = inlined_call_operand.hbm [shape: bf16[160,512], index: 1, kind: input, shape index: {}]
  %s2 = inlined_call_operand.vmem [shape: f32[1,192], index: 2, kind: input, shape index: {}]
  %s3 = inlined_call_operand.hbm [shape: bf16[960,256], index: 3, kind: input, shape index: {}]
  %s4 = inlined_call_operand.vmem [shape: f32[1,128], index: 4, kind: input, shape index: {}]
  %s5 = inlined_call_operand.hbm [shape: bf16[512,128], index: 5, kind: input, shape index: {}]
  %s6 = inlined_call_operand.vmem [shape: f32[1,128], index: 6, kind: input, shape index: {}]
  %s7 = inlined_call_operand.vmem [shape: f32[8,128], index: 7, kind: output, shape index: {}]
  %s8 = sld [smem:[#allocation0]]
  $region50: #{cnn_model_binary_forward.1} parent=0
    _
  %s10 = ssub.s32 1, %s8
  %s11 = scalar_select 0, %s10, %s8
  $region1: #{cnn_model_binary_forward.1} parent=0
    #allocation2 [shape = 'u8[163840]{0}', space=vmem, size = 0x28000, scoped, tag = 'input window, operand 1, single buffered']
    #allocation3 [shape = 's32[1]{0}', space=sflag, size = 0x4, scoped, tag = 'scoped memory for cnn_model_binary_forward.1']
    #allocation4 [shape = 'u8[491520]{0}', space=vmem, size = 0x78000, scoped, tag = 'input window, operand 3, single buffered']
    #allocation5 [shape = 's32[1]{0}', space=sflag, size = 0x4, scoped, tag = 'scoped memory for cnn_model_binary_forward.1']
    #allocation6 [shape = 'u8[131072]{0}', space=vmem, size = 0x20000, scoped, tag = 'input window, operand 5, single buffered']
    %12 = vsyncpa [#allocation3], 0
    %13 = vsyncpa [#allocation5], 0
    // Predicated region
    $region2: #{cnn_model_binary_forward.1} parent=1 // pred_check
      _
    $region3: #{cnn_model_binary_forward.1} parent=1 // pred_check_branch
      %15 = sbr.rel (0) target = $region5
    $region4: #{cnn_model_binary_forward.1} parent=1 // pred_region
      _
    $region5: #{cnn_model_binary_forward.1} parent=1 // pred_fallthru
      _
    // Predicated region
    $region6: #{cnn_model_binary_forward.1} parent=1 // pred_check
      _
    $region7: #{cnn_model_binary_forward.1} parent=1 // pred_check_branch
      %17 = sbr.rel (0) target = $region9
    $region8: #{cnn_model_binary_forward.1} parent=1 // pred_region
      %s19 = ssub.s32 5120, 5120
      %20 = vsyncadd [#allocation3], %s19
      %s21 = sshll.u32 [#allocation2], 4
      %s22 = int_to_ptr.vmem [resolvable:$true] %s21
      %27 = dma.hbm_to_vmem [thread:$0]  %s1, 5120, %s22, [#allocation3], 256, 256, 16
    $region9: #{cnn_model_binary_forward.1} parent=1 // pred_fallthru
      _
    // Predicated region
    $region10: #{cnn_model_binary_forward.1} parent=1 // pred_check
      _
    $region11: #{cnn_model_binary_forward.1} parent=1 // pred_check_branch
      %29 = sbr.rel (0) target = $region13
    $region12: #{cnn_model_binary_forward.1} parent=1 // pred_region
      _
    $region13: #{cnn_model_binary_forward.1} parent=1 // pred_fallthru
      _
    // Predicated region
    $region14: #{cnn_model_binary_forward.1} parent=1 // pred_check
      _
    $region15: #{cnn_model_binary_forward.1} parent=1 // pred_check_branch
      %31 = sbr.rel (0) target = $region17
    $region16: #{cnn_model_binary_forward.1} parent=1 // pred_region
      %s33 = ssub.s32 15360, 15360
      %34 = vsyncadd [#allocation5], %s33
      %s35 = sshll.u32 [#allocation4], 4
      %s36 = int_to_ptr.vmem [resolvable:$true] %s35
      %41 = dma.hbm_to_vmem [thread:$0]  %s3, 15360, %s36, [#allocation5], 128, 128, 8
    $region17: #{cnn_model_binary_forward.1} parent=1 // pred_fallthru
      _
    // Predicated region
    $region18: #{cnn_model_binary_forward.1} parent=1 // pred_check
      _
    $region19: #{cnn_model_binary_forward.1} parent=1 // pred_check_branch
      %43 = sbr.rel (0) target = $region21
    $region20: #{cnn_model_binary_forward.1} parent=1 // pred_region
      _
    $region21: #{cnn_model_binary_forward.1} parent=1 // pred_fallthru
      _
    // Predicated region
    $region22: #{cnn_model_binary_forward.1} parent=1 // pred_check
      _
    $region23: #{cnn_model_binary_forward.1} parent=1 // pred_check_branch
      %45 = sbr.rel (0) target = $region25
    $region24: #{cnn_model_binary_forward.1} parent=1 // pred_region
      %s47 = ssub.s32 4096, 4096
      %48 = vsyncadd [#allocation5], %s47
      %s49 = sshll.u32 [#allocation6], 4
      %s50 = int_to_ptr.vmem [resolvable:$true] %s49
      %55 = dma.hbm_to_vmem [thread:$0]  %s5, 4096, %s50, [#allocation5], 64, 64, 4
    $region25: #{cnn_model_binary_forward.1} parent=1 // pred_fallthru
      _
    // Predicated region
    $region26: #{cnn_model_binary_forward.1} parent=1 // pred_check
      _
    $region27: #{cnn_model_binary_forward.1} parent=1 // pred_check_branch
      %57 = sbr.rel (0) target = $region29
    $region28: #{cnn_model_binary_forward.1} parent=1 // pred_region
      _
    $region29: #{cnn_model_binary_forward.1} parent=1 // pred_fallthru
      _
    // Predicated region
    $region30: #{cnn_model_binary_forward.1} parent=1 // pred_check
      _
    $region31: #{cnn_model_binary_forward.1} parent=1 // pred_check_branch
      %59 = sbr.rel (0) target = $region33
    $region32: #{cnn_model_binary_forward.1} parent=1 // pred_region
      %60 = dma.done [#allocation3], 5120
    $region33: #{cnn_model_binary_forward.1} parent=1 // pred_fallthru
      _
    // Predicated region
    $region34: #{cnn_model_binary_forward.1} parent=1 // pred_check
      _
    $region35: #{cnn_model_binary_forward.1} parent=1 // pred_check_branch
      %62 = sbr.rel (0) target = $region37
    $region36: #{cnn_model_binary_forward.1} parent=1 // pred_region
      %63 = dma.done [#allocation5], 15360
    $region37: #{cnn_model_binary_forward.1} parent=1 // pred_fallthru
      _
    // Predicated region
    $region38: #{cnn_model_binary_forward.1} parent=1 // pred_check
      _
    $region39: #{cnn_model_binary_forward.1} parent=1 // pred_check_branch
      %65 = sbr.rel (0) target = $region41
    $region40: #{cnn_model_binary_forward.1} parent=1 // pred_region
      %66 = dma.done [#allocation5], 4096
    $region41: #{cnn_model_binary_forward.1} parent=1 // pred_fallthru
      _
    %v68 = vld [vmem:[%s0] sm:$0xf]
    %v69 = vld [vmem:[%s0 + $0x4] sm:$0xf]
    %v70 = vld [vmem:[%s0 + $0x8] sm:$0xf]
    %v71 = vld [vmem:[%s0 + $0xc] sm:$0xf]
    %v72 = vld [vmem:[%s0 + $0x10] sm:$0xf]
    %v73 = vld [vmem:[%s0 + $0x14] sm:$0xf]
    %v74 = vld [vmem:[%s0 + $0x18] sm:$0xf]
    %v75 = vld [vmem:[%s0 + $0x1c] sm:$0xf]
    %v76 = vld [vmem:[%s0 + $0x20] sm:$0xf]
    %v77 = vld [vmem:[%s0 + $0x24] sm:$0xf]
    %v78 = vld [vmem:[%s0 + $0x28] sm:$0xf]
    %v79 = vld [vmem:[%s0 + $0x2c] sm:$0xf]
    %v80 = vld [vmem:[%s0 + $0x30] sm:$0xf]
    %v81 = vld [vmem:[%s0 + $0x34] sm:$0xf]
    %v82 = vld [vmem:[%s0 + $0x38] sm:$0xf]
    %v83 = vld [vmem:[%s0 + $0x3c] sm:$0xf]
    %v84 = vld [vmem:[%s0 + $0x40] sm:$0xf]
    %v85 = vld [vmem:[%s0 + $0x44] sm:$0xf]
    %v86 = vld [vmem:[%s0 + $0x48] sm:$0xf]
    %v87 = vld [vmem:[%s0 + $0x4c] sm:$0xf]
    %v88 = vld [vmem:[%s0 + $0x50] sm:$0xf]
    %v89 = vld [vmem:[%s0 + $0x54] sm:$0xf]
    %v90 = vld [vmem:[%s0 + $0x58] sm:$0xf]
    %v91 = vld [vmem:[%s0 + $0x5c] sm:$0xf]
    %v92 = vld [vmem:[%s0 + $0x60] sm:$0xf]
    %v93 = vld [vmem:[%s0 + $0x64] sm:$0xf]
    %v94 = vld [vmem:[%s0 + $0x68] sm:$0xf]
    %v95 = vld [vmem:[%s0 + $0x6c] sm:$0xf]
    %v120 = vunpack.c.l.b16 %v69
    %v121 = vunpack.c.l.b16 %v70
    %v122 = vunpack.c.l.b16 %v71
    %v123 = vunpack.c.l.b16 %v72
    %v124 = vunpack.c.l.b16 %v73
    %v125 = vunpack.c.l.b16 %v74
    %v126 = vunpack.c.l.b16 %v75
    %v127 = vunpack.c.l.b16 %v76
    %v128 = vunpack.c.l.b16 %v77
    %v129 = vunpack.c.l.b16 %v78
    %v130 = vunpack.c.l.b16 %v79
    %v131 = vunpack.c.l.b16 %v80
    %v132 = vunpack.c.l.b16 %v81
    %v133 = vunpack.c.l.b16 %v82
    %v134 = vunpack.c.l.b16 %v83
    %v135 = vunpack.c.l.b16 %v84
    %v136 = vunpack.c.l.b16 %v85
    %v137 = vunpack.c.l.b16 %v86
    %v138 = vunpack.c.l.b16 %v87
    %v139 = vunpack.c.l.b16 %v88
    %v140 = vunpack.c.l.b16 %v89
    %v141 = vunpack.c.l.b16 %v90
    %v142 = vunpack.c.l.b16 %v91
    %v143 = vunpack.c.l.b16 %v92
    %v144 = vpack.c.b16 %v120, %v120
    %v145 = vpack.c.b16 %v121, %v121
    %v146 = vpack.c.b16 %v122, %v122
    %v147 = vpack.c.b16 %v123, %v123
    %v148 = vpack.c.b16 %v124, %v124
    %v149 = vpack.c.b16 %v125, %v125
    %v150 = vpack.c.b16 %v126, %v126
    %v151 = vpack.c.b16 %v127, %v127
    %v152 = vpack.c.b16 %v128, %v128
    %v153 = vpack.c.b16 %v129, %v129
    %v154 = vpack.c.b16 %v130, %v130
    %v155 = vpack.c.b16 %v131, %v131
    %v156 = vpack.c.b16 %v132, %v132
    %v157 = vpack.c.b16 %v133, %v133
    %v158 = vpack.c.b16 %v134, %v134
    %v159 = vpack.c.b16 %v135, %v135
    %v160 = vpack.c.b16 %v136, %v136
    %v161 = vpack.c.b16 %v137, %v137
    %v162 = vpack.c.b16 %v138, %v138
    %v163 = vpack.c.b16 %v139, %v139
    %v164 = vpack.c.b16 %v140, %v140
    %v165 = vpack.c.b16 %v141, %v141
    %v166 = vpack.c.b16 %v142, %v142
    %v167 = vpack.c.b16 %v143, %v143
    %168 = vrot.lane.b32.xlu0 %v144, 32
    %v169 = vpop.permute.xlu0 %168
    %170 = vrot.lane.b32.xlu0 %v145, 32
    %v171 = vpop.permute.xlu0 %170
    %172 = vrot.lane.b32.xlu0 %v146, 32
    %v173 = vpop.permute.xlu0 %172
    %174 = vrot.lane.b32.xlu0 %v147, 32
    %v175 = vpop.permute.xlu0 %174
    %176 = vrot.lane.b32.xlu0 %v148, 32
    %v177 = vpop.permute.xlu0 %176
    %178 = vrot.lane.b32.xlu0 %v149, 32
    %v179 = vpop.permute.xlu0 %178
    %180 = vrot.lane.b32.xlu0 %v150, 32
    %v181 = vpop.permute.xlu0 %180
    %182 = vrot.lane.b32.xlu0 %v151, 32
    %v183 = vpop.permute.xlu0 %182
    %184 = vrot.lane.b32.xlu0 %v152, 32
    %v185 = vpop.permute.xlu0 %184
    %186 = vrot.lane.b32.xlu0 %v153, 32
    %v187 = vpop.permute.xlu0 %186
    %188 = vrot.lane.b32.xlu0 %v154, 32
    %v189 = vpop.permute.xlu0 %188
    %190 = vrot.lane.b32.xlu0 %v155, 32
    %v191 = vpop.permute.xlu0 %190
    %192 = vrot.lane.b32.xlu0 %v156, 32
    %v193 = vpop.permute.xlu0 %192
    %194 = vrot.lane.b32.xlu0 %v157, 32
    %v195 = vpop.permute.xlu0 %194
    %196 = vrot.lane.b32.xlu0 %v158, 32
    %v197 = vpop.permute.xlu0 %196
    %198 = vrot.lane.b32.xlu0 %v159, 32
    %v199 = vpop.permute.xlu0 %198
    %200 = vrot.lane.b32.xlu0 %v160, 32
    %v201 = vpop.permute.xlu0 %200
    %202 = vrot.lane.b32.xlu0 %v161, 32
    %v203 = vpop.permute.xlu0 %202
    %204 = vrot.lane.b32.xlu0 %v162, 32
    %v205 = vpop.permute.xlu0 %204
    %206 = vrot.lane.b32.xlu0 %v163, 32
    %v207 = vpop.permute.xlu0 %206
    %208 = vrot.lane.b32.xlu0 %v164, 32
    %v209 = vpop.permute.xlu0 %208
    %210 = vrot.lane.b32.xlu0 %v165, 32
    %v211 = vpop.permute.xlu0 %210
    %212 = vrot.lane.b32.xlu0 %v166, 32
    %v213 = vpop.permute.xlu0 %212
    %214 = vrot.lane.b32.xlu0 %v167, 32
    %v215 = vpop.permute.xlu0 %214
    %v217 = vunpack.c.l.b16 %v93
    %v218 = vpack.c.b16 %v217, %v217
    %219 = vrot.lane.b32.xlu0 %v145, 64
    %v220 = vpop.permute.xlu0 %219
    %221 = vrot.lane.b32.xlu0 %v146, 64
    %v222 = vpop.permute.xlu0 %221
    %223 = vrot.lane.b32.xlu0 %v147, 64
    %v224 = vpop.permute.xlu0 %223
    %225 = vrot.lane.b32.xlu0 %v148, 64
    %v226 = vpop.permute.xlu0 %225
    %227 = vrot.lane.b32.xlu0 %v149, 64
    %v228 = vpop.permute.xlu0 %227
    %229 = vrot.lane.b32.xlu0 %v150, 64
    %v230 = vpop.permute.xlu0 %229
    %231 = vrot.lane.b32.xlu0 %v151, 64
    %v232 = vpop.permute.xlu0 %231
    %233 = vrot.lane.b32.xlu0 %v152, 64
    %v234 = vpop.permute.xlu0 %233
    %235 = vrot.lane.b32.xlu0 %v153, 64
    %v236 = vpop.permute.xlu0 %235
    %237 = vrot.lane.b32.xlu0 %v154, 64
    %v238 = vpop.permute.xlu0 %237
    %239 = vrot.lane.b32.xlu0 %v155, 64
    %v240 = vpop.permute.xlu0 %239
    %241 = vrot.lane.b32.xlu0 %v156, 64
    %v242 = vpop.permute.xlu0 %241
    %243 = vrot.lane.b32.xlu0 %v157, 64
    %v244 = vpop.permute.xlu0 %243
    %245 = vrot.lane.b32.xlu0 %v158, 64
    %v246 = vpop.permute.xlu0 %245
    %247 = vrot.lane.b32.xlu0 %v159, 64
    %v248 = vpop.permute.xlu0 %247
    %249 = vrot.lane.b32.xlu0 %v160, 64
    %v250 = vpop.permute.xlu0 %249
    %251 = vrot.lane.b32.xlu0 %v161, 64
    %v252 = vpop.permute.xlu0 %251
    %253 = vrot.lane.b32.xlu0 %v162, 64
    %v254 = vpop.permute.xlu0 %253
    %255 = vrot.lane.b32.xlu0 %v163, 64
    %v256 = vpop.permute.xlu0 %255
    %257 = vrot.lane.b32.xlu0 %v164, 64
    %v258 = vpop.permute.xlu0 %257
    %259 = vrot.lane.b32.xlu0 %v165, 64
    %v260 = vpop.permute.xlu0 %259
    %261 = vrot.lane.b32.xlu0 %v166, 64
    %v262 = vpop.permute.xlu0 %261
    %263 = vrot.lane.b32.xlu0 %v167, 64
    %v264 = vpop.permute.xlu0 %263
    %265 = vrot.lane.b32.xlu0 %v218, 64
    %v266 = vpop.permute.xlu0 %265
    %v268 = vunpack.c.l.b16 %v94
    %v269 = vpack.c.b16 %v268, %v268
    %270 = vrot.lane.b32.xlu0 %v146, 96
    %v271 = vpop.permute.xlu0 %270
    %272 = vrot.lane.b32.xlu0 %v147, 96
    %v273 = vpop.permute.xlu0 %272
    %274 = vrot.lane.b32.xlu0 %v148, 96
    %v275 = vpop.permute.xlu0 %274
    %276 = vrot.lane.b32.xlu0 %v149, 96
    %v277 = vpop.permute.xlu0 %276
    %278 = vrot.lane.b32.xlu0 %v150, 96
    %v279 = vpop.permute.xlu0 %278
    %280 = vrot.lane.b32.xlu0 %v151, 96
    %v281 = vpop.permute.xlu0 %280
    %282 = vrot.lane.b32.xlu0 %v152, 96
    %v283 = vpop.permute.xlu0 %282
    %284 = vrot.lane.b32.xlu0 %v153, 96
    %v285 = vpop.permute.xlu0 %284
    %286 = vrot.lane.b32.xlu0 %v154, 96
    %v287 = vpop.permute.xlu0 %286
    %288 = vrot.lane.b32.xlu0 %v155, 96
    %v289 = vpop.permute.xlu0 %288
    %290 = vrot.lane.b32.xlu0 %v156, 96
    %v291 = vpop.permute.xlu0 %290
    %292 = vrot.lane.b32.xlu0 %v157, 96
    %v293 = vpop.permute.xlu0 %292
    %294 = vrot.lane.b32.xlu0 %v158, 96
    %v295 = vpop.permute.xlu0 %294
    %296 = vrot.lane.b32.xlu0 %v159, 96
    %v297 = vpop.permute.xlu0 %296
    %298 = vrot.lane.b32.xlu0 %v160, 96
    %v299 = vpop.permute.xlu0 %298
    %300 = vrot.lane.b32.xlu0 %v161, 96
    %v301 = vpop.permute.xlu0 %300
    %302 = vrot.lane.b32.xlu0 %v162, 96
    %v303 = vpop.permute.xlu0 %302
    %304 = vrot.lane.b32.xlu0 %v163, 96
    %v305 = vpop.permute.xlu0 %304
    %306 = vrot.lane.b32.xlu0 %v164, 96
    %v307 = vpop.permute.xlu0 %306
    %308 = vrot.lane.b32.xlu0 %v165, 96
    %v309 = vpop.permute.xlu0 %308
    %310 = vrot.lane.b32.xlu0 %v166, 96
    %v311 = vpop.permute.xlu0 %310
    %312 = vrot.lane.b32.xlu0 %v167, 96
    %v313 = vpop.permute.xlu0 %312
    %314 = vrot.lane.b32.xlu0 %v218, 96
    %v315 = vpop.permute.xlu0 %314
    %316 = vrot.lane.b32.xlu0 %v269, 96
    %v317 = vpop.permute.xlu0 %316
    %vm318 = vcmask 261120
    %v321 = vsel %vm318, %v68, %v169
    %v324 = vsel %vm318, %v69, %v171
    %v327 = vsel %vm318, %v70, %v173
    %v330 = vsel %vm318, %v71, %v175
    %v333 = vsel %vm318, %v72, %v177
    %v336 = vsel %vm318, %v73, %v179
    %v339 = vsel %vm318, %v74, %v181
    %v342 = vsel %vm318, %v75, %v183
    %v345 = vsel %vm318, %v76, %v185
    %v348 = vsel %vm318, %v77, %v187
    %v351 = vsel %vm318, %v78, %v189
    %v354 = vsel %vm318, %v79, %v191
    %v357 = vsel %vm318, %v80, %v193
    %v360 = vsel %vm318, %v81, %v195
    %v363 = vsel %vm318, %v82, %v197
    %v366 = vsel %vm318, %v83, %v199
    %v369 = vsel %vm318, %v84, %v201
    %v372 = vsel %vm318, %v85, %v203
    %v375 = vsel %vm318, %v86, %v205
    %v378 = vsel %vm318, %v87, %v207
    %v381 = vsel %vm318, %v88, %v209
    %v384 = vsel %vm318, %v89, %v211
    %v387 = vsel %vm318, %v90, %v213
    %v390 = vsel %vm318, %v91, %v215
    %vm391 = vcmask 523264
    %v393 = vsel %vm391, %v321, %v220
    %v395 = vsel %vm391, %v324, %v222
    %v397 = vsel %vm391, %v327, %v224
    %v399 = vsel %vm391, %v330, %v226
    %v401 = vsel %vm391, %v333, %v228
    %v403 = vsel %vm391, %v336, %v230
    %v405 = vsel %vm391, %v339, %v232
    %v407 = vsel %vm391, %v342, %v234
    %v409 = vsel %vm391, %v345, %v236
    %v411 = vsel %vm391, %v348, %v238
    %v413 = vsel %vm391, %v351, %v240
    %v415 = vsel %vm391, %v354, %v242
    %v417 = vsel %vm391, %v357, %v244
    %v419 = vsel %vm391, %v360, %v246
    %v421 = vsel %vm391, %v363, %v248
    %v423 = vsel %vm391, %v366, %v250
    %v425 = vsel %vm391, %v369, %v252
    %v427 = vsel %vm391, %v372, %v254
    %v429 = vsel %vm391, %v375, %v256
    %v431 = vsel %vm391, %v378, %v258
    %v433 = vsel %vm391, %v381, %v260
    %v435 = vsel %vm391, %v384, %v262
    %v437 = vsel %vm391, %v387, %v264
    %v439 = vsel %vm391, %v390, %v266
    %vm440 = vcmask 785408
    %v442 = vsel %vm440, %v393, %v271
    %v444 = vsel %vm440, %v395, %v273
    %v446 = vsel %vm440, %v397, %v275
    %v448 = vsel %vm440, %v399, %v277
    %v450 = vsel %vm440, %v401, %v279
    %v452 = vsel %vm440, %v403, %v281
    %v454 = vsel %vm440, %v405, %v283
    %v456 = vsel %vm440, %v407, %v285
    %v458 = vsel %vm440, %v409, %v287
    %v460 = vsel %vm440, %v411, %v289
    %v462 = vsel %vm440, %v413, %v291
    %v464 = vsel %vm440, %v415, %v293
    %v466 = vsel %vm440, %v417, %v295
    %v468 = vsel %vm440, %v419, %v297
    %v470 = vsel %vm440, %v421, %v299
    %v472 = vsel %vm440, %v423, %v301
    %v474 = vsel %vm440, %v425, %v303
    %v476 = vsel %vm440, %v427, %v305
    %v478 = vsel %vm440, %v429, %v307
    %v480 = vsel %vm440, %v431, %v309
    %v482 = vsel %vm440, %v433, %v311
    %v484 = vsel %vm440, %v435, %v313
    %v486 = vsel %vm440, %v437, %v315
    %v488 = vsel %vm440, %v439, %v317
    %v514 = vunpack.c.l.b16 %v442
    %v515 = vunpack.c.l.b16 %v444
    %v516 = vunpack.c.l.b16 %v446
    %v517 = vunpack.c.l.b16 %v448
    %v518 = vunpack.c.l.b16 %v450
    %v519 = vunpack.c.l.b16 %v452
    %v520 = vunpack.c.l.b16 %v454
    %v521 = vunpack.c.l.b16 %v456
    %v522 = vunpack.c.l.b16 %v458
    %v523 = vunpack.c.l.b16 %v460
    %v524 = vunpack.c.l.b16 %v462
    %v525 = vunpack.c.l.b16 %v464
    %v526 = vunpack.c.l.b16 %v466
    %v527 = vunpack.c.l.b16 %v468
    %v528 = vunpack.c.l.b16 %v470
    %v529 = vunpack.c.l.b16 %v472
    %v530 = vunpack.c.l.b16 %v474
    %v531 = vunpack.c.l.b16 %v476
    %v532 = vunpack.c.l.b16 %v478
    %v533 = vunpack.c.l.b16 %v480
    %v534 = vunpack.c.l.b16 %v482
    %v535 = vunpack.c.l.b16 %v484
    %v536 = vunpack.c.l.b16 %v486
    %v537 = vunpack.c.l.b16 %v488
    %v538 = vunpack.c.l.b16 %v95
    %v539 = vld [vmem:[#allocation2] sm:$0xff]
    %v540 = vld [vmem:[#allocation2 + $0x8] sm:$0xff]
    %v541 = vld [vmem:[#allocation2 + $0x10] sm:$0xff]
    %v542 = vld [vmem:[#allocation2 + $0x18] sm:$0xff]
    %v543 = vld [vmem:[#allocation2 + $0x20] sm:$0xff]
    %v544 = vld [vmem:[#allocation2 + $0x28] sm:$0xff]
    %v545 = vld [vmem:[#allocation2 + $0x30] sm:$0xff]
    %v546 = vld [vmem:[#allocation2 + $0x38] sm:$0xff]
    %v547 = vld [vmem:[#allocation2 + $0x40] sm:$0xff]
    %v548 = vld [vmem:[#allocation2 + $0x48] sm:$0xff]
    %v549 = vld [vmem:[#allocation2 + $0x50] sm:$0xff]
    %v550 = vld [vmem:[#allocation2 + $0x58] sm:$0xff]
    %v551 = vld [vmem:[#allocation2 + $0x60] sm:$0xff]
    %v552 = vld [vmem:[#allocation2 + $0x68] sm:$0xff]
    %v553 = vld [vmem:[#allocation2 + $0x70] sm:$0xff]
    %v554 = vld [vmem:[#allocation2 + $0x78] sm:$0xff]
    %v555 = vld [vmem:[#allocation2 + $0x80] sm:$0xff]
    %v556 = vld [vmem:[#allocation2 + $0x88] sm:$0xff]
    %v557 = vld [vmem:[#allocation2 + $0x90] sm:$0xff]
    %v558 = vld [vmem:[#allocation2 + $0x98] sm:$0xff]
    %v559 = vld [vmem:[#allocation2 + $0xa0] sm:$0xff]
    %v560 = vld [vmem:[#allocation2 + $0xa8] sm:$0xff]
    %v561 = vld [vmem:[#allocation2 + $0xb0] sm:$0xff]
    %v562 = vld [vmem:[#allocation2 + $0xb8] sm:$0xff]
    %v563 = vld [vmem:[#allocation2 + $0xc0] sm:$0xff]
    %v564 = vld [vmem:[#allocation2 + $0xc8] sm:$0xff]
    %v565 = vld [vmem:[#allocation2 + $0xd0] sm:$0xff]
    %v566 = vld [vmem:[#allocation2 + $0xd8] sm:$0xff]
    %v567 = vld [vmem:[#allocation2 + $0xe0] sm:$0xff]
    %v568 = vld [vmem:[#allocation2 + $0xe8] sm:$0xff]
    %v569 = vld [vmem:[#allocation2 + $0xf0] sm:$0xff]
    %v570 = vld [vmem:[#allocation2 + $0xf8] sm:$0xff]
    %v571 = vld [vmem:[#allocation2 + $0x100] sm:$0xff]
    %v572 = vld [vmem:[#allocation2 + $0x108] sm:$0xff]
    %v573 = vld [vmem:[#allocation2 + $0x110] sm:$0xff]
    %v574 = vld [vmem:[#allocation2 + $0x118] sm:$0xff]
    %v575 = vld [vmem:[#allocation2 + $0x120] sm:$0xff]
    %v576 = vld [vmem:[#allocation2 + $0x128] sm:$0xff]
    %v577 = vld [vmem:[#allocation2 + $0x130] sm:$0xff]
    %v578 = vld [vmem:[#allocation2 + $0x138] sm:$0xff]
    %v579 = vpack.c.b16 %v515, %v514
    %v580 = vpack.c.b16 %v124, %v123
    %v581 = vpack.c.b16 %v517, %v516
    %v582 = vpack.c.b16 %v126, %v125
    %v583 = vpack.c.b16 %v519, %v518
    %v584 = vpack.c.b16 %v128, %v127
    %v585 = vpack.c.b16 %v521, %v520
    %v586 = vpack.c.b16 %v130, %v129
    %v587 = vpack.c.b16 %v523, %v522
    %v588 = vpack.c.b16 %v132, %v131
    %v589 = vpack.c.b16 %v525, %v524
    %v590 = vpack.c.b16 %v134, %v133
    %v591 = vpack.c.b16 %v527, %v526
    %v592 = vpack.c.b16 %v136, %v135
    %v593 = vpack.c.b16 %v529, %v528
    %v594 = vpack.c.b16 %v138, %v137
    %v595 = vpack.c.b16 %v531, %v530
    %v596 = vpack.c.b16 %v140, %v139
    %v597 = vpack.c.b16 %v533, %v532
    %v598 = vpack.c.b16 %v142, %v141
    %v599 = vpack.c.b16 %v535, %v534
    %v600 = vpack.c.b16 %v217, %v143
    %v601 = vpack.c.b16 %v537, %v536
    %v602 = vpack.c.b16 %v538, %v268
    %v655 = vunpack.c.l.b16 %v539
    %v656 = vunpack.c.h.b16 %v539
    %v657 = vunpack.c.l.b16 %v540
    %v658 = vunpack.c.h.b16 %v540
    %v659 = vunpack.c.l.b16 %v541
    %v660 = vunpack.c.h.b16 %v541
    %v661 = vunpack.c.l.b16 %v542
    %v662 = vunpack.c.h.b16 %v542
    %v663 = vunpack.c.l.b16 %v543
    %v664 = vunpack.c.h.b16 %v543
    %v665 = vunpack.c.l.b16 %v544
    %v666 = vunpack.c.h.b16 %v544
    %v667 = vunpack.c.l.b16 %v545
    %v668 = vunpack.c.h.b16 %v545
    %v669 = vunpack.c.l.b16 %v546
    %v670 = vunpack.c.h.b16 %v546
    %v671 = vunpack.c.l.b16 %v547
    %v672 = vunpack.c.h.b16 %v547
    %v673 = vunpack.c.l.b16 %v548
    %v674 = vunpack.c.h.b16 %v548
    %v675 = vunpack.c.l.b16 %v549
    %v676 = vunpack.c.h.b16 %v549
    %v677 = vunpack.c.l.b16 %v550
    %v678 = vunpack.c.h.b16 %v550
    %v679 = vunpack.c.l.b16 %v551
    %v680 = vunpack.c.h.b16 %v551
    %v681 = vunpack.c.l.b16 %v552
    %v682 = vunpack.c.h.b16 %v552
    %v683 = vunpack.c.l.b16 %v553
    %v684 = vunpack.c.h.b16 %v553
    %v685 = vunpack.c.l.b16 %v554
    %v686 = vunpack.c.h.b16 %v554
    %v687 = vunpack.c.l.b16 %v555
    %v688 = vunpack.c.h.b16 %v555
    %v689 = vunpack.c.l.b16 %v556
    %v690 = vunpack.c.h.b16 %v556
    %v691 = vunpack.c.l.b16 %v557
    %v692 = vunpack.c.h.b16 %v557
    %v693 = vunpack.c.l.b16 %v558
    %v694 = vunpack.c.h.b16 %v558
    %v695 = vunpack.c.l.b16 %v559
    %v696 = vunpack.c.h.b16 %v559
    %v697 = vunpack.c.l.b16 %v560
    %v698 = vunpack.c.h.b16 %v560
    %v699 = vunpack.c.l.b16 %v561
    %v700 = vunpack.c.h.b16 %v561
    %v701 = vunpack.c.l.b16 %v562
    %v702 = vunpack.c.h.b16 %v562
    %v703 = vunpack.c.l.b16 %v563
    %v704 = vunpack.c.h.b16 %v563
    %v705 = vunpack.c.l.b16 %v564
    %v706 = vunpack.c.h.b16 %v564
    %v707 = vunpack.c.l.b16 %v565
    %v708 = vunpack.c.h.b16 %v565
    %v709 = vunpack.c.l.b16 %v566
    %v710 = vunpack.c.h.b16 %v566
    %v711 = vunpack.c.l.b16 %v567
    %v712 = vunpack.c.h.b16 %v567
    %v713 = vunpack.c.l.b16 %v568
    %v714 = vunpack.c.h.b16 %v568
    %v715 = vunpack.c.l.b16 %v569
    %v716 = vunpack.c.h.b16 %v569
    %v717 = vunpack.c.l.b16 %v570
    %v718 = vunpack.c.h.b16 %v570
    %v719 = vunpack.c.l.b16 %v571
    %v720 = vunpack.c.h.b16 %v571
    %v721 = vunpack.c.l.b16 %v572
    %v722 = vunpack.c.h.b16 %v572
    %v723 = vunpack.c.l.b16 %v573
    %v724 = vunpack.c.h.b16 %v573
    %v725 = vunpack.c.l.b16 %v574
    %v726 = vunpack.c.h.b16 %v574
    %v727 = vunpack.c.l.b16 %v575
    %v728 = vunpack.c.h.b16 %v575
    %v729 = vunpack.c.l.b16 %v576
    %v730 = vunpack.c.h.b16 %v576
    %v731 = vunpack.c.l.b16 %v577
    %v732 = vunpack.c.h.b16 %v577
    %v733 = vunpack.c.l.b16 %v578
    %v734 = vunpack.c.h.b16 %v578
    %v735 = vpack.c.b16 %v659, %v655
    %v736 = vpack.c.b16 %v660, %v656
    %v737 = vpack.c.b16 %v661, %v657
    %v738 = vpack.c.b16 %v662, %v658
    %v739 = vpack.c.b16 %v667, %v663
    %v740 = vpack.c.b16 %v668, %v664
    %v741 = vpack.c.b16 %v669, %v665
    %v742 = vpack.c.b16 %v670, %v666
    %v743 = vpack.c.b16 %v675, %v671
    %v744 = vpack.c.b16 %v676, %v672
    %v745 = vpack.c.b16 %v677, %v673
    %v746 = vpack.c.b16 %v678, %v674
    %v747 = vpack.c.b16 %v683, %v679
    %v748 = vpack.c.b16 %v684, %v680
    %v749 = vpack.c.b16 %v685, %v681
    %v750 = vpack.c.b16 %v686, %v682
    %v751 = vpack.c.b16 %v691, %v687
    %v752 = vpack.c.b16 %v692, %v688
    %v753 = vpack.c.b16 %v693, %v689
    %v754 = vpack.c.b16 %v694, %v690
    %v755 = vpack.c.b16 %v699, %v695
    %v756 = vpack.c.b16 %v700, %v696
    %v757 = vpack.c.b16 %v701, %v697
    %v758 = vpack.c.b16 %v702, %v698
    %v759 = vpack.c.b16 %v707, %v703
    %v760 = vpack.c.b16 %v708, %v704
    %v761 = vpack.c.b16 %v709, %v705
    %v762 = vpack.c.b16 %v710, %v706
    %v763 = vpack.c.b16 %v715, %v711
    %v764 = vpack.c.b16 %v716, %v712
    %v765 = vpack.c.b16 %v717, %v713
    %v766 = vpack.c.b16 %v718, %v714
    %v767 = vpack.c.b16 %v723, %v719
    %v768 = vpack.c.b16 %v724, %v720
    %v769 = vpack.c.b16 %v725, %v721
    %v770 = vpack.c.b16 %v726, %v722
    %v771 = vpack.c.b16 %v731, %v727
    %v772 = vpack.c.b16 %v732, %v728
    %v773 = vpack.c.b16 %v733, %v729
    %v774 = vpack.c.b16 %v734, %v730
    %v816 = vsel %vm318, %v580, 0
    %v819 = vsel %vm318, %v582, 0
    %v822 = vsel %vm318, %v584, 0
    %v825 = vsel %vm318, %v586, 0
    %v828 = vsel %vm318, %v588, 0
    %v831 = vsel %vm318, %v590, 0
    %v834 = vsel %vm318, %v592, 0
    %v837 = vsel %vm318, %v594, 0
    %v840 = vsel %vm318, %v596, 0
    %v843 = vsel %vm318, %v598, 0
    %v846 = vsel %vm318, %v600, 0
    %v849 = vsel %vm318, %v602, 0
    %851 = vmatprep.subr.bf16.mxu0 %v736
    %852 = vmatpush1.bf16.msra.mxu0 %v735
    %853 = vmatprep.subr.bf16.mxu0 %v740
    %854 = vmatpush1.bf16.msra.mxu0 %v739
    %855 = vmatprep.subr.bf16.mxu0 %v744
    %856 = vmatpush1.bf16.msra.mxu0 %v743
    %857 = vmatprep.subr.bf16.mxu0 %v748
    %858 = vmatpush1.bf16.msra.mxu0 %v747
    %859 = vmatprep.subr.bf16.mxu0 %v752
    %860 = vmatpush1.bf16.msra.mxu0 %v751
    %861 = vmatprep.subr.bf16.mxu0 %v756
    %862 = vmatpush1.bf16.msra.mxu0 %v755
    %863 = vmatprep.subr.bf16.mxu0 %v760
    %864 = vmatpush1.bf16.msra.mxu0 %v759
    %865 = vmatprep.subr.bf16.mxu0 %v764
    %866 = vmatpush1.bf16.msra.mxu0 %v763
    %867 = vmatprep.subr.bf16.mxu0 %v768
    %868 = vmatpush1.bf16.msra.mxu0 %v767
    %869 = vmatprep.subr.bf16.mxu0 %v772
    %870 = vmatpush1.bf16.msra.mxu0 %v771
    %871 = vmatprep.subr.bf16.mxu0 0
    %872 = vmatpush1.bf16.msra.mxu0 0
    %873 = vmatprep.subr.bf16.mxu0 0
    %874 = vmatpush1.bf16.msra.mxu0 0
    %875 = vmatprep.subr.bf16.mxu0 0
    %876 = vmatpush1.bf16.msra.mxu0 0
    %877 = vmatprep.subr.bf16.mxu0 0
    %878 = vmatpush1.bf16.msra.mxu0 0
    %879 = vmatprep.subr.bf16.mxu0 0
    %880 = vmatpush1.bf16.msra.mxu0 0
    %881 = vmatprep.subr.bf16.mxu0 0
    %882 = vmatpush1.bf16.msra.mxu0 0
    %883 = vmatprep.mubr.bf16.mxu0 %v816
    %884 = vmatmul.mubr.bf16.gmra.mrb[0].mxu0 %v579
    %v885 = vpop.f32.mrb[0].mxu0
    %v886 = vadd.f32 0.0, %v885
    %v887 = vpop.f32.mrb[0].mxu0
    %v888 = vadd.f32 0.0, %v887
    %v889 = vpop.f32.mrb[0].mxu0
    %v890 = vadd.f32 0.0, %v889
    %v891 = vpop.f32.mrb[0].mxu0
    %v892 = vadd.f32 0.0, %v891
    %893 = vmatprep.mubr.bf16.mxu0 %v819
    %894 = vmatmul.mubr.bf16.gmra.mrb[0].mxu0 %v581
    %v895 = vpop.f32.mrb[0].mxu0
    %v896 = vadd.f32 0.0, %v895
    %v897 = vpop.f32.mrb[0].mxu0
    %v898 = vadd.f32 0.0, %v897
    %v899 = vpop.f32.mrb[0].mxu0
    %v900 = vadd.f32 0.0, %v899
    %v901 = vpop.f32.mrb[0].mxu0
    %v902 = vadd.f32 0.0, %v901
    %903 = vmatprep.mubr.bf16.mxu0 %v822
    %904 = vmatmul.mubr.bf16.gmra.mrb[0].mxu0 %v583
    %v905 = vpop.f32.mrb[0].mxu0
    %v906 = vadd.f32 0.0, %v905
    %v907 = vpop.f32.mrb[0].mxu0
    %v908 = vadd.f32 0.0, %v907
    %v909 = vpop.f32.mrb[0].mxu0
    %v910 = vadd.f32 0.0, %v909
    %v911 = vpop.f32.mrb[0].mxu0
    %v912 = vadd.f32 0.0, %v911
    %913 = vmatprep.mubr.bf16.mxu0 %v825
    %914 = vmatmul.mubr.bf16.gmra.mrb[0].mxu0 %v585
    %v915 = vpop.f32.mrb[0].mxu0
    %v916 = vadd.f32 0.0, %v915
    %v917 = vpop.f32.mrb[0].mxu0
    %v918 = vadd.f32 0.0, %v917
    %v919 = vpop.f32.mrb[0].mxu0
    %v920 = vadd.f32 0.0, %v919
    %v921 = vpop.f32.mrb[0].mxu0
    %v922 = vadd.f32 0.0, %v921
    %923 = vmatprep.mubr.bf16.mxu0 %v828
    %924 = vmatmul.mubr.bf16.gmra.mrb[0].mxu0 %v587
    %v925 = vpop.f32.mrb[0].mxu0
    %v926 = vadd.f32 0.0, %v925
    %v927 = vpop.f32.mrb[0].mxu0
    %v928 = vadd.f32 0.0, %v927
    %v929 = vpop.f32.mrb[0].mxu0
    %v930 = vadd.f32 0.0, %v929
    %v931 = vpop.f32.mrb[0].mxu0
    %v932 = vadd.f32 0.0, %v931
    %933 = vmatprep.mubr.bf16.mxu0 %v831
    %934 = vmatmul.mubr.bf16.gmra.mrb[0].mxu0 %v589
    %v935 = vpop.f32.mrb[0].mxu0
    %v936 = vadd.f32 0.0, %v935
    %v937 = vpop.f32.mrb[0].mxu0
    %v938 = vadd.f32 0.0, %v937
    %v939 = vpop.f32.mrb[0].mxu0
    %v940 = vadd.f32 0.0, %v939
    %v941 = vpop.f32.mrb[0].mxu0
    %v942 = vadd.f32 0.0, %v941
    %943 = vmatprep.mubr.bf16.mxu0 %v834
    %944 = vmatmul.mubr.bf16.gmra.mrb[0].mxu0 %v591
    %v945 = vpop.f32.mrb[0].mxu0
    %v946 = vadd.f32 0.0, %v945
    %v947 = vpop.f32.mrb[0].mxu0
    %v948 = vadd.f32 0.0, %v947
    %v949 = vpop.f32.mrb[0].mxu0
    %v950 = vadd.f32 0.0, %v949
    %v951 = vpop.f32.mrb[0].mxu0
    %v952 = vadd.f32 0.0, %v951
    %953 = vmatprep.mubr.bf16.mxu0 %v837
    %954 = vmatmul.mubr.bf16.gmra.mrb[0].mxu0 %v593
    %v955 = vpop.f32.mrb[0].mxu0
    %v956 = vadd.f32 0.0, %v955
    %v957 = vpop.f32.mrb[0].mxu0
    %v958 = vadd.f32 0.0, %v957
    %v959 = vpop.f32.mrb[0].mxu0
    %v960 = vadd.f32 0.0, %v959
    %v961 = vpop.f32.mrb[0].mxu0
    %v962 = vadd.f32 0.0, %v961
    %963 = vmatprep.mubr.bf16.mxu0 %v840
    %964 = vmatmul.mubr.bf16.gmra.mrb[0].mxu0 %v595
    %v965 = vpop.f32.mrb[0].mxu0
    %v966 = vadd.f32 0.0, %v965
    %v967 = vpop.f32.mrb[0].mxu0
    %v968 = vadd.f32 0.0, %v967
    %v969 = vpop.f32.mrb[0].mxu0
    %v970 = vadd.f32 0.0, %v969
    %v971 = vpop.f32.mrb[0].mxu0
    %v972 = vadd.f32 0.0, %v971
    %973 = vmatprep.mubr.bf16.mxu0 %v843
    %974 = vmatmul.mubr.bf16.gmra.mrb[0].mxu0 %v597
    %v975 = vpop.f32.mrb[0].mxu0
    %v976 = vadd.f32 0.0, %v975
    %v977 = vpop.f32.mrb[0].mxu0
    %v978 = vadd.f32 0.0, %v977
    %v979 = vpop.f32.mrb[0].mxu0
    %v980 = vadd.f32 0.0, %v979
    %v981 = vpop.f32.mrb[0].mxu0
    %v982 = vadd.f32 0.0, %v981
    %983 = vmatprep.mubr.bf16.mxu0 %v846
    %984 = vmatmul.mubr.bf16.gmra.mrb[0].mxu0 %v599
    %v985 = vpop.f32.mrb[0].mxu0
    %v986 = vadd.f32 0.0, %v985
    %v987 = vpop.f32.mrb[0].mxu0
    %v988 = vadd.f32 0.0, %v987
    %v989 = vpop.f32.mrb[0].mxu0
    %v990 = vadd.f32 0.0, %v989
    %v991 = vpop.f32.mrb[0].mxu0
    %v992 = vadd.f32 0.0, %v991
    %993 = vmatprep.mubr.bf16.mxu0 %v849
    %994 = vmatmul.mubr.bf16.gmra.mrb[0].mxu0 %v601
    %v995 = vpop.f32.mrb[0].mxu0
    %v996 = vadd.f32 0.0, %v995
    %v997 = vpop.f32.mrb[0].mxu0
    %v998 = vadd.f32 0.0, %v997
    %v999 = vpop.f32.mrb[0].mxu0
    %v1000 = vadd.f32 0.0, %v999
    %v1001 = vpop.f32.mrb[0].mxu0
    %v1002 = vadd.f32 0.0, %v1001
    %1003 = vdwg.mxu0
    %1004 = vmatprep.subr.bf16.mxu0 %v738
    %1005 = vmatpush1.bf16.msra.mxu0 %v737
    %1006 = vmatprep.subr.bf16.mxu0 %v742
    %1007 = vmatpush1.bf16.msra.mxu0 %v741
    %1008 = vmatprep.subr.bf16.mxu0 %v746
    %1009 = vmatpush1.bf16.msra.mxu0 %v745
    %1010 = vmatprep.subr.bf16.mxu0 %v750
    %1011 = vmatpush1.bf16.msra.mxu0 %v749
    %1012 = vmatprep.subr.bf16.mxu0 %v754
    %1013 = vmatpush1.bf16.msra.mxu0 %v753
    %1014 = vmatprep.subr.bf16.mxu0 %v758
    %1015 = vmatpush1.bf16.msra.mxu0 %v757
    %1016 = vmatprep.subr.bf16.mxu0 %v762
    %1017 = vmatpush1.bf16.msra.mxu0 %v761
    %1018 = vmatprep.subr.bf16.mxu0 %v766
    %1019 = vmatpush1.bf16.msra.mxu0 %v765
    %1020 = vmatprep.subr.bf16.mxu0 %v770
    %1021 = vmatpush1.bf16.msra.mxu0 %v769
    %1022 = vmatprep.subr.bf16.mxu0 %v774
    %1023 = vmatpush1.bf16.msra.mxu0 %v773
    %1024 = vmatprep.subr.bf16.mxu0 0
    %1025 = vmatpush1.bf16.msra.mxu0 0
    %1026 = vmatprep.subr.bf16.mxu0 0
    %1027 = vmatpush1.bf16.msra.mxu0 0
    %1028 = vmatprep.subr.bf16.mxu0 0
    %1029 = vmatpush1.bf16.msra.mxu0 0
    %1030 = vmatprep.subr.bf16.mxu0 0
    %1031 = vmatpush1.bf16.msra.mxu0 0
    %1032 = vmatprep.subr.bf16.mxu0 0
    %1033 = vmatpush1.bf16.msra.mxu0 0
    %1034 = vmatprep.subr.bf16.mxu0 0
    %1035 = vmatpush1.bf16.msra.mxu0 0
    %1036 = vmatprep.mubr.bf16.mxu0 %v816
    %1037 = vmatmul.mubr.bf16.gmra.mrb[0].mxu0 %v579
    %v1038 = vpop.f32.mrb[0].mxu0
    %v1039 = vadd.f32 0.0, %v1038
    %v1040 = vpop.f32.mrb[0].mxu0
    %v1041 = vadd.f32 0.0, %v1040
    %v1042 = vpop.f32.mrb[0].mxu0
    %v1043 = vadd.f32 0.0, %v1042
    %v1044 = vpop.f32.mrb[0].mxu0
    %v1045 = vadd.f32 0.0, %v1044
    %1046 = vmatprep.mubr.bf16.mxu0 %v819
    %1047 = vmatmul.mubr.bf16.gmra.mrb[0].mxu0 %v581
    %v1048 = vpop.f32.mrb[0].mxu0
    %v1049 = vadd.f32 0.0, %v1048
    %v1050 = vpop.f32.mrb[0].mxu0
    %v1051 = vadd.f32 0.0, %v1050
    %v1052 = vpop.f32.mrb[0].mxu0
    %v1053 = vadd.f32 0.0, %v1052
    %v1054 = vpop.f32.mrb[0].mxu0
    %v1055 = vadd.f32 0.0, %v1054
    %1056 = vmatprep.mubr.bf16.mxu0 %v822
    %1057 = vmatmul.mubr.bf16.gmra.mrb[0].mxu0 %v583
    %v1058 = vpop.f32.mrb[0].mxu0
    %v1059 = vadd.f32 0.0, %v1058
    %v1060 = vpop.f32.mrb[0].mxu0
    %v1061 = vadd.f32 0.0, %v1060
    %v1062 = vpop.f32.mrb[0].mxu0
    %v1063 = vadd.f32 0.0, %v1062
    %v1064 = vpop.f32.mrb[0].mxu0
    %v1065 = vadd.f32 0.0, %v1064
    %1066 = vmatprep.mubr.bf16.mxu0 %v825
    %1067 = vmatmul.mubr.bf16.gmra.mrb[0].mxu0 %v585
    %v1068 = vpop.f32.mrb[0].mxu0
    %v1069 = vadd.f32 0.0, %v1068
    %v1070 = vpop.f32.mrb[0].mxu0
    %v1071 = vadd.f32 0.0, %v1070
    %v1072 = vpop.f32.mrb[0].mxu0
    %v1073 = vadd.f32 0.0, %v1072
    %v1074 = vpop.f32.mrb[0].mxu0
    %v1075 = vadd.f32 0.0, %v1074
    %1076 = vmatprep.mubr.bf16.mxu0 %v828
    %1077 = vmatmul.mubr.bf16.gmra.mrb[0].mxu0 %v587
    %v1078 = vpop.f32.mrb[0].mxu0
    %v1079 = vadd.f32 0.0, %v1078
    %v1080 = vpop.f32.mrb[0].mxu0
    %v1081 = vadd.f32 0.0, %v1080
    %v1082 = vpop.f32.mrb[0].mxu0
    %v1083 = vadd.f32 0.0, %v1082
    %v1084 = vpop.f32.mrb[0].mxu0
    %v1085 = vadd.f32 0.0, %v1084
    %1086 = vmatprep.mubr.bf16.mxu0 %v831
    %1087 = vmatmul.mubr.bf16.gmra.mrb[0].mxu0 %v589
    %v1088 = vpop.f32.mrb[0].mxu0
    %v1089 = vadd.f32 0.0, %v1088
    %v1090 = vpop.f32.mrb[0].mxu0
    %v1091 = vadd.f32 0.0, %v1090
    %v1092 = vpop.f32.mrb[0].mxu0
    %v1093 = vadd.f32 0.0, %v1092
    %v1094 = vpop.f32.mrb[0].mxu0
    %v1095 = vadd.f32 0.0, %v1094
    %1096 = vmatprep.mubr.bf16.mxu0 %v834
    %1097 = vmatmul.mubr.bf16.gmra.mrb[0].mxu0 %v591
    %v1098 = vpop.f32.mrb[0].mxu0
    %v1099 = vadd.f32 0.0, %v1098
    %v1100 = vpop.f32.mrb[0].mxu0
    %v1101 = vadd.f32 0.0, %v1100
    %v1102 = vpop.f32.mrb[0].mxu0
    %v1103 = vadd.f32 0.0, %v1102
    %v1104 = vpop.f32.mrb[0].mxu0
    %v1105 = vadd.f32 0.0, %v1104
    %1106 = vmatprep.mubr.bf16.mxu0 %v837
    %1107 = vmatmul.mubr.bf16.gmra.mrb[0].mxu0 %v593
    %v1108 = vpop.f32.mrb[0].mxu0
    %v1109 = vadd.f32 0.0, %v1108
    %v1110 = vpop.f32.mrb[0].mxu0
    %v1111 = vadd.f32 0.0, %v1110
    %v1112 = vpop.f32.mrb[0].mxu0
    %v1113 = vadd.f32 0.0, %v1112
    %v1114 = vpop.f32.mrb[0].mxu0
    %v1115 = vadd.f32 0.0, %v1114
    %1116 = vmatprep.mubr.bf16.mxu0 %v840
    %1117 = vmatmul.mubr.bf16.gmra.mrb[0].mxu0 %v595
    %v1118 = vpop.f32.mrb[0].mxu0
    %v1119 = vadd.f32 0.0, %v1118
    %v1120 = vpop.f32.mrb[0].mxu0
    %v1121 = vadd.f32 0.0, %v1120
    %v1122 = vpop.f32.mrb[0].mxu0
    %v1123 = vadd.f32 0.0, %v1122
    %v1124 = vpop.f32.mrb[0].mxu0
    %v1125 = vadd.f32 0.0, %v1124
    %1126 = vmatprep.mubr.bf16.mxu0 %v843
    %1127 = vmatmul.mubr.bf16.gmra.mrb[0].mxu0 %v597
    %v1128 = vpop.f32.mrb[0].mxu0
    %v1129 = vadd.f32 0.0, %v1128
    %v1130 = vpop.f32.mrb[0].mxu0
    %v1131 = vadd.f32 0.0, %v1130
    %v1132 = vpop.f32.mrb[0].mxu0
    %v1133 = vadd.f32 0.0, %v1132
    %v1134 = vpop.f32.mrb[0].mxu0
    %v1135 = vadd.f32 0.0, %v1134
    %1136 = vmatprep.mubr.bf16.mxu0 %v846
    %1137 = vmatmul.mubr.bf16.gmra.mrb[0].mxu0 %v599
    %v1138 = vpop.f32.mrb[0].mxu0
    %v1139 = vadd.f32 0.0, %v1138
    %v1140 = vpop.f32.mrb[0].mxu0
    %v1141 = vadd.f32 0.0, %v1140
    %v1142 = vpop.f32.mrb[0].mxu0
    %v1143 = vadd.f32 0.0, %v1142
    %v1144 = vpop.f32.mrb[0].mxu0
    %v1145 = vadd.f32 0.0, %v1144
    %1146 = vmatprep.mubr.bf16.mxu0 %v849
    %1147 = vmatmul.mubr.bf16.gmra.mrb[0].mxu0 %v601
    %v1148 = vpop.f32.mrb[0].mxu0
    %v1149 = vadd.f32 0.0, %v1148
    %v1150 = vpop.f32.mrb[0].mxu0
    %v1151 = vadd.f32 0.0, %v1150
    %v1152 = vpop.f32.mrb[0].mxu0
    %v1153 = vadd.f32 0.0, %v1152
    %v1154 = vpop.f32.mrb[0].mxu0
    %v1155 = vadd.f32 0.0, %v1154
    %1156 = vdwg.mxu0
    %v1157 = vmax.f32 %v886, %v1039
    %v1158 = vmax.f32 %v888, %v1041
    %v1159 = vmax.f32 %v890, %v1043
    %v1160 = vmax.f32 %v892, %v1045
    %v1161 = vmax.f32 %v896, %v1049
    %v1162 = vmax.f32 %v898, %v1051
    %v1163 = vmax.f32 %v900, %v1053
    %v1164 = vmax.f32 %v902, %v1055
    %v1165 = vmax.f32 %v906, %v1059
    %v1166 = vmax.f32 %v908, %v1061
    %v1167 = vmax.f32 %v910, %v1063
    %v1168 = vmax.f32 %v912, %v1065
    %v1169 = vmax.f32 %v916, %v1069
    %v1170 = vmax.f32 %v918, %v1071
    %v1171 = vmax.f32 %v920, %v1073
    %v1172 = vmax.f32 %v922, %v1075
    %v1173 = vmax.f32 %v926, %v1079
    %v1174 = vmax.f32 %v928, %v1081
    %v1175 = vmax.f32 %v930, %v1083
    %v1176 = vmax.f32 %v932, %v1085
    %v1177 = vmax.f32 %v936, %v1089
    %v1178 = vmax.f32 %v938, %v1091
    %v1179 = vmax.f32 %v940, %v1093
    %v1180 = vmax.f32 %v942, %v1095
    %v1181 = vmax.f32 %v946, %v1099
    %v1182 = vmax.f32 %v948, %v1101
    %v1183 = vmax.f32 %v950, %v1103
    %v1184 = vmax.f32 %v952, %v1105
    %v1185 = vmax.f32 %v956, %v1109
    %v1186 = vmax.f32 %v958, %v1111
    %v1187 = vmax.f32 %v960, %v1113
    %v1188 = vmax.f32 %v962, %v1115
    %v1189 = vmax.f32 %v966, %v1119
    %v1190 = vmax.f32 %v968, %v1121
    %v1191 = vmax.f32 %v970, %v1123
    %v1192 = vmax.f32 %v972, %v1125
    %v1193 = vmax.f32 %v976, %v1129
    %v1194 = vmax.f32 %v978, %v1131
    %v1195 = vmax.f32 %v980, %v1133
    %v1196 = vmax.f32 %v982, %v1135
    %v1197 = vmax.f32 %v986, %v1139
    %v1198 = vmax.f32 %v988, %v1141
    %v1199 = vmax.f32 %v990, %v1143
    %v1200 = vmax.f32 %v992, %v1145
    %v1201 = vmax.f32 %v996, %v1149
    %v1202 = vmax.f32 %v998, %v1151
    %v1203 = vmax.f32 %v1000, %v1153
    %v1204 = vmax.f32 %v1002, %v1155
    %v1205 = vmax.f32 %v1157, %v1159
    %v1206 = vmax.f32 %v1158, %v1160
    %v1207 = vmax.f32 %v1161, %v1163
    %v1208 = vmax.f32 %v1162, %v1164
    %v1209 = vmax.f32 %v1165, %v1167
    %v1210 = vmax.f32 %v1166, %v1168
    %v1211 = vmax.f32 %v1169, %v1171
    %v1212 = vmax.f32 %v1170, %v1172
    %v1213 = vmax.f32 %v1173, %v1175
    %v1214 = vmax.f32 %v1174, %v1176
    %v1215 = vmax.f32 %v1177, %v1179
    %v1216 = vmax.f32 %v1178, %v1180
    %v1217 = vmax.f32 %v1181, %v1183
    %v1218 = vmax.f32 %v1182, %v1184
    %v1219 = vmax.f32 %v1185, %v1187
    %v1220 = vmax.f32 %v1186, %v1188
    %v1221 = vmax.f32 %v1189, %v1191
    %v1222 = vmax.f32 %v1190, %v1192
    %v1223 = vmax.f32 %v1193, %v1195
    %v1224 = vmax.f32 %v1194, %v1196
    %v1225 = vmax.f32 %v1197, %v1199
    %v1226 = vmax.f32 %v1198, %v1200
    %v1227 = vmax.f32 %v1201, %v1203
    %v1228 = vmax.f32 %v1202, %v1204
    %v1229 = vld [vmem:[%s2] sm:$0x3]
    %v1231 = vlaneseq
    %v1232 = vshrl.u32 %v1231, 7
    %v1233 = vsub.s32 0, %v1232
    %v1234 = vrot.slane %v1229, %v1233
    %v1235 = vlaneseq
    %v1236 = vshrl.u32 %v1235, 7
    %v1237 = vsub.s32 1, %v1236
    %v1238 = vrot.slane %v1229, %v1237
    %v1241 = vadd.f32 %v1205, %v1234
    %v1242 = vadd.f32 %v1206, %v1238
    %v1243 = vadd.f32 %v1207, %v1234
    %v1244 = vadd.f32 %v1208, %v1238
    %v1245 = vadd.f32 %v1209, %v1234
    %v1246 = vadd.f32 %v1210, %v1238
    %v1247 = vadd.f32 %v1211, %v1234
    %v1248 = vadd.f32 %v1212, %v1238
    %v1249 = vadd.f32 %v1213, %v1234
    %v1250 = vadd.f32 %v1214, %v1238
    %v1251 = vadd.f32 %v1215, %v1234
    %v1252 = vadd.f32 %v1216, %v1238
    %v1253 = vadd.f32 %v1217, %v1234
    %v1254 = vadd.f32 %v1218, %v1238
    %v1255 = vadd.f32 %v1219, %v1234
    %v1256 = vadd.f32 %v1220, %v1238
    %v1257 = vadd.f32 %v1221, %v1234
    %v1258 = vadd.f32 %v1222, %v1238
    %v1259 = vadd.f32 %v1223, %v1234
    %v1260 = vadd.f32 %v1224, %v1238
    %v1261 = vadd.f32 %v1225, %v1234
    %v1262 = vadd.f32 %v1226, %v1238
    %v1263 = vadd.f32 %v1227, %v1234
    %v1264 = vadd.f32 %v1228, %v1238
    %v1265 = vmax.f32 %v1241, 0.0
    %v1266 = vmax.f32 %v1242, 0.0
    %v1267 = vmax.f32 %v1243, 0.0
    %v1268 = vmax.f32 %v1244, 0.0
    %v1269 = vmax.f32 %v1245, 0.0
    %v1270 = vmax.f32 %v1246, 0.0
    %v1271 = vmax.f32 %v1247, 0.0
    %v1272 = vmax.f32 %v1248, 0.0
    %v1273 = vmax.f32 %v1249, 0.0
    %v1274 = vmax.f32 %v1250, 0.0
    %v1275 = vmax.f32 %v1251, 0.0
    %v1276 = vmax.f32 %v1252, 0.0
    %v1277 = vmax.f32 %v1253, 0.0
    %v1278 = vmax.f32 %v1254, 0.0
    %v1279 = vmax.f32 %v1255, 0.0
    %v1280 = vmax.f32 %v1256, 0.0
    %v1281 = vmax.f32 %v1257, 0.0
    %v1282 = vmax.f32 %v1258, 0.0
    %v1283 = vmax.f32 %v1259, 0.0
    %v1284 = vmax.f32 %v1260, 0.0
    %v1285 = vmax.f32 %v1261, 0.0
    %v1286 = vmax.f32 %v1262, 0.0
    %v1287 = vmax.f32 %v1263, 0.0
    %v1288 = vmax.f32 %v1264, 0.0
    %v1289 = vpack.c.bf16 %v1265, %v1265
    %v1290 = vpack.c.bf16 %v1266, %v1266
    %v1291 = vpack.c.bf16 %v1267, %v1267
    %v1292 = vpack.c.bf16 %v1268, %v1268
    %v1293 = vpack.c.bf16 %v1269, %v1269
    %v1294 = vpack.c.bf16 %v1270, %v1270
    %v1295 = vpack.c.bf16 %v1271, %v1271
    %v1296 = vpack.c.bf16 %v1272, %v1272
    %v1297 = vpack.c.bf16 %v1273, %v1273
    %v1298 = vpack.c.bf16 %v1274, %v1274
    %v1299 = vpack.c.bf16 %v1275, %v1275
    %v1300 = vpack.c.bf16 %v1276, %v1276
    %v1301 = vpack.c.bf16 %v1277, %v1277
    %v1302 = vpack.c.bf16 %v1278, %v1278
    %v1303 = vpack.c.bf16 %v1279, %v1279
    %v1304 = vpack.c.bf16 %v1280, %v1280
    %v1305 = vpack.c.bf16 %v1281, %v1281
    %v1306 = vpack.c.bf16 %v1282, %v1282
    %v1307 = vpack.c.bf16 %v1283, %v1283
    %v1308 = vpack.c.bf16 %v1284, %v1284
    %v1309 = vpack.c.bf16 %v1285, %v1285
    %v1310 = vpack.c.bf16 %v1286, %v1286
    %v1311 = vpack.c.bf16 %v1287, %v1287
    %v1312 = vpack.c.bf16 %v1288, %v1288
    %1329 = vrot.lane.b32.xlu0 %v1291, 64
    %v1330 = vpop.permute.xlu0 %1329
    %1331 = vrot.lane.b32.xlu0 %v1292, 64
    %v1332 = vpop.permute.xlu0 %1331
    %1333 = vrot.lane.b32.xlu0 %v1293, 64
    %v1334 = vpop.permute.xlu0 %1333
    %1335 = vrot.lane.b32.xlu0 %v1294, 64
    %v1336 = vpop.permute.xlu0 %1335
    %1337 = vrot.lane.b32.xlu0 %v1295, 64
    %v1338 = vpop.permute.xlu0 %1337
    %1339 = vrot.lane.b32.xlu0 %v1296, 64
    %v1340 = vpop.permute.xlu0 %1339
    %1341 = vrot.lane.b32.xlu0 %v1297, 64
    %v1342 = vpop.permute.xlu0 %1341
    %1343 = vrot.lane.b32.xlu0 %v1298, 64
    %v1344 = vpop.permute.xlu0 %1343
    %1345 = vrot.lane.b32.xlu0 %v1299, 64
    %v1346 = vpop.permute.xlu0 %1345
    %1347 = vrot.lane.b32.xlu0 %v1300, 64
    %v1348 = vpop.permute.xlu0 %1347
    %1349 = vrot.lane.b32.xlu0 %v1301, 64
    %v1350 = vpop.permute.xlu0 %1349
    %1351 = vrot.lane.b32.xlu0 %v1302, 64
    %v1352 = vpop.permute.xlu0 %1351
    %1353 = vrot.lane.b32.xlu0 %v1303, 64
    %v1354 = vpop.permute.xlu0 %1353
    %1355 = vrot.lane.b32.xlu0 %v1304, 64
    %v1356 = vpop.permute.xlu0 %1355
    %1357 = vrot.lane.b32.xlu0 %v1305, 64
    %v1358 = vpop.permute.xlu0 %1357
    %1359 = vrot.lane.b32.xlu0 %v1306, 64
    %v1360 = vpop.permute.xlu0 %1359
    %vm1361 = vcmask 523264
    %v1362 = vsel %vm1361, %v1330, %v1332
    %v1363 = vsel %vm1361, %v1334, %v1336
    %v1364 = vsel %vm1361, %v1338, %v1340
    %v1365 = vsel %vm1361, %v1342, %v1344
    %v1366 = vsel %vm1361, %v1346, %v1348
    %v1367 = vsel %vm1361, %v1350, %v1352
    %v1368 = vsel %vm1361, %v1354, %v1356
    %v1369 = vsel %vm1361, %v1358, %v1360
    %1374 = vrot.lane.b32.xlu0 %v1307, 64
    %v1375 = vpop.permute.xlu0 %1374
    %1376 = vrot.lane.b32.xlu0 %v1308, 64
    %v1377 = vpop.permute.xlu0 %1376
    %1378 = vrot.lane.b32.xlu0 %v1309, 64
    %v1379 = vpop.permute.xlu0 %1378
    %1380 = vrot.lane.b32.xlu0 %v1310, 64
    %v1381 = vpop.permute.xlu0 %1380
    %v1382 = vsel %vm1361, %v1375, %v1377
    %v1383 = vsel %vm1361, %v1379, %v1381
    %v1386 = vsel %vm391, %v1290, %v1330
    %v1389 = vsel %vm391, %v1292, %v1334
    %v1392 = vsel %vm391, %v1294, %v1338
    %v1395 = vsel %vm391, %v1296, %v1342
    %v1398 = vsel %vm391, %v1298, %v1346
    %v1401 = vsel %vm391, %v1300, %v1350
    %v1404 = vsel %vm391, %v1302, %v1354
    %v1407 = vsel %vm391, %v1304, %v1358
    %v1410 = vsel %vm391, %v1306, %v1375
    %v1413 = vsel %vm391, %v1308, %v1379
    %v1427 = vunpack.c.l.b16 %v1289
    %v1428 = vunpack.c.l.b16 %v1386
    %v1429 = vunpack.c.l.b16 %v1362
    %v1430 = vunpack.c.l.b16 %v1293
    %v1431 = vunpack.c.l.b16 %v1392
    %v1432 = vunpack.c.l.b16 %v1364
    %v1433 = vunpack.c.l.b16 %v1297
    %v1434 = vunpack.c.l.b16 %v1298
    %v1435 = vunpack.c.l.b16 %v1291
    %v1436 = vunpack.c.l.b16 %v1389
    %v1437 = vunpack.c.l.b16 %v1363
    %v1438 = vunpack.c.l.b16 %v1295
    %v1439 = vunpack.c.l.b16 %v1395
    %v1440 = vunpack.c.l.b16 %v1365
    %v1441 = vunpack.c.l.b16 %v1299
    %v1442 = vunpack.c.l.b16 %v1300
    %v1443 = vunpack.c.l.b16 %v1398
    %v1444 = vunpack.c.l.b16 %v1366
    %v1445 = vunpack.c.l.b16 %v1301
    %v1446 = vunpack.c.l.b16 %v1302
    %v1447 = vunpack.c.l.b16 %v1401
    %v1448 = vunpack.c.l.b16 %v1367
    %v1449 = vunpack.c.l.b16 %v1303
    %v1450 = vunpack.c.l.b16 %v1304
    %v1451 = vunpack.c.l.b16 %v1404
    %v1452 = vunpack.c.l.b16 %v1368
    %v1453 = vunpack.c.l.b16 %v1305
    %v1454 = vunpack.c.l.b16 %v1306
    %v1455 = vunpack.c.l.b16 %v1407
    %v1456 = vunpack.c.l.b16 %v1369
    %v1457 = vunpack.c.l.b16 %v1307
    %v1458 = vunpack.c.l.b16 %v1308
    %v1459 = vunpack.c.l.b16 %v1410
    %v1460 = vunpack.c.l.b16 %v1382
    %v1461 = vunpack.c.l.b16 %v1309
    %v1462 = vunpack.c.l.b16 %v1310
    %v1463 = vunpack.c.l.b16 %v1413
    %v1464 = vunpack.c.l.b16 %v1383
    %v1465 = vunpack.c.l.b16 %v1311
    %v1466 = vunpack.c.l.b16 %v1312
    %v1467 = vld [vmem:[#allocation4] sm:$0xff]
    %v1468 = vld [vmem:[#allocation4 + $0x8] sm:$0xff]
    %v1469 = vld [vmem:[#allocation4 + $0x10] sm:$0xff]
    %v1470 = vld [vmem:[#allocation4 + $0x18] sm:$0xff]
    %v1471 = vld [vmem:[#allocation4 + $0x20] sm:$0xff]
    %v1472 = vld [vmem:[#allocation4 + $0x28] sm:$0xff]
    %v1473 = vld [vmem:[#allocation4 + $0x30] sm:$0xff]
    %v1474 = vld [vmem:[#allocation4 + $0x38] sm:$0xff]
    %v1475 = vld [vmem:[#allocation4 + $0x40] sm:$0xff]
    %v1476 = vld [vmem:[#allocation4 + $0x48] sm:$0xff]
    %v1477 = vld [vmem:[#allocation4 + $0x50] sm:$0xff]
    %v1478 = vld [vmem:[#allocation4 + $0x58] sm:$0xff]
    %v1479 = vld [vmem:[#allocation4 + $0x60] sm:$0xff]
    %v1480 = vld [vmem:[#allocation4 + $0x68] sm:$0xff]
    %v1481 = vld [vmem:[#allocation4 + $0x70] sm:$0xff]
    %v1482 = vld [vmem:[#allocation4 + $0x78] sm:$0xff]
    %v1483 = vld [vmem:[#allocation4 + $0x80] sm:$0xff]
    %v1484 = vld [vmem:[#allocation4 + $0x88] sm:$0xff]
    %v1485 = vld [vmem:[#allocation4 + $0x90] sm:$0xff]
    %v1486 = vld [vmem:[#allocation4 + $0x98] sm:$0xff]
    %v1487 = vld [vmem:[#allocation4 + $0xa0] sm:$0xff]
    %v1488 = vld [vmem:[#allocation4 + $0xa8] sm:$0xff]
    %v1489 = vld [vmem:[#allocation4 + $0xb0] sm:$0xff]
    %v1490 = vld [vmem:[#allocation4 + $0xb8] sm:$0xff]
    %v1491 = vld [vmem:[#allocation4 + $0xc0] sm:$0xff]
    %v1492 = vld [vmem:[#allocation4 + $0xc8] sm:$0xff]
    %v1493 = vld [vmem:[#allocation4 + $0xd0] sm:$0xff]
    %v1494 = vld [vmem:[#allocation4 + $0xd8] sm:$0xff]
    %v1495 = vld [vmem:[#allocation4 + $0xe0] sm:$0xff]
    %v1496 = vld [vmem:[#allocation4 + $0xe8] sm:$0xff]
    %v1497 = vld [vmem:[#allocation4 + $0xf0] sm:$0xff]
    %v1498 = vld [vmem:[#allocation4 + $0xf8] sm:$0xff]
    %v1499 = vld [vmem:[#allocation4 + $0x100] sm:$0xff]
    %v1500 = vld [vmem:[#allocation4 + $0x108] sm:$0xff]
    %v1501 = vld [vmem:[#allocation4 + $0x110] sm:$0xff]
    %v1502 = vld [vmem:[#allocation4 + $0x118] sm:$0xff]
    %v1503 = vld [vmem:[#allocation4 + $0x120] sm:$0xff]
    %v1504 = vld [vmem:[#allocation4 + $0x128] sm:$0xff]
    %v1505 = vld [vmem:[#allocation4 + $0x130] sm:$0xff]
    %v1506 = vld [vmem:[#allocation4 + $0x138] sm:$0xff]
    %v1507 = vld [vmem:[#allocation4 + $0x140] sm:$0xff]
    %v1508 = vld [vmem:[#allocation4 + $0x148] sm:$0xff]
    %v1509 = vld [vmem:[#allocation4 + $0x150] sm:$0xff]
    %v1510 = vld [vmem:[#allocation4 + $0x158] sm:$0xff]
    %v1511 = vld [vmem:[#allocation4 + $0x160] sm:$0xff]
    %v1512 = vld [vmem:[#allocation4 + $0x168] sm:$0xff]
    %v1513 = vld [vmem:[#allocation4 + $0x170] sm:$0xff]
    %v1514 = vld [vmem:[#allocation4 + $0x178] sm:$0xff]
    %v1515 = vld [vmem:[#allocation4 + $0x180] sm:$0xff]
    %v1516 = vld [vmem:[#allocation4 + $0x188] sm:$0xff]
    %v1517 = vld [vmem:[#allocation4 + $0x190] sm:$0xff]
    %v1518 = vld [vmem:[#allocation4 + $0x198] sm:$0xff]
    %v1519 = vld [vmem:[#allocation4 + $0x1a0] sm:$0xff]
    %v1520 = vld [vmem:[#allocation4 + $0x1a8] sm:$0xff]
    %v1521 = vld [vmem:[#allocation4 + $0x1b0] sm:$0xff]
    %v1522 = vld [vmem:[#allocation4 + $0x1b8] sm:$0xff]
    %v1523 = vld [vmem:[#allocation4 + $0x1c0] sm:$0xff]
    %v1524 = vld [vmem:[#allocation4 + $0x1c8] sm:$0xff]
    %v1525 = vld [vmem:[#allocation4 + $0x1d0] sm:$0xff]
    %v1526 = vld [vmem:[#allocation4 + $0x1d8] sm:$0xff]
    %v1527 = vld [vmem:[#allocation4 + $0x1e0] sm:$0xff]
    %v1528 = vld [vmem:[#allocation4 + $0x1e8] sm:$0xff]
    %v1529 = vld [vmem:[#allocation4 + $0x1f0] sm:$0xff]
    %v1530 = vld [vmem:[#allocation4 + $0x1f8] sm:$0xff]
    %v1531 = vld [vmem:[#allocation4 + $0x200] sm:$0xff]
    %v1532 = vld [vmem:[#allocation4 + $0x208] sm:$0xff]
    %v1533 = vld [vmem:[#allocation4 + $0x210] sm:$0xff]
    %v1534 = vld [vmem:[#allocation4 + $0x218] sm:$0xff]
    %v1535 = vld [vmem:[#allocation4 + $0x220] sm:$0xff]
    %v1536 = vld [vmem:[#allocation4 + $0x228] sm:$0xff]
    %v1537 = vld [vmem:[#allocation4 + $0x230] sm:$0xff]
    %v1538 = vld [vmem:[#allocation4 + $0x238] sm:$0xff]
    %v1539 = vld [vmem:[#allocation4 + $0x240] sm:$0xff]
    %v1540 = vld [vmem:[#allocation4 + $0x248] sm:$0xff]
    %v1541 = vld [vmem:[#allocation4 + $0x250] sm:$0xff]
    %v1542 = vld [vmem:[#allocation4 + $0x258] sm:$0xff]
    %v1543 = vld [vmem:[#allocation4 + $0x260] sm:$0xff]
    %v1544 = vld [vmem:[#allocation4 + $0x268] sm:$0xff]
    %v1545 = vld [vmem:[#allocation4 + $0x270] sm:$0xff]
    %v1546 = vld [vmem:[#allocation4 + $0x278] sm:$0xff]
    %v1547 = vld [vmem:[#allocation4 + $0x280] sm:$0xff]
    %v1548 = vld [vmem:[#allocation4 + $0x288] sm:$0xff]
    %v1549 = vld [vmem:[#allocation4 + $0x290] sm:$0xff]
    %v1550 = vld [vmem:[#allocation4 + $0x298] sm:$0xff]
    %v1551 = vld [vmem:[#allocation4 + $0x2a0] sm:$0xff]
    %v1552 = vld [vmem:[#allocation4 + $0x2a8] sm:$0xff]
    %v1553 = vld [vmem:[#allocation4 + $0x2b0] sm:$0xff]
    %v1554 = vld [vmem:[#allocation4 + $0x2b8] sm:$0xff]
    %v1555 = vld [vmem:[#allocation4 + $0x2c0] sm:$0xff]
    %v1556 = vld [vmem:[#allocation4 + $0x2c8] sm:$0xff]
    %v1557 = vld [vmem:[#allocation4 + $0x2d0] sm:$0xff]
    %v1558 = vld [vmem:[#allocation4 + $0x2d8] sm:$0xff]
    %v1559 = vld [vmem:[#allocation4 + $0x2e0] sm:$0xff]
    %v1560 = vld [vmem:[#allocation4 + $0x2e8] sm:$0xff]
    %v1561 = vld [vmem:[#allocation4 + $0x2f0] sm:$0xff]
    %v1562 = vld [vmem:[#allocation4 + $0x2f8] sm:$0xff]
    %v1563 = vld [vmem:[#allocation4 + $0x300] sm:$0xff]
    %v1564 = vld [vmem:[#allocation4 + $0x308] sm:$0xff]
    %v1565 = vld [vmem:[#allocation4 + $0x310] sm:$0xff]
    %v1566 = vld [vmem:[#allocation4 + $0x318] sm:$0xff]
    %v1567 = vld [vmem:[#allocation4 + $0x320] sm:$0xff]
    %v1568 = vld [vmem:[#allocation4 + $0x328] sm:$0xff]
    %v1569 = vld [vmem:[#allocation4 + $0x330] sm:$0xff]
    %v1570 = vld [vmem:[#allocation4 + $0x338] sm:$0xff]
    %v1571 = vld [vmem:[#allocation4 + $0x340] sm:$0xff]
    %v1572 = vld [vmem:[#allocation4 + $0x348] sm:$0xff]
    %v1573 = vld [vmem:[#allocation4 + $0x350] sm:$0xff]
    %v1574 = vld [vmem:[#allocation4 + $0x358] sm:$0xff]
    %v1575 = vld [vmem:[#allocation4 + $0x360] sm:$0xff]
    %v1576 = vld [vmem:[#allocation4 + $0x368] sm:$0xff]
    %v1577 = vld [vmem:[#allocation4 + $0x370] sm:$0xff]
    %v1578 = vld [vmem:[#allocation4 + $0x378] sm:$0xff]
    %v1579 = vld [vmem:[#allocation4 + $0x380] sm:$0xff]
    %v1580 = vld [vmem:[#allocation4 + $0x388] sm:$0xff]
    %v1581 = vld [vmem:[#allocation4 + $0x390] sm:$0xff]
    %v1582 = vld [vmem:[#allocation4 + $0x398] sm:$0xff]
    %v1583 = vld [vmem:[#allocation4 + $0x3a0] sm:$0xff]
    %v1584 = vld [vmem:[#allocation4 + $0x3a8] sm:$0xff]
    %v1585 = vld [vmem:[#allocation4 + $0x3b0] sm:$0xff]
    %v1586 = vld [vmem:[#allocation4 + $0x3b8] sm:$0xff]
    %v1587 = vpack.c.b16 %v1435, %v1427
    %v1588 = vpack.c.b16 %v1436, %v1428
    %v1589 = vpack.c.b16 %v1437, %v1429
    %v1590 = vpack.c.b16 %v1438, %v1430
    %v1591 = vpack.c.b16 %v1439, %v1431
    %v1592 = vpack.c.b16 %v1440, %v1432
    %v1593 = vpack.c.b16 %v1441, %v1433
    %v1594 = vpack.c.b16 %v1442, %v1434
    %v1595 = vpack.c.b16 %v1447, %v1443
    %v1596 = vpack.c.b16 %v1448, %v1444
    %v1597 = vpack.c.b16 %v1449, %v1445
    %v1598 = vpack.c.b16 %v1450, %v1446
    %v1599 = vpack.c.b16 %v1455, %v1451
    %v1600 = vpack.c.b16 %v1456, %v1452
    %v1601 = vpack.c.b16 %v1457, %v1453
    %v1602 = vpack.c.b16 %v1458, %v1454
    %v1603 = vpack.c.b16 %v1463, %v1459
    %v1604 = vpack.c.b16 %v1464, %v1460
    %v1605 = vpack.c.b16 %v1465, %v1461
    %v1606 = vpack.c.b16 %v1466, %v1462
    %v1743 = vunpack.c.l.b16 %v1467
    %v1744 = vunpack.c.h.b16 %v1467
    %v1745 = vunpack.c.l.b16 %v1468
    %v1746 = vunpack.c.h.b16 %v1468
    %v1747 = vunpack.c.l.b16 %v1469
    %v1748 = vunpack.c.h.b16 %v1469
    %v1749 = vunpack.c.l.b16 %v1470
    %v1750 = vunpack.c.h.b16 %v1470
    %v1751 = vunpack.c.l.b16 %v1471
    %v1752 = vunpack.c.h.b16 %v1471
    %v1753 = vunpack.c.l.b16 %v1472
    %v1754 = vunpack.c.h.b16 %v1472
    %v1755 = vunpack.c.l.b16 %v1473
    %v1756 = vunpack.c.h.b16 %v1473
    %v1757 = vunpack.c.l.b16 %v1474
    %v1758 = vunpack.c.h.b16 %v1474
    %v1759 = vunpack.c.l.b16 %v1475
    %v1760 = vunpack.c.h.b16 %v1475
    %v1761 = vunpack.c.l.b16 %v1476
    %v1762 = vunpack.c.h.b16 %v1476
    %v1763 = vunpack.c.l.b16 %v1477
    %v1764 = vunpack.c.h.b16 %v1477
    %v1765 = vunpack.c.l.b16 %v1478
    %v1766 = vunpack.c.h.b16 %v1478
    %v1767 = vunpack.c.l.b16 %v1479
    %v1768 = vunpack.c.h.b16 %v1479
    %v1769 = vunpack.c.l.b16 %v1480
    %v1770 = vunpack.c.h.b16 %v1480
    %v1771 = vunpack.c.l.b16 %v1481
    %v1772 = vunpack.c.h.b16 %v1481
    %v1773 = vunpack.c.l.b16 %v1482
    %v1774 = vunpack.c.h.b16 %v1482
    %v1775 = vunpack.c.l.b16 %v1483
    %v1776 = vunpack.c.h.b16 %v1483
    %v1777 = vunpack.c.l.b16 %v1484
    %v1778 = vunpack.c.h.b16 %v1484
    %v1779 = vunpack.c.l.b16 %v1485
    %v1780 = vunpack.c.h.b16 %v1485
    %v1781 = vunpack.c.l.b16 %v1486
    %v1782 = vunpack.c.h.b16 %v1486
    %v1783 = vunpack.c.l.b16 %v1487
    %v1784 = vunpack.c.h.b16 %v1487
    %v1785 = vunpack.c.l.b16 %v1488
    %v1786 = vunpack.c.h.b16 %v1488
    %v1787 = vunpack.c.l.b16 %v1489
    %v1788 = vunpack.c.h.b16 %v1489
    %v1789 = vunpack.c.l.b16 %v1490
    %v1790 = vunpack.c.h.b16 %v1490
    %v1791 = vunpack.c.l.b16 %v1491
    %v1792 = vunpack.c.h.b16 %v1491
    %v1793 = vunpack.c.l.b16 %v1492
    %v1794 = vunpack.c.h.b16 %v1492
    %v1795 = vunpack.c.l.b16 %v1493
    %v1796 = vunpack.c.h.b16 %v1493
    %v1797 = vunpack.c.l.b16 %v1494
    %v1798 = vunpack.c.h.b16 %v1494
    %v1799 = vunpack.c.l.b16 %v1495
    %v1800 = vunpack.c.h.b16 %v1495
    %v1801 = vunpack.c.l.b16 %v1496
    %v1802 = vunpack.c.h.b16 %v1496
    %v1803 = vunpack.c.l.b16 %v1497
    %v1804 = vunpack.c.h.b16 %v1497
    %v1805 = vunpack.c.l.b16 %v1498
    %v1806 = vunpack.c.h.b16 %v1498
    %v1807 = vunpack.c.l.b16 %v1499
    %v1808 = vunpack.c.h.b16 %v1499
    %v1809 = vunpack.c.l.b16 %v1500
    %v1810 = vunpack.c.h.b16 %v1500
    %v1811 = vunpack.c.l.b16 %v1501
    %v1812 = vunpack.c.h.b16 %v1501
    %v1813 = vunpack.c.l.b16 %v1502
    %v1814 = vunpack.c.h.b16 %v1502
    %v1815 = vunpack.c.l.b16 %v1503
    %v1816 = vunpack.c.h.b16 %v1503
    %v1817 = vunpack.c.l.b16 %v1504
    %v1818 = vunpack.c.h.b16 %v1504
    %v1819 = vunpack.c.l.b16 %v1505
    %v1820 = vunpack.c.h.b16 %v1505
    %v1821 = vunpack.c.l.b16 %v1506
    %v1822 = vunpack.c.h.b16 %v1506
    %v1823 = vunpack.c.l.b16 %v1507
    %v1824 = vunpack.c.h.b16 %v1507
    %v1825 = vunpack.c.l.b16 %v1508
    %v1826 = vunpack.c.h.b16 %v1508
    %v1827 = vunpack.c.l.b16 %v1509
    %v1828 = vunpack.c.h.b16 %v1509
    %v1829 = vunpack.c.l.b16 %v1510
    %v1830 = vunpack.c.h.b16 %v1510
    %v1831 = vunpack.c.l.b16 %v1511
    %v1832 = vunpack.c.h.b16 %v1511
    %v1833 = vunpack.c.l.b16 %v1512
    %v1834 = vunpack.c.h.b16 %v1512
    %v1835 = vunpack.c.l.b16 %v1513
    %v1836 = vunpack.c.h.b16 %v1513
    %v1837 = vunpack.c.l.b16 %v1514
    %v1838 = vunpack.c.h.b16 %v1514
    %v1839 = vunpack.c.l.b16 %v1515
    %v1840 = vunpack.c.h.b16 %v1515
    %v1841 = vunpack.c.l.b16 %v1516
    %v1842 = vunpack.c.h.b16 %v1516
    %v1843 = vunpack.c.l.b16 %v1517
    %v1844 = vunpack.c.h.b16 %v1517
    %v1845 = vunpack.c.l.b16 %v1518
    %v1846 = vunpack.c.h.b16 %v1518
    %v1847 = vunpack.c.l.b16 %v1519
    %v1848 = vunpack.c.h.b16 %v1519
    %v1849 = vunpack.c.l.b16 %v1520
    %v1850 = vunpack.c.h.b16 %v1520
    %v1851 = vunpack.c.l.b16 %v1521
    %v1852 = vunpack.c.h.b16 %v1521
    %v1853 = vunpack.c.l.b16 %v1522
    %v1854 = vunpack.c.h.b16 %v1522
    %v1855 = vunpack.c.l.b16 %v1523
    %v1856 = vunpack.c.h.b16 %v1523
    %v1857 = vunpack.c.l.b16 %v1524
    %v1858 = vunpack.c.h.b16 %v1524
    %v1859 = vunpack.c.l.b16 %v1525
    %v1860 = vunpack.c.h.b16 %v1525
    %v1861 = vunpack.c.l.b16 %v1526
    %v1862 = vunpack.c.h.b16 %v1526
    %v1863 = vunpack.c.l.b16 %v1527
    %v1864 = vunpack.c.h.b16 %v1527
    %v1865 = vunpack.c.l.b16 %v1528
    %v1866 = vunpack.c.h.b16 %v1528
    %v1867 = vunpack.c.l.b16 %v1529
    %v1868 = vunpack.c.h.b16 %v1529
    %v1869 = vunpack.c.l.b16 %v1530
    %v1870 = vunpack.c.h.b16 %v1530
    %v1871 = vunpack.c.l.b16 %v1531
    %v1872 = vunpack.c.h.b16 %v1531
    %v1873 = vunpack.c.l.b16 %v1532
    %v1874 = vunpack.c.h.b16 %v1532
    %v1875 = vunpack.c.l.b16 %v1533
    %v1876 = vunpack.c.h.b16 %v1533
    %v1877 = vunpack.c.l.b16 %v1534
    %v1878 = vunpack.c.h.b16 %v1534
    %v1879 = vunpack.c.l.b16 %v1535
    %v1880 = vunpack.c.h.b16 %v1535
    %v1881 = vunpack.c.l.b16 %v1536
    %v1882 = vunpack.c.h.b16 %v1536
    %v1883 = vunpack.c.l.b16 %v1537
    %v1884 = vunpack.c.h.b16 %v1537
    %v1885 = vunpack.c.l.b16 %v1538
    %v1886 = vunpack.c.h.b16 %v1538
    %v1887 = vunpack.c.l.b16 %v1539
    %v1888 = vunpack.c.h.b16 %v1539
    %v1889 = vunpack.c.l.b16 %v1540
    %v1890 = vunpack.c.h.b16 %v1540
    %v1891 = vunpack.c.l.b16 %v1541
    %v1892 = vunpack.c.h.b16 %v1541
    %v1893 = vunpack.c.l.b16 %v1542
    %v1894 = vunpack.c.h.b16 %v1542
    %v1895 = vunpack.c.l.b16 %v1543
    %v1896 = vunpack.c.h.b16 %v1543
    %v1897 = vunpack.c.l.b16 %v1544
    %v1898 = vunpack.c.h.b16 %v1544
    %v1899 = vunpack.c.l.b16 %v1545
    %v1900 = vunpack.c.h.b16 %v1545
    %v1901 = vunpack.c.l.b16 %v1546
    %v1902 = vunpack.c.h.b16 %v1546
    %v1903 = vunpack.c.l.b16 %v1547
    %v1904 = vunpack.c.h.b16 %v1547
    %v1905 = vunpack.c.l.b16 %v1548
    %v1906 = vunpack.c.h.b16 %v1548
    %v1907 = vunpack.c.l.b16 %v1549
    %v1908 = vunpack.c.h.b16 %v1549
    %v1909 = vunpack.c.l.b16 %v1550
    %v1910 = vunpack.c.h.b16 %v1550
    %v1911 = vunpack.c.l.b16 %v1551
    %v1912 = vunpack.c.h.b16 %v1551
    %v1913 = vunpack.c.l.b16 %v1552
    %v1914 = vunpack.c.h.b16 %v1552
    %v1915 = vunpack.c.l.b16 %v1553
    %v1916 = vunpack.c.h.b16 %v1553
    %v1917 = vunpack.c.l.b16 %v1554
    %v1918 = vunpack.c.h.b16 %v1554
    %v1919 = vunpack.c.l.b16 %v1555
    %v1920 = vunpack.c.h.b16 %v1555
    %v1921 = vunpack.c.l.b16 %v1556
    %v1922 = vunpack.c.h.b16 %v1556
    %v1923 = vunpack.c.l.b16 %v1557
    %v1924 = vunpack.c.h.b16 %v1557
    %v1925 = vunpack.c.l.b16 %v1558
    %v1926 = vunpack.c.h.b16 %v1558
    %v1927 = vunpack.c.l.b16 %v1559
    %v1928 = vunpack.c.h.b16 %v1559
    %v1929 = vunpack.c.l.b16 %v1560
    %v1930 = vunpack.c.h.b16 %v1560
    %v1931 = vunpack.c.l.b16 %v1561
    %v1932 = vunpack.c.h.b16 %v1561
    %v1933 = vunpack.c.l.b16 %v1562
    %v1934 = vunpack.c.h.b16 %v1562
    %v1935 = vunpack.c.l.b16 %v1563
    %v1936 = vunpack.c.h.b16 %v1563
    %v1937 = vunpack.c.l.b16 %v1564
    %v1938 = vunpack.c.h.b16 %v1564
    %v1939 = vunpack.c.l.b16 %v1565
    %v1940 = vunpack.c.h.b16 %v1565
    %v1941 = vunpack.c.l.b16 %v1566
    %v1942 = vunpack.c.h.b16 %v1566
    %v1943 = vunpack.c.l.b16 %v1567
    %v1944 = vunpack.c.h.b16 %v1567
    %v1945 = vunpack.c.l.b16 %v1568
    %v1946 = vunpack.c.h.b16 %v1568
    %v1947 = vunpack.c.l.b16 %v1569
    %v1948 = vunpack.c.h.b16 %v1569
    %v1949 = vunpack.c.l.b16 %v1570
    %v1950 = vunpack.c.h.b16 %v1570
    %v1951 = vunpack.c.l.b16 %v1571
    %v1952 = vunpack.c.h.b16 %v1571
    %v1953 = vunpack.c.l.b16 %v1572
    %v1954 = vunpack.c.h.b16 %v1572
    %v1955 = vunpack.c.l.b16 %v1573
    %v1956 = vunpack.c.h.b16 %v1573
    %v1957 = vunpack.c.l.b16 %v1574
    %v1958 = vunpack.c.h.b16 %v1574
    %v1959 = vunpack.c.l.b16 %v1575
    %v1960 = vunpack.c.h.b16 %v1575
    %v1961 = vunpack.c.l.b16 %v1576
    %v1962 = vunpack.c.h.b16 %v1576
    %v1963 = vunpack.c.l.b16 %v1577
    %v1964 = vunpack.c.h.b16 %v1577
    %v1965 = vunpack.c.l.b16 %v1578
    %v1966 = vunpack.c.h.b16 %v1578
    %v1967 = vunpack.c.l.b16 %v1579
    %v1968 = vunpack.c.h.b16 %v1579
    %v1969 = vunpack.c.l.b16 %v1580
    %v1970 = vunpack.c.h.b16 %v1580
    %v1971 = vunpack.c.l.b16 %v1581
    %v1972 = vunpack.c.h.b16 %v1581
    %v1973 = vunpack.c.l.b16 %v1582
    %v1974 = vunpack.c.h.b16 %v1582
    %v1975 = vunpack.c.l.b16 %v1583
    %v1976 = vunpack.c.h.b16 %v1583
    %v1977 = vunpack.c.l.b16 %v1584
    %v1978 = vunpack.c.h.b16 %v1584
    %v1979 = vunpack.c.l.b16 %v1585
    %v1980 = vunpack.c.h.b16 %v1585
    %v1981 = vunpack.c.l.b16 %v1586
    %v1982 = vunpack.c.h.b16 %v1586
    %v1983 = vpack.c.b16 %v1745, %v1743
    %v1984 = vpack.c.b16 %v1746, %v1744
    %v1985 = vpack.c.b16 %v1749, %v1747
    %v1986 = vpack.c.b16 %v1750, %v1748
    %v1987 = vpack.c.b16 %v1753, %v1751
    %v1988 = vpack.c.b16 %v1754, %v1752
    %v1989 = vpack.c.b16 %v1757, %v1755
    %v1990 = vpack.c.b16 %v1758, %v1756
    %v1991 = vpack.c.b16 %v1761, %v1759
    %v1992 = vpack.c.b16 %v1762, %v1760
    %v1993 = vpack.c.b16 %v1765, %v1763
    %v1994 = vpack.c.b16 %v1766, %v1764
    %v1995 = vpack.c.b16 %v1769, %v1767
    %v1996 = vpack.c.b16 %v1770, %v1768
    %v1997 = vpack.c.b16 %v1773, %v1771
    %v1998 = vpack.c.b16 %v1774, %v1772
    %v1999 = vpack.c.b16 %v1777, %v1775
    %v2000 = vpack.c.b16 %v1778, %v1776
    %v2001 = vpack.c.b16 %v1781, %v1779
    %v2002 = vpack.c.b16 %v1782, %v1780
    %v2003 = vpack.c.b16 %v1785, %v1783
    %v2004 = vpack.c.b16 %v1786, %v1784
    %v2005 = vpack.c.b16 %v1789, %v1787
    %v2006 = vpack.c.b16 %v1790, %v1788
    %v2007 = vpack.c.b16 %v1793, %v1791
    %v2008 = vpack.c.b16 %v1794, %v1792
    %v2009 = vpack.c.b16 %v1797, %v1795
    %v2010 = vpack.c.b16 %v1798, %v1796
    %v2011 = vpack.c.b16 %v1801, %v1799
    %v2012 = vpack.c.b16 %v1802, %v1800
    %v2013 = vpack.c.b16 %v1805, %v1803
    %v2014 = vpack.c.b16 %v1806, %v1804
    %v2015 = vpack.c.b16 %v1809, %v1807
    %v2016 = vpack.c.b16 %v1810, %v1808
    %v2017 = vpack.c.b16 %v1813, %v1811
    %v2018 = vpack.c.b16 %v1814, %v1812
    %v2019 = vpack.c.b16 %v1817, %v1815
    %v2020 = vpack.c.b16 %v1818, %v1816
    %v2021 = vpack.c.b16 %v1821, %v1819
    %v2022 = vpack.c.b16 %v1822, %v1820
    %v2023 = vpack.c.b16 %v1825, %v1823
    %v2024 = vpack.c.b16 %v1826, %v1824
    %v2025 = vpack.c.b16 %v1829, %v1827
    %v2026 = vpack.c.b16 %v1830, %v1828
    %v2027 = vpack.c.b16 %v1833, %v1831
    %v2028 = vpack.c.b16 %v1834, %v1832
    %v2029 = vpack.c.b16 %v1837, %v1835
    %v2030 = vpack.c.b16 %v1838, %v1836
    %v2031 = vpack.c.b16 %v1841, %v1839
    %v2032 = vpack.c.b16 %v1842, %v1840
    %v2033 = vpack.c.b16 %v1845, %v1843
    %v2034 = vpack.c.b16 %v1846, %v1844
    %v2035 = vpack.c.b16 %v1849, %v1847
    %v2036 = vpack.c.b16 %v1850, %v1848
    %v2037 = vpack.c.b16 %v1853, %v1851
    %v2038 = vpack.c.b16 %v1854, %v1852
    %v2039 = vpack.c.b16 %v1857, %v1855
    %v2040 = vpack.c.b16 %v1858, %v1856
    %v2041 = vpack.c.b16 %v1861, %v1859
    %v2042 = vpack.c.b16 %v1862, %v1860
    %v2043 = vpack.c.b16 %v1865, %v1863
    %v2044 = vpack.c.b16 %v1866, %v1864
    %v2045 = vpack.c.b16 %v1869, %v1867
    %v2046 = vpack.c.b16 %v1870, %v1868
    %v2047 = vpack.c.b16 %v1873, %v1871
    %v2048 = vpack.c.b16 %v1874, %v1872
    %v2049 = vpack.c.b16 %v1877, %v1875
    %v2050 = vpack.c.b16 %v1878, %v1876
    %v2051 = vpack.c.b16 %v1881, %v1879
    %v2052 = vpack.c.b16 %v1882, %v1880
    %v2053 = vpack.c.b16 %v1885, %v1883
    %v2054 = vpack.c.b16 %v1886, %v1884
    %v2055 = vpack.c.b16 %v1889, %v1887
    %v2056 = vpack.c.b16 %v1890, %v1888
    %v2057 = vpack.c.b16 %v1893, %v1891
    %v2058 = vpack.c.b16 %v1894, %v1892
    %v2059 = vpack.c.b16 %v1897, %v1895
    %v2060 = vpack.c.b16 %v1898, %v1896
    %v2061 = vpack.c.b16 %v1901, %v1899
    %v2062 = vpack.c.b16 %v1902, %v1900
    %v2063 = vpack.c.b16 %v1905, %v1903
    %v2064 = vpack.c.b16 %v1906, %v1904
    %v2065 = vpack.c.b16 %v1909, %v1907
    %v2066 = vpack.c.b16 %v1910, %v1908
    %v2067 = vpack.c.b16 %v1913, %v1911
    %v2068 = vpack.c.b16 %v1914, %v1912
    %v2069 = vpack.c.b16 %v1917, %v1915
    %v2070 = vpack.c.b16 %v1918, %v1916
    %v2071 = vpack.c.b16 %v1921, %v1919
    %v2072 = vpack.c.b16 %v1922, %v1920
    %v2073 = vpack.c.b16 %v1925, %v1923
    %v2074 = vpack.c.b16 %v1926, %v1924
    %v2075 = vpack.c.b16 %v1929, %v1927
    %v2076 = vpack.c.b16 %v1930, %v1928
    %v2077 = vpack.c.b16 %v1933, %v1931
    %v2078 = vpack.c.b16 %v1934, %v1932
    %v2079 = vpack.c.b16 %v1937, %v1935
    %v2080 = vpack.c.b16 %v1938, %v1936
    %v2081 = vpack.c.b16 %v1941, %v1939
    %v2082 = vpack.c.b16 %v1942, %v1940
    %v2083 = vpack.c.b16 %v1945, %v1943
    %v2084 = vpack.c.b16 %v1946, %v1944
    %v2085 = vpack.c.b16 %v1949, %v1947
    %v2086 = vpack.c.b16 %v1950, %v1948
    %v2087 = vpack.c.b16 %v1953, %v1951
    %v2088 = vpack.c.b16 %v1954, %v1952
    %v2089 = vpack.c.b16 %v1957, %v1955
    %v2090 = vpack.c.b16 %v1958, %v1956
    %v2091 = vpack.c.b16 %v1961, %v1959
    %v2092 = vpack.c.b16 %v1962, %v1960
    %v2093 = vpack.c.b16 %v1965, %v1963
    %v2094 = vpack.c.b16 %v1966, %v1964
    %v2095 = vpack.c.b16 %v1969, %v1967
    %v2096 = vpack.c.b16 %v1970, %v1968
    %v2097 = vpack.c.b16 %v1973, %v1971
    %v2098 = vpack.c.b16 %v1974, %v1972
    %v2099 = vpack.c.b16 %v1977, %v1975
    %v2100 = vpack.c.b16 %v1978, %v1976
    %v2101 = vpack.c.b16 %v1981, %v1979
    %v2102 = vpack.c.b16 %v1982, %v1980
    %v2224 = vsel %vm391, %v1594, 0
    %v2227 = vsel %vm391, %v1598, 0
    %v2230 = vsel %vm391, %v1602, 0
    %v2233 = vsel %vm391, %v1606, 0
    %2235 = vmatprep.subr.bf16.mxu0 %v1984
    %2236 = vmatpush1.bf16.msra.mxu0 %v1983
    %2237 = vmatprep.subr.bf16.mxu0 %v1986
    %2238 = vmatpush1.bf16.msra.mxu0 %v1985
    %2239 = vmatprep.subr.bf16.mxu0 %v1988
    %2240 = vmatpush1.bf16.msra.mxu0 %v1987
    %2241 = vmatprep.subr.bf16.mxu0 %v1990
    %2242 = vmatpush1.bf16.msra.mxu0 %v1989
    %2243 = vmatprep.subr.bf16.mxu0 %v1992
    %2244 = vmatpush1.bf16.msra.mxu0 %v1991
    %2245 = vmatprep.subr.bf16.mxu0 %v1994
    %2246 = vmatpush1.bf16.msra.mxu0 %v1993
    %2247 = vmatprep.subr.bf16.mxu0 %v1996
    %2248 = vmatpush1.bf16.msra.mxu0 %v1995
    %2249 = vmatprep.subr.bf16.mxu0 %v1998
    %2250 = vmatpush1.bf16.msra.mxu0 %v1997
    %2251 = vmatprep.subr.bf16.mxu0 %v2000
    %2252 = vmatpush1.bf16.msra.mxu0 %v1999
    %2253 = vmatprep.subr.bf16.mxu0 %v2002
    %2254 = vmatpush1.bf16.msra.mxu0 %v2001
    %2255 = vmatprep.subr.bf16.mxu0 %v2004
    %2256 = vmatpush1.bf16.msra.mxu0 %v2003
    %2257 = vmatprep.subr.bf16.mxu0 %v2006
    %2258 = vmatpush1.bf16.msra.mxu0 %v2005
    %2259 = vmatprep.subr.bf16.mxu0 %v2008
    %2260 = vmatpush1.bf16.msra.mxu0 %v2007
    %2261 = vmatprep.subr.bf16.mxu0 %v2010
    %2262 = vmatpush1.bf16.msra.mxu0 %v2009
    %2263 = vmatprep.subr.bf16.mxu0 %v2012
    %2264 = vmatpush1.bf16.msra.mxu0 %v2011
    %2265 = vmatprep.subr.bf16.mxu0 %v2014
    %2266 = vmatpush1.bf16.msra.mxu0 %v2013
    %2267 = vmatprep.mubr.bf16.mxu0 %v1588
    %2268 = vmatmul.mubr.bf16.gmra.mrb[0].mxu0 %v1587
    %v2269 = vpop.f32.mrb[0].mxu0
    %v2270 = vadd.f32 0.0, %v2269
    %v2271 = vpop.f32.mrb[0].mxu0
    %v2272 = vadd.f32 0.0, %v2271
    %v2273 = vpop.f32.mrb[0].mxu0
    %v2274 = vadd.f32 0.0, %v2273
    %v2275 = vpop.f32.mrb[0].mxu0
    %v2276 = vadd.f32 0.0, %v2275
    %2277 = vmatprep.mubr.bf16.mxu0 %v1591
    %2278 = vmatmul.mubr.bf16.gmra.mrb[0].mxu0 %v1590
    %v2279 = vpop.f32.mrb[0].mxu0
    %v2280 = vadd.f32 0.0, %v2279
    %v2281 = vpop.f32.mrb[0].mxu0
    %v2282 = vadd.f32 0.0, %v2281
    %v2283 = vpop.f32.mrb[0].mxu0
    %v2284 = vadd.f32 0.0, %v2283
    %v2285 = vpop.f32.mrb[0].mxu0
    %v2286 = vadd.f32 0.0, %v2285
    %2287 = vmatprep.mubr.bf16.mxu0 %v1595
    %2288 = vmatmul.mubr.bf16.gmra.mrb[0].mxu0 %v1593
    %v2289 = vpop.f32.mrb[0].mxu0
    %v2290 = vadd.f32 0.0, %v2289
    %v2291 = vpop.f32.mrb[0].mxu0
    %v2292 = vadd.f32 0.0, %v2291
    %v2293 = vpop.f32.mrb[0].mxu0
    %v2294 = vadd.f32 0.0, %v2293
    %v2295 = vpop.f32.mrb[0].mxu0
    %v2296 = vadd.f32 0.0, %v2295
    %2297 = vmatprep.mubr.bf16.mxu0 %v1599
    %2298 = vmatmul.mubr.bf16.gmra.mrb[0].mxu0 %v1597
    %v2299 = vpop.f32.mrb[0].mxu0
    %v2300 = vadd.f32 0.0, %v2299
    %v2301 = vpop.f32.mrb[0].mxu0
    %v2302 = vadd.f32 0.0, %v2301
    %v2303 = vpop.f32.mrb[0].mxu0
    %v2304 = vadd.f32 0.0, %v2303
    %v2305 = vpop.f32.mrb[0].mxu0
    %v2306 = vadd.f32 0.0, %v2305
    %2307 = vdwg.mxu0
    %2308 = vmatprep.subr.bf16.mxu0 %v2016
    %2309 = vmatpush1.bf16.msra.mxu0 %v2015
    %2310 = vmatprep.subr.bf16.mxu0 %v2018
    %2311 = vmatpush1.bf16.msra.mxu0 %v2017
    %2312 = vmatprep.subr.bf16.mxu0 %v2020
    %2313 = vmatpush1.bf16.msra.mxu0 %v2019
    %2314 = vmatprep.subr.bf16.mxu0 %v2022
    %2315 = vmatpush1.bf16.msra.mxu0 %v2021
    %2316 = vmatprep.subr.bf16.mxu0 %v2024
    %2317 = vmatpush1.bf16.msra.mxu0 %v2023
    %2318 = vmatprep.subr.bf16.mxu0 %v2026
    %2319 = vmatpush1.bf16.msra.mxu0 %v2025
    %2320 = vmatprep.subr.bf16.mxu0 %v2028
    %2321 = vmatpush1.bf16.msra.mxu0 %v2027
    %2322 = vmatprep.subr.bf16.mxu0 %v2030
    %2323 = vmatpush1.bf16.msra.mxu0 %v2029
    %2324 = vmatprep.subr.bf16.mxu0 %v2032
    %2325 = vmatpush1.bf16.msra.mxu0 %v2031
    %2326 = vmatprep.subr.bf16.mxu0 %v2034
    %2327 = vmatpush1.bf16.msra.mxu0 %v2033
    %2328 = vmatprep.subr.bf16.mxu0 %v2036
    %2329 = vmatpush1.bf16.msra.mxu0 %v2035
    %2330 = vmatprep.subr.bf16.mxu0 %v2038
    %2331 = vmatpush1.bf16.msra.mxu0 %v2037
    %2332 = vmatprep.subr.bf16.mxu0 %v2040
    %2333 = vmatpush1.bf16.msra.mxu0 %v2039
    %2334 = vmatprep.subr.bf16.mxu0 %v2042
    %2335 = vmatpush1.bf16.msra.mxu0 %v2041
    %2336 = vmatprep.subr.bf16.mxu0 %v2044
    %2337 = vmatpush1.bf16.msra.mxu0 %v2043
    %2338 = vmatprep.subr.bf16.mxu0 %v2046
    %2339 = vmatpush1.bf16.msra.mxu0 %v2045
    %2340 = vmatprep.mubr.bf16.mxu0 %v1590
    %2341 = vmatmul.mubr.bf16.gmra.mrb[0].mxu0 %v1589
    %v2342 = vpop.f32.mrb[0].mxu0
    %v2343 = vadd.f32 %v2270, %v2342
    %v2344 = vpop.f32.mrb[0].mxu0
    %v2345 = vadd.f32 %v2272, %v2344
    %v2346 = vpop.f32.mrb[0].mxu0
    %v2347 = vadd.f32 %v2274, %v2346
    %v2348 = vpop.f32.mrb[0].mxu0
    %v2349 = vadd.f32 %v2276, %v2348
    %2350 = vmatprep.mubr.bf16.mxu0 %v1593
    %2351 = vmatmul.mubr.bf16.gmra.mrb[0].mxu0 %v1592
    %v2352 = vpop.f32.mrb[0].mxu0
    %v2353 = vadd.f32 %v2280, %v2352
    %v2354 = vpop.f32.mrb[0].mxu0
    %v2355 = vadd.f32 %v2282, %v2354
    %v2356 = vpop.f32.mrb[0].mxu0
    %v2357 = vadd.f32 %v2284, %v2356
    %v2358 = vpop.f32.mrb[0].mxu0
    %v2359 = vadd.f32 %v2286, %v2358
    %2360 = vmatprep.mubr.bf16.mxu0 %v1597
    %2361 = vmatmul.mubr.bf16.gmra.mrb[0].mxu0 %v1596
    %v2362 = vpop.f32.mrb[0].mxu0
    %v2363 = vadd.f32 %v2290, %v2362
    %v2364 = vpop.f32.mrb[0].mxu0
    %v2365 = vadd.f32 %v2292, %v2364
    %v2366 = vpop.f32.mrb[0].mxu0
    %v2367 = vadd.f32 %v2294, %v2366
    %v2368 = vpop.f32.mrb[0].mxu0
    %v2369 = vadd.f32 %v2296, %v2368
    %2370 = vmatprep.mubr.bf16.mxu0 %v1601
    %2371 = vmatmul.mubr.bf16.gmra.mrb[0].mxu0 %v1600
    %v2372 = vpop.f32.mrb[0].mxu0
    %v2373 = vadd.f32 %v2300, %v2372
    %v2374 = vpop.f32.mrb[0].mxu0
    %v2375 = vadd.f32 %v2302, %v2374
    %v2376 = vpop.f32.mrb[0].mxu0
    %v2377 = vadd.f32 %v2304, %v2376
    %v2378 = vpop.f32.mrb[0].mxu0
    %v2379 = vadd.f32 %v2306, %v2378
    %2380 = vdwg.mxu0
    %2381 = vmatprep.subr.bf16.mxu0 %v2048
    %2382 = vmatpush1.bf16.msra.mxu0 %v2047
    %2383 = vmatprep.subr.bf16.mxu0 %v2050
    %2384 = vmatpush1.bf16.msra.mxu0 %v2049
    %2385 = vmatprep.subr.bf16.mxu0 %v2052
    %2386 = vmatpush1.bf16.msra.mxu0 %v2051
    %2387 = vmatprep.subr.bf16.mxu0 %v2054
    %2388 = vmatpush1.bf16.msra.mxu0 %v2053
    %2389 = vmatprep.subr.bf16.mxu0 %v2056
    %2390 = vmatpush1.bf16.msra.mxu0 %v2055
    %2391 = vmatprep.subr.bf16.mxu0 %v2058
    %2392 = vmatpush1.bf16.msra.mxu0 %v2057
    %2393 = vmatprep.subr.bf16.mxu0 %v2060
    %2394 = vmatpush1.bf16.msra.mxu0 %v2059
    %2395 = vmatprep.subr.bf16.mxu0 %v2062
    %2396 = vmatpush1.bf16.msra.mxu0 %v2061
    %2397 = vmatprep.subr.bf16.mxu0 %v2064
    %2398 = vmatpush1.bf16.msra.mxu0 %v2063
    %2399 = vmatprep.subr.bf16.mxu0 %v2066
    %2400 = vmatpush1.bf16.msra.mxu0 %v2065
    %2401 = vmatprep.subr.bf16.mxu0 %v2068
    %2402 = vmatpush1.bf16.msra.mxu0 %v2067
    %2403 = vmatprep.subr.bf16.mxu0 %v2070
    %2404 = vmatpush1.bf16.msra.mxu0 %v2069
    %2405 = vmatprep.subr.bf16.mxu0 %v2072
    %2406 = vmatpush1.bf16.msra.mxu0 %v2071
    %2407 = vmatprep.subr.bf16.mxu0 %v2074
    %2408 = vmatpush1.bf16.msra.mxu0 %v2073
    %2409 = vmatprep.subr.bf16.mxu0 %v2076
    %2410 = vmatpush1.bf16.msra.mxu0 %v2075
    %2411 = vmatprep.subr.bf16.mxu0 %v2078
    %2412 = vmatpush1.bf16.msra.mxu0 %v2077
    %2413 = vmatprep.mubr.bf16.mxu0 %v1592
    %2414 = vmatmul.mubr.bf16.gmra.mrb[0].mxu0 %v1591
    %v2415 = vpop.f32.mrb[0].mxu0
    %v2416 = vadd.f32 %v2343, %v2415
    %v2417 = vpop.f32.mrb[0].mxu0
    %v2418 = vadd.f32 %v2345, %v2417
    %v2419 = vpop.f32.mrb[0].mxu0
    %v2420 = vadd.f32 %v2347, %v2419
    %v2421 = vpop.f32.mrb[0].mxu0
    %v2422 = vadd.f32 %v2349, %v2421
    %2423 = vmatprep.mubr.bf16.mxu0 %v1596
    %2424 = vmatmul.mubr.bf16.gmra.mrb[0].mxu0 %v1595
    %v2425 = vpop.f32.mrb[0].mxu0
    %v2426 = vadd.f32 %v2353, %v2425
    %v2427 = vpop.f32.mrb[0].mxu0
    %v2428 = vadd.f32 %v2355, %v2427
    %v2429 = vpop.f32.mrb[0].mxu0
    %v2430 = vadd.f32 %v2357, %v2429
    %v2431 = vpop.f32.mrb[0].mxu0
    %v2432 = vadd.f32 %v2359, %v2431
    %2433 = vmatprep.mubr.bf16.mxu0 %v1600
    %2434 = vmatmul.mubr.bf16.gmra.mrb[0].mxu0 %v1599
    %v2435 = vpop.f32.mrb[0].mxu0
    %v2436 = vadd.f32 %v2363, %v2435
    %v2437 = vpop.f32.mrb[0].mxu0
    %v2438 = vadd.f32 %v2365, %v2437
    %v2439 = vpop.f32.mrb[0].mxu0
    %v2440 = vadd.f32 %v2367, %v2439
    %v2441 = vpop.f32.mrb[0].mxu0
    %v2442 = vadd.f32 %v2369, %v2441
    %2443 = vmatprep.mubr.bf16.mxu0 %v1604
    %2444 = vmatmul.mubr.bf16.gmra.mrb[0].mxu0 %v1603
    %v2445 = vpop.f32.mrb[0].mxu0
    %v2446 = vadd.f32 %v2373, %v2445
    %v2447 = vpop.f32.mrb[0].mxu0
    %v2448 = vadd.f32 %v2375, %v2447
    %v2449 = vpop.f32.mrb[0].mxu0
    %v2450 = vadd.f32 %v2377, %v2449
    %v2451 = vpop.f32.mrb[0].mxu0
    %v2452 = vadd.f32 %v2379, %v2451
    %2453 = vdwg.mxu0
    %2454 = vmatprep.subr.bf16.mxu0 %v2080
    %2455 = vmatpush1.bf16.msra.mxu0 %v2079
    %2456 = vmatprep.subr.bf16.mxu0 %v2082
    %2457 = vmatpush1.bf16.msra.mxu0 %v2081
    %2458 = vmatprep.subr.bf16.mxu0 %v2084
    %2459 = vmatpush1.bf16.msra.mxu0 %v2083
    %2460 = vmatprep.subr.bf16.mxu0 %v2086
    %2461 = vmatpush1.bf16.msra.mxu0 %v2085
    %2462 = vmatprep.subr.bf16.mxu0 %v2088
    %2463 = vmatpush1.bf16.msra.mxu0 %v2087
    %2464 = vmatprep.subr.bf16.mxu0 %v2090
    %2465 = vmatpush1.bf16.msra.mxu0 %v2089
    %2466 = vmatprep.subr.bf16.mxu0 %v2092
    %2467 = vmatpush1.bf16.msra.mxu0 %v2091
    %2468 = vmatprep.subr.bf16.mxu0 %v2094
    %2469 = vmatpush1.bf16.msra.mxu0 %v2093
    %2470 = vmatprep.subr.bf16.mxu0 %v2096
    %2471 = vmatpush1.bf16.msra.mxu0 %v2095
    %2472 = vmatprep.subr.bf16.mxu0 %v2098
    %2473 = vmatpush1.bf16.msra.mxu0 %v2097
    %2474 = vmatprep.subr.bf16.mxu0 %v2100
    %2475 = vmatpush1.bf16.msra.mxu0 %v2099
    %2476 = vmatprep.subr.bf16.mxu0 %v2102
    %2477 = vmatpush1.bf16.msra.mxu0 %v2101
    %2478 = vmatprep.subr.bf16.mxu0 0
    %2479 = vmatpush1.bf16.msra.mxu0 0
    %2480 = vmatprep.subr.bf16.mxu0 0
    %2481 = vmatpush1.bf16.msra.mxu0 0
    %2482 = vmatprep.subr.bf16.mxu0 0
    %2483 = vmatpush1.bf16.msra.mxu0 0
    %2484 = vmatprep.subr.bf16.mxu0 0
    %2485 = vmatpush1.bf16.msra.mxu0 0
    %2486 = vmatprep.mubr.bf16.mxu0 %v2224
    %2487 = vmatmul.mubr.bf16.gmra.mrb[0].mxu0 %v1593
    %v2488 = vpop.f32.mrb[0].mxu0
    %v2489 = vadd.f32 %v2416, %v2488
    %v2490 = vpop.f32.mrb[0].mxu0
    %v2491 = vadd.f32 %v2418, %v2490
    %v2492 = vpop.f32.mrb[0].mxu0
    %v2493 = vadd.f32 %v2420, %v2492
    %v2494 = vpop.f32.mrb[0].mxu0
    %v2495 = vadd.f32 %v2422, %v2494
    %2496 = vmatprep.mubr.bf16.mxu0 %v2227
    %2497 = vmatmul.mubr.bf16.gmra.mrb[0].mxu0 %v1597
    %v2498 = vpop.f32.mrb[0].mxu0
    %v2499 = vadd.f32 %v2426, %v2498
    %v2500 = vpop.f32.mrb[0].mxu0
    %v2501 = vadd.f32 %v2428, %v2500
    %v2502 = vpop.f32.mrb[0].mxu0
    %v2503 = vadd.f32 %v2430, %v2502
    %v2504 = vpop.f32.mrb[0].mxu0
    %v2505 = vadd.f32 %v2432, %v2504
    %2506 = vmatprep.mubr.bf16.mxu0 %v2230
    %2507 = vmatmul.mubr.bf16.gmra.mrb[0].mxu0 %v1601
    %v2508 = vpop.f32.mrb[0].mxu0
    %v2509 = vadd.f32 %v2436, %v2508
    %v2510 = vpop.f32.mrb[0].mxu0
    %v2511 = vadd.f32 %v2438, %v2510
    %v2512 = vpop.f32.mrb[0].mxu0
    %v2513 = vadd.f32 %v2440, %v2512
    %v2514 = vpop.f32.mrb[0].mxu0
    %v2515 = vadd.f32 %v2442, %v2514
    %2516 = vmatprep.mubr.bf16.mxu0 %v2233
    %2517 = vmatmul.mubr.bf16.gmra.mrb[0].mxu0 %v1605
    %v2518 = vpop.f32.mrb[0].mxu0
    %v2519 = vadd.f32 %v2446, %v2518
    %v2520 = vpop.f32.mrb[0].mxu0
    %v2521 = vadd.f32 %v2448, %v2520
    %v2522 = vpop.f32.mrb[0].mxu0
    %v2523 = vadd.f32 %v2450, %v2522
    %v2524 = vpop.f32.mrb[0].mxu0
    %v2525 = vadd.f32 %v2452, %v2524
    %2526 = vdwg.mxu0
    %v2527 = vmax.f32 %v2489, %v2491
    %v2528 = vmax.f32 %v2493, %v2495
    %v2529 = vmax.f32 %v2499, %v2501
    %v2530 = vmax.f32 %v2503, %v2505
    %v2531 = vmax.f32 %v2509, %v2511
    %v2532 = vmax.f32 %v2513, %v2515
    %v2533 = vmax.f32 %v2519, %v2521
    %v2534 = vmax.f32 %v2523, %v2525
    %v2535 = vmax.f32 %v2527, %v2528
    %v2536 = vmax.f32 %v2529, %v2530
    %v2537 = vmax.f32 %v2531, %v2532
    %v2538 = vmax.f32 %v2533, %v2534
    %v2539 = vld [vmem:[%s4] sm:$0x1]
    %v2541 = vlaneseq
    %v2542 = vshrl.u32 %v2541, 7
    %v2543 = vsub.s32 0, %v2542
    %v2544 = vrot.slane %v2539, %v2543
    %v2546 = vadd.f32 %v2535, %v2544
    %v2547 = vadd.f32 %v2536, %v2544
    %v2548 = vadd.f32 %v2537, %v2544
    %v2549 = vadd.f32 %v2538, %v2544
    %v2550 = vmax.f32 %v2546, 0.0
    %v2551 = vmax.f32 %v2547, 0.0
    %v2552 = vmax.f32 %v2548, 0.0
    %v2553 = vmax.f32 %v2549, 0.0
    %v2554 = vpack.c.bf16 %v2550, %v2550
    %v2555 = vpack.c.bf16 %v2551, %v2551
    %v2556 = vpack.c.bf16 %v2552, %v2552
    %v2557 = vpack.c.bf16 %v2553, %v2553
    %v2558 = vld [vmem:[#allocation6] sm:$0xf]
    %v2559 = vld [vmem:[#allocation6 + $0x4] sm:$0xf]
    %v2560 = vld [vmem:[#allocation6 + $0x8] sm:$0xf]
    %v2561 = vld [vmem:[#allocation6 + $0xc] sm:$0xf]
    %v2562 = vld [vmem:[#allocation6 + $0x10] sm:$0xf]
    %v2563 = vld [vmem:[#allocation6 + $0x14] sm:$0xf]
    %v2564 = vld [vmem:[#allocation6 + $0x18] sm:$0xf]
    %v2565 = vld [vmem:[#allocation6 + $0x1c] sm:$0xf]
    %v2566 = vld [vmem:[#allocation6 + $0x20] sm:$0xf]
    %v2567 = vld [vmem:[#allocation6 + $0x24] sm:$0xf]
    %v2568 = vld [vmem:[#allocation6 + $0x28] sm:$0xf]
    %v2569 = vld [vmem:[#allocation6 + $0x2c] sm:$0xf]
    %v2570 = vld [vmem:[#allocation6 + $0x30] sm:$0xf]
    %v2571 = vld [vmem:[#allocation6 + $0x34] sm:$0xf]
    %v2572 = vld [vmem:[#allocation6 + $0x38] sm:$0xf]
    %v2573 = vld [vmem:[#allocation6 + $0x3c] sm:$0xf]
    %v2574 = vld [vmem:[#allocation6 + $0x40] sm:$0xf]
    %v2575 = vld [vmem:[#allocation6 + $0x44] sm:$0xf]
    %v2576 = vld [vmem:[#allocation6 + $0x48] sm:$0xf]
    %v2577 = vld [vmem:[#allocation6 + $0x4c] sm:$0xf]
    %v2578 = vld [vmem:[#allocation6 + $0x50] sm:$0xf]
    %v2579 = vld [vmem:[#allocation6 + $0x54] sm:$0xf]
    %v2580 = vld [vmem:[#allocation6 + $0x58] sm:$0xf]
    %v2581 = vld [vmem:[#allocation6 + $0x5c] sm:$0xf]
    %v2582 = vld [vmem:[#allocation6 + $0x60] sm:$0xf]
    %v2583 = vld [vmem:[#allocation6 + $0x64] sm:$0xf]
    %v2584 = vld [vmem:[#allocation6 + $0x68] sm:$0xf]
    %v2585 = vld [vmem:[#allocation6 + $0x6c] sm:$0xf]
    %v2586 = vld [vmem:[#allocation6 + $0x70] sm:$0xf]
    %v2587 = vld [vmem:[#allocation6 + $0x74] sm:$0xf]
    %v2588 = vld [vmem:[#allocation6 + $0x78] sm:$0xf]
    %v2589 = vld [vmem:[#allocation6 + $0x7c] sm:$0xf]
    %v2590 = vld [vmem:[#allocation6 + $0x80] sm:$0xf]
    %v2591 = vld [vmem:[#allocation6 + $0x84] sm:$0xf]
    %v2592 = vld [vmem:[#allocation6 + $0x88] sm:$0xf]
    %v2593 = vld [vmem:[#allocation6 + $0x8c] sm:$0xf]
    %v2594 = vld [vmem:[#allocation6 + $0x90] sm:$0xf]
    %v2595 = vld [vmem:[#allocation6 + $0x94] sm:$0xf]
    %v2596 = vld [vmem:[#allocation6 + $0x98] sm:$0xf]
    %v2597 = vld [vmem:[#allocation6 + $0x9c] sm:$0xf]
    %v2598 = vld [vmem:[#allocation6 + $0xa0] sm:$0xf]
    %v2599 = vld [vmem:[#allocation6 + $0xa4] sm:$0xf]
    %v2600 = vld [vmem:[#allocation6 + $0xa8] sm:$0xf]
    %v2601 = vld [vmem:[#allocation6 + $0xac] sm:$0xf]
    %v2602 = vld [vmem:[#allocation6 + $0xb0] sm:$0xf]
    %v2603 = vld [vmem:[#allocation6 + $0xb4] sm:$0xf]
    %v2604 = vld [vmem:[#allocation6 + $0xb8] sm:$0xf]
    %v2605 = vld [vmem:[#allocation6 + $0xbc] sm:$0xf]
    %v2606 = vld [vmem:[#allocation6 + $0xc0] sm:$0xf]
    %v2607 = vld [vmem:[#allocation6 + $0xc4] sm:$0xf]
    %v2608 = vld [vmem:[#allocation6 + $0xc8] sm:$0xf]
    %v2609 = vld [vmem:[#allocation6 + $0xcc] sm:$0xf]
    %v2610 = vld [vmem:[#allocation6 + $0xd0] sm:$0xf]
    %v2611 = vld [vmem:[#allocation6 + $0xd4] sm:$0xf]
    %v2612 = vld [vmem:[#allocation6 + $0xd8] sm:$0xf]
    %v2613 = vld [vmem:[#allocation6 + $0xdc] sm:$0xf]
    %v2614 = vld [vmem:[#allocation6 + $0xe0] sm:$0xf]
    %v2615 = vld [vmem:[#allocation6 + $0xe4] sm:$0xf]
    %v2616 = vld [vmem:[#allocation6 + $0xe8] sm:$0xf]
    %v2617 = vld [vmem:[#allocation6 + $0xec] sm:$0xf]
    %v2618 = vld [vmem:[#allocation6 + $0xf0] sm:$0xf]
    %v2619 = vld [vmem:[#allocation6 + $0xf4] sm:$0xf]
    %v2620 = vld [vmem:[#allocation6 + $0xf8] sm:$0xf]
    %v2621 = vld [vmem:[#allocation6 + $0xfc] sm:$0xf]
    %v2622 = vld [vmem:[%s6] sm:$0x1]
    %v2624 = vlaneseq
    %v2625 = vshrl.u32 %v2624, 7
    %v2626 = vsub.s32 0, %v2625
    %v2627 = vrot.slane %v2622, %v2626
    %v2693 = vunpack.c.l.b16 %v2558
    %v2694 = vunpack.c.l.b16 %v2559
    %v2695 = vunpack.c.l.b16 %v2560
    %v2696 = vunpack.c.l.b16 %v2561
    %v2697 = vunpack.c.l.b16 %v2562
    %v2698 = vunpack.c.l.b16 %v2563
    %v2699 = vunpack.c.l.b16 %v2564
    %v2700 = vunpack.c.l.b16 %v2565
    %v2701 = vunpack.c.l.b16 %v2566
    %v2702 = vunpack.c.l.b16 %v2567
    %v2703 = vunpack.c.l.b16 %v2568
    %v2704 = vunpack.c.l.b16 %v2569
    %v2705 = vunpack.c.l.b16 %v2570
    %v2706 = vunpack.c.l.b16 %v2571
    %v2707 = vunpack.c.l.b16 %v2572
    %v2708 = vunpack.c.l.b16 %v2573
    %v2709 = vunpack.c.l.b16 %v2574
    %v2710 = vunpack.c.l.b16 %v2575
    %v2711 = vunpack.c.l.b16 %v2576
    %v2712 = vunpack.c.l.b16 %v2577
    %v2713 = vunpack.c.l.b16 %v2578
    %v2714 = vunpack.c.l.b16 %v2579
    %v2715 = vunpack.c.l.b16 %v2580
    %v2716 = vunpack.c.l.b16 %v2581
    %v2717 = vunpack.c.l.b16 %v2582
    %v2718 = vunpack.c.l.b16 %v2583
    %v2719 = vunpack.c.l.b16 %v2584
    %v2720 = vunpack.c.l.b16 %v2585
    %v2721 = vunpack.c.l.b16 %v2586
    %v2722 = vunpack.c.l.b16 %v2587
    %v2723 = vunpack.c.l.b16 %v2588
    %v2724 = vunpack.c.l.b16 %v2589
    %v2725 = vunpack.c.l.b16 %v2590
    %v2726 = vunpack.c.l.b16 %v2591
    %v2727 = vunpack.c.l.b16 %v2592
    %v2728 = vunpack.c.l.b16 %v2593
    %v2729 = vunpack.c.l.b16 %v2594
    %v2730 = vunpack.c.l.b16 %v2595
    %v2731 = vunpack.c.l.b16 %v2596
    %v2732 = vunpack.c.l.b16 %v2597
    %v2733 = vunpack.c.l.b16 %v2598
    %v2734 = vunpack.c.l.b16 %v2599
    %v2735 = vunpack.c.l.b16 %v2600
    %v2736 = vunpack.c.l.b16 %v2601
    %v2737 = vunpack.c.l.b16 %v2602
    %v2738 = vunpack.c.l.b16 %v2603
    %v2739 = vunpack.c.l.b16 %v2604
    %v2740 = vunpack.c.l.b16 %v2605
    %v2741 = vunpack.c.l.b16 %v2606
    %v2742 = vunpack.c.l.b16 %v2607
    %v2743 = vunpack.c.l.b16 %v2608
    %v2744 = vunpack.c.l.b16 %v2609
    %v2745 = vunpack.c.l.b16 %v2610
    %v2746 = vunpack.c.l.b16 %v2611
    %v2747 = vunpack.c.l.b16 %v2612
    %v2748 = vunpack.c.l.b16 %v2613
    %v2749 = vunpack.c.l.b16 %v2614
    %v2750 = vunpack.c.l.b16 %v2615
    %v2751 = vunpack.c.l.b16 %v2616
    %v2752 = vunpack.c.l.b16 %v2617
    %v2753 = vunpack.c.l.b16 %v2618
    %v2754 = vunpack.c.l.b16 %v2619
    %v2755 = vunpack.c.l.b16 %v2620
    %v2756 = vunpack.c.l.b16 %v2621
    %v2757 = vpack.c.b16 %v2694, %v2693
    %v2758 = vpack.c.b16 %v2696, %v2695
    %v2759 = vpack.c.b16 %v2698, %v2697
    %v2760 = vpack.c.b16 %v2700, %v2699
    %v2761 = vpack.c.b16 %v2702, %v2701
    %v2762 = vpack.c.b16 %v2704, %v2703
    %v2763 = vpack.c.b16 %v2706, %v2705
    %v2764 = vpack.c.b16 %v2708, %v2707
    %v2765 = vpack.c.b16 %v2710, %v2709
    %v2766 = vpack.c.b16 %v2712, %v2711
    %v2767 = vpack.c.b16 %v2714, %v2713
    %v2768 = vpack.c.b16 %v2716, %v2715
    %v2769 = vpack.c.b16 %v2718, %v2717
    %v2770 = vpack.c.b16 %v2720, %v2719
    %v2771 = vpack.c.b16 %v2722, %v2721
    %v2772 = vpack.c.b16 %v2724, %v2723
    %v2773 = vpack.c.b16 %v2726, %v2725
    %v2774 = vpack.c.b16 %v2728, %v2727
    %v2775 = vpack.c.b16 %v2730, %v2729
    %v2776 = vpack.c.b16 %v2732, %v2731
    %v2777 = vpack.c.b16 %v2734, %v2733
    %v2778 = vpack.c.b16 %v2736, %v2735
    %v2779 = vpack.c.b16 %v2738, %v2737
    %v2780 = vpack.c.b16 %v2740, %v2739
    %v2781 = vpack.c.b16 %v2742, %v2741
    %v2782 = vpack.c.b16 %v2744, %v2743
    %v2783 = vpack.c.b16 %v2746, %v2745
    %v2784 = vpack.c.b16 %v2748, %v2747
    %v2785 = vpack.c.b16 %v2750, %v2749
    %v2786 = vpack.c.b16 %v2752, %v2751
    %v2787 = vpack.c.b16 %v2754, %v2753
    %v2788 = vpack.c.b16 %v2756, %v2755
    %2821 = vmatprep.subr.bf16.mxu0 0
    %2822 = vmatpush1.bf16.msra.mxu0 %v2757
    %2823 = vmatprep.subr.bf16.mxu0 0
    %2824 = vmatpush1.bf16.msra.mxu0 %v2758
    %2825 = vmatprep.subr.bf16.mxu0 0
    %2826 = vmatpush1.bf16.msra.mxu0 %v2759
    %2827 = vmatprep.subr.bf16.mxu0 0
    %2828 = vmatpush1.bf16.msra.mxu0 %v2760
    %2829 = vmatprep.subr.bf16.mxu0 0
    %2830 = vmatpush1.bf16.msra.mxu0 %v2761
    %2831 = vmatprep.subr.bf16.mxu0 0
    %2832 = vmatpush1.bf16.msra.mxu0 %v2762
    %2833 = vmatprep.subr.bf16.mxu0 0
    %2834 = vmatpush1.bf16.msra.mxu0 %v2763
    %2835 = vmatprep.subr.bf16.mxu0 0
    %2836 = vmatpush1.bf16.msra.mxu0 %v2764
    %2837 = vmatprep.subr.bf16.mxu0 0
    %2838 = vmatpush1.bf16.msra.mxu0 %v2765
    %2839 = vmatprep.subr.bf16.mxu0 0
    %2840 = vmatpush1.bf16.msra.mxu0 %v2766
    %2841 = vmatprep.subr.bf16.mxu0 0
    %2842 = vmatpush1.bf16.msra.mxu0 %v2767
    %2843 = vmatprep.subr.bf16.mxu0 0
    %2844 = vmatpush1.bf16.msra.mxu0 %v2768
    %2845 = vmatprep.subr.bf16.mxu0 0
    %2846 = vmatpush1.bf16.msra.mxu0 %v2769
    %2847 = vmatprep.subr.bf16.mxu0 0
    %2848 = vmatpush1.bf16.msra.mxu0 %v2770
    %2849 = vmatprep.subr.bf16.mxu0 0
    %2850 = vmatpush1.bf16.msra.mxu0 %v2771
    %2851 = vmatprep.subr.bf16.mxu0 0
    %2852 = vmatpush1.bf16.msra.mxu0 %v2772
    %2853 = vmatprep.mubr.bf16.mxu0 %v2555
    %2854 = vmatmul.mubr.bf16.gmra.mrb[0].mxu0 %v2554
    %v2855 = vpop.f32.mrb[0].mxu0
    %v2856 = vadd.f32 %v2627, %v2855
    %v2857 = vpop.f32.mrb[0].mxu0
    %v2858 = vpop.f32.mrb[0].mxu0
    %v2859 = vpop.f32.mrb[0].mxu0
    %2860 = vdwg.mxu0
    %2861 = vmatprep.subr.bf16.mxu0 0
    %2862 = vmatpush1.bf16.msra.mxu0 %v2773
    %2863 = vmatprep.subr.bf16.mxu0 0
    %2864 = vmatpush1.bf16.msra.mxu0 %v2774
    %2865 = vmatprep.subr.bf16.mxu0 0
    %2866 = vmatpush1.bf16.msra.mxu0 %v2775
    %2867 = vmatprep.subr.bf16.mxu0 0
    %2868 = vmatpush1.bf16.msra.mxu0 %v2776
    %2869 = vmatprep.subr.bf16.mxu0 0
    %2870 = vmatpush1.bf16.msra.mxu0 %v2777
    %2871 = vmatprep.subr.bf16.mxu0 0
    %2872 = vmatpush1.bf16.msra.mxu0 %v2778
    %2873 = vmatprep.subr.bf16.mxu0 0
    %2874 = vmatpush1.bf16.msra.mxu0 %v2779
    %2875 = vmatprep.subr.bf16.mxu0 0
    %2876 = vmatpush1.bf16.msra.mxu0 %v2780
    %2877 = vmatprep.subr.bf16.mxu0 0
    %2878 = vmatpush1.bf16.msra.mxu0 %v2781
    %2879 = vmatprep.subr.bf16.mxu0 0
    %2880 = vmatpush1.bf16.msra.mxu0 %v2782
    %2881 = vmatprep.subr.bf16.mxu0 0
    %2882 = vmatpush1.bf16.msra.mxu0 %v2783
    %2883 = vmatprep.subr.bf16.mxu0 0
    %2884 = vmatpush1.bf16.msra.mxu0 %v2784
    %2885 = vmatprep.subr.bf16.mxu0 0
    %2886 = vmatpush1.bf16.msra.mxu0 %v2785
    %2887 = vmatprep.subr.bf16.mxu0 0
    %2888 = vmatpush1.bf16.msra.mxu0 %v2786
    %2889 = vmatprep.subr.bf16.mxu0 0
    %2890 = vmatpush1.bf16.msra.mxu0 %v2787
    %2891 = vmatprep.subr.bf16.mxu0 0
    %2892 = vmatpush1.bf16.msra.mxu0 %v2788
    %2893 = vmatprep.mubr.bf16.mxu0 %v2557
    %2894 = vmatmul.mubr.bf16.gmra.mrb[0].mxu0 %v2556
    %v2895 = vpop.f32.mrb[0].mxu0
    %v2896 = vadd.f32 %v2856, %v2895
    %v2897 = vpop.f32.mrb[0].mxu0
    %v2898 = vpop.f32.mrb[0].mxu0
    %v2899 = vpop.f32.mrb[0].mxu0
    %2900 = vdwg.mxu0
    %2901 = vst [vmem:[%s7] sm:$0xff] %v2896
    // Predicated region
    $region42: #{cnn_model_binary_forward.1} parent=1 // pred_check
      _
    $region43: #{cnn_model_binary_forward.1} parent=1 // pred_check_branch
      %2903 = sbr.rel (0) target = $region45
    $region44: #{cnn_model_binary_forward.1} parent=1 // pred_region
      _
    $region45: #{cnn_model_binary_forward.1} parent=1 // pred_fallthru
      _
    // Predicated region
    $region46: #{cnn_model_binary_forward.1} parent=1 // pred_check
      _
    $region47: #{cnn_model_binary_forward.1} parent=1 // pred_check_branch
      %2905 = sbr.rel (0) target = $region49
    $region48: #{cnn_model_binary_forward.1} parent=1 // pred_region
      _
    $region49: #{cnn_model_binary_forward.1} parent=1 // pred_fallthru
      _
    %2906 = vsyncpa [#allocation3], 1
    %2907 = vsyncpa [#allocation5], 1

// kernel: cnn_model_binary_forward.1
$region0: #{cnn_model_binary_forward.1}
  #allocation0 [shape = 'u32[]', space=smem, size = 0x4, offset = 0x4, fixed_abs, tag = 'smem constant byte address 0x4 - core index']
  #allocation1 [shape = 'u32[144,128]{1,0:T(1,128)}', space=vmem, size = 0x12000, scoped, tag = 'internal scratch']
  %s0 = inlined_call_operand.vmem [shape: bf16[28,8,32], index: 0, kind: input, shape index: {}]
  %s1 = inlined_call_operand.hbm [shape: bf16[160,512], index: 1, kind: input, shape index: {}]
  %s2 = inlined_call_operand.vmem [shape: f32[1,192], index: 2, kind: input, shape index: {}]
  %s3 = inlined_call_operand.hbm [shape: bf16[960,256], index: 3, kind: input, shape index: {}]
  %s4 = inlined_call_operand.vmem [shape: f32[1,128], index: 4, kind: input, shape index: {}]
  %s5 = inlined_call_operand.hbm [shape: bf16[512,128], index: 5, kind: input, shape index: {}]
  %s6 = inlined_call_operand.vmem [shape: f32[1,128], index: 6, kind: input, shape index: {}]
  %s7 = inlined_call_operand.vmem [shape: f32[8,128], index: 7, kind: output, shape index: {}]
  %s8 = sld [smem:[#allocation0]]
  $region50: #{cnn_model_binary_forward.1} parent=0
    _
  %s10 = ssub.s32 1, %s8
  %s11 = scalar_select 0, %s10, %s8
  $region1: #{cnn_model_binary_forward.1} parent=0
    #allocation2 [shape = 'u8[163840]{0}', space=vmem, size = 0x28000, scoped, tag = 'input window, operand 1, single buffered']
    #allocation3 [shape = 's32[1]{0}', space=sflag, size = 0x4, scoped, tag = 'scoped memory for cnn_model_binary_forward.1']
    #allocation4 [shape = 'u8[491520]{0}', space=vmem, size = 0x78000, scoped, tag = 'input window, operand 3, single buffered']
    #allocation5 [shape = 's32[1]{0}', space=sflag, size = 0x4, scoped, tag = 'scoped memory for cnn_model_binary_forward.1']
    #allocation6 [shape = 'u8[131072]{0}', space=vmem, size = 0x20000, scoped, tag = 'input window, operand 5, single buffered']
    %12 = vsyncpa [#allocation3], 0
    %13 = vsyncpa [#allocation5], 0
    // Predicated region
    $region2: #{cnn_model_binary_forward.1} parent=1 // pred_check
      _
    $region3: #{cnn_model_binary_forward.1} parent=1 // pred_check_branch
      %15 = sbr.rel (0) target = $region5
    $region4: #{cnn_model_binary_forward.1} parent=1 // pred_region
      _
    $region5: #{cnn_model_binary_forward.1} parent=1 // pred_fallthru
      _
    // Predicated region
    $region6: #{cnn_model_binary_forward.1} parent=1 // pred_check
      _
    $region7: #{cnn_model_binary_forward.1} parent=1 // pred_check_branch
      %17 = sbr.rel (0) target = $region9
    $region8: #{cnn_model_binary_forward.1} parent=1 // pred_region
      %s19 = ssub.s32 5120, 5120
      %20 = vsyncadd [#allocation3], %s19
      %s21 = sshll.u32 [#allocation2], 4
      %s22 = int_to_ptr.vmem [resolvable:$true] %s21
      %27 = dma.hbm_to_vmem [thread:$0]  %s1, 5120, %s22, [#allocation3], 256, 256, 16
    $region9: #{cnn_model_binary_forward.1} parent=1 // pred_fallthru
      _
    // Predicated region
    $region10: #{cnn_model_binary_forward.1} parent=1 // pred_check
      _
    $region11: #{cnn_model_binary_forward.1} parent=1 // pred_check_branch
      %29 = sbr.rel (0) target = $region13
    $region12: #{cnn_model_binary_forward.1} parent=1 // pred_region
      _
    $region13: #{cnn_model_binary_forward.1} parent=1 // pred_fallthru
      _
    // Predicated region
    $region14: #{cnn_model_binary_forward.1} parent=1 // pred_check
      _
    $region15: #{cnn_model_binary_forward.1} parent=1 // pred_check_branch
      %31 = sbr.rel (0) target = $region17
    $region16: #{cnn_model_binary_forward.1} parent=1 // pred_region
      %s33 = ssub.s32 15360, 15360
      %34 = vsyncadd [#allocation5], %s33
      %s35 = sshll.u32 [#allocation4], 4
      %s36 = int_to_ptr.vmem [resolvable:$true] %s35
      %41 = dma.hbm_to_vmem [thread:$0]  %s3, 15360, %s36, [#allocation5], 128, 128, 8
    $region17: #{cnn_model_binary_forward.1} parent=1 // pred_fallthru
      _
    // Predicated region
    $region18: #{cnn_model_binary_forward.1} parent=1 // pred_check
      _
    $region19: #{cnn_model_binary_forward.1} parent=1 // pred_check_branch
      %43 = sbr.rel (0) target = $region21
    $region20: #{cnn_model_binary_forward.1} parent=1 // pred_region
      _
    $region21: #{cnn_model_binary_forward.1} parent=1 // pred_fallthru
      _
    // Predicated region
    $region22: #{cnn_model_binary_forward.1} parent=1 // pred_check
      _
    $region23: #{cnn_model_binary_forward.1} parent=1 // pred_check_branch
      %45 = sbr.rel (0) target = $region25
    $region24: #{cnn_model_binary_forward.1} parent=1 // pred_region
      %s47 = ssub.s32 4096, 4096
      %48 = vsyncadd [#allocation5], %s47
      %s49 = sshll.u32 [#allocation6], 4
      %s50 = int_to_ptr.vmem [resolvable:$true] %s49
      %55 = dma.hbm_to_vmem [thread:$0]  %s5, 4096, %s50, [#allocation5], 64, 64, 4
    $region25: #{cnn_model_binary_forward.1} parent=1 // pred_fallthru
      _
    // Predicated region
    $region26: #{cnn_model_binary_forward.1} parent=1 // pred_check
      _
    $region27: #{cnn_model_binary_forward.1} parent=1 // pred_check_branch
      %57 = sbr.rel (0) target = $region29
    $region28: #{cnn_model_binary_forward.1} parent=1 // pred_region
      _
    $region29: #{cnn_model_binary_forward.1} parent=1 // pred_fallthru
      _
    // Predicated region
    $region30: #{cnn_model_binary_forward.1} parent=1 // pred_check
      _
    $region31: #{cnn_model_binary_forward.1} parent=1 // pred_check_branch
      %59 = sbr.rel (0) target = $region33
    $region32: #{cnn_model_binary_forward.1} parent=1 // pred_region
      %60 = dma.done [#allocation3], 5120
    $region33: #{cnn_model_binary_forward.1} parent=1 // pred_fallthru
      _
    // Predicated region
    $region34: #{cnn_model_binary_forward.1} parent=1 // pred_check
      _
    $region35: #{cnn_model_binary_forward.1} parent=1 // pred_check_branch
      %62 = sbr.rel (0) target = $region37
    $region36: #{cnn_model_binary_forward.1} parent=1 // pred_region
      %63 = dma.done [#allocation5], 15360
    $region37: #{cnn_model_binary_forward.1} parent=1 // pred_fallthru
      _
    // Predicated region
    $region38: #{cnn_model_binary_forward.1} parent=1 // pred_check
      _
    $region39: #{cnn_model_binary_forward.1} parent=1 // pred_check_branch
      %65 = sbr.rel (0) target = $region41
    $region40: #{cnn_model_binary_forward.1} parent=1 // pred_region
      %66 = dma.done [#allocation5], 4096
    $region41: #{cnn_model_binary_forward.1} parent=1 // pred_fallthru
      _
    %v68 = vld [vmem:[%s0] sm:$0xf]
    %v69 = vld [vmem:[%s0 + $0x4] sm:$0xf]
    %v70 = vld [vmem:[%s0 + $0x8] sm:$0xf]
    %v71 = vld [vmem:[%s0 + $0xc] sm:$0xf]
    %v72 = vld [vmem:[%s0 + $0x10] sm:$0xf]
    %v73 = vld [vmem:[%s0 + $0x14] sm:$0xf]
    %v74 = vld [vmem:[%s0 + $0x18] sm:$0xf]
    %v75 = vld [vmem:[%s0 + $0x1c] sm:$0xf]
    %v76 = vld [vmem:[%s0 + $0x20] sm:$0xf]
    %v77 = vld [vmem:[%s0 + $0x24] sm:$0xf]
    %v78 = vld [vmem:[%s0 + $0x28] sm:$0xf]
    %v79 = vld [vmem:[%s0 + $0x2c] sm:$0xf]
    %v80 = vld [vmem:[%s0 + $0x30] sm:$0xf]
    %v81 = vld [vmem:[%s0 + $0x34] sm:$0xf]
    %v82 = vld [vmem:[%s0 + $0x38] sm:$0xf]
    %v83 = vld [vmem:[%s0 + $0x3c] sm:$0xf]
    %v84 = vld [vmem:[%s0 + $0x40] sm:$0xf]
    %v85 = vld [vmem:[%s0 + $0x44] sm:$0xf]
    %v86 = vld [vmem:[%s0 + $0x48] sm:$0xf]
    %v87 = vld [vmem:[%s0 + $0x4c] sm:$0xf]
    %v88 = vld [vmem:[%s0 + $0x50] sm:$0xf]
    %v89 = vld [vmem:[%s0 + $0x54] sm:$0xf]
    %v90 = vld [vmem:[%s0 + $0x58] sm:$0xf]
    %v91 = vld [vmem:[%s0 + $0x5c] sm:$0xf]
    %v92 = vld [vmem:[%s0 + $0x60] sm:$0xf]
    %v93 = vld [vmem:[%s0 + $0x64] sm:$0xf]
    %v94 = vld [vmem:[%s0 + $0x68] sm:$0xf]
    %v95 = vld [vmem:[%s0 + $0x6c] sm:$0xf]
    %v96 = vld [vmem:[#allocation2] sm:$0xff]
    %v97 = vld [vmem:[#allocation2 + $0x8] sm:$0xff]
    %v98 = vld [vmem:[#allocation2 + $0x10] sm:$0xff]
    %v99 = vld [vmem:[#allocation2 + $0x18] sm:$0xff]
    %v100 = vld [vmem:[#allocation2 + $0x20] sm:$0xff]
    %v101 = vld [vmem:[#allocation2 + $0x28] sm:$0xff]
    %v102 = vld [vmem:[#allocation2 + $0x30] sm:$0xff]
    %v103 = vld [vmem:[#allocation2 + $0x38] sm:$0xff]
    %v104 = vld [vmem:[#allocation2 + $0x40] sm:$0xff]
    %v105 = vld [vmem:[#allocation2 + $0x48] sm:$0xff]
    %v106 = vld [vmem:[#allocation2 + $0x50] sm:$0xff]
    %v107 = vld [vmem:[#allocation2 + $0x58] sm:$0xff]
    %v108 = vld [vmem:[#allocation2 + $0x60] sm:$0xff]
    %v109 = vld [vmem:[#allocation2 + $0x68] sm:$0xff]
    %v110 = vld [vmem:[#allocation2 + $0x70] sm:$0xff]
    %v111 = vld [vmem:[#allocation2 + $0x78] sm:$0xff]
    %v136 = vunpack.c.l.b16 %v69
    %v137 = vunpack.c.l.b16 %v70
    %v138 = vunpack.c.l.b16 %v71
    %v139 = vunpack.c.l.b16 %v72
    %v140 = vunpack.c.l.b16 %v73
    %v141 = vunpack.c.l.b16 %v74
    %v142 = vunpack.c.l.b16 %v75
    %v143 = vunpack.c.l.b16 %v76
    %v144 = vunpack.c.l.b16 %v77
    %v145 = vunpack.c.l.b16 %v78
    %v146 = vunpack.c.l.b16 %v79
    %v147 = vunpack.c.l.b16 %v80
    %v148 = vunpack.c.l.b16 %v81
    %v149 = vunpack.c.l.b16 %v82
    %v150 = vunpack.c.l.b16 %v83
    %v151 = vunpack.c.l.b16 %v84
    %v152 = vunpack.c.l.b16 %v85
    %v153 = vunpack.c.l.b16 %v86
    %v154 = vunpack.c.l.b16 %v87
    %v155 = vunpack.c.l.b16 %v88
    %v156 = vunpack.c.l.b16 %v89
    %v157 = vunpack.c.l.b16 %v90
    %v158 = vunpack.c.l.b16 %v91
    %v159 = vunpack.c.l.b16 %v92
    %v160 = vpack.c.b16 %v137, %v136
    %v161 = vpack.c.b16 %v139, %v138
    %v162 = vpack.c.b16 %v141, %v140
    %v163 = vpack.c.b16 %v143, %v142
    %v164 = vpack.c.b16 %v145, %v144
    %v165 = vpack.c.b16 %v147, %v146
    %v166 = vpack.c.b16 %v149, %v148
    %v167 = vpack.c.b16 %v151, %v150
    %v168 = vpack.c.b16 %v153, %v152
    %v169 = vpack.c.b16 %v155, %v154
    %v170 = vpack.c.b16 %v157, %v156
    %v171 = vpack.c.b16 %v159, %v158
    %v180 = vunpack.c.l.b16 %v104
    %v181 = vunpack.c.h.b16 %v104
    %v182 = vunpack.c.l.b16 %v105
    %v183 = vunpack.c.h.b16 %v105
    %v184 = vunpack.c.l.b16 %v106
    %v185 = vunpack.c.h.b16 %v106
    %v186 = vunpack.c.l.b16 %v107
    %v187 = vunpack.c.h.b16 %v107
    %v188 = vunpack.c.l.b16 %v108
    %v189 = vunpack.c.h.b16 %v108
    %v190 = vunpack.c.l.b16 %v109
    %v191 = vunpack.c.h.b16 %v109
    %v192 = vunpack.c.l.b16 %v110
    %v193 = vunpack.c.h.b16 %v110
    %v194 = vunpack.c.l.b16 %v111
    %v195 = vunpack.c.h.b16 %v111
    %v196 = vpack.c.b16 %v184, %v180
    %v197 = vpack.c.b16 %v185, %v181
    %v198 = vpack.c.b16 %v186, %v182
    %v199 = vpack.c.b16 %v187, %v183
    %v200 = vpack.c.b16 %v192, %v188
    %v201 = vpack.c.b16 %v193, %v189
    %v202 = vpack.c.b16 %v194, %v190
    %v203 = vpack.c.b16 %v195, %v191
    %vm212 = vcmask 261120
    %v214 = vsel %vm212, %v160, 0
    %v217 = vsel %vm212, %v161, 0
    %v220 = vsel %vm212, %v162, 0
    %v223 = vsel %vm212, %v163, 0
    %v226 = vsel %vm212, %v164, 0
    %v229 = vsel %vm212, %v165, 0
    %v232 = vsel %vm212, %v166, 0
    %v235 = vsel %vm212, %v167, 0
    %v238 = vsel %vm212, %v168, 0
    %v241 = vsel %vm212, %v169, 0
    %v244 = vsel %vm212, %v170, 0
    %v247 = vsel %vm212, %v171, 0
    %249 = vmatprep.subr.bf16.mxu0 %v197
    %250 = vmatpush1.bf16.msra.mxu0 %v196
    %251 = vmatprep.subr.bf16.mxu0 %v201
    %252 = vmatpush1.bf16.msra.mxu0 %v200
    %253 = vmatprep.subr.bf16.mxu0 0
    %254 = vmatpush1.bf16.msra.mxu0 0
    %255 = vmatprep.subr.bf16.mxu0 0
    %256 = vmatpush1.bf16.msra.mxu0 0
    %257 = vmatprep.subr.bf16.mxu0 0
    %258 = vmatpush1.bf16.msra.mxu0 0
    %259 = vmatprep.subr.bf16.mxu0 0
    %260 = vmatpush1.bf16.msra.mxu0 0
    %261 = vmatprep.subr.bf16.mxu0 0
    %262 = vmatpush1.bf16.msra.mxu0 0
    %263 = vmatprep.subr.bf16.mxu0 0
    %264 = vmatpush1.bf16.msra.mxu0 0
    %265 = vmatprep.subr.bf16.mxu0 0
    %266 = vmatpush1.bf16.msra.mxu0 0
    %267 = vmatprep.subr.bf16.mxu0 0
    %268 = vmatpush1.bf16.msra.mxu0 0
    %269 = vmatprep.subr.bf16.mxu0 0
    %270 = vmatpush1.bf16.msra.mxu0 0
    %271 = vmatprep.subr.bf16.mxu0 0
    %272 = vmatpush1.bf16.msra.mxu0 0
    %273 = vmatprep.subr.bf16.mxu0 0
    %274 = vmatpush1.bf16.msra.mxu0 0
    %275 = vmatprep.subr.bf16.mxu0 0
    %276 = vmatpush1.bf16.msra.mxu0 0
    %277 = vmatprep.subr.bf16.mxu0 0
    %278 = vmatpush1.bf16.msra.mxu0 0
    %279 = vmatprep.subr.bf16.mxu0 0
    %280 = vmatpush1.bf16.msra.mxu0 0
    %281 = vmatprep.mubr.bf16.mxu0 0
    %282 = vmatmul.mubr.bf16.gmra.mrb[0].mxu0 %v214
    %v283 = vpop.f32.mrb[0].mxu0
    %v284 = vadd.f32 0.0, %v283
    %v285 = vpop.f32.mrb[0].mxu0
    %v286 = vadd.f32 0.0, %v285
    %v287 = vpop.f32.mrb[0].mxu0
    %v288 = vadd.f32 0.0, %v287
    %v289 = vpop.f32.mrb[0].mxu0
    %v290 = vadd.f32 0.0, %v289
    %291 = vmatprep.mubr.bf16.mxu0 0
    %292 = vmatmul.mubr.bf16.gmra.mrb[0].mxu0 %v217
    %v293 = vpop.f32.mrb[0].mxu0
    %v294 = vadd.f32 0.0, %v293
    %v295 = vpop.f32.mrb[0].mxu0
    %v296 = vadd.f32 0.0, %v295
    %v297 = vpop.f32.mrb[0].mxu0
    %v298 = vadd.f32 0.0, %v297
    %v299 = vpop.f32.mrb[0].mxu0
    %v300 = vadd.f32 0.0, %v299
    %301 = vmatprep.mubr.bf16.mxu0 0
    %302 = vmatmul.mubr.bf16.gmra.mrb[0].mxu0 %v220
    %v303 = vpop.f32.mrb[0].mxu0
    %v304 = vadd.f32 0.0, %v303
    %v305 = vpop.f32.mrb[0].mxu0
    %v306 = vadd.f32 0.0, %v305
    %v307 = vpop.f32.mrb[0].mxu0
    %v308 = vadd.f32 0.0, %v307
    %v309 = vpop.f32.mrb[0].mxu0
    %v310 = vadd.f32 0.0, %v309
    %311 = vmatprep.mubr.bf16.mxu0 0
    %312 = vmatmul.mubr.bf16.gmra.mrb[0].mxu0 %v223
    %v313 = vpop.f32.mrb[0].mxu0
    %v314 = vadd.f32 0.0, %v313
    %v315 = vpop.f32.mrb[0].mxu0
    %v316 = vadd.f32 0.0, %v315
    %v317 = vpop.f32.mrb[0].mxu0
    %v318 = vadd.f32 0.0, %v317
    %v319 = vpop.f32.mrb[0].mxu0
    %v320 = vadd.f32 0.0, %v319
    %321 = vmatprep.mubr.bf16.mxu0 0
    %322 = vmatmul.mubr.bf16.gmra.mrb[0].mxu0 %v226
    %v323 = vpop.f32.mrb[0].mxu0
    %v324 = vadd.f32 0.0, %v323
    %v325 = vpop.f32.mrb[0].mxu0
    %v326 = vadd.f32 0.0, %v325
    %v327 = vpop.f32.mrb[0].mxu0
    %v328 = vadd.f32 0.0, %v327
    %v329 = vpop.f32.mrb[0].mxu0
    %v330 = vadd.f32 0.0, %v329
    %331 = vmatprep.mubr.bf16.mxu0 0
    %332 = vmatmul.mubr.bf16.gmra.mrb[0].mxu0 %v229
    %v333 = vpop.f32.mrb[0].mxu0
    %v334 = vadd.f32 0.0, %v333
    %v335 = vpop.f32.mrb[0].mxu0
    %v336 = vadd.f32 0.0, %v335
    %v337 = vpop.f32.mrb[0].mxu0
    %v338 = vadd.f32 0.0, %v337
    %v339 = vpop.f32.mrb[0].mxu0
    %v340 = vadd.f32 0.0, %v339
    %341 = vmatprep.mubr.bf16.mxu0 0
    %342 = vmatmul.mubr.bf16.gmra.mrb[0].mxu0 %v232
    %v343 = vpop.f32.mrb[0].mxu0
    %v344 = vadd.f32 0.0, %v343
    %v345 = vpop.f32.mrb[0].mxu0
    %v346 = vadd.f32 0.0, %v345
    %v347 = vpop.f32.mrb[0].mxu0
    %v348 = vadd.f32 0.0, %v347
    %v349 = vpop.f32.mrb[0].mxu0
    %v350 = vadd.f32 0.0, %v349
    %351 = vmatprep.mubr.bf16.mxu0 0
    %352 = vmatmul.mubr.bf16.gmra.mrb[0].mxu0 %v235
    %v353 = vpop.f32.mrb[0].mxu0
    %v354 = vadd.f32 0.0, %v353
    %v355 = vpop.f32.mrb[0].mxu0
    %v356 = vadd.f32 0.0, %v355
    %v357 = vpop.f32.mrb[0].mxu0
    %v358 = vadd.f32 0.0, %v357
    %v359 = vpop.f32.mrb[0].mxu0
    %v360 = vadd.f32 0.0, %v359
    %361 = vmatprep.mubr.bf16.mxu0 0
    %362 = vmatmul.mubr.bf16.gmra.mrb[0].mxu0 %v238
    %v363 = vpop.f32.mrb[0].mxu0
    %v364 = vadd.f32 0.0, %v363
    %v365 = vpop.f32.mrb[0].mxu0
    %v366 = vadd.f32 0.0, %v365
    %v367 = vpop.f32.mrb[0].mxu0
    %v368 = vadd.f32 0.0, %v367
    %v369 = vpop.f32.mrb[0].mxu0
    %v370 = vadd.f32 0.0, %v369
    %371 = vmatprep.mubr.bf16.mxu0 0
    %372 = vmatmul.mubr.bf16.gmra.mrb[0].mxu0 %v241
    %v373 = vpop.f32.mrb[0].mxu0
    %v374 = vadd.f32 0.0, %v373
    %v375 = vpop.f32.mrb[0].mxu0
    %v376 = vadd.f32 0.0, %v375
    %v377 = vpop.f32.mrb[0].mxu0
    %v378 = vadd.f32 0.0, %v377
    %v379 = vpop.f32.mrb[0].mxu0
    %v380 = vadd.f32 0.0, %v379
    %381 = vmatprep.mubr.bf16.mxu0 0
    %382 = vmatmul.mubr.bf16.gmra.mrb[0].mxu0 %v244
    %v383 = vpop.f32.mrb[0].mxu0
    %v384 = vadd.f32 0.0, %v383
    %v385 = vpop.f32.mrb[0].mxu0
    %v386 = vadd.f32 0.0, %v385
    %v387 = vpop.f32.mrb[0].mxu0
    %v388 = vadd.f32 0.0, %v387
    %v389 = vpop.f32.mrb[0].mxu0
    %v390 = vadd.f32 0.0, %v389
    %391 = vmatprep.mubr.bf16.mxu0 0
    %392 = vmatmul.mubr.bf16.gmra.mrb[0].mxu0 %v247
    %v393 = vpop.f32.mrb[0].mxu0
    %v394 = vadd.f32 0.0, %v393
    %v395 = vpop.f32.mrb[0].mxu0
    %v396 = vadd.f32 0.0, %v395
    %v397 = vpop.f32.mrb[0].mxu0
    %v398 = vadd.f32 0.0, %v397
    %v399 = vpop.f32.mrb[0].mxu0
    %v400 = vadd.f32 0.0, %v399
    %401 = vdwg.mxu0
    %402 = vmatprep.subr.bf16.mxu0 %v199
    %403 = vmatpush1.bf16.msra.mxu0 %v198
    %404 = vmatprep.subr.bf16.mxu0 %v203
    %405 = vmatpush1.bf16.msra.mxu0 %v202
    %406 = vmatprep.subr.bf16.mxu0 0
    %407 = vmatpush1.bf16.msra.mxu0 0
    %408 = vmatprep.subr.bf16.mxu0 0
    %409 = vmatpush1.bf16.msra.mxu0 0
    %410 = vmatprep.subr.bf16.mxu0 0
    %411 = vmatpush1.bf16.msra.mxu0 0
    %412 = vmatprep.subr.bf16.mxu0 0
    %413 = vmatpush1.bf16.msra.mxu0 0
    %414 = vmatprep.subr.bf16.mxu0 0
    %415 = vmatpush1.bf16.msra.mxu0 0
    %416 = vmatprep.subr.bf16.mxu0 0
    %417 = vmatpush1.bf16.msra.mxu0 0
    %418 = vmatprep.subr.bf16.mxu0 0
    %419 = vmatpush1.bf16.msra.mxu0 0
    %420 = vmatprep.subr.bf16.mxu0 0
    %421 = vmatpush1.bf16.msra.mxu0 0
    %422 = vmatprep.subr.bf16.mxu0 0
    %423 = vmatpush1.bf16.msra.mxu0 0
    %424 = vmatprep.subr.bf16.mxu0 0
    %425 = vmatpush1.bf16.msra.mxu0 0
    %426 = vmatprep.subr.bf16.mxu0 0
    %427 = vmatpush1.bf16.msra.mxu0 0
    %428 = vmatprep.subr.bf16.mxu0 0
    %429 = vmatpush1.bf16.msra.mxu0 0
    %430 = vmatprep.subr.bf16.mxu0 0
    %431 = vmatpush1.bf16.msra.mxu0 0
    %432 = vmatprep.subr.bf16.mxu0 0
    %433 = vmatpush1.bf16.msra.mxu0 0
    %434 = vmatprep.mubr.bf16.mxu0 0
    %435 = vmatmul.mubr.bf16.gmra.mrb[0].mxu0 %v214
    %v436 = vpop.f32.mrb[0].mxu0
    %v437 = vadd.f32 0.0, %v436
    %v438 = vpop.f32.mrb[0].mxu0
    %v439 = vadd.f32 0.0, %v438
    %v440 = vpop.f32.mrb[0].mxu0
    %v441 = vadd.f32 0.0, %v440
    %v442 = vpop.f32.mrb[0].mxu0
    %v443 = vadd.f32 0.0, %v442
    %444 = vmatprep.mubr.bf16.mxu0 0
    %445 = vmatmul.mubr.bf16.gmra.mrb[0].mxu0 %v217
    %v446 = vpop.f32.mrb[0].mxu0
    %v447 = vadd.f32 0.0, %v446
    %v448 = vpop.f32.mrb[0].mxu0
    %v449 = vadd.f32 0.0, %v448
    %v450 = vpop.f32.mrb[0].mxu0
    %v451 = vadd.f32 0.0, %v450
    %v452 = vpop.f32.mrb[0].mxu0
    %v453 = vadd.f32 0.0, %v452
    %454 = vmatprep.mubr.bf16.mxu0 0
    %455 = vmatmul.mubr.bf16.gmra.mrb[0].mxu0 %v220
    %v456 = vpop.f32.mrb[0].mxu0
    %v457 = vadd.f32 0.0, %v456
    %v458 = vpop.f32.mrb[0].mxu0
    %v459 = vadd.f32 0.0, %v458
    %v460 = vpop.f32.mrb[0].mxu0
    %v461 = vadd.f32 0.0, %v460
    %v462 = vpop.f32.mrb[0].mxu0
    %v463 = vadd.f32 0.0, %v462
    %464 = vmatprep.mubr.bf16.mxu0 0
    %465 = vmatmul.mubr.bf16.gmra.mrb[0].mxu0 %v223
    %v466 = vpop.f32.mrb[0].mxu0
    %v467 = vadd.f32 0.0, %v466
    %v468 = vpop.f32.mrb[0].mxu0
    %v469 = vadd.f32 0.0, %v468
    %v470 = vpop.f32.mrb[0].mxu0
    %v471 = vadd.f32 0.0, %v470
    %v472 = vpop.f32.mrb[0].mxu0
    %v473 = vadd.f32 0.0, %v472
    %474 = vmatprep.mubr.bf16.mxu0 0
    %475 = vmatmul.mubr.bf16.gmra.mrb[0].mxu0 %v226
    %v476 = vpop.f32.mrb[0].mxu0
    %v477 = vadd.f32 0.0, %v476
    %v478 = vpop.f32.mrb[0].mxu0
    %v479 = vadd.f32 0.0, %v478
    %v480 = vpop.f32.mrb[0].mxu0
    %v481 = vadd.f32 0.0, %v480
    %v482 = vpop.f32.mrb[0].mxu0
    %v483 = vadd.f32 0.0, %v482
    %484 = vmatprep.mubr.bf16.mxu0 0
    %485 = vmatmul.mubr.bf16.gmra.mrb[0].mxu0 %v229
    %v486 = vpop.f32.mrb[0].mxu0
    %v487 = vadd.f32 0.0, %v486
    %v488 = vpop.f32.mrb[0].mxu0
    %v489 = vadd.f32 0.0, %v488
    %v490 = vpop.f32.mrb[0].mxu0
    %v491 = vadd.f32 0.0, %v490
    %v492 = vpop.f32.mrb[0].mxu0
    %v493 = vadd.f32 0.0, %v492
    %494 = vmatprep.mubr.bf16.mxu0 0
    %495 = vmatmul.mubr.bf16.gmra.mrb[0].mxu0 %v232
    %v496 = vpop.f32.mrb[0].mxu0
    %v497 = vadd.f32 0.0, %v496
    %v498 = vpop.f32.mrb[0].mxu0
    %v499 = vadd.f32 0.0, %v498
    %v500 = vpop.f32.mrb[0].mxu0
    %v501 = vadd.f32 0.0, %v500
    %v502 = vpop.f32.mrb[0].mxu0
    %v503 = vadd.f32 0.0, %v502
    %504 = vmatprep.mubr.bf16.mxu0 0
    %505 = vmatmul.mubr.bf16.gmra.mrb[0].mxu0 %v235
    %v506 = vpop.f32.mrb[0].mxu0
    %v507 = vadd.f32 0.0, %v506
    %v508 = vpop.f32.mrb[0].mxu0
    %v509 = vadd.f32 0.0, %v508
    %v510 = vpop.f32.mrb[0].mxu0
    %v511 = vadd.f32 0.0, %v510
    %v512 = vpop.f32.mrb[0].mxu0
    %v513 = vadd.f32 0.0, %v512
    %514 = vmatprep.mubr.bf16.mxu0 0
    %515 = vmatmul.mubr.bf16.gmra.mrb[0].mxu0 %v238
    %v516 = vpop.f32.mrb[0].mxu0
    %v517 = vadd.f32 0.0, %v516
    %v518 = vpop.f32.mrb[0].mxu0
    %v519 = vadd.f32 0.0, %v518
    %v520 = vpop.f32.mrb[0].mxu0
    %v521 = vadd.f32 0.0, %v520
    %v522 = vpop.f32.mrb[0].mxu0
    %v523 = vadd.f32 0.0, %v522
    %524 = vmatprep.mubr.bf16.mxu0 0
    %525 = vmatmul.mubr.bf16.gmra.mrb[0].mxu0 %v241
    %v526 = vpop.f32.mrb[0].mxu0
    %v527 = vadd.f32 0.0, %v526
    %v528 = vpop.f32.mrb[0].mxu0
    %v529 = vadd.f32 0.0, %v528
    %v530 = vpop.f32.mrb[0].mxu0
    %v531 = vadd.f32 0.0, %v530
    %v532 = vpop.f32.mrb[0].mxu0
    %v533 = vadd.f32 0.0, %v532
    %534 = vmatprep.mubr.bf16.mxu0 0
    %535 = vmatmul.mubr.bf16.gmra.mrb[0].mxu0 %v244
    %v536 = vpop.f32.mrb[0].mxu0
    %v537 = vadd.f32 0.0, %v536
    %v538 = vpop.f32.mrb[0].mxu0
    %v539 = vadd.f32 0.0, %v538
    %v540 = vpop.f32.mrb[0].mxu0
    %v541 = vadd.f32 0.0, %v540
    %v542 = vpop.f32.mrb[0].mxu0
    %v543 = vadd.f32 0.0, %v542
    %544 = vmatprep.mubr.bf16.mxu0 0
    %545 = vmatmul.mubr.bf16.gmra.mrb[0].mxu0 %v247
    %v546 = vpop.f32.mrb[0].mxu0
    %v547 = vadd.f32 0.0, %v546
    %v548 = vpop.f32.mrb[0].mxu0
    %v549 = vadd.f32 0.0, %v548
    %v550 = vpop.f32.mrb[0].mxu0
    %v551 = vadd.f32 0.0, %v550
    %v552 = vpop.f32.mrb[0].mxu0
    %v553 = vadd.f32 0.0, %v552
    %554 = vdwg.mxu0
    %v556 = vunpack.c.l.b16 %v68
    %v557 = vpack.c.b16 %v136, %v556
    %v558 = vpack.c.b16 %v138, %v137
    %v559 = vpack.c.b16 %v140, %v139
    %v560 = vpack.c.b16 %v142, %v141
    %v561 = vpack.c.b16 %v144, %v143
    %v562 = vpack.c.b16 %v146, %v145
    %v563 = vpack.c.b16 %v148, %v147
    %v564 = vpack.c.b16 %v150, %v149
    %v565 = vpack.c.b16 %v152, %v151
    %v566 = vpack.c.b16 %v154, %v153
    %v567 = vpack.c.b16 %v156, %v155
    %v568 = vpack.c.b16 %v158, %v157
    %v577 = vunpack.c.l.b16 %v96
    %v578 = vunpack.c.h.b16 %v96
    %v579 = vunpack.c.l.b16 %v97
    %v580 = vunpack.c.h.b16 %v97
    %v581 = vunpack.c.l.b16 %v98
    %v582 = vunpack.c.h.b16 %v98
    %v583 = vunpack.c.l.b16 %v99
    %v584 = vunpack.c.h.b16 %v99
    %v585 = vunpack.c.l.b16 %v100
    %v586 = vunpack.c.h.b16 %v100
    %v587 = vunpack.c.l.b16 %v101
    %v588 = vunpack.c.h.b16 %v101
    %v589 = vunpack.c.l.b16 %v102
    %v590 = vunpack.c.h.b16 %v102
    %v591 = vunpack.c.l.b16 %v103
    %v592 = vunpack.c.h.b16 %v103
    %v593 = vpack.c.b16 %v581, %v577
    %v594 = vpack.c.b16 %v582, %v578
    %v595 = vpack.c.b16 %v583, %v579
    %v596 = vpack.c.b16 %v584, %v580
    %v597 = vpack.c.b16 %v589, %v585
    %v598 = vpack.c.b16 %v590, %v586
    %v599 = vpack.c.b16 %v591, %v587
    %v600 = vpack.c.b16 %v592, %v588
    %v610 = vsel %vm212, %v557, 0
    %v613 = vsel %vm212, %v558, 0
    %v616 = vsel %vm212, %v559, 0
    %v619 = vsel %vm212, %v560, 0
    %v622 = vsel %vm212, %v561, 0
    %v625 = vsel %vm212, %v562, 0
    %v628 = vsel %vm212, %v563, 0
    %v631 = vsel %vm212, %v564, 0
    %v634 = vsel %vm212, %v565, 0
    %v637 = vsel %vm212, %v566, 0
    %v640 = vsel %vm212, %v567, 0
    %v643 = vsel %vm212, %v568, 0
    %645 = vmatprep.subr.bf16.mxu0 %v594
    %646 = vmatpush1.bf16.msra.mxu0 %v593
    %647 = vmatprep.subr.bf16.mxu0 %v598
    %648 = vmatpush1.bf16.msra.mxu0 %v597
    %649 = vmatprep.subr.bf16.mxu0 0
    %650 = vmatpush1.bf16.msra.mxu0 0
    %651 = vmatprep.subr.bf16.mxu0 0
    %652 = vmatpush1.bf16.msra.mxu0 0
    %653 = vmatprep.subr.bf16.mxu0 0
    %654 = vmatpush1.bf16.msra.mxu0 0
    %655 = vmatprep.subr.bf16.mxu0 0
    %656 = vmatpush1.bf16.msra.mxu0 0
    %657 = vmatprep.subr.bf16.mxu0 0
    %658 = vmatpush1.bf16.msra.mxu0 0
    %659 = vmatprep.subr.bf16.mxu0 0
    %660 = vmatpush1.bf16.msra.mxu0 0
    %661 = vmatprep.subr.bf16.mxu0 0
    %662 = vmatpush1.bf16.msra.mxu0 0
    %663 = vmatprep.subr.bf16.mxu0 0
    %664 = vmatpush1.bf16.msra.mxu0 0
    %665 = vmatprep.subr.bf16.mxu0 0
    %666 = vmatpush1.bf16.msra.mxu0 0
    %667 = vmatprep.subr.bf16.mxu0 0
    %668 = vmatpush1.bf16.msra.mxu0 0
    %669 = vmatprep.subr.bf16.mxu0 0
    %670 = vmatpush1.bf16.msra.mxu0 0
    %671 = vmatprep.subr.bf16.mxu0 0
    %672 = vmatpush1.bf16.msra.mxu0 0
    %673 = vmatprep.subr.bf16.mxu0 0
    %674 = vmatpush1.bf16.msra.mxu0 0
    %675 = vmatprep.subr.bf16.mxu0 0
    %676 = vmatpush1.bf16.msra.mxu0 0
    %677 = vmatprep.mubr.bf16.mxu0 0
    %678 = vmatmul.mubr.bf16.gmra.mrb[0].mxu0 %v610
    %v679 = vpop.f32.mrb[0].mxu0
    %v680 = vadd.f32 %v284, %v679
    %v681 = vpop.f32.mrb[0].mxu0
    %v682 = vadd.f32 %v286, %v681
    %v683 = vpop.f32.mrb[0].mxu0
    %v684 = vadd.f32 %v288, %v683
    %v685 = vpop.f32.mrb[0].mxu0
    %v686 = vadd.f32 %v290, %v685
    %687 = vmatprep.mubr.bf16.mxu0 0
    %688 = vmatmul.mubr.bf16.gmra.mrb[0].mxu0 %v613
    %v689 = vpop.f32.mrb[0].mxu0
    %v690 = vadd.f32 %v294, %v689
    %v691 = vpop.f32.mrb[0].mxu0
    %v692 = vadd.f32 %v296, %v691
    %v693 = vpop.f32.mrb[0].mxu0
    %v694 = vadd.f32 %v298, %v693
    %v695 = vpop.f32.mrb[0].mxu0
    %v696 = vadd.f32 %v300, %v695
    %697 = vmatprep.mubr.bf16.mxu0 0
    %698 = vmatmul.mubr.bf16.gmra.mrb[0].mxu0 %v616
    %v699 = vpop.f32.mrb[0].mxu0
    %v700 = vadd.f32 %v304, %v699
    %v701 = vpop.f32.mrb[0].mxu0
    %v702 = vadd.f32 %v306, %v701
    %v703 = vpop.f32.mrb[0].mxu0
    %v704 = vadd.f32 %v308, %v703
    %v705 = vpop.f32.mrb[0].mxu0
    %v706 = vadd.f32 %v310, %v705
    %707 = vmatprep.mubr.bf16.mxu0 0
    %708 = vmatmul.mubr.bf16.gmra.mrb[0].mxu0 %v619
    %v709 = vpop.f32.mrb[0].mxu0
    %v710 = vadd.f32 %v314, %v709
    %v711 = vpop.f32.mrb[0].mxu0
    %v712 = vadd.f32 %v316, %v711
    %v713 = vpop.f32.mrb[0].mxu0
    %v714 = vadd.f32 %v318, %v713
    %v715 = vpop.f32.mrb[0].mxu0
    %v716 = vadd.f32 %v320, %v715
    %717 = vmatprep.mubr.bf16.mxu0 0
    %718 = vmatmul.mubr.bf16.gmra.mrb[0].mxu0 %v622
    %v719 = vpop.f32.mrb[0].mxu0
    %v720 = vadd.f32 %v324, %v719
    %v721 = vpop.f32.mrb[0].mxu0
    %v722 = vadd.f32 %v326, %v721
    %v723 = vpop.f32.mrb[0].mxu0
    %v724 = vadd.f32 %v328, %v723
    %v725 = vpop.f32.mrb[0].mxu0
    %v726 = vadd.f32 %v330, %v725
    %727 = vmatprep.mubr.bf16.mxu0 0
    %728 = vmatmul.mubr.bf16.gmra.mrb[0].mxu0 %v625
    %v729 = vpop.f32.mrb[0].mxu0
    %v730 = vadd.f32 %v334, %v729
    %v731 = vpop.f32.mrb[0].mxu0
    %v732 = vadd.f32 %v336, %v731
    %v733 = vpop.f32.mrb[0].mxu0
    %v734 = vadd.f32 %v338, %v733
    %v735 = vpop.f32.mrb[0].mxu0
    %v736 = vadd.f32 %v340, %v735
    %737 = vmatprep.mubr.bf16.mxu0 0
    %738 = vmatmul.mubr.bf16.gmra.mrb[0].mxu0 %v628
    %v739 = vpop.f32.mrb[0].mxu0
    %v740 = vadd.f32 %v344, %v739
    %v741 = vpop.f32.mrb[0].mxu0
    %v742 = vadd.f32 %v346, %v741
    %v743 = vpop.f32.mrb[0].mxu0
    %v744 = vadd.f32 %v348, %v743
    %v745 = vpop.f32.mrb[0].mxu0
    %v746 = vadd.f32 %v350, %v745
    %747 = vmatprep.mubr.bf16.mxu0 0
    %748 = vmatmul.mubr.bf16.gmra.mrb[0].mxu0 %v631
    %v749 = vpop.f32.mrb[0].mxu0
    %v750 = vadd.f32 %v354, %v749
    %v751 = vpop.f32.mrb[0].mxu0
    %v752 = vadd.f32 %v356, %v751
    %v753 = vpop.f32.mrb[0].mxu0
    %v754 = vadd.f32 %v358, %v753
    %v755 = vpop.f32.mrb[0].mxu0
    %v756 = vadd.f32 %v360, %v755
    %757 = vmatprep.mubr.bf16.mxu0 0
    %758 = vmatmul.mubr.bf16.gmra.mrb[0].mxu0 %v634
    %v759 = vpop.f32.mrb[0].mxu0
    %v760 = vadd.f32 %v364, %v759
    %v761 = vpop.f32.mrb[0].mxu0
    %v762 = vadd.f32 %v366, %v761
    %v763 = vpop.f32.mrb[0].mxu0
    %v764 = vadd.f32 %v368, %v763
    %v765 = vpop.f32.mrb[0].mxu0
    %v766 = vadd.f32 %v370, %v765
    %767 = vmatprep.mubr.bf16.mxu0 0
    %768 = vmatmul.mubr.bf16.gmra.mrb[0].mxu0 %v637
    %v769 = vpop.f32.mrb[0].mxu0
    %v770 = vadd.f32 %v374, %v769
    %v771 = vpop.f32.mrb[0].mxu0
    %v772 = vadd.f32 %v376, %v771
    %v773 = vpop.f32.mrb[0].mxu0
    %v774 = vadd.f32 %v378, %v773
    %v775 = vpop.f32.mrb[0].mxu0
    %v776 = vadd.f32 %v380, %v775
    %777 = vmatprep.mubr.bf16.mxu0 0
    %778 = vmatmul.mubr.bf16.gmra.mrb[0].mxu0 %v640
    %v779 = vpop.f32.mrb[0].mxu0
    %v780 = vadd.f32 %v384, %v779
    %v781 = vpop.f32.mrb[0].mxu0
    %v782 = vadd.f32 %v386, %v781
    %v783 = vpop.f32.mrb[0].mxu0
    %v784 = vadd.f32 %v388, %v783
    %v785 = vpop.f32.mrb[0].mxu0
    %v786 = vadd.f32 %v390, %v785
    %787 = vmatprep.mubr.bf16.mxu0 0
    %788 = vmatmul.mubr.bf16.gmra.mrb[0].mxu0 %v643
    %v789 = vpop.f32.mrb[0].mxu0
    %v790 = vadd.f32 %v394, %v789
    %v791 = vpop.f32.mrb[0].mxu0
    %v792 = vadd.f32 %v396, %v791
    %v793 = vpop.f32.mrb[0].mxu0
    %v794 = vadd.f32 %v398, %v793
    %v795 = vpop.f32.mrb[0].mxu0
    %v796 = vadd.f32 %v400, %v795
    %797 = vdwg.mxu0
    %798 = vmatprep.subr.bf16.mxu0 %v596
    %799 = vmatpush1.bf16.msra.mxu0 %v595
    %800 = vmatprep.subr.bf16.mxu0 %v600
    %801 = vmatpush1.bf16.msra.mxu0 %v599
    %802 = vmatprep.subr.bf16.mxu0 0
    %803 = vmatpush1.bf16.msra.mxu0 0
    %804 = vmatprep.subr.bf16.mxu0 0
    %805 = vmatpush1.bf16.msra.mxu0 0
    %806 = vmatprep.subr.bf16.mxu0 0
    %807 = vmatpush1.bf16.msra.mxu0 0
    %808 = vmatprep.subr.bf16.mxu0 0
    %809 = vmatpush1.bf16.msra.mxu0 0
    %810 = vmatprep.subr.bf16.mxu0 0
    %811 = vmatpush1.bf16.msra.mxu0 0
    %812 = vmatprep.subr.bf16.mxu0 0
    %813 = vmatpush1.bf16.msra.mxu0 0
    %814 = vmatprep.subr.bf16.mxu0 0
    %815 = vmatpush1.bf16.msra.mxu0 0
    %816 = vmatprep.subr.bf16.mxu0 0
    %817 = vmatpush1.bf16.msra.mxu0 0
    %818 = vmatprep.subr.bf16.mxu0 0
    %819 = vmatpush1.bf16.msra.mxu0 0
    %820 = vmatprep.subr.bf16.mxu0 0
    %821 = vmatpush1.bf16.msra.mxu0 0
    %822 = vmatprep.subr.bf16.mxu0 0
    %823 = vmatpush1.bf16.msra.mxu0 0
    %824 = vmatprep.subr.bf16.mxu0 0
    %825 = vmatpush1.bf16.msra.mxu0 0
    %826 = vmatprep.subr.bf16.mxu0 0
    %827 = vmatpush1.bf16.msra.mxu0 0
    %828 = vmatprep.subr.bf16.mxu0 0
    %829 = vmatpush1.bf16.msra.mxu0 0
    %830 = vmatprep.mubr.bf16.mxu0 0
    %831 = vmatmul.mubr.bf16.gmra.mrb[0].mxu0 %v610
    %v832 = vpop.f32.mrb[0].mxu0
    %v833 = vadd.f32 %v437, %v832
    %v834 = vpop.f32.mrb[0].mxu0
    %v835 = vadd.f32 %v439, %v834
    %v836 = vpop.f32.mrb[0].mxu0
    %v837 = vadd.f32 %v441, %v836
    %v838 = vpop.f32.mrb[0].mxu0
    %v839 = vadd.f32 %v443, %v838
    %840 = vmatprep.mubr.bf16.mxu0 0
    %841 = vmatmul.mubr.bf16.gmra.mrb[0].mxu0 %v613
    %v842 = vpop.f32.mrb[0].mxu0
    %v843 = vadd.f32 %v447, %v842
    %v844 = vpop.f32.mrb[0].mxu0
    %v845 = vadd.f32 %v449, %v844
    %v846 = vpop.f32.mrb[0].mxu0
    %v847 = vadd.f32 %v451, %v846
    %v848 = vpop.f32.mrb[0].mxu0
    %v849 = vadd.f32 %v453, %v848
    %850 = vmatprep.mubr.bf16.mxu0 0
    %851 = vmatmul.mubr.bf16.gmra.mrb[0].mxu0 %v616
    %v852 = vpop.f32.mrb[0].mxu0
    %v853 = vadd.f32 %v457, %v852
    %v854 = vpop.f32.mrb[0].mxu0
    %v855 = vadd.f32 %v459, %v854
    %v856 = vpop.f32.mrb[0].mxu0
    %v857 = vadd.f32 %v461, %v856
    %v858 = vpop.f32.mrb[0].mxu0
    %v859 = vadd.f32 %v463, %v858
    %860 = vmatprep.mubr.bf16.mxu0 0
    %861 = vmatmul.mubr.bf16.gmra.mrb[0].mxu0 %v619
    %v862 = vpop.f32.mrb[0].mxu0
    %v863 = vadd.f32 %v467, %v862
    %v864 = vpop.f32.mrb[0].mxu0
    %v865 = vadd.f32 %v469, %v864
    %v866 = vpop.f32.mrb[0].mxu0
    %v867 = vadd.f32 %v471, %v866
    %v868 = vpop.f32.mrb[0].mxu0
    %v869 = vadd.f32 %v473, %v868
    %870 = vmatprep.mubr.bf16.mxu0 0
    %871 = vmatmul.mubr.bf16.gmra.mrb[0].mxu0 %v622
    %v872 = vpop.f32.mrb[0].mxu0
    %v873 = vadd.f32 %v477, %v872
    %v874 = vpop.f32.mrb[0].mxu0
    %v875 = vadd.f32 %v479, %v874
    %v876 = vpop.f32.mrb[0].mxu0
    %v877 = vadd.f32 %v481, %v876
    %v878 = vpop.f32.mrb[0].mxu0
    %v879 = vadd.f32 %v483, %v878
    %880 = vmatprep.mubr.bf16.mxu0 0
    %881 = vmatmul.mubr.bf16.gmra.mrb[0].mxu0 %v625
    %v882 = vpop.f32.mrb[0].mxu0
    %v883 = vadd.f32 %v487, %v882
    %v884 = vpop.f32.mrb[0].mxu0
    %v885 = vadd.f32 %v489, %v884
    %v886 = vpop.f32.mrb[0].mxu0
    %v887 = vadd.f32 %v491, %v886
    %v888 = vpop.f32.mrb[0].mxu0
    %v889 = vadd.f32 %v493, %v888
    %890 = vmatprep.mubr.bf16.mxu0 0
    %891 = vmatmul.mubr.bf16.gmra.mrb[0].mxu0 %v628
    %v892 = vpop.f32.mrb[0].mxu0
    %v893 = vadd.f32 %v497, %v892
    %v894 = vpop.f32.mrb[0].mxu0
    %v895 = vadd.f32 %v499, %v894
    %v896 = vpop.f32.mrb[0].mxu0
    %v897 = vadd.f32 %v501, %v896
    %v898 = vpop.f32.mrb[0].mxu0
    %v899 = vadd.f32 %v503, %v898
    %900 = vmatprep.mubr.bf16.mxu0 0
    %901 = vmatmul.mubr.bf16.gmra.mrb[0].mxu0 %v631
    %v902 = vpop.f32.mrb[0].mxu0
    %v903 = vadd.f32 %v507, %v902
    %v904 = vpop.f32.mrb[0].mxu0
    %v905 = vadd.f32 %v509, %v904
    %v906 = vpop.f32.mrb[0].mxu0
    %v907 = vadd.f32 %v511, %v906
    %v908 = vpop.f32.mrb[0].mxu0
    %v909 = vadd.f32 %v513, %v908
    %910 = vmatprep.mubr.bf16.mxu0 0
    %911 = vmatmul.mubr.bf16.gmra.mrb[0].mxu0 %v634
    %v912 = vpop.f32.mrb[0].mxu0
    %v913 = vadd.f32 %v517, %v912
    %v914 = vpop.f32.mrb[0].mxu0
    %v915 = vadd.f32 %v519, %v914
    %v916 = vpop.f32.mrb[0].mxu0
    %v917 = vadd.f32 %v521, %v916
    %v918 = vpop.f32.mrb[0].mxu0
    %v919 = vadd.f32 %v523, %v918
    %920 = vmatprep.mubr.bf16.mxu0 0
    %921 = vmatmul.mubr.bf16.gmra.mrb[0].mxu0 %v637
    %v922 = vpop.f32.mrb[0].mxu0
    %v923 = vadd.f32 %v527, %v922
    %v924 = vpop.f32.mrb[0].mxu0
    %v925 = vadd.f32 %v529, %v924
    %v926 = vpop.f32.mrb[0].mxu0
    %v927 = vadd.f32 %v531, %v926
    %v928 = vpop.f32.mrb[0].mxu0
    %v929 = vadd.f32 %v533, %v928
    %930 = vmatprep.mubr.bf16.mxu0 0
    %931 = vmatmul.mubr.bf16.gmra.mrb[0].mxu0 %v640
    %v932 = vpop.f32.mrb[0].mxu0
    %v933 = vadd.f32 %v537, %v932
    %v934 = vpop.f32.mrb[0].mxu0
    %v935 = vadd.f32 %v539, %v934
    %v936 = vpop.f32.mrb[0].mxu0
    %v937 = vadd.f32 %v541, %v936
    %v938 = vpop.f32.mrb[0].mxu0
    %v939 = vadd.f32 %v543, %v938
    %940 = vmatprep.mubr.bf16.mxu0 0
    %941 = vmatmul.mubr.bf16.gmra.mrb[0].mxu0 %v643
    %v942 = vpop.f32.mrb[0].mxu0
    %v943 = vadd.f32 %v547, %v942
    %v944 = vpop.f32.mrb[0].mxu0
    %v945 = vadd.f32 %v549, %v944
    %v946 = vpop.f32.mrb[0].mxu0
    %v947 = vadd.f32 %v551, %v946
    %v948 = vpop.f32.mrb[0].mxu0
    %v949 = vadd.f32 %v553, %v948
    %950 = vdwg.mxu0
    %v951 = vld [vmem:[#allocation2 + $0x80] sm:$0xff]
    %v952 = vld [vmem:[#allocation2 + $0x88] sm:$0xff]
    %v953 = vld [vmem:[#allocation2 + $0x90] sm:$0xff]
    %v954 = vld [vmem:[#allocation2 + $0x98] sm:$0xff]
    %v955 = vld [vmem:[#allocation2 + $0xa0] sm:$0xff]
    %v956 = vld [vmem:[#allocation2 + $0xa8] sm:$0xff]
    %v957 = vld [vmem:[#allocation2 + $0xb0] sm:$0xff]
    %v958 = vld [vmem:[#allocation2 + $0xb8] sm:$0xff]
    %v960 = vunpack.c.l.b16 %v93
    %v961 = vpack.c.b16 %v960, %v159
    %v970 = vunpack.c.l.b16 %v951
    %v971 = vunpack.c.h.b16 %v951
    %v972 = vunpack.c.l.b16 %v952
    %v973 = vunpack.c.h.b16 %v952
    %v974 = vunpack.c.l.b16 %v953
    %v975 = vunpack.c.h.b16 %v953
    %v976 = vunpack.c.l.b16 %v954
    %v977 = vunpack.c.h.b16 %v954
    %v978 = vunpack.c.l.b16 %v955
    %v979 = vunpack.c.h.b16 %v955
    %v980 = vunpack.c.l.b16 %v956
    %v981 = vunpack.c.h.b16 %v956
    %v982 = vunpack.c.l.b16 %v957
    %v983 = vunpack.c.h.b16 %v957
    %v984 = vunpack.c.l.b16 %v958
    %v985 = vunpack.c.h.b16 %v958
    %v986 = vpack.c.b16 %v974, %v970
    %v987 = vpack.c.b16 %v975, %v971
    %v988 = vpack.c.b16 %v976, %v972
    %v989 = vpack.c.b16 %v977, %v973
    %v990 = vpack.c.b16 %v982, %v978
    %v991 = vpack.c.b16 %v983, %v979
    %v992 = vpack.c.b16 %v984, %v980
    %v993 = vpack.c.b16 %v985, %v981
    %v1003 = vsel %vm212, %v961, 0
    %1005 = vmatprep.subr.bf16.mxu0 %v987
    %1006 = vmatpush1.bf16.msra.mxu0 %v986
    %1007 = vmatprep.subr.bf16.mxu0 %v991
    %1008 = vmatpush1.bf16.msra.mxu0 %v990
    %1009 = vmatprep.subr.bf16.mxu0 0
    %1010 = vmatpush1.bf16.msra.mxu0 0
    %1011 = vmatprep.subr.bf16.mxu0 0
    %1012 = vmatpush1.bf16.msra.mxu0 0
    %1013 = vmatprep.subr.bf16.mxu0 0
    %1014 = vmatpush1.bf16.msra.mxu0 0
    %1015 = vmatprep.subr.bf16.mxu0 0
    %1016 = vmatpush1.bf16.msra.mxu0 0
    %1017 = vmatprep.subr.bf16.mxu0 0
    %1018 = vmatpush1.bf16.msra.mxu0 0
    %1019 = vmatprep.subr.bf16.mxu0 0
    %1020 = vmatpush1.bf16.msra.mxu0 0
    %1021 = vmatprep.subr.bf16.mxu0 0
    %1022 = vmatpush1.bf16.msra.mxu0 0
    %1023 = vmatprep.subr.bf16.mxu0 0
    %1024 = vmatpush1.bf16.msra.mxu0 0
    %1025 = vmatprep.subr.bf16.mxu0 0
    %1026 = vmatpush1.bf16.msra.mxu0 0
    %1027 = vmatprep.subr.bf16.mxu0 0
    %1028 = vmatpush1.bf16.msra.mxu0 0
    %1029 = vmatprep.subr.bf16.mxu0 0
    %1030 = vmatpush1.bf16.msra.mxu0 0
    %1031 = vmatprep.subr.bf16.mxu0 0
    %1032 = vmatpush1.bf16.msra.mxu0 0
    %1033 = vmatprep.subr.bf16.mxu0 0
    %1034 = vmatpush1.bf16.msra.mxu0 0
    %1035 = vmatprep.subr.bf16.mxu0 0
    %1036 = vmatpush1.bf16.msra.mxu0 0
    %1037 = vmatprep.mubr.bf16.mxu0 0
    %1038 = vmatmul.mubr.bf16.gmra.mrb[0].mxu0 %v613
    %v1039 = vpop.f32.mrb[0].mxu0
    %v1040 = vadd.f32 0.0, %v1039
    %v1041 = vpop.f32.mrb[0].mxu0
    %v1042 = vadd.f32 0.0, %v1041
    %v1043 = vpop.f32.mrb[0].mxu0
    %v1044 = vadd.f32 0.0, %v1043
    %v1045 = vpop.f32.mrb[0].mxu0
    %v1046 = vadd.f32 0.0, %v1045
    %1047 = vmatprep.mubr.bf16.mxu0 0
    %1048 = vmatmul.mubr.bf16.gmra.mrb[0].mxu0 %v616
    %v1049 = vpop.f32.mrb[0].mxu0
    %v1050 = vadd.f32 0.0, %v1049
    %v1051 = vpop.f32.mrb[0].mxu0
    %v1052 = vadd.f32 0.0, %v1051
    %v1053 = vpop.f32.mrb[0].mxu0
    %v1054 = vadd.f32 0.0, %v1053
    %v1055 = vpop.f32.mrb[0].mxu0
    %v1056 = vadd.f32 0.0, %v1055
    %1057 = vmatprep.mubr.bf16.mxu0 0
    %1058 = vmatmul.mubr.bf16.gmra.mrb[0].mxu0 %v619
    %v1059 = vpop.f32.mrb[0].mxu0
    %v1060 = vadd.f32 0.0, %v1059
    %v1061 = vpop.f32.mrb[0].mxu0
    %v1062 = vadd.f32 0.0, %v1061
    %v1063 = vpop.f32.mrb[0].mxu0
    %v1064 = vadd.f32 0.0, %v1063
    %v1065 = vpop.f32.mrb[0].mxu0
    %v1066 = vadd.f32 0.0, %v1065
    %1067 = vmatprep.mubr.bf16.mxu0 0
    %1068 = vmatmul.mubr.bf16.gmra.mrb[0].mxu0 %v622
    %v1069 = vpop.f32.mrb[0].mxu0
    %v1070 = vadd.f32 0.0, %v1069
    %v1071 = vpop.f32.mrb[0].mxu0
    %v1072 = vadd.f32 0.0, %v1071
    %v1073 = vpop.f32.mrb[0].mxu0
    %v1074 = vadd.f32 0.0, %v1073
    %v1075 = vpop.f32.mrb[0].mxu0
    %v1076 = vadd.f32 0.0, %v1075
    %1077 = vmatprep.mubr.bf16.mxu0 0
    %1078 = vmatmul.mubr.bf16.gmra.mrb[0].mxu0 %v625
    %v1079 = vpop.f32.mrb[0].mxu0
    %v1080 = vadd.f32 0.0, %v1079
    %v1081 = vpop.f32.mrb[0].mxu0
    %v1082 = vadd.f32 0.0, %v1081
    %v1083 = vpop.f32.mrb[0].mxu0
    %v1084 = vadd.f32 0.0, %v1083
    %v1085 = vpop.f32.mrb[0].mxu0
    %v1086 = vadd.f32 0.0, %v1085
    %1087 = vmatprep.mubr.bf16.mxu0 0
    %1088 = vmatmul.mubr.bf16.gmra.mrb[0].mxu0 %v628
    %v1089 = vpop.f32.mrb[0].mxu0
    %v1090 = vadd.f32 0.0, %v1089
    %v1091 = vpop.f32.mrb[0].mxu0
    %v1092 = vadd.f32 0.0, %v1091
    %v1093 = vpop.f32.mrb[0].mxu0
    %v1094 = vadd.f32 0.0, %v1093
    %v1095 = vpop.f32.mrb[0].mxu0
    %v1096 = vadd.f32 0.0, %v1095
    %1097 = vmatprep.mubr.bf16.mxu0 0
    %1098 = vmatmul.mubr.bf16.gmra.mrb[0].mxu0 %v631
    %v1099 = vpop.f32.mrb[0].mxu0
    %v1100 = vadd.f32 0.0, %v1099
    %v1101 = vpop.f32.mrb[0].mxu0
    %v1102 = vadd.f32 0.0, %v1101
    %v1103 = vpop.f32.mrb[0].mxu0
    %v1104 = vadd.f32 0.0, %v1103
    %v1105 = vpop.f32.mrb[0].mxu0
    %v1106 = vadd.f32 0.0, %v1105
    %1107 = vmatprep.mubr.bf16.mxu0 0
    %1108 = vmatmul.mubr.bf16.gmra.mrb[0].mxu0 %v634
    %v1109 = vpop.f32.mrb[0].mxu0
    %v1110 = vadd.f32 0.0, %v1109
    %v1111 = vpop.f32.mrb[0].mxu0
    %v1112 = vadd.f32 0.0, %v1111
    %v1113 = vpop.f32.mrb[0].mxu0
    %v1114 = vadd.f32 0.0, %v1113
    %v1115 = vpop.f32.mrb[0].mxu0
    %v1116 = vadd.f32 0.0, %v1115
    %1117 = vmatprep.mubr.bf16.mxu0 0
    %1118 = vmatmul.mubr.bf16.gmra.mrb[0].mxu0 %v637
    %v1119 = vpop.f32.mrb[0].mxu0
    %v1120 = vadd.f32 0.0, %v1119
    %v1121 = vpop.f32.mrb[0].mxu0
    %v1122 = vadd.f32 0.0, %v1121
    %v1123 = vpop.f32.mrb[0].mxu0
    %v1124 = vadd.f32 0.0, %v1123
    %v1125 = vpop.f32.mrb[0].mxu0
    %v1126 = vadd.f32 0.0, %v1125
    %1127 = vmatprep.mubr.bf16.mxu0 0
    %1128 = vmatmul.mubr.bf16.gmra.mrb[0].mxu0 %v640
    %v1129 = vpop.f32.mrb[0].mxu0
    %v1130 = vadd.f32 0.0, %v1129
    %v1131 = vpop.f32.mrb[0].mxu0
    %v1132 = vadd.f32 0.0, %v1131
    %v1133 = vpop.f32.mrb[0].mxu0
    %v1134 = vadd.f32 0.0, %v1133
    %v1135 = vpop.f32.mrb[0].mxu0
    %v1136 = vadd.f32 0.0, %v1135
    %1137 = vmatprep.mubr.bf16.mxu0 0
    %1138 = vmatmul.mubr.bf16.gmra.mrb[0].mxu0 %v643
    %v1139 = vpop.f32.mrb[0].mxu0
    %v1140 = vadd.f32 0.0, %v1139
    %v1141 = vpop.f32.mrb[0].mxu0
    %v1142 = vadd.f32 0.0, %v1141
    %v1143 = vpop.f32.mrb[0].mxu0
    %v1144 = vadd.f32 0.0, %v1143
    %v1145 = vpop.f32.mrb[0].mxu0
    %v1146 = vadd.f32 0.0, %v1145
    %1147 = vmatprep.mubr.bf16.mxu0 0
    %1148 = vmatmul.mubr.bf16.gmra.mrb[0].mxu0 %v1003
    %v1149 = vpop.f32.mrb[0].mxu0
    %v1150 = vadd.f32 0.0, %v1149
    %v1151 = vpop.f32.mrb[0].mxu0
    %v1152 = vadd.f32 0.0, %v1151
    %v1153 = vpop.f32.mrb[0].mxu0
    %v1154 = vadd.f32 0.0, %v1153
    %v1155 = vpop.f32.mrb[0].mxu0
    %v1156 = vadd.f32 0.0, %v1155
    %1157 = vdwg.mxu0
    %1158 = vmatprep.subr.bf16.mxu0 %v989
    %1159 = vmatpush1.bf16.msra.mxu0 %v988
    %1160 = vmatprep.subr.bf16.mxu0 %v993
    %1161 = vmatpush1.bf16.msra.mxu0 %v992
    %1162 = vmatprep.subr.bf16.mxu0 0
    %1163 = vmatpush1.bf16.msra.mxu0 0
    %1164 = vmatprep.subr.bf16.mxu0 0
    %1165 = vmatpush1.bf16.msra.mxu0 0
    %1166 = vmatprep.subr.bf16.mxu0 0
    %1167 = vmatpush1.bf16.msra.mxu0 0
    %1168 = vmatprep.subr.bf16.mxu0 0
    %1169 = vmatpush1.bf16.msra.mxu0 0
    %1170 = vmatprep.subr.bf16.mxu0 0
    %1171 = vmatpush1.bf16.msra.mxu0 0
    %1172 = vmatprep.subr.bf16.mxu0 0
    %1173 = vmatpush1.bf16.msra.mxu0 0
    %1174 = vmatprep.subr.bf16.mxu0 0
    %1175 = vmatpush1.bf16.msra.mxu0 0
    %1176 = vmatprep.subr.bf16.mxu0 0
    %1177 = vmatpush1.bf16.msra.mxu0 0
    %1178 = vmatprep.subr.bf16.mxu0 0
    %1179 = vmatpush1.bf16.msra.mxu0 0
    %1180 = vmatprep.subr.bf16.mxu0 0
    %1181 = vmatpush1.bf16.msra.mxu0 0
    %1182 = vmatprep.subr.bf16.mxu0 0
    %1183 = vmatpush1.bf16.msra.mxu0 0
    %1184 = vmatprep.subr.bf16.mxu0 0
    %1185 = vmatpush1.bf16.msra.mxu0 0
    %1186 = vmatprep.subr.bf16.mxu0 0
    %1187 = vmatpush1.bf16.msra.mxu0 0
    %1188 = vmatprep.subr.bf16.mxu0 0
    %1189 = vmatpush1.bf16.msra.mxu0 0
    %1190 = vmatprep.mubr.bf16.mxu0 0
    %1191 = vmatmul.mubr.bf16.gmra.mrb[0].mxu0 %v613
    %v1192 = vpop.f32.mrb[0].mxu0
    %v1193 = vadd.f32 0.0, %v1192
    %v1194 = vpop.f32.mrb[0].mxu0
    %v1195 = vadd.f32 0.0, %v1194
    %v1196 = vpop.f32.mrb[0].mxu0
    %v1197 = vadd.f32 0.0, %v1196
    %v1198 = vpop.f32.mrb[0].mxu0
    %v1199 = vadd.f32 0.0, %v1198
    %1200 = vmatprep.mubr.bf16.mxu0 0
    %1201 = vmatmul.mubr.bf16.gmra.mrb[0].mxu0 %v616
    %v1202 = vpop.f32.mrb[0].mxu0
    %v1203 = vadd.f32 0.0, %v1202
    %v1204 = vpop.f32.mrb[0].mxu0
    %v1205 = vadd.f32 0.0, %v1204
    %v1206 = vpop.f32.mrb[0].mxu0
    %v1207 = vadd.f32 0.0, %v1206
    %v1208 = vpop.f32.mrb[0].mxu0
    %v1209 = vadd.f32 0.0, %v1208
    %1210 = vmatprep.mubr.bf16.mxu0 0
    %1211 = vmatmul.mubr.bf16.gmra.mrb[0].mxu0 %v619
    %v1212 = vpop.f32.mrb[0].mxu0
    %v1213 = vadd.f32 0.0, %v1212
    %v1214 = vpop.f32.mrb[0].mxu0
    %v1215 = vadd.f32 0.0, %v1214
    %v1216 = vpop.f32.mrb[0].mxu0
    %v1217 = vadd.f32 0.0, %v1216
    %v1218 = vpop.f32.mrb[0].mxu0
    %v1219 = vadd.f32 0.0, %v1218
    %1220 = vmatprep.mubr.bf16.mxu0 0
    %1221 = vmatmul.mubr.bf16.gmra.mrb[0].mxu0 %v622
    %v1222 = vpop.f32.mrb[0].mxu0
    %v1223 = vadd.f32 0.0, %v1222
    %v1224 = vpop.f32.mrb[0].mxu0
    %v1225 = vadd.f32 0.0, %v1224
    %v1226 = vpop.f32.mrb[0].mxu0
    %v1227 = vadd.f32 0.0, %v1226
    %v1228 = vpop.f32.mrb[0].mxu0
    %v1229 = vadd.f32 0.0, %v1228
    %1230 = vmatprep.mubr.bf16.mxu0 0
    %1231 = vmatmul.mubr.bf16.gmra.mrb[0].mxu0 %v625
    %v1232 = vpop.f32.mrb[0].mxu0
    %v1233 = vadd.f32 0.0, %v1232
    %v1234 = vpop.f32.mrb[0].mxu0
    %v1235 = vadd.f32 0.0, %v1234
    %v1236 = vpop.f32.mrb[0].mxu0
    %v1237 = vadd.f32 0.0, %v1236
    %v1238 = vpop.f32.mrb[0].mxu0
    %v1239 = vadd.f32 0.0, %v1238
    %1240 = vmatprep.mubr.bf16.mxu0 0
    %1241 = vmatmul.mubr.bf16.gmra.mrb[0].mxu0 %v628
    %v1242 = vpop.f32.mrb[0].mxu0
    %v1243 = vadd.f32 0.0, %v1242
    %v1244 = vpop.f32.mrb[0].mxu0
    %v1245 = vadd.f32 0.0, %v1244
    %v1246 = vpop.f32.mrb[0].mxu0
    %v1247 = vadd.f32 0.0, %v1246
    %v1248 = vpop.f32.mrb[0].mxu0
    %v1249 = vadd.f32 0.0, %v1248
    %1250 = vmatprep.mubr.bf16.mxu0 0
    %1251 = vmatmul.mubr.bf16.gmra.mrb[0].mxu0 %v631
    %v1252 = vpop.f32.mrb[0].mxu0
    %v1253 = vadd.f32 0.0, %v1252
    %v1254 = vpop.f32.mrb[0].mxu0
    %v1255 = vadd.f32 0.0, %v1254
    %v1256 = vpop.f32.mrb[0].mxu0
    %v1257 = vadd.f32 0.0, %v1256
    %v1258 = vpop.f32.mrb[0].mxu0
    %v1259 = vadd.f32 0.0, %v1258
    %1260 = vmatprep.mubr.bf16.mxu0 0
    %1261 = vmatmul.mubr.bf16.gmra.mrb[0].mxu0 %v634
    %v1262 = vpop.f32.mrb[0].mxu0
    %v1263 = vadd.f32 0.0, %v1262
    %v1264 = vpop.f32.mrb[0].mxu0
    %v1265 = vadd.f32 0.0, %v1264
    %v1266 = vpop.f32.mrb[0].mxu0
    %v1267 = vadd.f32 0.0, %v1266
    %v1268 = vpop.f32.mrb[0].mxu0
    %v1269 = vadd.f32 0.0, %v1268
    %1270 = vmatprep.mubr.bf16.mxu0 0
    %1271 = vmatmul.mubr.bf16.gmra.mrb[0].mxu0 %v637
    %v1272 = vpop.f32.mrb[0].mxu0
    %v1273 = vadd.f32 0.0, %v1272
    %v1274 = vpop.f32.mrb[0].mxu0
    %v1275 = vadd.f32 0.0, %v1274
    %v1276 = vpop.f32.mrb[0].mxu0
    %v1277 = vadd.f32 0.0, %v1276
    %v1278 = vpop.f32.mrb[0].mxu0
    %v1279 = vadd.f32 0.0, %v1278
    %1280 = vmatprep.mubr.bf16.mxu0 0
    %1281 = vmatmul.mubr.bf16.gmra.mrb[0].mxu0 %v640
    %v1282 = vpop.f32.mrb[0].mxu0
    %v1283 = vadd.f32 0.0, %v1282
    %v1284 = vpop.f32.mrb[0].mxu0
    %v1285 = vadd.f32 0.0, %v1284
    %v1286 = vpop.f32.mrb[0].mxu0
    %v1287 = vadd.f32 0.0, %v1286
    %v1288 = vpop.f32.mrb[0].mxu0
    %v1289 = vadd.f32 0.0, %v1288
    %1290 = vmatprep.mubr.bf16.mxu0 0
    %1291 = vmatmul.mubr.bf16.gmra.mrb[0].mxu0 %v643
    %v1292 = vpop.f32.mrb[0].mxu0
    %v1293 = vadd.f32 0.0, %v1292
    %v1294 = vpop.f32.mrb[0].mxu0
    %v1295 = vadd.f32 0.0, %v1294
    %v1296 = vpop.f32.mrb[0].mxu0
    %v1297 = vadd.f32 0.0, %v1296
    %v1298 = vpop.f32.mrb[0].mxu0
    %v1299 = vadd.f32 0.0, %v1298
    %1300 = vmatprep.mubr.bf16.mxu0 0
    %1301 = vmatmul.mubr.bf16.gmra.mrb[0].mxu0 %v1003
    %v1302 = vpop.f32.mrb[0].mxu0
    %v1303 = vadd.f32 0.0, %v1302
    %v1304 = vpop.f32.mrb[0].mxu0
    %v1305 = vadd.f32 0.0, %v1304
    %v1306 = vpop.f32.mrb[0].mxu0
    %v1307 = vadd.f32 0.0, %v1306
    %v1308 = vpop.f32.mrb[0].mxu0
    %v1309 = vadd.f32 0.0, %v1308
    %1310 = vdwg.mxu0
    %v1311 = vadd.f32 %v680, %v1040
    %v1312 = vadd.f32 %v682, %v1042
    %v1313 = vadd.f32 %v833, %v1193
    %v1314 = vadd.f32 %v835, %v1195
    %v1315 = vadd.f32 %v684, %v1044
    %v1316 = vadd.f32 %v686, %v1046
    %v1317 = vadd.f32 %v837, %v1197
    %v1318 = vadd.f32 %v839, %v1199
    %v1319 = vadd.f32 %v690, %v1050
    %v1320 = vadd.f32 %v692, %v1052
    %v1321 = vadd.f32 %v843, %v1203
    %v1322 = vadd.f32 %v845, %v1205
    %v1323 = vadd.f32 %v694, %v1054
    %v1324 = vadd.f32 %v696, %v1056
    %v1325 = vadd.f32 %v847, %v1207
    %v1326 = vadd.f32 %v849, %v1209
    %v1327 = vadd.f32 %v700, %v1060
    %v1328 = vadd.f32 %v702, %v1062
    %v1329 = vadd.f32 %v853, %v1213
    %v1330 = vadd.f32 %v855, %v1215
    %v1331 = vadd.f32 %v704, %v1064
    %v1332 = vadd.f32 %v706, %v1066
    %v1333 = vadd.f32 %v857, %v1217
    %v1334 = vadd.f32 %v859, %v1219
    %v1335 = vadd.f32 %v710, %v1070
    %v1336 = vadd.f32 %v712, %v1072
    %v1337 = vadd.f32 %v863, %v1223
    %v1338 = vadd.f32 %v865, %v1225
    %v1339 = vadd.f32 %v714, %v1074
    %v1340 = vadd.f32 %v716, %v1076
    %v1341 = vadd.f32 %v867, %v1227
    %v1342 = vadd.f32 %v869, %v1229
    %v1343 = vadd.f32 %v720, %v1080
    %v1344 = vadd.f32 %v722, %v1082
    %v1345 = vadd.f32 %v873, %v1233
    %v1346 = vadd.f32 %v875, %v1235
    %v1347 = vadd.f32 %v724, %v1084
    %v1348 = vadd.f32 %v726, %v1086
    %v1349 = vadd.f32 %v877, %v1237
    %v1350 = vadd.f32 %v879, %v1239
    %v1351 = vadd.f32 %v730, %v1090
    %v1352 = vadd.f32 %v732, %v1092
    %v1353 = vadd.f32 %v883, %v1243
    %v1354 = vadd.f32 %v885, %v1245
    %v1355 = vadd.f32 %v734, %v1094
    %v1356 = vadd.f32 %v736, %v1096
    %v1357 = vadd.f32 %v887, %v1247
    %v1358 = vadd.f32 %v889, %v1249
    %v1359 = vadd.f32 %v740, %v1100
    %v1360 = vadd.f32 %v742, %v1102
    %v1361 = vadd.f32 %v893, %v1253
    %v1362 = vadd.f32 %v895, %v1255
    %v1363 = vadd.f32 %v744, %v1104
    %v1364 = vadd.f32 %v746, %v1106
    %v1365 = vadd.f32 %v897, %v1257
    %v1366 = vadd.f32 %v899, %v1259
    %v1367 = vadd.f32 %v750, %v1110
    %v1368 = vadd.f32 %v752, %v1112
    %v1369 = vadd.f32 %v903, %v1263
    %v1370 = vadd.f32 %v905, %v1265
    %v1371 = vadd.f32 %v754, %v1114
    %v1372 = vadd.f32 %v756, %v1116
    %v1373 = vadd.f32 %v907, %v1267
    %v1374 = vadd.f32 %v909, %v1269
    %v1375 = vadd.f32 %v760, %v1120
    %v1376 = vadd.f32 %v762, %v1122
    %v1377 = vadd.f32 %v913, %v1273
    %v1378 = vadd.f32 %v915, %v1275
    %v1379 = vadd.f32 %v764, %v1124
    %v1380 = vadd.f32 %v766, %v1126
    %v1381 = vadd.f32 %v917, %v1277
    %v1382 = vadd.f32 %v919, %v1279
    %v1383 = vadd.f32 %v770, %v1130
    %v1384 = vadd.f32 %v772, %v1132
    %v1385 = vadd.f32 %v923, %v1283
    %v1386 = vadd.f32 %v925, %v1285
    %v1387 = vadd.f32 %v774, %v1134
    %v1388 = vadd.f32 %v776, %v1136
    %v1389 = vadd.f32 %v927, %v1287
    %v1390 = vadd.f32 %v929, %v1289
    %v1391 = vadd.f32 %v780, %v1140
    %v1392 = vadd.f32 %v782, %v1142
    %v1393 = vadd.f32 %v933, %v1293
    %v1394 = vadd.f32 %v935, %v1295
    %v1395 = vadd.f32 %v784, %v1144
    %v1396 = vadd.f32 %v786, %v1146
    %v1397 = vadd.f32 %v937, %v1297
    %v1398 = vadd.f32 %v939, %v1299
    %v1399 = vadd.f32 %v790, %v1150
    %v1400 = vadd.f32 %v792, %v1152
    %v1401 = vadd.f32 %v943, %v1303
    %v1402 = vadd.f32 %v945, %v1305
    %v1403 = vadd.f32 %v794, %v1154
    %v1404 = vadd.f32 %v796, %v1156
    %v1405 = vadd.f32 %v947, %v1307
    %v1406 = vadd.f32 %v949, %v1309
    %v1407 = vld [vmem:[#allocation2 + $0xc0] sm:$0xff]
    %v1408 = vld [vmem:[#allocation2 + $0xc8] sm:$0xff]
    %v1409 = vld [vmem:[#allocation2 + $0xd0] sm:$0xff]
    %v1410 = vld [vmem:[#allocation2 + $0xd8] sm:$0xff]
    %v1411 = vld [vmem:[#allocation2 + $0xe0] sm:$0xff]
    %v1412 = vld [vmem:[#allocation2 + $0xe8] sm:$0xff]
    %v1413 = vld [vmem:[#allocation2 + $0xf0] sm:$0xff]
    %v1414 = vld [vmem:[#allocation2 + $0xf8] sm:$0xff]
    %v1416 = vunpack.c.l.b16 %v94
    %v1417 = vpack.c.b16 %v1416, %v960
    %v1426 = vunpack.c.l.b16 %v1407
    %v1427 = vunpack.c.h.b16 %v1407
    %v1428 = vunpack.c.l.b16 %v1408
    %v1429 = vunpack.c.h.b16 %v1408
    %v1430 = vunpack.c.l.b16 %v1409
    %v1431 = vunpack.c.h.b16 %v1409
    %v1432 = vunpack.c.l.b16 %v1410
    %v1433 = vunpack.c.h.b16 %v1410
    %v1434 = vunpack.c.l.b16 %v1411
    %v1435 = vunpack.c.h.b16 %v1411
    %v1436 = vunpack.c.l.b16 %v1412
    %v1437 = vunpack.c.h.b16 %v1412
    %v1438 = vunpack.c.l.b16 %v1413
    %v1439 = vunpack.c.h.b16 %v1413
    %v1440 = vunpack.c.l.b16 %v1414
    %v1441 = vunpack.c.h.b16 %v1414
    %v1442 = vpack.c.b16 %v1430, %v1426
    %v1443 = vpack.c.b16 %v1431, %v1427
    %v1444 = vpack.c.b16 %v1432, %v1428
    %v1445 = vpack.c.b16 %v1433, %v1429
    %v1446 = vpack.c.b16 %v1438, %v1434
    %v1447 = vpack.c.b16 %v1439, %v1435
    %v1448 = vpack.c.b16 %v1440, %v1436
    %v1449 = vpack.c.b16 %v1441, %v1437
    %v1459 = vsel %vm212, %v1417, 0
    %1461 = vmatprep.subr.bf16.mxu0 %v1443
    %1462 = vmatpush1.bf16.msra.mxu0 %v1442
    %1463 = vmatprep.subr.bf16.mxu0 %v1447
    %1464 = vmatpush1.bf16.msra.mxu0 %v1446
    %1465 = vmatprep.subr.bf16.mxu0 0
    %1466 = vmatpush1.bf16.msra.mxu0 0
    %1467 = vmatprep.subr.bf16.mxu0 0
    %1468 = vmatpush1.bf16.msra.mxu0 0
    %1469 = vmatprep.subr.bf16.mxu0 0
    %1470 = vmatpush1.bf16.msra.mxu0 0
    %1471 = vmatprep.subr.bf16.mxu0 0
    %1472 = vmatpush1.bf16.msra.mxu0 0
    %1473 = vmatprep.subr.bf16.mxu0 0
    %1474 = vmatpush1.bf16.msra.mxu0 0
    %1475 = vmatprep.subr.bf16.mxu0 0
    %1476 = vmatpush1.bf16.msra.mxu0 0
    %1477 = vmatprep.subr.bf16.mxu0 0
    %1478 = vmatpush1.bf16.msra.mxu0 0
    %1479 = vmatprep.subr.bf16.mxu0 0
    %1480 = vmatpush1.bf16.msra.mxu0 0
    %1481 = vmatprep.subr.bf16.mxu0 0
    %1482 = vmatpush1.bf16.msra.mxu0 0
    %1483 = vmatprep.subr.bf16.mxu0 0
    %1484 = vmatpush1.bf16.msra.mxu0 0
    %1485 = vmatprep.subr.bf16.mxu0 0
    %1486 = vmatpush1.bf16.msra.mxu0 0
    %1487 = vmatprep.subr.bf16.mxu0 0
    %1488 = vmatpush1.bf16.msra.mxu0 0
    %1489 = vmatprep.subr.bf16.mxu0 0
    %1490 = vmatpush1.bf16.msra.mxu0 0
    %1491 = vmatprep.subr.bf16.mxu0 0
    %1492 = vmatpush1.bf16.msra.mxu0 0
    %1493 = vmatprep.mubr.bf16.mxu0 0
    %1494 = vmatmul.mubr.bf16.gmra.mrb[0].mxu0 %v217
    %v1495 = vpop.f32.mrb[0].mxu0
    %v1496 = vadd.f32 0.0, %v1495
    %v1497 = vpop.f32.mrb[0].mxu0
    %v1498 = vadd.f32 0.0, %v1497
    %v1499 = vpop.f32.mrb[0].mxu0
    %v1500 = vadd.f32 0.0, %v1499
    %v1501 = vpop.f32.mrb[0].mxu0
    %v1502 = vadd.f32 0.0, %v1501
    %1503 = vmatprep.mubr.bf16.mxu0 0
    %1504 = vmatmul.mubr.bf16.gmra.mrb[0].mxu0 %v220
    %v1505 = vpop.f32.mrb[0].mxu0
    %v1506 = vadd.f32 0.0, %v1505
    %v1507 = vpop.f32.mrb[0].mxu0
    %v1508 = vadd.f32 0.0, %v1507
    %v1509 = vpop.f32.mrb[0].mxu0
    %v1510 = vadd.f32 0.0, %v1509
    %v1511 = vpop.f32.mrb[0].mxu0
    %v1512 = vadd.f32 0.0, %v1511
    %1513 = vmatprep.mubr.bf16.mxu0 0
    %1514 = vmatmul.mubr.bf16.gmra.mrb[0].mxu0 %v223
    %v1515 = vpop.f32.mrb[0].mxu0
    %v1516 = vadd.f32 0.0, %v1515
    %v1517 = vpop.f32.mrb[0].mxu0
    %v1518 = vadd.f32 0.0, %v1517
    %v1519 = vpop.f32.mrb[0].mxu0
    %v1520 = vadd.f32 0.0, %v1519
    %v1521 = vpop.f32.mrb[0].mxu0
    %v1522 = vadd.f32 0.0, %v1521
    %1523 = vmatprep.mubr.bf16.mxu0 0
    %1524 = vmatmul.mubr.bf16.gmra.mrb[0].mxu0 %v226
    %v1525 = vpop.f32.mrb[0].mxu0
    %v1526 = vadd.f32 0.0, %v1525
    %v1527 = vpop.f32.mrb[0].mxu0
    %v1528 = vadd.f32 0.0, %v1527
    %v1529 = vpop.f32.mrb[0].mxu0
    %v1530 = vadd.f32 0.0, %v1529
    %v1531 = vpop.f32.mrb[0].mxu0
    %v1532 = vadd.f32 0.0, %v1531
    %1533 = vmatprep.mubr.bf16.mxu0 0
    %1534 = vmatmul.mubr.bf16.gmra.mrb[0].mxu0 %v229
    %v1535 = vpop.f32.mrb[0].mxu0
    %v1536 = vadd.f32 0.0, %v1535
    %v1537 = vpop.f32.mrb[0].mxu0
    %v1538 = vadd.f32 0.0, %v1537
    %v1539 = vpop.f32.mrb[0].mxu0
    %v1540 = vadd.f32 0.0, %v1539
    %v1541 = vpop.f32.mrb[0].mxu0
    %v1542 = vadd.f32 0.0, %v1541
    %1543 = vmatprep.mubr.bf16.mxu0 0
    %1544 = vmatmul.mubr.bf16.gmra.mrb[0].mxu0 %v232
    %v1545 = vpop.f32.mrb[0].mxu0
    %v1546 = vadd.f32 0.0, %v1545
    %v1547 = vpop.f32.mrb[0].mxu0
    %v1548 = vadd.f32 0.0, %v1547
    %v1549 = vpop.f32.mrb[0].mxu0
    %v1550 = vadd.f32 0.0, %v1549
    %v1551 = vpop.f32.mrb[0].mxu0
    %v1552 = vadd.f32 0.0, %v1551
    %1553 = vmatprep.mubr.bf16.mxu0 0
    %1554 = vmatmul.mubr.bf16.gmra.mrb[0].mxu0 %v235
    %v1555 = vpop.f32.mrb[0].mxu0
    %v1556 = vadd.f32 0.0, %v1555
    %v1557 = vpop.f32.mrb[0].mxu0
    %v1558 = vadd.f32 0.0, %v1557
    %v1559 = vpop.f32.mrb[0].mxu0
    %v1560 = vadd.f32 0.0, %v1559
    %v1561 = vpop.f32.mrb[0].mxu0
    %v1562 = vadd.f32 0.0, %v1561
    %1563 = vmatprep.mubr.bf16.mxu0 0
    %1564 = vmatmul.mubr.bf16.gmra.mrb[0].mxu0 %v238
    %v1565 = vpop.f32.mrb[0].mxu0
    %v1566 = vadd.f32 0.0, %v1565
    %v1567 = vpop.f32.mrb[0].mxu0
    %v1568 = vadd.f32 0.0, %v1567
    %v1569 = vpop.f32.mrb[0].mxu0
    %v1570 = vadd.f32 0.0, %v1569
    %v1571 = vpop.f32.mrb[0].mxu0
    %v1572 = vadd.f32 0.0, %v1571
    %1573 = vmatprep.mubr.bf16.mxu0 0
    %1574 = vmatmul.mubr.bf16.gmra.mrb[0].mxu0 %v241
    %v1575 = vpop.f32.mrb[0].mxu0
    %v1576 = vadd.f32 0.0, %v1575
    %v1577 = vpop.f32.mrb[0].mxu0
    %v1578 = vadd.f32 0.0, %v1577
    %v1579 = vpop.f32.mrb[0].mxu0
    %v1580 = vadd.f32 0.0, %v1579
    %v1581 = vpop.f32.mrb[0].mxu0
    %v1582 = vadd.f32 0.0, %v1581
    %1583 = vmatprep.mubr.bf16.mxu0 0
    %1584 = vmatmul.mubr.bf16.gmra.mrb[0].mxu0 %v244
    %v1585 = vpop.f32.mrb[0].mxu0
    %v1586 = vadd.f32 0.0, %v1585
    %v1587 = vpop.f32.mrb[0].mxu0
    %v1588 = vadd.f32 0.0, %v1587
    %v1589 = vpop.f32.mrb[0].mxu0
    %v1590 = vadd.f32 0.0, %v1589
    %v1591 = vpop.f32.mrb[0].mxu0
    %v1592 = vadd.f32 0.0, %v1591
    %1593 = vmatprep.mubr.bf16.mxu0 0
    %1594 = vmatmul.mubr.bf16.gmra.mrb[0].mxu0 %v247
    %v1595 = vpop.f32.mrb[0].mxu0
    %v1596 = vadd.f32 0.0, %v1595
    %v1597 = vpop.f32.mrb[0].mxu0
    %v1598 = vadd.f32 0.0, %v1597
    %v1599 = vpop.f32.mrb[0].mxu0
    %v1600 = vadd.f32 0.0, %v1599
    %v1601 = vpop.f32.mrb[0].mxu0
    %v1602 = vadd.f32 0.0, %v1601
    %1603 = vmatprep.mubr.bf16.mxu0 0
    %1604 = vmatmul.mubr.bf16.gmra.mrb[0].mxu0 %v1459
    %v1605 = vpop.f32.mrb[0].mxu0
    %v1606 = vadd.f32 0.0, %v1605
    %v1607 = vpop.f32.mrb[0].mxu0
    %v1608 = vadd.f32 0.0, %v1607
    %v1609 = vpop.f32.mrb[0].mxu0
    %v1610 = vadd.f32 0.0, %v1609
    %v1611 = vpop.f32.mrb[0].mxu0
    %v1612 = vadd.f32 0.0, %v1611
    %1613 = vdwg.mxu0
    %1614 = vmatprep.subr.bf16.mxu0 %v1445
    %1615 = vmatpush1.bf16.msra.mxu0 %v1444
    %1616 = vmatprep.subr.bf16.mxu0 %v1449
    %1617 = vmatpush1.bf16.msra.mxu0 %v1448
    %1618 = vmatprep.subr.bf16.mxu0 0
    %1619 = vmatpush1.bf16.msra.mxu0 0
    %1620 = vmatprep.subr.bf16.mxu0 0
    %1621 = vmatpush1.bf16.msra.mxu0 0
    %1622 = vmatprep.subr.bf16.mxu0 0
    %1623 = vmatpush1.bf16.msra.mxu0 0
    %1624 = vmatprep.subr.bf16.mxu0 0
    %1625 = vmatpush1.bf16.msra.mxu0 0
    %1626 = vmatprep.subr.bf16.mxu0 0
    %1627 = vmatpush1.bf16.msra.mxu0 0
    %1628 = vmatprep.subr.bf16.mxu0 0
    %1629 = vmatpush1.bf16.msra.mxu0 0
    %1630 = vmatprep.subr.bf16.mxu0 0
    %1631 = vmatpush1.bf16.msra.mxu0 0
    %1632 = vmatprep.subr.bf16.mxu0 0
    %1633 = vmatpush1.bf16.msra.mxu0 0
    %1634 = vmatprep.subr.bf16.mxu0 0
    %1635 = vmatpush1.bf16.msra.mxu0 0
    %1636 = vmatprep.subr.bf16.mxu0 0
    %1637 = vmatpush1.bf16.msra.mxu0 0
    %1638 = vmatprep.subr.bf16.mxu0 0
    %1639 = vmatpush1.bf16.msra.mxu0 0
    %1640 = vmatprep.subr.bf16.mxu0 0
    %1641 = vmatpush1.bf16.msra.mxu0 0
    %1642 = vmatprep.subr.bf16.mxu0 0
    %1643 = vmatpush1.bf16.msra.mxu0 0
    %1644 = vmatprep.subr.bf16.mxu0 0
    %1645 = vmatpush1.bf16.msra.mxu0 0
    %1646 = vmatprep.mubr.bf16.mxu0 0
    %1647 = vmatmul.mubr.bf16.gmra.mrb[0].mxu0 %v217
    %v1648 = vpop.f32.mrb[0].mxu0
    %v1649 = vadd.f32 0.0, %v1648
    %v1650 = vpop.f32.mrb[0].mxu0
    %v1651 = vadd.f32 0.0, %v1650
    %v1652 = vpop.f32.mrb[0].mxu0
    %v1653 = vadd.f32 0.0, %v1652
    %v1654 = vpop.f32.mrb[0].mxu0
    %v1655 = vadd.f32 0.0, %v1654
    %1656 = vmatprep.mubr.bf16.mxu0 0
    %1657 = vmatmul.mubr.bf16.gmra.mrb[0].mxu0 %v220
    %v1658 = vpop.f32.mrb[0].mxu0
    %v1659 = vadd.f32 0.0, %v1658
    %v1660 = vpop.f32.mrb[0].mxu0
    %v1661 = vadd.f32 0.0, %v1660
    %v1662 = vpop.f32.mrb[0].mxu0
    %v1663 = vadd.f32 0.0, %v1662
    %v1664 = vpop.f32.mrb[0].mxu0
    %v1665 = vadd.f32 0.0, %v1664
    %1666 = vmatprep.mubr.bf16.mxu0 0
    %1667 = vmatmul.mubr.bf16.gmra.mrb[0].mxu0 %v223
    %v1668 = vpop.f32.mrb[0].mxu0
    %v1669 = vadd.f32 0.0, %v1668
    %v1670 = vpop.f32.mrb[0].mxu0
    %v1671 = vadd.f32 0.0, %v1670
    %v1672 = vpop.f32.mrb[0].mxu0
    %v1673 = vadd.f32 0.0, %v1672
    %v1674 = vpop.f32.mrb[0].mxu0
    %v1675 = vadd.f32 0.0, %v1674
    %1676 = vmatprep.mubr.bf16.mxu0 0
    %1677 = vmatmul.mubr.bf16.gmra.mrb[0].mxu0 %v226
    %v1678 = vpop.f32.mrb[0].mxu0
    %v1679 = vadd.f32 0.0, %v1678
    %v1680 = vpop.f32.mrb[0].mxu0
    %v1681 = vadd.f32 0.0, %v1680
    %v1682 = vpop.f32.mrb[0].mxu0
    %v1683 = vadd.f32 0.0, %v1682
    %v1684 = vpop.f32.mrb[0].mxu0
    %v1685 = vadd.f32 0.0, %v1684
    %1686 = vmatprep.mubr.bf16.mxu0 0
    %1687 = vmatmul.mubr.bf16.gmra.mrb[0].mxu0 %v229
    %v1688 = vpop.f32.mrb[0].mxu0
    %v1689 = vadd.f32 0.0, %v1688
    %v1690 = vpop.f32.mrb[0].mxu0
    %v1691 = vadd.f32 0.0, %v1690
    %v1692 = vpop.f32.mrb[0].mxu0
    %v1693 = vadd.f32 0.0, %v1692
    %v1694 = vpop.f32.mrb[0].mxu0
    %v1695 = vadd.f32 0.0, %v1694
    %1696 = vmatprep.mubr.bf16.mxu0 0
    %1697 = vmatmul.mubr.bf16.gmra.mrb[0].mxu0 %v232
    %v1698 = vpop.f32.mrb[0].mxu0
    %v1699 = vadd.f32 0.0, %v1698
    %v1700 = vpop.f32.mrb[0].mxu0
    %v1701 = vadd.f32 0.0, %v1700
    %v1702 = vpop.f32.mrb[0].mxu0
    %v1703 = vadd.f32 0.0, %v1702
    %v1704 = vpop.f32.mrb[0].mxu0
    %v1705 = vadd.f32 0.0, %v1704
    %1706 = vmatprep.mubr.bf16.mxu0 0
    %1707 = vmatmul.mubr.bf16.gmra.mrb[0].mxu0 %v235
    %v1708 = vpop.f32.mrb[0].mxu0
    %v1709 = vadd.f32 0.0, %v1708
    %v1710 = vpop.f32.mrb[0].mxu0
    %v1711 = vadd.f32 0.0, %v1710
    %v1712 = vpop.f32.mrb[0].mxu0
    %v1713 = vadd.f32 0.0, %v1712
    %v1714 = vpop.f32.mrb[0].mxu0
    %v1715 = vadd.f32 0.0, %v1714
    %1716 = vmatprep.mubr.bf16.mxu0 0
    %1717 = vmatmul.mubr.bf16.gmra.mrb[0].mxu0 %v238
    %v1718 = vpop.f32.mrb[0].mxu0
    %v1719 = vadd.f32 0.0, %v1718
    %v1720 = vpop.f32.mrb[0].mxu0
    %v1721 = vadd.f32 0.0, %v1720
    %v1722 = vpop.f32.mrb[0].mxu0
    %v1723 = vadd.f32 0.0, %v1722
    %v1724 = vpop.f32.mrb[0].mxu0
    %v1725 = vadd.f32 0.0, %v1724
    %1726 = vmatprep.mubr.bf16.mxu0 0
    %1727 = vmatmul.mubr.bf16.gmra.mrb[0].mxu0 %v241
    %v1728 = vpop.f32.mrb[0].mxu0
    %v1729 = vadd.f32 0.0, %v1728
    %v1730 = vpop.f32.mrb[0].mxu0
    %v1731 = vadd.f32 0.0, %v1730
    %v1732 = vpop.f32.mrb[0].mxu0
    %v1733 = vadd.f32 0.0, %v1732
    %v1734 = vpop.f32.mrb[0].mxu0
    %v1735 = vadd.f32 0.0, %v1734
    %1736 = vmatprep.mubr.bf16.mxu0 0
    %1737 = vmatmul.mubr.bf16.gmra.mrb[0].mxu0 %v244
    %v1738 = vpop.f32.mrb[0].mxu0
    %v1739 = vadd.f32 0.0, %v1738
    %v1740 = vpop.f32.mrb[0].mxu0
    %v1741 = vadd.f32 0.0, %v1740
    %v1742 = vpop.f32.mrb[0].mxu0
    %v1743 = vadd.f32 0.0, %v1742
    %v1744 = vpop.f32.mrb[0].mxu0
    %v1745 = vadd.f32 0.0, %v1744
    %1746 = vmatprep.mubr.bf16.mxu0 0
    %1747 = vmatmul.mubr.bf16.gmra.mrb[0].mxu0 %v247
    %v1748 = vpop.f32.mrb[0].mxu0
    %v1749 = vadd.f32 0.0, %v1748
    %v1750 = vpop.f32.mrb[0].mxu0
    %v1751 = vadd.f32 0.0, %v1750
    %v1752 = vpop.f32.mrb[0].mxu0
    %v1753 = vadd.f32 0.0, %v1752
    %v1754 = vpop.f32.mrb[0].mxu0
    %v1755 = vadd.f32 0.0, %v1754
    %1756 = vmatprep.mubr.bf16.mxu0 0
    %1757 = vmatmul.mubr.bf16.gmra.mrb[0].mxu0 %v1459
    %v1758 = vpop.f32.mrb[0].mxu0
    %v1759 = vadd.f32 0.0, %v1758
    %v1760 = vpop.f32.mrb[0].mxu0
    %v1761 = vadd.f32 0.0, %v1760
    %v1762 = vpop.f32.mrb[0].mxu0
    %v1763 = vadd.f32 0.0, %v1762
    %v1764 = vpop.f32.mrb[0].mxu0
    %v1765 = vadd.f32 0.0, %v1764
    %1766 = vdwg.mxu0
    %v1767 = vadd.f32 %v1311, %v1496
    %v1768 = vadd.f32 %v1312, %v1498
    %v1769 = vadd.f32 %v1313, %v1649
    %v1770 = vadd.f32 %v1314, %v1651
    %v1771 = vadd.f32 %v1315, %v1500
    %v1772 = vadd.f32 %v1316, %v1502
    %v1773 = vadd.f32 %v1317, %v1653
    %v1774 = vadd.f32 %v1318, %v1655
    %v1775 = vadd.f32 %v1319, %v1506
    %v1776 = vadd.f32 %v1320, %v1508
    %v1777 = vadd.f32 %v1321, %v1659
    %v1778 = vadd.f32 %v1322, %v1661
    %v1779 = vadd.f32 %v1323, %v1510
    %v1780 = vadd.f32 %v1324, %v1512
    %v1781 = vadd.f32 %v1325, %v1663
    %v1782 = vadd.f32 %v1326, %v1665
    %v1783 = vadd.f32 %v1327, %v1516
    %v1784 = vadd.f32 %v1328, %v1518
    %v1785 = vadd.f32 %v1329, %v1669
    %v1786 = vadd.f32 %v1330, %v1671
    %v1787 = vadd.f32 %v1331, %v1520
    %v1788 = vadd.f32 %v1332, %v1522
    %v1789 = vadd.f32 %v1333, %v1673
    %v1790 = vadd.f32 %v1334, %v1675
    %v1791 = vadd.f32 %v1335, %v1526
    %v1792 = vadd.f32 %v1336, %v1528
    %v1793 = vadd.f32 %v1337, %v1679
    %v1794 = vadd.f32 %v1338, %v1681
    %v1795 = vadd.f32 %v1339, %v1530
    %v1796 = vadd.f32 %v1340, %v1532
    %v1797 = vadd.f32 %v1341, %v1683
    %v1798 = vadd.f32 %v1342, %v1685
    %v1799 = vadd.f32 %v1343, %v1536
    %v1800 = vadd.f32 %v1344, %v1538
    %v1801 = vadd.f32 %v1345, %v1689
    %v1802 = vadd.f32 %v1346, %v1691
    %v1803 = vadd.f32 %v1347, %v1540
    %v1804 = vadd.f32 %v1348, %v1542
    %v1805 = vadd.f32 %v1349, %v1693
    %v1806 = vadd.f32 %v1350, %v1695
    %v1807 = vadd.f32 %v1351, %v1546
    %v1808 = vadd.f32 %v1352, %v1548
    %v1809 = vadd.f32 %v1353, %v1699
    %v1810 = vadd.f32 %v1354, %v1701
    %v1811 = vadd.f32 %v1355, %v1550
    %v1812 = vadd.f32 %v1356, %v1552
    %v1813 = vadd.f32 %v1357, %v1703
    %v1814 = vadd.f32 %v1358, %v1705
    %v1815 = vadd.f32 %v1359, %v1556
    %v1816 = vadd.f32 %v1360, %v1558
    %v1817 = vadd.f32 %v1361, %v1709
    %v1818 = vadd.f32 %v1362, %v1711
    %v1819 = vadd.f32 %v1363, %v1560
    %v1820 = vadd.f32 %v1364, %v1562
    %v1821 = vadd.f32 %v1365, %v1713
    %v1822 = vadd.f32 %v1366, %v1715
    %v1823 = vadd.f32 %v1367, %v1566
    %v1824 = vadd.f32 %v1368, %v1568
    %v1825 = vadd.f32 %v1369, %v1719
    %v1826 = vadd.f32 %v1370, %v1721
    %v1827 = vadd.f32 %v1371, %v1570
    %v1828 = vadd.f32 %v1372, %v1572
    %v1829 = vadd.f32 %v1373, %v1723
    %v1830 = vadd.f32 %v1374, %v1725
    %v1831 = vadd.f32 %v1375, %v1576
    %v1832 = vadd.f32 %v1376, %v1578
    %v1833 = vadd.f32 %v1377, %v1729
    %v1834 = vadd.f32 %v1378, %v1731
    %v1835 = vadd.f32 %v1379, %v1580
    %v1836 = vadd.f32 %v1380, %v1582
    %v1837 = vadd.f32 %v1381, %v1733
    %v1838 = vadd.f32 %v1382, %v1735
    %v1839 = vadd.f32 %v1383, %v1586
    %v1840 = vadd.f32 %v1384, %v1588
    %v1841 = vadd.f32 %v1385, %v1739
    %v1842 = vadd.f32 %v1386, %v1741
    %v1843 = vadd.f32 %v1387, %v1590
    %v1844 = vadd.f32 %v1388, %v1592
    %v1845 = vadd.f32 %v1389, %v1743
    %v1846 = vadd.f32 %v1390, %v1745
    %v1847 = vadd.f32 %v1391, %v1596
    %v1848 = vadd.f32 %v1392, %v1598
    %v1849 = vadd.f32 %v1393, %v1749
    %v1850 = vadd.f32 %v1394, %v1751
    %v1851 = vadd.f32 %v1395, %v1600
    %v1852 = vadd.f32 %v1396, %v1602
    %v1853 = vadd.f32 %v1397, %v1753
    %v1854 = vadd.f32 %v1398, %v1755
    %v1855 = vadd.f32 %v1399, %v1606
    %v1856 = vadd.f32 %v1400, %v1608
    %v1857 = vadd.f32 %v1401, %v1759
    %v1858 = vadd.f32 %v1402, %v1761
    %v1859 = vadd.f32 %v1403, %v1610
    %v1860 = vadd.f32 %v1404, %v1612
    %v1861 = vadd.f32 %v1405, %v1763
    %v1862 = vadd.f32 %v1406, %v1765
    %v1863 = vld [vmem:[#allocation2 + $0x100] sm:$0xff]
    %v1864 = vld [vmem:[#allocation2 + $0x108] sm:$0xff]
    %v1865 = vld [vmem:[#allocation2 + $0x110] sm:$0xff]
    %v1866 = vld [vmem:[#allocation2 + $0x118] sm:$0xff]
    %v1867 = vld [vmem:[#allocation2 + $0x120] sm:$0xff]
    %v1868 = vld [vmem:[#allocation2 + $0x128] sm:$0xff]
    %v1869 = vld [vmem:[#allocation2 + $0x130] sm:$0xff]
    %v1870 = vld [vmem:[#allocation2 + $0x138] sm:$0xff]
    %v1872 = vunpack.c.l.b16 %v95
    %v1873 = vpack.c.b16 %v1872, %v1416
    %v1882 = vunpack.c.l.b16 %v1863
    %v1883 = vunpack.c.h.b16 %v1863
    %v1884 = vunpack.c.l.b16 %v1864
    %v1885 = vunpack.c.h.b16 %v1864
    %v1886 = vunpack.c.l.b16 %v1865
    %v1887 = vunpack.c.h.b16 %v1865
    %v1888 = vunpack.c.l.b16 %v1866
    %v1889 = vunpack.c.h.b16 %v1866
    %v1890 = vunpack.c.l.b16 %v1867
    %v1891 = vunpack.c.h.b16 %v1867
    %v1892 = vunpack.c.l.b16 %v1868
    %v1893 = vunpack.c.h.b16 %v1868
    %v1894 = vunpack.c.l.b16 %v1869
    %v1895 = vunpack.c.h.b16 %v1869
    %v1896 = vunpack.c.l.b16 %v1870
    %v1897 = vunpack.c.h.b16 %v1870
    %v1898 = vpack.c.b16 %v1886, %v1882
    %v1899 = vpack.c.b16 %v1887, %v1883
    %v1900 = vpack.c.b16 %v1888, %v1884
    %v1901 = vpack.c.b16 %v1889, %v1885
    %v1902 = vpack.c.b16 %v1894, %v1890
    %v1903 = vpack.c.b16 %v1895, %v1891
    %v1904 = vpack.c.b16 %v1896, %v1892
    %v1905 = vpack.c.b16 %v1897, %v1893
    %v1915 = vsel %vm212, %v1873, 0
    %1917 = vmatprep.subr.bf16.mxu0 %v1899
    %1918 = vmatpush1.bf16.msra.mxu0 %v1898
    %1919 = vmatprep.subr.bf16.mxu0 %v1903
    %1920 = vmatpush1.bf16.msra.mxu0 %v1902
    %1921 = vmatprep.subr.bf16.mxu0 0
    %1922 = vmatpush1.bf16.msra.mxu0 0
    %1923 = vmatprep.subr.bf16.mxu0 0
    %1924 = vmatpush1.bf16.msra.mxu0 0
    %1925 = vmatprep.subr.bf16.mxu0 0
    %1926 = vmatpush1.bf16.msra.mxu0 0
    %1927 = vmatprep.subr.bf16.mxu0 0
    %1928 = vmatpush1.bf16.msra.mxu0 0
    %1929 = vmatprep.subr.bf16.mxu0 0
    %1930 = vmatpush1.bf16.msra.mxu0 0
    %1931 = vmatprep.subr.bf16.mxu0 0
    %1932 = vmatpush1.bf16.msra.mxu0 0
    %1933 = vmatprep.subr.bf16.mxu0 0
    %1934 = vmatpush1.bf16.msra.mxu0 0
    %1935 = vmatprep.subr.bf16.mxu0 0
    %1936 = vmatpush1.bf16.msra.mxu0 0
    %1937 = vmatprep.subr.bf16.mxu0 0
    %1938 = vmatpush1.bf16.msra.mxu0 0
    %1939 = vmatprep.subr.bf16.mxu0 0
    %1940 = vmatpush1.bf16.msra.mxu0 0
    %1941 = vmatprep.subr.bf16.mxu0 0
    %1942 = vmatpush1.bf16.msra.mxu0 0
    %1943 = vmatprep.subr.bf16.mxu0 0
    %1944 = vmatpush1.bf16.msra.mxu0 0
    %1945 = vmatprep.subr.bf16.mxu0 0
    %1946 = vmatpush1.bf16.msra.mxu0 0
    %1947 = vmatprep.subr.bf16.mxu0 0
    %1948 = vmatpush1.bf16.msra.mxu0 0
    %1949 = vmatprep.mubr.bf16.mxu0 0
    %1950 = vmatmul.mubr.bf16.gmra.mrb[0].mxu0 %v616
    %v1951 = vpop.f32.mrb[0].mxu0
    %v1952 = vadd.f32 0.0, %v1951
    %v1953 = vpop.f32.mrb[0].mxu0
    %v1954 = vadd.f32 0.0, %v1953
    %v1955 = vpop.f32.mrb[0].mxu0
    %v1956 = vadd.f32 0.0, %v1955
    %v1957 = vpop.f32.mrb[0].mxu0
    %v1958 = vadd.f32 0.0, %v1957
    %1959 = vmatprep.mubr.bf16.mxu0 0
    %1960 = vmatmul.mubr.bf16.gmra.mrb[0].mxu0 %v619
    %v1961 = vpop.f32.mrb[0].mxu0
    %v1962 = vadd.f32 0.0, %v1961
    %v1963 = vpop.f32.mrb[0].mxu0
    %v1964 = vadd.f32 0.0, %v1963
    %v1965 = vpop.f32.mrb[0].mxu0
    %v1966 = vadd.f32 0.0, %v1965
    %v1967 = vpop.f32.mrb[0].mxu0
    %v1968 = vadd.f32 0.0, %v1967
    %1969 = vmatprep.mubr.bf16.mxu0 0
    %1970 = vmatmul.mubr.bf16.gmra.mrb[0].mxu0 %v622
    %v1971 = vpop.f32.mrb[0].mxu0
    %v1972 = vadd.f32 0.0, %v1971
    %v1973 = vpop.f32.mrb[0].mxu0
    %v1974 = vadd.f32 0.0, %v1973
    %v1975 = vpop.f32.mrb[0].mxu0
    %v1976 = vadd.f32 0.0, %v1975
    %v1977 = vpop.f32.mrb[0].mxu0
    %v1978 = vadd.f32 0.0, %v1977
    %1979 = vmatprep.mubr.bf16.mxu0 0
    %1980 = vmatmul.mubr.bf16.gmra.mrb[0].mxu0 %v625
    %v1981 = vpop.f32.mrb[0].mxu0
    %v1982 = vadd.f32 0.0, %v1981
    %v1983 = vpop.f32.mrb[0].mxu0
    %v1984 = vadd.f32 0.0, %v1983
    %v1985 = vpop.f32.mrb[0].mxu0
    %v1986 = vadd.f32 0.0, %v1985
    %v1987 = vpop.f32.mrb[0].mxu0
    %v1988 = vadd.f32 0.0, %v1987
    %1989 = vmatprep.mubr.bf16.mxu0 0
    %1990 = vmatmul.mubr.bf16.gmra.mrb[0].mxu0 %v628
    %v1991 = vpop.f32.mrb[0].mxu0
    %v1992 = vadd.f32 0.0, %v1991
    %v1993 = vpop.f32.mrb[0].mxu0
    %v1994 = vadd.f32 0.0, %v1993
    %v1995 = vpop.f32.mrb[0].mxu0
    %v1996 = vadd.f32 0.0, %v1995
    %v1997 = vpop.f32.mrb[0].mxu0
    %v1998 = vadd.f32 0.0, %v1997
    %1999 = vmatprep.mubr.bf16.mxu0 0
    %2000 = vmatmul.mubr.bf16.gmra.mrb[0].mxu0 %v631
    %v2001 = vpop.f32.mrb[0].mxu0
    %v2002 = vadd.f32 0.0, %v2001
    %v2003 = vpop.f32.mrb[0].mxu0
    %v2004 = vadd.f32 0.0, %v2003
    %v2005 = vpop.f32.mrb[0].mxu0
    %v2006 = vadd.f32 0.0, %v2005
    %v2007 = vpop.f32.mrb[0].mxu0
    %v2008 = vadd.f32 0.0, %v2007
    %2009 = vmatprep.mubr.bf16.mxu0 0
    %2010 = vmatmul.mubr.bf16.gmra.mrb[0].mxu0 %v634
    %v2011 = vpop.f32.mrb[0].mxu0
    %v2012 = vadd.f32 0.0, %v2011
    %v2013 = vpop.f32.mrb[0].mxu0
    %v2014 = vadd.f32 0.0, %v2013
    %v2015 = vpop.f32.mrb[0].mxu0
    %v2016 = vadd.f32 0.0, %v2015
    %v2017 = vpop.f32.mrb[0].mxu0
    %v2018 = vadd.f32 0.0, %v2017
    %2019 = vmatprep.mubr.bf16.mxu0 0
    %2020 = vmatmul.mubr.bf16.gmra.mrb[0].mxu0 %v637
    %v2021 = vpop.f32.mrb[0].mxu0
    %v2022 = vadd.f32 0.0, %v2021
    %v2023 = vpop.f32.mrb[0].mxu0
    %v2024 = vadd.f32 0.0, %v2023
    %v2025 = vpop.f32.mrb[0].mxu0
    %v2026 = vadd.f32 0.0, %v2025
    %v2027 = vpop.f32.mrb[0].mxu0
    %v2028 = vadd.f32 0.0, %v2027
    %2029 = vmatprep.mubr.bf16.mxu0 0
    %2030 = vmatmul.mubr.bf16.gmra.mrb[0].mxu0 %v640
    %v2031 = vpop.f32.mrb[0].mxu0
    %v2032 = vadd.f32 0.0, %v2031
    %v2033 = vpop.f32.mrb[0].mxu0
    %v2034 = vadd.f32 0.0, %v2033
    %v2035 = vpop.f32.mrb[0].mxu0
    %v2036 = vadd.f32 0.0, %v2035
    %v2037 = vpop.f32.mrb[0].mxu0
    %v2038 = vadd.f32 0.0, %v2037
    %2039 = vmatprep.mubr.bf16.mxu0 0
    %2040 = vmatmul.mubr.bf16.gmra.mrb[0].mxu0 %v643
    %v2041 = vpop.f32.mrb[0].mxu0
    %v2042 = vadd.f32 0.0, %v2041
    %v2043 = vpop.f32.mrb[0].mxu0
    %v2044 = vadd.f32 0.0, %v2043
    %v2045 = vpop.f32.mrb[0].mxu0
    %v2046 = vadd.f32 0.0, %v2045
    %v2047 = vpop.f32.mrb[0].mxu0
    %v2048 = vadd.f32 0.0, %v2047
    %2049 = vmatprep.mubr.bf16.mxu0 0
    %2050 = vmatmul.mubr.bf16.gmra.mrb[0].mxu0 %v1003
    %v2051 = vpop.f32.mrb[0].mxu0
    %v2052 = vadd.f32 0.0, %v2051
    %v2053 = vpop.f32.mrb[0].mxu0
    %v2054 = vadd.f32 0.0, %v2053
    %v2055 = vpop.f32.mrb[0].mxu0
    %v2056 = vadd.f32 0.0, %v2055
    %v2057 = vpop.f32.mrb[0].mxu0
    %v2058 = vadd.f32 0.0, %v2057
    %2059 = vmatprep.mubr.bf16.mxu0 0
    %2060 = vmatmul.mubr.bf16.gmra.mrb[0].mxu0 %v1915
    %v2061 = vpop.f32.mrb[0].mxu0
    %v2062 = vadd.f32 0.0, %v2061
    %v2063 = vpop.f32.mrb[0].mxu0
    %v2064 = vadd.f32 0.0, %v2063
    %v2065 = vpop.f32.mrb[0].mxu0
    %v2066 = vadd.f32 0.0, %v2065
    %v2067 = vpop.f32.mrb[0].mxu0
    %v2068 = vadd.f32 0.0, %v2067
    %2069 = vdwg.mxu0
    %2070 = vmatprep.subr.bf16.mxu0 %v1901
    %2071 = vmatpush1.bf16.msra.mxu0 %v1900
    %2072 = vmatprep.subr.bf16.mxu0 %v1905
    %2073 = vmatpush1.bf16.msra.mxu0 %v1904
    %2074 = vmatprep.subr.bf16.mxu0 0
    %2075 = vmatpush1.bf16.msra.mxu0 0
    %2076 = vmatprep.subr.bf16.mxu0 0
    %2077 = vmatpush1.bf16.msra.mxu0 0
    %2078 = vmatprep.subr.bf16.mxu0 0
    %2079 = vmatpush1.bf16.msra.mxu0 0
    %2080 = vmatprep.subr.bf16.mxu0 0
    %2081 = vmatpush1.bf16.msra.mxu0 0
    %2082 = vmatprep.subr.bf16.mxu0 0
    %2083 = vmatpush1.bf16.msra.mxu0 0
    %2084 = vmatprep.subr.bf16.mxu0 0
    %2085 = vmatpush1.bf16.msra.mxu0 0
    %2086 = vmatprep.subr.bf16.mxu0 0
    %2087 = vmatpush1.bf16.msra.mxu0 0
    %2088 = vmatprep.subr.bf16.mxu0 0
    %2089 = vmatpush1.bf16.msra.mxu0 0
    %2090 = vmatprep.subr.bf16.mxu0 0
    %2091 = vmatpush1.bf16.msra.mxu0 0
    %2092 = vmatprep.subr.bf16.mxu0 0
    %2093 = vmatpush1.bf16.msra.mxu0 0
    %2094 = vmatprep.subr.bf16.mxu0 0
    %2095 = vmatpush1.bf16.msra.mxu0 0
    %2096 = vmatprep.subr.bf16.mxu0 0
    %2097 = vmatpush1.bf16.msra.mxu0 0
    %2098 = vmatprep.subr.bf16.mxu0 0
    %2099 = vmatpush1.bf16.msra.mxu0 0
    %2100 = vmatprep.subr.bf16.mxu0 0
    %2101 = vmatpush1.bf16.msra.mxu0 0
    %2102 = vmatprep.mubr.bf16.mxu0 0
    %2103 = vmatmul.mubr.bf16.gmra.mrb[0].mxu0 %v616
    %v2104 = vpop.f32.mrb[0].mxu0
    %v2105 = vadd.f32 0.0, %v2104
    %v2106 = vpop.f32.mrb[0].mxu0
    %v2107 = vadd.f32 0.0, %v2106
    %v2108 = vpop.f32.mrb[0].mxu0
    %v2109 = vadd.f32 0.0, %v2108
    %v2110 = vpop.f32.mrb[0].mxu0
    %v2111 = vadd.f32 0.0, %v2110
    %2112 = vmatprep.mubr.bf16.mxu0 0
    %2113 = vmatmul.mubr.bf16.gmra.mrb[0].mxu0 %v619
    %v2114 = vpop.f32.mrb[0].mxu0
    %v2115 = vadd.f32 0.0, %v2114
    %v2116 = vpop.f32.mrb[0].mxu0
    %v2117 = vadd.f32 0.0, %v2116
    %v2118 = vpop.f32.mrb[0].mxu0
    %v2119 = vadd.f32 0.0, %v2118
    %v2120 = vpop.f32.mrb[0].mxu0
    %v2121 = vadd.f32 0.0, %v2120
    %2122 = vmatprep.mubr.bf16.mxu0 0
    %2123 = vmatmul.mubr.bf16.gmra.mrb[0].mxu0 %v622
    %v2124 = vpop.f32.mrb[0].mxu0
    %v2125 = vadd.f32 0.0, %v2124
    %v2126 = vpop.f32.mrb[0].mxu0
    %v2127 = vadd.f32 0.0, %v2126
    %v2128 = vpop.f32.mrb[0].mxu0
    %v2129 = vadd.f32 0.0, %v2128
    %v2130 = vpop.f32.mrb[0].mxu0
    %v2131 = vadd.f32 0.0, %v2130
    %2132 = vmatprep.mubr.bf16.mxu0 0
    %2133 = vmatmul.mubr.bf16.gmra.mrb[0].mxu0 %v625
    %v2134 = vpop.f32.mrb[0].mxu0
    %v2135 = vadd.f32 0.0, %v2134
    %v2136 = vpop.f32.mrb[0].mxu0
    %v2137 = vadd.f32 0.0, %v2136
    %v2138 = vpop.f32.mrb[0].mxu0
    %v2139 = vadd.f32 0.0, %v2138
    %v2140 = vpop.f32.mrb[0].mxu0
    %v2141 = vadd.f32 0.0, %v2140
    %2142 = vmatprep.mubr.bf16.mxu0 0
    %2143 = vmatmul.mubr.bf16.gmra.mrb[0].mxu0 %v628
    %v2144 = vpop.f32.mrb[0].mxu0
    %v2145 = vadd.f32 0.0, %v2144
    %v2146 = vpop.f32.mrb[0].mxu0
    %v2147 = vadd.f32 0.0, %v2146
    %v2148 = vpop.f32.mrb[0].mxu0
    %v2149 = vadd.f32 0.0, %v2148
    %v2150 = vpop.f32.mrb[0].mxu0
    %v2151 = vadd.f32 0.0, %v2150
    %2152 = vmatprep.mubr.bf16.mxu0 0
    %2153 = vmatmul.mubr.bf16.gmra.mrb[0].mxu0 %v631
    %v2154 = vpop.f32.mrb[0].mxu0
    %v2155 = vadd.f32 0.0, %v2154
    %v2156 = vpop.f32.mrb[0].mxu0
    %v2157 = vadd.f32 0.0, %v2156
    %v2158 = vpop.f32.mrb[0].mxu0
    %v2159 = vadd.f32 0.0, %v2158
    %v2160 = vpop.f32.mrb[0].mxu0
    %v2161 = vadd.f32 0.0, %v2160
    %2162 = vmatprep.mubr.bf16.mxu0 0
    %2163 = vmatmul.mubr.bf16.gmra.mrb[0].mxu0 %v634
    %v2164 = vpop.f32.mrb[0].mxu0
    %v2165 = vadd.f32 0.0, %v2164
    %v2166 = vpop.f32.mrb[0].mxu0
    %v2167 = vadd.f32 0.0, %v2166
    %v2168 = vpop.f32.mrb[0].mxu0
    %v2169 = vadd.f32 0.0, %v2168
    %v2170 = vpop.f32.mrb[0].mxu0
    %v2171 = vadd.f32 0.0, %v2170
    %2172 = vmatprep.mubr.bf16.mxu0 0
    %2173 = vmatmul.mubr.bf16.gmra.mrb[0].mxu0 %v637
    %v2174 = vpop.f32.mrb[0].mxu0
    %v2175 = vadd.f32 0.0, %v2174
    %v2176 = vpop.f32.mrb[0].mxu0
    %v2177 = vadd.f32 0.0, %v2176
    %v2178 = vpop.f32.mrb[0].mxu0
    %v2179 = vadd.f32 0.0, %v2178
    %v2180 = vpop.f32.mrb[0].mxu0
    %v2181 = vadd.f32 0.0, %v2180
    %2182 = vmatprep.mubr.bf16.mxu0 0
    %2183 = vmatmul.mubr.bf16.gmra.mrb[0].mxu0 %v640
    %v2184 = vpop.f32.mrb[0].mxu0
    %v2185 = vadd.f32 0.0, %v2184
    %v2186 = vpop.f32.mrb[0].mxu0
    %v2187 = vadd.f32 0.0, %v2186
    %v2188 = vpop.f32.mrb[0].mxu0
    %v2189 = vadd.f32 0.0, %v2188
    %v2190 = vpop.f32.mrb[0].mxu0
    %v2191 = vadd.f32 0.0, %v2190
    %2192 = vmatprep.mubr.bf16.mxu0 0
    %2193 = vmatmul.mubr.bf16.gmra.mrb[0].mxu0 %v643
    %v2194 = vpop.f32.mrb[0].mxu0
    %v2195 = vadd.f32 0.0, %v2194
    %v2196 = vpop.f32.mrb[0].mxu0
    %v2197 = vadd.f32 0.0, %v2196
    %v2198 = vpop.f32.mrb[0].mxu0
    %v2199 = vadd.f32 0.0, %v2198
    %v2200 = vpop.f32.mrb[0].mxu0
    %v2201 = vadd.f32 0.0, %v2200
    %2202 = vmatprep.mubr.bf16.mxu0 0
    %2203 = vmatmul.mubr.bf16.gmra.mrb[0].mxu0 %v1003
    %v2204 = vpop.f32.mrb[0].mxu0
    %v2205 = vadd.f32 0.0, %v2204
    %v2206 = vpop.f32.mrb[0].mxu0
    %v2207 = vadd.f32 0.0, %v2206
    %v2208 = vpop.f32.mrb[0].mxu0
    %v2209 = vadd.f32 0.0, %v2208
    %v2210 = vpop.f32.mrb[0].mxu0
    %v2211 = vadd.f32 0.0, %v2210
    %2212 = vmatprep.mubr.bf16.mxu0 0
    %2213 = vmatmul.mubr.bf16.gmra.mrb[0].mxu0 %v1915
    %v2214 = vpop.f32.mrb[0].mxu0
    %v2215 = vadd.f32 0.0, %v2214
    %v2216 = vpop.f32.mrb[0].mxu0
    %v2217 = vadd.f32 0.0, %v2216
    %v2218 = vpop.f32.mrb[0].mxu0
    %v2219 = vadd.f32 0.0, %v2218
    %v2220 = vpop.f32.mrb[0].mxu0
    %v2221 = vadd.f32 0.0, %v2220
    %2222 = vdwg.mxu0
    %v2223 = vadd.f32 %v1767, %v1952
    %v2224 = vadd.f32 %v1768, %v1954
    %v2225 = vadd.f32 %v1769, %v2105
    %v2226 = vadd.f32 %v1770, %v2107
    %v2227 = vadd.f32 %v1771, %v1956
    %v2228 = vadd.f32 %v1772, %v1958
    %v2229 = vadd.f32 %v1773, %v2109
    %v2230 = vadd.f32 %v1774, %v2111
    %v2231 = vadd.f32 %v1775, %v1962
    %v2232 = vadd.f32 %v1776, %v1964
    %v2233 = vadd.f32 %v1777, %v2115
    %v2234 = vadd.f32 %v1778, %v2117
    %v2235 = vadd.f32 %v1779, %v1966
    %v2236 = vadd.f32 %v1780, %v1968
    %v2237 = vadd.f32 %v1781, %v2119
    %v2238 = vadd.f32 %v1782, %v2121
    %v2239 = vadd.f32 %v1783, %v1972
    %v2240 = vadd.f32 %v1784, %v1974
    %v2241 = vadd.f32 %v1785, %v2125
    %v2242 = vadd.f32 %v1786, %v2127
    %v2243 = vadd.f32 %v1787, %v1976
    %v2244 = vadd.f32 %v1788, %v1978
    %v2245 = vadd.f32 %v1789, %v2129
    %v2246 = vadd.f32 %v1790, %v2131
    %v2247 = vadd.f32 %v1791, %v1982
    %v2248 = vadd.f32 %v1792, %v1984
    %v2249 = vadd.f32 %v1793, %v2135
    %v2250 = vadd.f32 %v1794, %v2137
    %v2251 = vadd.f32 %v1795, %v1986
    %v2252 = vadd.f32 %v1796, %v1988
    %v2253 = vadd.f32 %v1797, %v2139
    %v2254 = vadd.f32 %v1798, %v2141
    %v2255 = vadd.f32 %v1799, %v1992
    %v2256 = vadd.f32 %v1800, %v1994
    %v2257 = vadd.f32 %v1801, %v2145
    %v2258 = vadd.f32 %v1802, %v2147
    %v2259 = vadd.f32 %v1803, %v1996
    %v2260 = vadd.f32 %v1804, %v1998
    %v2261 = vadd.f32 %v1805, %v2149
    %v2262 = vadd.f32 %v1806, %v2151
    %v2263 = vadd.f32 %v1807, %v2002
    %v2264 = vadd.f32 %v1808, %v2004
    %v2265 = vadd.f32 %v1809, %v2155
    %v2266 = vadd.f32 %v1810, %v2157
    %v2267 = vadd.f32 %v1811, %v2006
    %v2268 = vadd.f32 %v1812, %v2008
    %v2269 = vadd.f32 %v1813, %v2159
    %v2270 = vadd.f32 %v1814, %v2161
    %v2271 = vadd.f32 %v1815, %v2012
    %v2272 = vadd.f32 %v1816, %v2014
    %v2273 = vadd.f32 %v1817, %v2165
    %v2274 = vadd.f32 %v1818, %v2167
    %v2275 = vadd.f32 %v1819, %v2016
    %v2276 = vadd.f32 %v1820, %v2018
    %v2277 = vadd.f32 %v1821, %v2169
    %v2278 = vadd.f32 %v1822, %v2171
    %v2279 = vadd.f32 %v1823, %v2022
    %v2280 = vadd.f32 %v1824, %v2024
    %v2281 = vadd.f32 %v1825, %v2175
    %v2282 = vadd.f32 %v1826, %v2177
    %v2283 = vadd.f32 %v1827, %v2026
    %v2284 = vadd.f32 %v1828, %v2028
    %v2285 = vadd.f32 %v1829, %v2179
    %v2286 = vadd.f32 %v1830, %v2181
    %v2287 = vadd.f32 %v1831, %v2032
    %v2288 = vadd.f32 %v1832, %v2034
    %v2289 = vadd.f32 %v1833, %v2185
    %v2290 = vadd.f32 %v1834, %v2187
    %v2291 = vadd.f32 %v1835, %v2036
    %v2292 = vadd.f32 %v1836, %v2038
    %v2293 = vadd.f32 %v1837, %v2189
    %v2294 = vadd.f32 %v1838, %v2191
    %v2295 = vadd.f32 %v1839, %v2042
    %v2296 = vadd.f32 %v1840, %v2044
    %v2297 = vadd.f32 %v1841, %v2195
    %v2298 = vadd.f32 %v1842, %v2197
    %v2299 = vadd.f32 %v1843, %v2046
    %v2300 = vadd.f32 %v1844, %v2048
    %v2301 = vadd.f32 %v1845, %v2199
    %v2302 = vadd.f32 %v1846, %v2201
    %v2303 = vadd.f32 %v1847, %v2052
    %v2304 = vadd.f32 %v1848, %v2054
    %v2305 = vadd.f32 %v1849, %v2205
    %v2306 = vadd.f32 %v1850, %v2207
    %v2307 = vadd.f32 %v1851, %v2056
    %v2308 = vadd.f32 %v1852, %v2058
    %v2309 = vadd.f32 %v1853, %v2209
    %v2310 = vadd.f32 %v1854, %v2211
    %v2311 = vadd.f32 %v1855, %v2062
    %v2312 = vadd.f32 %v1856, %v2064
    %v2313 = vadd.f32 %v1857, %v2215
    %v2314 = vadd.f32 %v1858, %v2217
    %v2315 = vadd.f32 %v1859, %v2066
    %v2316 = vadd.f32 %v1860, %v2068
    %v2317 = vadd.f32 %v1861, %v2219
    %v2318 = vadd.f32 %v1862, %v2221
    %v2319 = vmax.f32 %v2223, %v2225
    %v2320 = vmax.f32 %v2224, %v2226
    %v2321 = vmax.f32 %v2227, %v2229
    %v2322 = vmax.f32 %v2228, %v2230
    %v2323 = vmax.f32 %v2231, %v2233
    %v2324 = vmax.f32 %v2232, %v2234
    %v2325 = vmax.f32 %v2235, %v2237
    %v2326 = vmax.f32 %v2236, %v2238
    %v2327 = vmax.f32 %v2239, %v2241
    %v2328 = vmax.f32 %v2240, %v2242
    %v2329 = vmax.f32 %v2243, %v2245
    %v2330 = vmax.f32 %v2244, %v2246
    %v2331 = vmax.f32 %v2247, %v2249
    %v2332 = vmax.f32 %v2248, %v2250
    %v2333 = vmax.f32 %v2251, %v2253
    %v2334 = vmax.f32 %v2252, %v2254
    %v2335 = vmax.f32 %v2255, %v2257
    %v2336 = vmax.f32 %v2256, %v2258
    %v2337 = vmax.f32 %v2259, %v2261
    %v2338 = vmax.f32 %v2260, %v2262
    %v2339 = vmax.f32 %v2263, %v2265
    %v2340 = vmax.f32 %v2264, %v2266
    %v2341 = vmax.f32 %v2267, %v2269
    %v2342 = vmax.f32 %v2268, %v2270
    %v2343 = vmax.f32 %v2271, %v2273
    %v2344 = vmax.f32 %v2272, %v2274
    %v2345 = vmax.f32 %v2275, %v2277
    %v2346 = vmax.f32 %v2276, %v2278
    %v2347 = vmax.f32 %v2279, %v2281
    %v2348 = vmax.f32 %v2280, %v2282
    %v2349 = vmax.f32 %v2283, %v2285
    %v2350 = vmax.f32 %v2284, %v2286
    %v2351 = vmax.f32 %v2287, %v2289
    %v2352 = vmax.f32 %v2288, %v2290
    %v2353 = vmax.f32 %v2291, %v2293
    %v2354 = vmax.f32 %v2292, %v2294
    %v2355 = vmax.f32 %v2295, %v2297
    %v2356 = vmax.f32 %v2296, %v2298
    %v2357 = vmax.f32 %v2299, %v2301
    %v2358 = vmax.f32 %v2300, %v2302
    %v2359 = vmax.f32 %v2303, %v2305
    %v2360 = vmax.f32 %v2304, %v2306
    %v2361 = vmax.f32 %v2307, %v2309
    %v2362 = vmax.f32 %v2308, %v2310
    %v2363 = vmax.f32 %v2311, %v2313
    %v2364 = vmax.f32 %v2312, %v2314
    %v2365 = vmax.f32 %v2315, %v2317
    %v2366 = vmax.f32 %v2316, %v2318
    %v2367 = vmax.f32 %v2319, %v2321
    %v2368 = vmax.f32 %v2320, %v2322
    %v2369 = vmax.f32 %v2323, %v2325
    %v2370 = vmax.f32 %v2324, %v2326
    %v2371 = vmax.f32 %v2327, %v2329
    %v2372 = vmax.f32 %v2328, %v2330
    %v2373 = vmax.f32 %v2331, %v2333
    %v2374 = vmax.f32 %v2332, %v2334
    %v2375 = vmax.f32 %v2335, %v2337
    %v2376 = vmax.f32 %v2336, %v2338
    %v2377 = vmax.f32 %v2339, %v2341
    %v2378 = vmax.f32 %v2340, %v2342
    %v2379 = vmax.f32 %v2343, %v2345
    %v2380 = vmax.f32 %v2344, %v2346
    %v2381 = vmax.f32 %v2347, %v2349
    %v2382 = vmax.f32 %v2348, %v2350
    %v2383 = vmax.f32 %v2351, %v2353
    %v2384 = vmax.f32 %v2352, %v2354
    %v2385 = vmax.f32 %v2355, %v2357
    %v2386 = vmax.f32 %v2356, %v2358
    %v2387 = vmax.f32 %v2359, %v2361
    %v2388 = vmax.f32 %v2360, %v2362
    %v2389 = vmax.f32 %v2363, %v2365
    %v2390 = vmax.f32 %v2364, %v2366
    %v2391 = vld [vmem:[%s2] sm:$0x3]
    %v2393 = vlaneseq
    %v2394 = vshrl.u32 %v2393, 7
    %v2395 = vsub.s32 0, %v2394
    %v2396 = vrot.slane %v2391, %v2395
    %v2397 = vlaneseq
    %v2398 = vshrl.u32 %v2397, 7
    %v2399 = vsub.s32 1, %v2398
    %v2400 = vrot.slane %v2391, %v2399
    %v2403 = vadd.f32 %v2367, %v2396
    %v2404 = vadd.f32 %v2368, %v2400
    %v2405 = vadd.f32 %v2369, %v2396
    %v2406 = vadd.f32 %v2370, %v2400
    %v2407 = vadd.f32 %v2371, %v2396
    %v2408 = vadd.f32 %v2372, %v2400
    %v2409 = vadd.f32 %v2373, %v2396
    %v2410 = vadd.f32 %v2374, %v2400
    %v2411 = vadd.f32 %v2375, %v2396
    %v2412 = vadd.f32 %v2376, %v2400
    %v2413 = vadd.f32 %v2377, %v2396
    %v2414 = vadd.f32 %v2378, %v2400
    %v2415 = vadd.f32 %v2379, %v2396
    %v2416 = vadd.f32 %v2380, %v2400
    %v2417 = vadd.f32 %v2381, %v2396
    %v2418 = vadd.f32 %v2382, %v2400
    %v2419 = vadd.f32 %v2383, %v2396
    %v2420 = vadd.f32 %v2384, %v2400
    %v2421 = vadd.f32 %v2385, %v2396
    %v2422 = vadd.f32 %v2386, %v2400
    %v2423 = vadd.f32 %v2387, %v2396
    %v2424 = vadd.f32 %v2388, %v2400
    %v2425 = vadd.f32 %v2389, %v2396
    %v2426 = vadd.f32 %v2390, %v2400
    %v2427 = vmax.f32 %v2403, 0.0
    %v2428 = vmax.f32 %v2404, 0.0
    %v2429 = vmax.f32 %v2405, 0.0
    %v2430 = vmax.f32 %v2406, 0.0
    %v2431 = vmax.f32 %v2407, 0.0
    %v2432 = vmax.f32 %v2408, 0.0
    %v2433 = vmax.f32 %v2409, 0.0
    %v2434 = vmax.f32 %v2410, 0.0
    %v2435 = vmax.f32 %v2411, 0.0
    %v2436 = vmax.f32 %v2412, 0.0
    %v2437 = vmax.f32 %v2413, 0.0
    %v2438 = vmax.f32 %v2414, 0.0
    %v2439 = vmax.f32 %v2415, 0.0
    %v2440 = vmax.f32 %v2416, 0.0
    %v2441 = vmax.f32 %v2417, 0.0
    %v2442 = vmax.f32 %v2418, 0.0
    %v2443 = vmax.f32 %v2419, 0.0
    %v2444 = vmax.f32 %v2420, 0.0
    %v2445 = vmax.f32 %v2421, 0.0
    %v2446 = vmax.f32 %v2422, 0.0
    %v2447 = vmax.f32 %v2423, 0.0
    %v2448 = vmax.f32 %v2424, 0.0
    %v2449 = vmax.f32 %v2425, 0.0
    %v2450 = vmax.f32 %v2426, 0.0
    %v2451 = vpack.c.bf16 %v2427, %v2427
    %v2452 = vpack.c.bf16 %v2428, %v2428
    %v2453 = vpack.c.bf16 %v2429, %v2429
    %v2454 = vpack.c.bf16 %v2430, %v2430
    %v2455 = vpack.c.bf16 %v2431, %v2431
    %v2456 = vpack.c.bf16 %v2432, %v2432
    %v2457 = vpack.c.bf16 %v2433, %v2433
    %v2458 = vpack.c.bf16 %v2434, %v2434
    %v2459 = vpack.c.bf16 %v2435, %v2435
    %v2460 = vpack.c.bf16 %v2436, %v2436
    %v2461 = vpack.c.bf16 %v2437, %v2437
    %v2462 = vpack.c.bf16 %v2438, %v2438
    %v2463 = vpack.c.bf16 %v2439, %v2439
    %v2464 = vpack.c.bf16 %v2440, %v2440
    %v2465 = vpack.c.bf16 %v2441, %v2441
    %v2466 = vpack.c.bf16 %v2442, %v2442
    %v2467 = vpack.c.bf16 %v2443, %v2443
    %v2468 = vpack.c.bf16 %v2444, %v2444
    %v2469 = vpack.c.bf16 %v2445, %v2445
    %v2470 = vpack.c.bf16 %v2446, %v2446
    %v2471 = vpack.c.bf16 %v2447, %v2447
    %v2472 = vpack.c.bf16 %v2448, %v2448
    %v2473 = vpack.c.bf16 %v2449, %v2449
    %v2474 = vpack.c.bf16 %v2450, %v2450
    %v2491 = vunpack.c.l.b16 %v2451
    %v2492 = vunpack.c.l.b16 %v2452
    %v2493 = vunpack.c.l.b16 %v2453
    %v2494 = vunpack.c.l.b16 %v2454
    %v2495 = vunpack.c.l.b16 %v2455
    %v2496 = vunpack.c.l.b16 %v2456
    %v2497 = vunpack.c.l.b16 %v2457
    %v2498 = vunpack.c.l.b16 %v2458
    %v2499 = vunpack.c.l.b16 %v2459
    %v2500 = vunpack.c.l.b16 %v2460
    %v2501 = vunpack.c.l.b16 %v2461
    %v2502 = vunpack.c.l.b16 %v2462
    %v2503 = vunpack.c.l.b16 %v2463
    %v2504 = vunpack.c.l.b16 %v2464
    %v2505 = vunpack.c.l.b16 %v2465
    %v2506 = vunpack.c.l.b16 %v2466
    %v2507 = vld [vmem:[#allocation4] sm:$0xff]
    %v2508 = vld [vmem:[#allocation4 + $0x8] sm:$0xff]
    %v2509 = vld [vmem:[#allocation4 + $0x10] sm:$0xff]
    %v2510 = vld [vmem:[#allocation4 + $0x18] sm:$0xff]
    %v2511 = vld [vmem:[#allocation4 + $0x20] sm:$0xff]
    %v2512 = vld [vmem:[#allocation4 + $0x28] sm:$0xff]
    %v2513 = vld [vmem:[#allocation4 + $0x30] sm:$0xff]
    %v2514 = vld [vmem:[#allocation4 + $0x38] sm:$0xff]
    %v2515 = vld [vmem:[#allocation4 + $0x40] sm:$0xff]
    %v2516 = vld [vmem:[#allocation4 + $0x48] sm:$0xff]
    %v2517 = vld [vmem:[#allocation4 + $0x50] sm:$0xff]
    %v2518 = vld [vmem:[#allocation4 + $0x58] sm:$0xff]
    %v2519 = vld [vmem:[#allocation4 + $0x60] sm:$0xff]
    %v2520 = vld [vmem:[#allocation4 + $0x68] sm:$0xff]
    %v2521 = vld [vmem:[#allocation4 + $0x70] sm:$0xff]
    %v2522 = vld [vmem:[#allocation4 + $0x78] sm:$0xff]
    %v2523 = vld [vmem:[#allocation4 + $0x80] sm:$0xff]
    %v2524 = vld [vmem:[#allocation4 + $0x88] sm:$0xff]
    %v2525 = vld [vmem:[#allocation4 + $0x90] sm:$0xff]
    %v2526 = vld [vmem:[#allocation4 + $0x98] sm:$0xff]
    %v2527 = vld [vmem:[#allocation4 + $0xa0] sm:$0xff]
    %v2528 = vld [vmem:[#allocation4 + $0xa8] sm:$0xff]
    %v2529 = vld [vmem:[#allocation4 + $0xb0] sm:$0xff]
    %v2530 = vld [vmem:[#allocation4 + $0xb8] sm:$0xff]
    %v2533 = vunpack.c.l.b16 %v2467
    %v2534 = vunpack.c.l.b16 %v2468
    %v2535 = vld [vmem:[#allocation4 + $0xc0] sm:$0xff]
    %v2536 = vld [vmem:[#allocation4 + $0xc8] sm:$0xff]
    %v2537 = vld [vmem:[#allocation4 + $0xd0] sm:$0xff]
    %v2538 = vld [vmem:[#allocation4 + $0xd8] sm:$0xff]
    %v2539 = vld [vmem:[#allocation4 + $0xe0] sm:$0xff]
    %v2540 = vld [vmem:[#allocation4 + $0xe8] sm:$0xff]
    %v2541 = vld [vmem:[#allocation4 + $0xf0] sm:$0xff]
    %v2542 = vld [vmem:[#allocation4 + $0xf8] sm:$0xff]
    %v2543 = vld [vmem:[#allocation4 + $0x100] sm:$0xff]
    %v2544 = vld [vmem:[#allocation4 + $0x108] sm:$0xff]
    %v2545 = vld [vmem:[#allocation4 + $0x110] sm:$0xff]
    %v2546 = vld [vmem:[#allocation4 + $0x118] sm:$0xff]
    %v2547 = vld [vmem:[#allocation4 + $0x120] sm:$0xff]
    %v2548 = vld [vmem:[#allocation4 + $0x128] sm:$0xff]
    %v2549 = vld [vmem:[#allocation4 + $0x130] sm:$0xff]
    %v2550 = vld [vmem:[#allocation4 + $0x138] sm:$0xff]
    %v2551 = vld [vmem:[#allocation4 + $0x140] sm:$0xff]
    %v2552 = vld [vmem:[#allocation4 + $0x148] sm:$0xff]
    %v2553 = vld [vmem:[#allocation4 + $0x150] sm:$0xff]
    %v2554 = vld [vmem:[#allocation4 + $0x158] sm:$0xff]
    %v2555 = vld [vmem:[#allocation4 + $0x160] sm:$0xff]
    %v2556 = vld [vmem:[#allocation4 + $0x168] sm:$0xff]
    %v2557 = vld [vmem:[#allocation4 + $0x170] sm:$0xff]
    %v2558 = vld [vmem:[#allocation4 + $0x178] sm:$0xff]
    %v2559 = vpack.c.b16 %v2495, %v2493
    %v2560 = vpack.c.b16 %v2496, %v2494
    %v2561 = vpack.c.b16 %v2499, %v2497
    %v2562 = vpack.c.b16 %v2500, %v2498
    %v2563 = vpack.c.b16 %v2503, %v2501
    %v2564 = vpack.c.b16 %v2504, %v2502
    %v2565 = vpack.c.b16 %v2533, %v2505
    %v2566 = vpack.c.b16 %v2534, %v2506
    %v2595 = vunpack.c.l.b16 %v2535
    %v2596 = vunpack.c.h.b16 %v2535
    %v2597 = vunpack.c.l.b16 %v2536
    %v2598 = vunpack.c.h.b16 %v2536
    %v2599 = vunpack.c.l.b16 %v2537
    %v2600 = vunpack.c.h.b16 %v2537
    %v2601 = vunpack.c.l.b16 %v2538
    %v2602 = vunpack.c.h.b16 %v2538
    %v2603 = vunpack.c.l.b16 %v2539
    %v2604 = vunpack.c.h.b16 %v2539
    %v2605 = vunpack.c.l.b16 %v2540
    %v2606 = vunpack.c.h.b16 %v2540
    %v2607 = vunpack.c.l.b16 %v2541
    %v2608 = vunpack.c.h.b16 %v2541
    %v2609 = vunpack.c.l.b16 %v2542
    %v2610 = vunpack.c.h.b16 %v2542
    %v2611 = vunpack.c.l.b16 %v2543
    %v2612 = vunpack.c.h.b16 %v2543
    %v2613 = vunpack.c.l.b16 %v2544
    %v2614 = vunpack.c.h.b16 %v2544
    %v2615 = vunpack.c.l.b16 %v2545
    %v2616 = vunpack.c.h.b16 %v2545
    %v2617 = vunpack.c.l.b16 %v2546
    %v2618 = vunpack.c.h.b16 %v2546
    %v2619 = vunpack.c.l.b16 %v2547
    %v2620 = vunpack.c.h.b16 %v2547
    %v2621 = vunpack.c.l.b16 %v2548
    %v2622 = vunpack.c.h.b16 %v2548
    %v2623 = vunpack.c.l.b16 %v2549
    %v2624 = vunpack.c.h.b16 %v2549
    %v2625 = vunpack.c.l.b16 %v2550
    %v2626 = vunpack.c.h.b16 %v2550
    %v2627 = vunpack.c.l.b16 %v2551
    %v2628 = vunpack.c.h.b16 %v2551
    %v2629 = vunpack.c.l.b16 %v2552
    %v2630 = vunpack.c.h.b16 %v2552
    %v2631 = vunpack.c.l.b16 %v2553
    %v2632 = vunpack.c.h.b16 %v2553
    %v2633 = vunpack.c.l.b16 %v2554
    %v2634 = vunpack.c.h.b16 %v2554
    %v2635 = vunpack.c.l.b16 %v2555
    %v2636 = vunpack.c.h.b16 %v2555
    %v2637 = vunpack.c.l.b16 %v2556
    %v2638 = vunpack.c.h.b16 %v2556
    %v2639 = vunpack.c.l.b16 %v2557
    %v2640 = vunpack.c.h.b16 %v2557
    %v2641 = vunpack.c.l.b16 %v2558
    %v2642 = vunpack.c.h.b16 %v2558
    %v2643 = vpack.c.b16 %v2597, %v2595
    %v2644 = vpack.c.b16 %v2598, %v2596
    %v2645 = vpack.c.b16 %v2601, %v2599
    %v2646 = vpack.c.b16 %v2602, %v2600
    %v2647 = vpack.c.b16 %v2605, %v2603
    %v2648 = vpack.c.b16 %v2606, %v2604
    %v2649 = vpack.c.b16 %v2609, %v2607
    %v2650 = vpack.c.b16 %v2610, %v2608
    %v2651 = vpack.c.b16 %v2613, %v2611
    %v2652 = vpack.c.b16 %v2614, %v2612
    %v2653 = vpack.c.b16 %v2617, %v2615
    %v2654 = vpack.c.b16 %v2618, %v2616
    %v2655 = vpack.c.b16 %v2621, %v2619
    %v2656 = vpack.c.b16 %v2622, %v2620
    %v2657 = vpack.c.b16 %v2625, %v2623
    %v2658 = vpack.c.b16 %v2626, %v2624
    %v2659 = vpack.c.b16 %v2629, %v2627
    %v2660 = vpack.c.b16 %v2630, %v2628
    %v2661 = vpack.c.b16 %v2633, %v2631
    %v2662 = vpack.c.b16 %v2634, %v2632
    %v2663 = vpack.c.b16 %v2637, %v2635
    %v2664 = vpack.c.b16 %v2638, %v2636
    %v2665 = vpack.c.b16 %v2641, %v2639
    %v2666 = vpack.c.b16 %v2642, %v2640
    %vm2691 = vcmask 523264
    %v2693 = vsel %vm2691, %v2560, 0
    %v2696 = vsel %vm2691, %v2562, 0
    %v2699 = vsel %vm2691, %v2564, 0
    %v2702 = vsel %vm2691, %v2566, 0
    %2704 = vmatprep.subr.bf16.mxu0 %v2644
    %2705 = vmatpush1.bf16.msra.mxu0 %v2643
    %2706 = vmatprep.subr.bf16.mxu0 %v2646
    %2707 = vmatpush1.bf16.msra.mxu0 %v2645
    %2708 = vmatprep.subr.bf16.mxu0 %v2648
    %2709 = vmatpush1.bf16.msra.mxu0 %v2647
    %2710 = vmatprep.subr.bf16.mxu0 %v2650
    %2711 = vmatpush1.bf16.msra.mxu0 %v2649
    %2712 = vmatprep.subr.bf16.mxu0 %v2652
    %2713 = vmatpush1.bf16.msra.mxu0 %v2651
    %2714 = vmatprep.subr.bf16.mxu0 %v2654
    %2715 = vmatpush1.bf16.msra.mxu0 %v2653
    %2716 = vmatprep.subr.bf16.mxu0 %v2656
    %2717 = vmatpush1.bf16.msra.mxu0 %v2655
    %2718 = vmatprep.subr.bf16.mxu0 %v2658
    %2719 = vmatpush1.bf16.msra.mxu0 %v2657
    %2720 = vmatprep.subr.bf16.mxu0 %v2660
    %2721 = vmatpush1.bf16.msra.mxu0 %v2659
    %2722 = vmatprep.subr.bf16.mxu0 %v2662
    %2723 = vmatpush1.bf16.msra.mxu0 %v2661
    %2724 = vmatprep.subr.bf16.mxu0 %v2664
    %2725 = vmatpush1.bf16.msra.mxu0 %v2663
    %2726 = vmatprep.subr.bf16.mxu0 %v2666
    %2727 = vmatpush1.bf16.msra.mxu0 %v2665
    %2728 = vmatprep.subr.bf16.mxu0 0
    %2729 = vmatpush1.bf16.msra.mxu0 0
    %2730 = vmatprep.subr.bf16.mxu0 0
    %2731 = vmatpush1.bf16.msra.mxu0 0
    %2732 = vmatprep.subr.bf16.mxu0 0
    %2733 = vmatpush1.bf16.msra.mxu0 0
    %2734 = vmatprep.subr.bf16.mxu0 0
    %2735 = vmatpush1.bf16.msra.mxu0 0
    %2736 = vmatprep.mubr.bf16.mxu0 %v2693
    %2737 = vmatmul.mubr.bf16.gmra.mrb[0].mxu0 %v2559
    %v2738 = vpop.f32.mrb[0].mxu0
    %v2739 = vadd.f32 0.0, %v2738
    %v2740 = vpop.f32.mrb[0].mxu0
    %v2741 = vadd.f32 0.0, %v2740
    %v2742 = vpop.f32.mrb[0].mxu0
    %v2743 = vadd.f32 0.0, %v2742
    %v2744 = vpop.f32.mrb[0].mxu0
    %v2745 = vadd.f32 0.0, %v2744
    %2746 = vmatprep.mubr.bf16.mxu0 %v2696
    %2747 = vmatmul.mubr.bf16.gmra.mrb[0].mxu0 %v2561
    %v2748 = vpop.f32.mrb[0].mxu0
    %v2749 = vadd.f32 0.0, %v2748
    %v2750 = vpop.f32.mrb[0].mxu0
    %v2751 = vadd.f32 0.0, %v2750
    %v2752 = vpop.f32.mrb[0].mxu0
    %v2753 = vadd.f32 0.0, %v2752
    %v2754 = vpop.f32.mrb[0].mxu0
    %v2755 = vadd.f32 0.0, %v2754
    %2756 = vmatprep.mubr.bf16.mxu0 %v2699
    %2757 = vmatmul.mubr.bf16.gmra.mrb[0].mxu0 %v2563
    %v2758 = vpop.f32.mrb[0].mxu0
    %v2759 = vadd.f32 0.0, %v2758
    %v2760 = vpop.f32.mrb[0].mxu0
    %v2761 = vadd.f32 0.0, %v2760
    %v2762 = vpop.f32.mrb[0].mxu0
    %v2763 = vadd.f32 0.0, %v2762
    %v2764 = vpop.f32.mrb[0].mxu0
    %v2765 = vadd.f32 0.0, %v2764
    %2766 = vmatprep.mubr.bf16.mxu0 %v2702
    %2767 = vmatmul.mubr.bf16.gmra.mrb[0].mxu0 %v2565
    %v2768 = vpop.f32.mrb[0].mxu0
    %v2769 = vadd.f32 0.0, %v2768
    %v2770 = vpop.f32.mrb[0].mxu0
    %v2771 = vadd.f32 0.0, %v2770
    %v2772 = vpop.f32.mrb[0].mxu0
    %v2773 = vadd.f32 0.0, %v2772
    %v2774 = vpop.f32.mrb[0].mxu0
    %v2775 = vadd.f32 0.0, %v2774
    %2776 = vdwg.mxu0
    %v2777 = vpack.c.b16 %v2493, %v2491
    %v2778 = vpack.c.b16 %v2494, %v2492
    %v2779 = vpack.c.b16 %v2497, %v2495
    %v2780 = vpack.c.b16 %v2498, %v2496
    %v2781 = vpack.c.b16 %v2501, %v2499
    %v2782 = vpack.c.b16 %v2502, %v2500
    %v2783 = vpack.c.b16 %v2505, %v2503
    %v2784 = vpack.c.b16 %v2506, %v2504
    %v2813 = vunpack.c.l.b16 %v2507
    %v2814 = vunpack.c.h.b16 %v2507
    %v2815 = vunpack.c.l.b16 %v2508
    %v2816 = vunpack.c.h.b16 %v2508
    %v2817 = vunpack.c.l.b16 %v2509
    %v2818 = vunpack.c.h.b16 %v2509
    %v2819 = vunpack.c.l.b16 %v2510
    %v2820 = vunpack.c.h.b16 %v2510
    %v2821 = vunpack.c.l.b16 %v2511
    %v2822 = vunpack.c.h.b16 %v2511
    %v2823 = vunpack.c.l.b16 %v2512
    %v2824 = vunpack.c.h.b16 %v2512
    %v2825 = vunpack.c.l.b16 %v2513
    %v2826 = vunpack.c.h.b16 %v2513
    %v2827 = vunpack.c.l.b16 %v2514
    %v2828 = vunpack.c.h.b16 %v2514
    %v2829 = vunpack.c.l.b16 %v2515
    %v2830 = vunpack.c.h.b16 %v2515
    %v2831 = vunpack.c.l.b16 %v2516
    %v2832 = vunpack.c.h.b16 %v2516
    %v2833 = vunpack.c.l.b16 %v2517
    %v2834 = vunpack.c.h.b16 %v2517
    %v2835 = vunpack.c.l.b16 %v2518
    %v2836 = vunpack.c.h.b16 %v2518
    %v2837 = vunpack.c.l.b16 %v2519
    %v2838 = vunpack.c.h.b16 %v2519
    %v2839 = vunpack.c.l.b16 %v2520
    %v2840 = vunpack.c.h.b16 %v2520
    %v2841 = vunpack.c.l.b16 %v2521
    %v2842 = vunpack.c.h.b16 %v2521
    %v2843 = vunpack.c.l.b16 %v2522
    %v2844 = vunpack.c.h.b16 %v2522
    %v2845 = vunpack.c.l.b16 %v2523
    %v2846 = vunpack.c.h.b16 %v2523
    %v2847 = vunpack.c.l.b16 %v2524
    %v2848 = vunpack.c.h.b16 %v2524
    %v2849 = vunpack.c.l.b16 %v2525
    %v2850 = vunpack.c.h.b16 %v2525
    %v2851 = vunpack.c.l.b16 %v2526
    %v2852 = vunpack.c.h.b16 %v2526
    %v2853 = vunpack.c.l.b16 %v2527
    %v2854 = vunpack.c.h.b16 %v2527
    %v2855 = vunpack.c.l.b16 %v2528
    %v2856 = vunpack.c.h.b16 %v2528
    %v2857 = vunpack.c.l.b16 %v2529
    %v2858 = vunpack.c.h.b16 %v2529
    %v2859 = vunpack.c.l.b16 %v2530
    %v2860 = vunpack.c.h.b16 %v2530
    %v2861 = vpack.c.b16 %v2815, %v2813
    %v2862 = vpack.c.b16 %v2816, %v2814
    %v2863 = vpack.c.b16 %v2819, %v2817
    %v2864 = vpack.c.b16 %v2820, %v2818
    %v2865 = vpack.c.b16 %v2823, %v2821
    %v2866 = vpack.c.b16 %v2824, %v2822
    %v2867 = vpack.c.b16 %v2827, %v2825
    %v2868 = vpack.c.b16 %v2828, %v2826
    %v2869 = vpack.c.b16 %v2831, %v2829
    %v2870 = vpack.c.b16 %v2832, %v2830
    %v2871 = vpack.c.b16 %v2835, %v2833
    %v2872 = vpack.c.b16 %v2836, %v2834
    %v2873 = vpack.c.b16 %v2839, %v2837
    %v2874 = vpack.c.b16 %v2840, %v2838
    %v2875 = vpack.c.b16 %v2843, %v2841
    %v2876 = vpack.c.b16 %v2844, %v2842
    %v2877 = vpack.c.b16 %v2847, %v2845
    %v2878 = vpack.c.b16 %v2848, %v2846
    %v2879 = vpack.c.b16 %v2851, %v2849
    %v2880 = vpack.c.b16 %v2852, %v2850
    %v2881 = vpack.c.b16 %v2855, %v2853
    %v2882 = vpack.c.b16 %v2856, %v2854
    %v2883 = vpack.c.b16 %v2859, %v2857
    %v2884 = vpack.c.b16 %v2860, %v2858
    %v2910 = vsel %vm2691, %v2778, 0
    %v2913 = vsel %vm2691, %v2780, 0
    %v2916 = vsel %vm2691, %v2782, 0
    %v2919 = vsel %vm2691, %v2784, 0
    %2921 = vmatprep.subr.bf16.mxu0 %v2862
    %2922 = vmatpush1.bf16.msra.mxu0 %v2861
    %2923 = vmatprep.subr.bf16.mxu0 %v2864
    %2924 = vmatpush1.bf16.msra.mxu0 %v2863
    %2925 = vmatprep.subr.bf16.mxu0 %v2866
    %2926 = vmatpush1.bf16.msra.mxu0 %v2865
    %2927 = vmatprep.subr.bf16.mxu0 %v2868
    %2928 = vmatpush1.bf16.msra.mxu0 %v2867
    %2929 = vmatprep.subr.bf16.mxu0 %v2870
    %2930 = vmatpush1.bf16.msra.mxu0 %v2869
    %2931 = vmatprep.subr.bf16.mxu0 %v2872
    %2932 = vmatpush1.bf16.msra.mxu0 %v2871
    %2933 = vmatprep.subr.bf16.mxu0 %v2874
    %2934 = vmatpush1.bf16.msra.mxu0 %v2873
    %2935 = vmatprep.subr.bf16.mxu0 %v2876
    %2936 = vmatpush1.bf16.msra.mxu0 %v2875
    %2937 = vmatprep.subr.bf16.mxu0 %v2878
    %2938 = vmatpush1.bf16.msra.mxu0 %v2877
    %2939 = vmatprep.subr.bf16.mxu0 %v2880
    %2940 = vmatpush1.bf16.msra.mxu0 %v2879
    %2941 = vmatprep.subr.bf16.mxu0 %v2882
    %2942 = vmatpush1.bf16.msra.mxu0 %v2881
    %2943 = vmatprep.subr.bf16.mxu0 %v2884
    %2944 = vmatpush1.bf16.msra.mxu0 %v2883
    %2945 = vmatprep.subr.bf16.mxu0 0
    %2946 = vmatpush1.bf16.msra.mxu0 0
    %2947 = vmatprep.subr.bf16.mxu0 0
    %2948 = vmatpush1.bf16.msra.mxu0 0
    %2949 = vmatprep.subr.bf16.mxu0 0
    %2950 = vmatpush1.bf16.msra.mxu0 0
    %2951 = vmatprep.subr.bf16.mxu0 0
    %2952 = vmatpush1.bf16.msra.mxu0 0
    %2953 = vmatprep.mubr.bf16.mxu0 %v2910
    %2954 = vmatmul.mubr.bf16.gmra.mrb[0].mxu0 %v2777
    %v2955 = vpop.f32.mrb[0].mxu0
    %v2956 = vadd.f32 %v2739, %v2955
    %v2957 = vpop.f32.mrb[0].mxu0
    %v2958 = vadd.f32 %v2741, %v2957
    %v2959 = vpop.f32.mrb[0].mxu0
    %v2960 = vadd.f32 %v2743, %v2959
    %v2961 = vpop.f32.mrb[0].mxu0
    %v2962 = vadd.f32 %v2745, %v2961
    %2963 = vmatprep.mubr.bf16.mxu0 %v2913
    %2964 = vmatmul.mubr.bf16.gmra.mrb[0].mxu0 %v2779
    %v2965 = vpop.f32.mrb[0].mxu0
    %v2966 = vadd.f32 %v2749, %v2965
    %v2967 = vpop.f32.mrb[0].mxu0
    %v2968 = vadd.f32 %v2751, %v2967
    %v2969 = vpop.f32.mrb[0].mxu0
    %v2970 = vadd.f32 %v2753, %v2969
    %v2971 = vpop.f32.mrb[0].mxu0
    %v2972 = vadd.f32 %v2755, %v2971
    %2973 = vmatprep.mubr.bf16.mxu0 %v2916
    %2974 = vmatmul.mubr.bf16.gmra.mrb[0].mxu0 %v2781
    %v2975 = vpop.f32.mrb[0].mxu0
    %v2976 = vadd.f32 %v2759, %v2975
    %v2977 = vpop.f32.mrb[0].mxu0
    %v2978 = vadd.f32 %v2761, %v2977
    %v2979 = vpop.f32.mrb[0].mxu0
    %v2980 = vadd.f32 %v2763, %v2979
    %v2981 = vpop.f32.mrb[0].mxu0
    %v2982 = vadd.f32 %v2765, %v2981
    %2983 = vmatprep.mubr.bf16.mxu0 %v2919
    %2984 = vmatmul.mubr.bf16.gmra.mrb[0].mxu0 %v2783
    %v2985 = vpop.f32.mrb[0].mxu0
    %v2986 = vadd.f32 %v2769, %v2985
    %v2987 = vpop.f32.mrb[0].mxu0
    %v2988 = vadd.f32 %v2771, %v2987
    %v2989 = vpop.f32.mrb[0].mxu0
    %v2990 = vadd.f32 %v2773, %v2989
    %v2991 = vpop.f32.mrb[0].mxu0
    %v2992 = vadd.f32 %v2775, %v2991
    %2993 = vdwg.mxu0
    %v2996 = vunpack.c.l.b16 %v2469
    %v2997 = vunpack.c.l.b16 %v2470
    %v2998 = vld [vmem:[#allocation4 + $0x180] sm:$0xff]
    %v2999 = vld [vmem:[#allocation4 + $0x188] sm:$0xff]
    %v3000 = vld [vmem:[#allocation4 + $0x190] sm:$0xff]
    %v3001 = vld [vmem:[#allocation4 + $0x198] sm:$0xff]
    %v3002 = vld [vmem:[#allocation4 + $0x1a0] sm:$0xff]
    %v3003 = vld [vmem:[#allocation4 + $0x1a8] sm:$0xff]
    %v3004 = vld [vmem:[#allocation4 + $0x1b0] sm:$0xff]
    %v3005 = vld [vmem:[#allocation4 + $0x1b8] sm:$0xff]
    %v3006 = vld [vmem:[#allocation4 + $0x1c0] sm:$0xff]
    %v3007 = vld [vmem:[#allocation4 + $0x1c8] sm:$0xff]
    %v3008 = vld [vmem:[#allocation4 + $0x1d0] sm:$0xff]
    %v3009 = vld [vmem:[#allocation4 + $0x1d8] sm:$0xff]
    %v3010 = vld [vmem:[#allocation4 + $0x1e0] sm:$0xff]
    %v3011 = vld [vmem:[#allocation4 + $0x1e8] sm:$0xff]
    %v3012 = vld [vmem:[#allocation4 + $0x1f0] sm:$0xff]
    %v3013 = vld [vmem:[#allocation4 + $0x1f8] sm:$0xff]
    %v3014 = vld [vmem:[#allocation4 + $0x200] sm:$0xff]
    %v3015 = vld [vmem:[#allocation4 + $0x208] sm:$0xff]
    %v3016 = vld [vmem:[#allocation4 + $0x210] sm:$0xff]
    %v3017 = vld [vmem:[#allocation4 + $0x218] sm:$0xff]
    %v3018 = vld [vmem:[#allocation4 + $0x220] sm:$0xff]
    %v3019 = vld [vmem:[#allocation4 + $0x228] sm:$0xff]
    %v3020 = vld [vmem:[#allocation4 + $0x230] sm:$0xff]
    %v3021 = vld [vmem:[#allocation4 + $0x238] sm:$0xff]
    %v3022 = vpack.c.b16 %v2996, %v2533
    %v3023 = vpack.c.b16 %v2997, %v2534
    %v3049 = vunpack.c.l.b16 %v2998
    %v3050 = vunpack.c.h.b16 %v2998
    %v3051 = vunpack.c.l.b16 %v2999
    %v3052 = vunpack.c.h.b16 %v2999
    %v3053 = vunpack.c.l.b16 %v3000
    %v3054 = vunpack.c.h.b16 %v3000
    %v3055 = vunpack.c.l.b16 %v3001
    %v3056 = vunpack.c.h.b16 %v3001
    %v3057 = vunpack.c.l.b16 %v3002
    %v3058 = vunpack.c.h.b16 %v3002
    %v3059 = vunpack.c.l.b16 %v3003
    %v3060 = vunpack.c.h.b16 %v3003
    %v3061 = vunpack.c.l.b16 %v3004
    %v3062 = vunpack.c.h.b16 %v3004
    %v3063 = vunpack.c.l.b16 %v3005
    %v3064 = vunpack.c.h.b16 %v3005
    %v3065 = vunpack.c.l.b16 %v3006
    %v3066 = vunpack.c.h.b16 %v3006
    %v3067 = vunpack.c.l.b16 %v3007
    %v3068 = vunpack.c.h.b16 %v3007
    %v3069 = vunpack.c.l.b16 %v3008
    %v3070 = vunpack.c.h.b16 %v3008
    %v3071 = vunpack.c.l.b16 %v3009
    %v3072 = vunpack.c.h.b16 %v3009
    %v3073 = vunpack.c.l.b16 %v3010
    %v3074 = vunpack.c.h.b16 %v3010
    %v3075 = vunpack.c.l.b16 %v3011
    %v3076 = vunpack.c.h.b16 %v3011
    %v3077 = vunpack.c.l.b16 %v3012
    %v3078 = vunpack.c.h.b16 %v3012
    %v3079 = vunpack.c.l.b16 %v3013
    %v3080 = vunpack.c.h.b16 %v3013
    %v3081 = vunpack.c.l.b16 %v3014
    %v3082 = vunpack.c.h.b16 %v3014
    %v3083 = vunpack.c.l.b16 %v3015
    %v3084 = vunpack.c.h.b16 %v3015
    %v3085 = vunpack.c.l.b16 %v3016
    %v3086 = vunpack.c.h.b16 %v3016
    %v3087 = vunpack.c.l.b16 %v3017
    %v3088 = vunpack.c.h.b16 %v3017
    %v3089 = vunpack.c.l.b16 %v3018
    %v3090 = vunpack.c.h.b16 %v3018
    %v3091 = vunpack.c.l.b16 %v3019
    %v3092 = vunpack.c.h.b16 %v3019
    %v3093 = vunpack.c.l.b16 %v3020
    %v3094 = vunpack.c.h.b16 %v3020
    %v3095 = vunpack.c.l.b16 %v3021
    %v3096 = vunpack.c.h.b16 %v3021
    %v3097 = vpack.c.b16 %v3051, %v3049
    %v3098 = vpack.c.b16 %v3052, %v3050
    %v3099 = vpack.c.b16 %v3055, %v3053
    %v3100 = vpack.c.b16 %v3056, %v3054
    %v3101 = vpack.c.b16 %v3059, %v3057
    %v3102 = vpack.c.b16 %v3060, %v3058
    %v3103 = vpack.c.b16 %v3063, %v3061
    %v3104 = vpack.c.b16 %v3064, %v3062
    %v3105 = vpack.c.b16 %v3067, %v3065
    %v3106 = vpack.c.b16 %v3068, %v3066
    %v3107 = vpack.c.b16 %v3071, %v3069
    %v3108 = vpack.c.b16 %v3072, %v3070
    %v3109 = vpack.c.b16 %v3075, %v3073
    %v3110 = vpack.c.b16 %v3076, %v3074
    %v3111 = vpack.c.b16 %v3079, %v3077
    %v3112 = vpack.c.b16 %v3080, %v3078
    %v3113 = vpack.c.b16 %v3083, %v3081
    %v3114 = vpack.c.b16 %v3084, %v3082
    %v3115 = vpack.c.b16 %v3087, %v3085
    %v3116 = vpack.c.b16 %v3088, %v3086
    %v3117 = vpack.c.b16 %v3091, %v3089
    %v3118 = vpack.c.b16 %v3092, %v3090
    %v3119 = vpack.c.b16 %v3095, %v3093
    %v3120 = vpack.c.b16 %v3096, %v3094
    %v3146 = vsel %vm2691, %v3023, 0
    %3148 = vmatprep.subr.bf16.mxu0 %v3098
    %3149 = vmatpush1.bf16.msra.mxu0 %v3097
    %3150 = vmatprep.subr.bf16.mxu0 %v3100
    %3151 = vmatpush1.bf16.msra.mxu0 %v3099
    %3152 = vmatprep.subr.bf16.mxu0 %v3102
    %3153 = vmatpush1.bf16.msra.mxu0 %v3101
    %3154 = vmatprep.subr.bf16.mxu0 %v3104
    %3155 = vmatpush1.bf16.msra.mxu0 %v3103
    %3156 = vmatprep.subr.bf16.mxu0 %v3106
    %3157 = vmatpush1.bf16.msra.mxu0 %v3105
    %3158 = vmatprep.subr.bf16.mxu0 %v3108
    %3159 = vmatpush1.bf16.msra.mxu0 %v3107
    %3160 = vmatprep.subr.bf16.mxu0 %v3110
    %3161 = vmatpush1.bf16.msra.mxu0 %v3109
    %3162 = vmatprep.subr.bf16.mxu0 %v3112
    %3163 = vmatpush1.bf16.msra.mxu0 %v3111
    %3164 = vmatprep.subr.bf16.mxu0 %v3114
    %3165 = vmatpush1.bf16.msra.mxu0 %v3113
    %3166 = vmatprep.subr.bf16.mxu0 %v3116
    %3167 = vmatpush1.bf16.msra.mxu0 %v3115
    %3168 = vmatprep.subr.bf16.mxu0 %v3118
    %3169 = vmatpush1.bf16.msra.mxu0 %v3117
    %3170 = vmatprep.subr.bf16.mxu0 %v3120
    %3171 = vmatpush1.bf16.msra.mxu0 %v3119
    %3172 = vmatprep.subr.bf16.mxu0 0
    %3173 = vmatpush1.bf16.msra.mxu0 0
    %3174 = vmatprep.subr.bf16.mxu0 0
    %3175 = vmatpush1.bf16.msra.mxu0 0
    %3176 = vmatprep.subr.bf16.mxu0 0
    %3177 = vmatpush1.bf16.msra.mxu0 0
    %3178 = vmatprep.subr.bf16.mxu0 0
    %3179 = vmatpush1.bf16.msra.mxu0 0
    %3180 = vmatprep.mubr.bf16.mxu0 %v2913
    %3181 = vmatmul.mubr.bf16.gmra.mrb[0].mxu0 %v2779
    %v3182 = vpop.f32.mrb[0].mxu0
    %v3183 = vadd.f32 0.0, %v3182
    %v3184 = vpop.f32.mrb[0].mxu0
    %v3185 = vadd.f32 0.0, %v3184
    %v3186 = vpop.f32.mrb[0].mxu0
    %v3187 = vadd.f32 0.0, %v3186
    %v3188 = vpop.f32.mrb[0].mxu0
    %v3189 = vadd.f32 0.0, %v3188
    %3190 = vmatprep.mubr.bf16.mxu0 %v2916
    %3191 = vmatmul.mubr.bf16.gmra.mrb[0].mxu0 %v2781
    %v3192 = vpop.f32.mrb[0].mxu0
    %v3193 = vadd.f32 0.0, %v3192
    %v3194 = vpop.f32.mrb[0].mxu0
    %v3195 = vadd.f32 0.0, %v3194
    %v3196 = vpop.f32.mrb[0].mxu0
    %v3197 = vadd.f32 0.0, %v3196
    %v3198 = vpop.f32.mrb[0].mxu0
    %v3199 = vadd.f32 0.0, %v3198
    %3200 = vmatprep.mubr.bf16.mxu0 %v2919
    %3201 = vmatmul.mubr.bf16.gmra.mrb[0].mxu0 %v2783
    %v3202 = vpop.f32.mrb[0].mxu0
    %v3203 = vadd.f32 0.0, %v3202
    %v3204 = vpop.f32.mrb[0].mxu0
    %v3205 = vadd.f32 0.0, %v3204
    %v3206 = vpop.f32.mrb[0].mxu0
    %v3207 = vadd.f32 0.0, %v3206
    %v3208 = vpop.f32.mrb[0].mxu0
    %v3209 = vadd.f32 0.0, %v3208
    %3210 = vmatprep.mubr.bf16.mxu0 %v3146
    %3211 = vmatmul.mubr.bf16.gmra.mrb[0].mxu0 %v3022
    %v3212 = vpop.f32.mrb[0].mxu0
    %v3213 = vadd.f32 0.0, %v3212
    %v3214 = vpop.f32.mrb[0].mxu0
    %v3215 = vadd.f32 0.0, %v3214
    %v3216 = vpop.f32.mrb[0].mxu0
    %v3217 = vadd.f32 0.0, %v3216
    %v3218 = vpop.f32.mrb[0].mxu0
    %v3219 = vadd.f32 0.0, %v3218
    %3220 = vdwg.mxu0
    %v3221 = vadd.f32 %v2956, %v3183
    %v3222 = vadd.f32 %v2958, %v3185
    %v3223 = vadd.f32 %v2960, %v3187
    %v3224 = vadd.f32 %v2962, %v3189
    %v3225 = vadd.f32 %v2966, %v3193
    %v3226 = vadd.f32 %v2968, %v3195
    %v3227 = vadd.f32 %v2970, %v3197
    %v3228 = vadd.f32 %v2972, %v3199
    %v3229 = vadd.f32 %v2976, %v3203
    %v3230 = vadd.f32 %v2978, %v3205
    %v3231 = vadd.f32 %v2980, %v3207
    %v3232 = vadd.f32 %v2982, %v3209
    %v3233 = vadd.f32 %v2986, %v3213
    %v3234 = vadd.f32 %v2988, %v3215
    %v3235 = vadd.f32 %v2990, %v3217
    %v3236 = vadd.f32 %v2992, %v3219
    %v3239 = vunpack.c.l.b16 %v2471
    %v3240 = vunpack.c.l.b16 %v2472
    %v3241 = vld [vmem:[#allocation4 + $0x240] sm:$0xff]
    %v3242 = vld [vmem:[#allocation4 + $0x248] sm:$0xff]
    %v3243 = vld [vmem:[#allocation4 + $0x250] sm:$0xff]
    %v3244 = vld [vmem:[#allocation4 + $0x258] sm:$0xff]
    %v3245 = vld [vmem:[#allocation4 + $0x260] sm:$0xff]
    %v3246 = vld [vmem:[#allocation4 + $0x268] sm:$0xff]
    %v3247 = vld [vmem:[#allocation4 + $0x270] sm:$0xff]
    %v3248 = vld [vmem:[#allocation4 + $0x278] sm:$0xff]
    %v3249 = vld [vmem:[#allocation4 + $0x280] sm:$0xff]
    %v3250 = vld [vmem:[#allocation4 + $0x288] sm:$0xff]
    %v3251 = vld [vmem:[#allocation4 + $0x290] sm:$0xff]
    %v3252 = vld [vmem:[#allocation4 + $0x298] sm:$0xff]
    %v3253 = vld [vmem:[#allocation4 + $0x2a0] sm:$0xff]
    %v3254 = vld [vmem:[#allocation4 + $0x2a8] sm:$0xff]
    %v3255 = vld [vmem:[#allocation4 + $0x2b0] sm:$0xff]
    %v3256 = vld [vmem:[#allocation4 + $0x2b8] sm:$0xff]
    %v3257 = vld [vmem:[#allocation4 + $0x2c0] sm:$0xff]
    %v3258 = vld [vmem:[#allocation4 + $0x2c8] sm:$0xff]
    %v3259 = vld [vmem:[#allocation4 + $0x2d0] sm:$0xff]
    %v3260 = vld [vmem:[#allocation4 + $0x2d8] sm:$0xff]
    %v3261 = vld [vmem:[#allocation4 + $0x2e0] sm:$0xff]
    %v3262 = vld [vmem:[#allocation4 + $0x2e8] sm:$0xff]
    %v3263 = vld [vmem:[#allocation4 + $0x2f0] sm:$0xff]
    %v3264 = vld [vmem:[#allocation4 + $0x2f8] sm:$0xff]
    %v3265 = vpack.c.b16 %v3239, %v2996
    %v3266 = vpack.c.b16 %v3240, %v2997
    %v3292 = vunpack.c.l.b16 %v3241
    %v3293 = vunpack.c.h.b16 %v3241
    %v3294 = vunpack.c.l.b16 %v3242
    %v3295 = vunpack.c.h.b16 %v3242
    %v3296 = vunpack.c.l.b16 %v3243
    %v3297 = vunpack.c.h.b16 %v3243
    %v3298 = vunpack.c.l.b16 %v3244
    %v3299 = vunpack.c.h.b16 %v3244
    %v3300 = vunpack.c.l.b16 %v3245
    %v3301 = vunpack.c.h.b16 %v3245
    %v3302 = vunpack.c.l.b16 %v3246
    %v3303 = vunpack.c.h.b16 %v3246
    %v3304 = vunpack.c.l.b16 %v3247
    %v3305 = vunpack.c.h.b16 %v3247
    %v3306 = vunpack.c.l.b16 %v3248
    %v3307 = vunpack.c.h.b16 %v3248
    %v3308 = vunpack.c.l.b16 %v3249
    %v3309 = vunpack.c.h.b16 %v3249
    %v3310 = vunpack.c.l.b16 %v3250
    %v3311 = vunpack.c.h.b16 %v3250
    %v3312 = vunpack.c.l.b16 %v3251
    %v3313 = vunpack.c.h.b16 %v3251
    %v3314 = vunpack.c.l.b16 %v3252
    %v3315 = vunpack.c.h.b16 %v3252
    %v3316 = vunpack.c.l.b16 %v3253
    %v3317 = vunpack.c.h.b16 %v3253
    %v3318 = vunpack.c.l.b16 %v3254
    %v3319 = vunpack.c.h.b16 %v3254
    %v3320 = vunpack.c.l.b16 %v3255
    %v3321 = vunpack.c.h.b16 %v3255
    %v3322 = vunpack.c.l.b16 %v3256
    %v3323 = vunpack.c.h.b16 %v3256
    %v3324 = vunpack.c.l.b16 %v3257
    %v3325 = vunpack.c.h.b16 %v3257
    %v3326 = vunpack.c.l.b16 %v3258
    %v3327 = vunpack.c.h.b16 %v3258
    %v3328 = vunpack.c.l.b16 %v3259
    %v3329 = vunpack.c.h.b16 %v3259
    %v3330 = vunpack.c.l.b16 %v3260
    %v3331 = vunpack.c.h.b16 %v3260
    %v3332 = vunpack.c.l.b16 %v3261
    %v3333 = vunpack.c.h.b16 %v3261
    %v3334 = vunpack.c.l.b16 %v3262
    %v3335 = vunpack.c.h.b16 %v3262
    %v3336 = vunpack.c.l.b16 %v3263
    %v3337 = vunpack.c.h.b16 %v3263
    %v3338 = vunpack.c.l.b16 %v3264
    %v3339 = vunpack.c.h.b16 %v3264
    %v3340 = vpack.c.b16 %v3294, %v3292
    %v3341 = vpack.c.b16 %v3295, %v3293
    %v3342 = vpack.c.b16 %v3298, %v3296
    %v3343 = vpack.c.b16 %v3299, %v3297
    %v3344 = vpack.c.b16 %v3302, %v3300
    %v3345 = vpack.c.b16 %v3303, %v3301
    %v3346 = vpack.c.b16 %v3306, %v3304
    %v3347 = vpack.c.b16 %v3307, %v3305
    %v3348 = vpack.c.b16 %v3310, %v3308
    %v3349 = vpack.c.b16 %v3311, %v3309
    %v3350 = vpack.c.b16 %v3314, %v3312
    %v3351 = vpack.c.b16 %v3315, %v3313
    %v3352 = vpack.c.b16 %v3318, %v3316
    %v3353 = vpack.c.b16 %v3319, %v3317
    %v3354 = vpack.c.b16 %v3322, %v3320
    %v3355 = vpack.c.b16 %v3323, %v3321
    %v3356 = vpack.c.b16 %v3326, %v3324
    %v3357 = vpack.c.b16 %v3327, %v3325
    %v3358 = vpack.c.b16 %v3330, %v3328
    %v3359 = vpack.c.b16 %v3331, %v3329
    %v3360 = vpack.c.b16 %v3334, %v3332
    %v3361 = vpack.c.b16 %v3335, %v3333
    %v3362 = vpack.c.b16 %v3338, %v3336
    %v3363 = vpack.c.b16 %v3339, %v3337
    %v3389 = vsel %vm2691, %v3266, 0
    %3391 = vmatprep.subr.bf16.mxu0 %v3341
    %3392 = vmatpush1.bf16.msra.mxu0 %v3340
    %3393 = vmatprep.subr.bf16.mxu0 %v3343
    %3394 = vmatpush1.bf16.msra.mxu0 %v3342
    %3395 = vmatprep.subr.bf16.mxu0 %v3345
    %3396 = vmatpush1.bf16.msra.mxu0 %v3344
    %3397 = vmatprep.subr.bf16.mxu0 %v3347
    %3398 = vmatpush1.bf16.msra.mxu0 %v3346
    %3399 = vmatprep.subr.bf16.mxu0 %v3349
    %3400 = vmatpush1.bf16.msra.mxu0 %v3348
    %3401 = vmatprep.subr.bf16.mxu0 %v3351
    %3402 = vmatpush1.bf16.msra.mxu0 %v3350
    %3403 = vmatprep.subr.bf16.mxu0 %v3353
    %3404 = vmatpush1.bf16.msra.mxu0 %v3352
    %3405 = vmatprep.subr.bf16.mxu0 %v3355
    %3406 = vmatpush1.bf16.msra.mxu0 %v3354
    %3407 = vmatprep.subr.bf16.mxu0 %v3357
    %3408 = vmatpush1.bf16.msra.mxu0 %v3356
    %3409 = vmatprep.subr.bf16.mxu0 %v3359
    %3410 = vmatpush1.bf16.msra.mxu0 %v3358
    %3411 = vmatprep.subr.bf16.mxu0 %v3361
    %3412 = vmatpush1.bf16.msra.mxu0 %v3360
    %3413 = vmatprep.subr.bf16.mxu0 %v3363
    %3414 = vmatpush1.bf16.msra.mxu0 %v3362
    %3415 = vmatprep.subr.bf16.mxu0 0
    %3416 = vmatpush1.bf16.msra.mxu0 0
    %3417 = vmatprep.subr.bf16.mxu0 0
    %3418 = vmatpush1.bf16.msra.mxu0 0
    %3419 = vmatprep.subr.bf16.mxu0 0
    %3420 = vmatpush1.bf16.msra.mxu0 0
    %3421 = vmatprep.subr.bf16.mxu0 0
    %3422 = vmatpush1.bf16.msra.mxu0 0
    %3423 = vmatprep.mubr.bf16.mxu0 %v2696
    %3424 = vmatmul.mubr.bf16.gmra.mrb[0].mxu0 %v2561
    %v3425 = vpop.f32.mrb[0].mxu0
    %v3426 = vadd.f32 0.0, %v3425
    %v3427 = vpop.f32.mrb[0].mxu0
    %v3428 = vadd.f32 0.0, %v3427
    %v3429 = vpop.f32.mrb[0].mxu0
    %v3430 = vadd.f32 0.0, %v3429
    %v3431 = vpop.f32.mrb[0].mxu0
    %v3432 = vadd.f32 0.0, %v3431
    %3433 = vmatprep.mubr.bf16.mxu0 %v2699
    %3434 = vmatmul.mubr.bf16.gmra.mrb[0].mxu0 %v2563
    %v3435 = vpop.f32.mrb[0].mxu0
    %v3436 = vadd.f32 0.0, %v3435
    %v3437 = vpop.f32.mrb[0].mxu0
    %v3438 = vadd.f32 0.0, %v3437
    %v3439 = vpop.f32.mrb[0].mxu0
    %v3440 = vadd.f32 0.0, %v3439
    %v3441 = vpop.f32.mrb[0].mxu0
    %v3442 = vadd.f32 0.0, %v3441
    %3443 = vmatprep.mubr.bf16.mxu0 %v2702
    %3444 = vmatmul.mubr.bf16.gmra.mrb[0].mxu0 %v2565
    %v3445 = vpop.f32.mrb[0].mxu0
    %v3446 = vadd.f32 0.0, %v3445
    %v3447 = vpop.f32.mrb[0].mxu0
    %v3448 = vadd.f32 0.0, %v3447
    %v3449 = vpop.f32.mrb[0].mxu0
    %v3450 = vadd.f32 0.0, %v3449
    %v3451 = vpop.f32.mrb[0].mxu0
    %v3452 = vadd.f32 0.0, %v3451
    %3453 = vmatprep.mubr.bf16.mxu0 %v3389
    %3454 = vmatmul.mubr.bf16.gmra.mrb[0].mxu0 %v3265
    %v3455 = vpop.f32.mrb[0].mxu0
    %v3456 = vadd.f32 0.0, %v3455
    %v3457 = vpop.f32.mrb[0].mxu0
    %v3458 = vadd.f32 0.0, %v3457
    %v3459 = vpop.f32.mrb[0].mxu0
    %v3460 = vadd.f32 0.0, %v3459
    %v3461 = vpop.f32.mrb[0].mxu0
    %v3462 = vadd.f32 0.0, %v3461
    %3463 = vdwg.mxu0
    %v3464 = vadd.f32 %v3221, %v3426
    %v3465 = vadd.f32 %v3222, %v3428
    %v3466 = vadd.f32 %v3223, %v3430
    %v3467 = vadd.f32 %v3224, %v3432
    %v3468 = vadd.f32 %v3225, %v3436
    %v3469 = vadd.f32 %v3226, %v3438
    %v3470 = vadd.f32 %v3227, %v3440
    %v3471 = vadd.f32 %v3228, %v3442
    %v3472 = vadd.f32 %v3229, %v3446
    %v3473 = vadd.f32 %v3230, %v3448
    %v3474 = vadd.f32 %v3231, %v3450
    %v3475 = vadd.f32 %v3232, %v3452
    %v3476 = vadd.f32 %v3233, %v3456
    %v3477 = vadd.f32 %v3234, %v3458
    %v3478 = vadd.f32 %v3235, %v3460
    %v3479 = vadd.f32 %v3236, %v3462
    %v3482 = vunpack.c.l.b16 %v2473
    %v3483 = vunpack.c.l.b16 %v2474
    %v3484 = vld [vmem:[#allocation4 + $0x300] sm:$0xff]
    %v3485 = vld [vmem:[#allocation4 + $0x308] sm:$0xff]
    %v3486 = vld [vmem:[#allocation4 + $0x310] sm:$0xff]
    %v3487 = vld [vmem:[#allocation4 + $0x318] sm:$0xff]
    %v3488 = vld [vmem:[#allocation4 + $0x320] sm:$0xff]
    %v3489 = vld [vmem:[#allocation4 + $0x328] sm:$0xff]
    %v3490 = vld [vmem:[#allocation4 + $0x330] sm:$0xff]
    %v3491 = vld [vmem:[#allocation4 + $0x338] sm:$0xff]
    %v3492 = vld [vmem:[#allocation4 + $0x340] sm:$0xff]
    %v3493 = vld [vmem:[#allocation4 + $0x348] sm:$0xff]
    %v3494 = vld [vmem:[#allocation4 + $0x350] sm:$0xff]
    %v3495 = vld [vmem:[#allocation4 + $0x358] sm:$0xff]
    %v3496 = vld [vmem:[#allocation4 + $0x360] sm:$0xff]
    %v3497 = vld [vmem:[#allocation4 + $0x368] sm:$0xff]
    %v3498 = vld [vmem:[#allocation4 + $0x370] sm:$0xff]
    %v3499 = vld [vmem:[#allocation4 + $0x378] sm:$0xff]
    %v3500 = vld [vmem:[#allocation4 + $0x380] sm:$0xff]
    %v3501 = vld [vmem:[#allocation4 + $0x388] sm:$0xff]
    %v3502 = vld [vmem:[#allocation4 + $0x390] sm:$0xff]
    %v3503 = vld [vmem:[#allocation4 + $0x398] sm:$0xff]
    %v3504 = vld [vmem:[#allocation4 + $0x3a0] sm:$0xff]
    %v3505 = vld [vmem:[#allocation4 + $0x3a8] sm:$0xff]
    %v3506 = vld [vmem:[#allocation4 + $0x3b0] sm:$0xff]
    %v3507 = vld [vmem:[#allocation4 + $0x3b8] sm:$0xff]
    %v3508 = vpack.c.b16 %v3482, %v3239
    %v3509 = vpack.c.b16 %v3483, %v3240
    %v3535 = vunpack.c.l.b16 %v3484
    %v3536 = vunpack.c.h.b16 %v3484
    %v3537 = vunpack.c.l.b16 %v3485
    %v3538 = vunpack.c.h.b16 %v3485
    %v3539 = vunpack.c.l.b16 %v3486
    %v3540 = vunpack.c.h.b16 %v3486
    %v3541 = vunpack.c.l.b16 %v3487
    %v3542 = vunpack.c.h.b16 %v3487
    %v3543 = vunpack.c.l.b16 %v3488
    %v3544 = vunpack.c.h.b16 %v3488
    %v3545 = vunpack.c.l.b16 %v3489
    %v3546 = vunpack.c.h.b16 %v3489
    %v3547 = vunpack.c.l.b16 %v3490
    %v3548 = vunpack.c.h.b16 %v3490
    %v3549 = vunpack.c.l.b16 %v3491
    %v3550 = vunpack.c.h.b16 %v3491
    %v3551 = vunpack.c.l.b16 %v3492
    %v3552 = vunpack.c.h.b16 %v3492
    %v3553 = vunpack.c.l.b16 %v3493
    %v3554 = vunpack.c.h.b16 %v3493
    %v3555 = vunpack.c.l.b16 %v3494
    %v3556 = vunpack.c.h.b16 %v3494
    %v3557 = vunpack.c.l.b16 %v3495
    %v3558 = vunpack.c.h.b16 %v3495
    %v3559 = vunpack.c.l.b16 %v3496
    %v3560 = vunpack.c.h.b16 %v3496
    %v3561 = vunpack.c.l.b16 %v3497
    %v3562 = vunpack.c.h.b16 %v3497
    %v3563 = vunpack.c.l.b16 %v3498
    %v3564 = vunpack.c.h.b16 %v3498
    %v3565 = vunpack.c.l.b16 %v3499
    %v3566 = vunpack.c.h.b16 %v3499
    %v3567 = vunpack.c.l.b16 %v3500
    %v3568 = vunpack.c.h.b16 %v3500
    %v3569 = vunpack.c.l.b16 %v3501
    %v3570 = vunpack.c.h.b16 %v3501
    %v3571 = vunpack.c.l.b16 %v3502
    %v3572 = vunpack.c.h.b16 %v3502
    %v3573 = vunpack.c.l.b16 %v3503
    %v3574 = vunpack.c.h.b16 %v3503
    %v3575 = vunpack.c.l.b16 %v3504
    %v3576 = vunpack.c.h.b16 %v3504
    %v3577 = vunpack.c.l.b16 %v3505
    %v3578 = vunpack.c.h.b16 %v3505
    %v3579 = vunpack.c.l.b16 %v3506
    %v3580 = vunpack.c.h.b16 %v3506
    %v3581 = vunpack.c.l.b16 %v3507
    %v3582 = vunpack.c.h.b16 %v3507
    %v3583 = vpack.c.b16 %v3537, %v3535
    %v3584 = vpack.c.b16 %v3538, %v3536
    %v3585 = vpack.c.b16 %v3541, %v3539
    %v3586 = vpack.c.b16 %v3542, %v3540
    %v3587 = vpack.c.b16 %v3545, %v3543
    %v3588 = vpack.c.b16 %v3546, %v3544
    %v3589 = vpack.c.b16 %v3549, %v3547
    %v3590 = vpack.c.b16 %v3550, %v3548
    %v3591 = vpack.c.b16 %v3553, %v3551
    %v3592 = vpack.c.b16 %v3554, %v3552
    %v3593 = vpack.c.b16 %v3557, %v3555
    %v3594 = vpack.c.b16 %v3558, %v3556
    %v3595 = vpack.c.b16 %v3561, %v3559
    %v3596 = vpack.c.b16 %v3562, %v3560
    %v3597 = vpack.c.b16 %v3565, %v3563
    %v3598 = vpack.c.b16 %v3566, %v3564
    %v3599 = vpack.c.b16 %v3569, %v3567
    %v3600 = vpack.c.b16 %v3570, %v3568
    %v3601 = vpack.c.b16 %v3573, %v3571
    %v3602 = vpack.c.b16 %v3574, %v3572
    %v3603 = vpack.c.b16 %v3577, %v3575
    %v3604 = vpack.c.b16 %v3578, %v3576
    %v3605 = vpack.c.b16 %v3581, %v3579
    %v3606 = vpack.c.b16 %v3582, %v3580
    %v3632 = vsel %vm2691, %v3509, 0
    %3634 = vmatprep.subr.bf16.mxu0 %v3584
    %3635 = vmatpush1.bf16.msra.mxu0 %v3583
    %3636 = vmatprep.subr.bf16.mxu0 %v3586
    %3637 = vmatpush1.bf16.msra.mxu0 %v3585
    %3638 = vmatprep.subr.bf16.mxu0 %v3588
    %3639 = vmatpush1.bf16.msra.mxu0 %v3587
    %3640 = vmatprep.subr.bf16.mxu0 %v3590
    %3641 = vmatpush1.bf16.msra.mxu0 %v3589
    %3642 = vmatprep.subr.bf16.mxu0 %v3592
    %3643 = vmatpush1.bf16.msra.mxu0 %v3591
    %3644 = vmatprep.subr.bf16.mxu0 %v3594
    %3645 = vmatpush1.bf16.msra.mxu0 %v3593
    %3646 = vmatprep.subr.bf16.mxu0 %v3596
    %3647 = vmatpush1.bf16.msra.mxu0 %v3595
    %3648 = vmatprep.subr.bf16.mxu0 %v3598
    %3649 = vmatpush1.bf16.msra.mxu0 %v3597
    %3650 = vmatprep.subr.bf16.mxu0 %v3600
    %3651 = vmatpush1.bf16.msra.mxu0 %v3599
    %3652 = vmatprep.subr.bf16.mxu0 %v3602
    %3653 = vmatpush1.bf16.msra.mxu0 %v3601
    %3654 = vmatprep.subr.bf16.mxu0 %v3604
    %3655 = vmatpush1.bf16.msra.mxu0 %v3603
    %3656 = vmatprep.subr.bf16.mxu0 %v3606
    %3657 = vmatpush1.bf16.msra.mxu0 %v3605
    %3658 = vmatprep.subr.bf16.mxu0 0
    %3659 = vmatpush1.bf16.msra.mxu0 0
    %3660 = vmatprep.subr.bf16.mxu0 0
    %3661 = vmatpush1.bf16.msra.mxu0 0
    %3662 = vmatprep.subr.bf16.mxu0 0
    %3663 = vmatpush1.bf16.msra.mxu0 0
    %3664 = vmatprep.subr.bf16.mxu0 0
    %3665 = vmatpush1.bf16.msra.mxu0 0
    %3666 = vmatprep.mubr.bf16.mxu0 %v2916
    %3667 = vmatmul.mubr.bf16.gmra.mrb[0].mxu0 %v2781
    %v3668 = vpop.f32.mrb[0].mxu0
    %v3669 = vadd.f32 0.0, %v3668
    %v3670 = vpop.f32.mrb[0].mxu0
    %v3671 = vadd.f32 0.0, %v3670
    %v3672 = vpop.f32.mrb[0].mxu0
    %v3673 = vadd.f32 0.0, %v3672
    %v3674 = vpop.f32.mrb[0].mxu0
    %v3675 = vadd.f32 0.0, %v3674
    %3676 = vmatprep.mubr.bf16.mxu0 %v2919
    %3677 = vmatmul.mubr.bf16.gmra.mrb[0].mxu0 %v2783
    %v3678 = vpop.f32.mrb[0].mxu0
    %v3679 = vadd.f32 0.0, %v3678
    %v3680 = vpop.f32.mrb[0].mxu0
    %v3681 = vadd.f32 0.0, %v3680
    %v3682 = vpop.f32.mrb[0].mxu0
    %v3683 = vadd.f32 0.0, %v3682
    %v3684 = vpop.f32.mrb[0].mxu0
    %v3685 = vadd.f32 0.0, %v3684
    %3686 = vmatprep.mubr.bf16.mxu0 %v3146
    %3687 = vmatmul.mubr.bf16.gmra.mrb[0].mxu0 %v3022
    %v3688 = vpop.f32.mrb[0].mxu0
    %v3689 = vadd.f32 0.0, %v3688
    %v3690 = vpop.f32.mrb[0].mxu0
    %v3691 = vadd.f32 0.0, %v3690
    %v3692 = vpop.f32.mrb[0].mxu0
    %v3693 = vadd.f32 0.0, %v3692
    %v3694 = vpop.f32.mrb[0].mxu0
    %v3695 = vadd.f32 0.0, %v3694
    %3696 = vmatprep.mubr.bf16.mxu0 %v3632
    %3697 = vmatmul.mubr.bf16.gmra.mrb[0].mxu0 %v3508
    %v3698 = vpop.f32.mrb[0].mxu0
    %v3699 = vadd.f32 0.0, %v3698
    %v3700 = vpop.f32.mrb[0].mxu0
    %v3701 = vadd.f32 0.0, %v3700
    %v3702 = vpop.f32.mrb[0].mxu0
    %v3703 = vadd.f32 0.0, %v3702
    %v3704 = vpop.f32.mrb[0].mxu0
    %v3705 = vadd.f32 0.0, %v3704
    %3706 = vdwg.mxu0
    %v3707 = vadd.f32 %v3464, %v3669
    %v3708 = vadd.f32 %v3465, %v3671
    %v3709 = vadd.f32 %v3466, %v3673
    %v3710 = vadd.f32 %v3467, %v3675
    %v3711 = vadd.f32 %v3468, %v3679
    %v3712 = vadd.f32 %v3469, %v3681
    %v3713 = vadd.f32 %v3470, %v3683
    %v3714 = vadd.f32 %v3471, %v3685
    %v3715 = vadd.f32 %v3472, %v3689
    %v3716 = vadd.f32 %v3473, %v3691
    %v3717 = vadd.f32 %v3474, %v3693
    %v3718 = vadd.f32 %v3475, %v3695
    %v3719 = vadd.f32 %v3476, %v3699
    %v3720 = vadd.f32 %v3477, %v3701
    %v3721 = vadd.f32 %v3478, %v3703
    %v3722 = vadd.f32 %v3479, %v3705
    %v3723 = vmax.f32 %v3707, %v3708
    %v3724 = vmax.f32 %v3709, %v3710
    %v3725 = vmax.f32 %v3711, %v3712
    %v3726 = vmax.f32 %v3713, %v3714
    %v3727 = vmax.f32 %v3715, %v3716
    %v3728 = vmax.f32 %v3717, %v3718
    %v3729 = vmax.f32 %v3719, %v3720
    %v3730 = vmax.f32 %v3721, %v3722
    %v3731 = vmax.f32 %v3723, %v3724
    %v3732 = vmax.f32 %v3725, %v3726
    %v3733 = vmax.f32 %v3727, %v3728
    %v3734 = vmax.f32 %v3729, %v3730
    %v3735 = vld [vmem:[%s4] sm:$0x1]
    %v3737 = vlaneseq
    %v3738 = vshrl.u32 %v3737, 7
    %v3739 = vsub.s32 0, %v3738
    %v3740 = vrot.slane %v3735, %v3739
    %v3742 = vadd.f32 %v3731, %v3740
    %v3743 = vadd.f32 %v3732, %v3740
    %v3744 = vadd.f32 %v3733, %v3740
    %v3745 = vadd.f32 %v3734, %v3740
    %v3746 = vmax.f32 %v3742, 0.0
    %v3747 = vmax.f32 %v3743, 0.0
    %v3748 = vmax.f32 %v3744, 0.0
    %v3749 = vmax.f32 %v3745, 0.0
    %v3750 = vpack.c.bf16 %v3746, %v3746
    %v3751 = vpack.c.bf16 %v3747, %v3747
    %v3752 = vpack.c.bf16 %v3748, %v3748
    %v3753 = vpack.c.bf16 %v3749, %v3749
    %v3754 = vld [vmem:[#allocation6] sm:$0xf]
    %v3755 = vld [vmem:[#allocation6 + $0x4] sm:$0xf]
    %v3756 = vld [vmem:[#allocation6 + $0x8] sm:$0xf]
    %v3757 = vld [vmem:[#allocation6 + $0xc] sm:$0xf]
    %v3758 = vld [vmem:[#allocation6 + $0x10] sm:$0xf]
    %v3759 = vld [vmem:[#allocation6 + $0x14] sm:$0xf]
    %v3760 = vld [vmem:[#allocation6 + $0x18] sm:$0xf]
    %v3761 = vld [vmem:[#allocation6 + $0x1c] sm:$0xf]
    %v3762 = vld [vmem:[#allocation6 + $0x20] sm:$0xf]
    %v3763 = vld [vmem:[#allocation6 + $0x24] sm:$0xf]
    %v3764 = vld [vmem:[#allocation6 + $0x28] sm:$0xf]
    %v3765 = vld [vmem:[#allocation6 + $0x2c] sm:$0xf]
    %v3766 = vld [vmem:[#allocation6 + $0x30] sm:$0xf]
    %v3767 = vld [vmem:[#allocation6 + $0x34] sm:$0xf]
    %v3768 = vld [vmem:[#allocation6 + $0x38] sm:$0xf]
    %v3769 = vld [vmem:[#allocation6 + $0x3c] sm:$0xf]
    %v3770 = vld [vmem:[#allocation6 + $0x40] sm:$0xf]
    %v3771 = vld [vmem:[#allocation6 + $0x44] sm:$0xf]
    %v3772 = vld [vmem:[#allocation6 + $0x48] sm:$0xf]
    %v3773 = vld [vmem:[#allocation6 + $0x4c] sm:$0xf]
    %v3774 = vld [vmem:[#allocation6 + $0x50] sm:$0xf]
    %v3775 = vld [vmem:[#allocation6 + $0x54] sm:$0xf]
    %v3776 = vld [vmem:[#allocation6 + $0x58] sm:$0xf]
    %v3777 = vld [vmem:[#allocation6 + $0x5c] sm:$0xf]
    %v3778 = vld [vmem:[#allocation6 + $0x60] sm:$0xf]
    %v3779 = vld [vmem:[#allocation6 + $0x64] sm:$0xf]
    %v3780 = vld [vmem:[#allocation6 + $0x68] sm:$0xf]
    %v3781 = vld [vmem:[#allocation6 + $0x6c] sm:$0xf]
    %v3782 = vld [vmem:[#allocation6 + $0x70] sm:$0xf]
    %v3783 = vld [vmem:[#allocation6 + $0x74] sm:$0xf]
    %v3784 = vld [vmem:[#allocation6 + $0x78] sm:$0xf]
    %v3785 = vld [vmem:[#allocation6 + $0x7c] sm:$0xf]
    %v3802 = vunpack.c.l.b16 %v3770
    %v3803 = vunpack.c.l.b16 %v3771
    %v3804 = vunpack.c.l.b16 %v3772
    %v3805 = vunpack.c.l.b16 %v3773
    %v3806 = vunpack.c.l.b16 %v3774
    %v3807 = vunpack.c.l.b16 %v3775
    %v3808 = vunpack.c.l.b16 %v3776
    %v3809 = vunpack.c.l.b16 %v3777
    %v3810 = vunpack.c.l.b16 %v3778
    %v3811 = vunpack.c.l.b16 %v3779
    %v3812 = vunpack.c.l.b16 %v3780
    %v3813 = vunpack.c.l.b16 %v3781
    %v3814 = vunpack.c.l.b16 %v3782
    %v3815 = vunpack.c.l.b16 %v3783
    %v3816 = vunpack.c.l.b16 %v3784
    %v3817 = vunpack.c.l.b16 %v3785
    %v3818 = vpack.c.b16 %v3803, %v3802
    %v3819 = vpack.c.b16 %v3805, %v3804
    %v3820 = vpack.c.b16 %v3807, %v3806
    %v3821 = vpack.c.b16 %v3809, %v3808
    %v3822 = vpack.c.b16 %v3811, %v3810
    %v3823 = vpack.c.b16 %v3813, %v3812
    %v3824 = vpack.c.b16 %v3815, %v3814
    %v3825 = vpack.c.b16 %v3817, %v3816
    %3834 = vmatprep.subr.bf16.mxu0 0
    %3835 = vmatpush1.bf16.msra.mxu0 %v3818
    %3836 = vmatprep.subr.bf16.mxu0 0
    %3837 = vmatpush1.bf16.msra.mxu0 %v3819
    %3838 = vmatprep.subr.bf16.mxu0 0
    %3839 = vmatpush1.bf16.msra.mxu0 %v3820
    %3840 = vmatprep.subr.bf16.mxu0 0
    %3841 = vmatpush1.bf16.msra.mxu0 %v3821
    %3842 = vmatprep.subr.bf16.mxu0 0
    %3843 = vmatpush1.bf16.msra.mxu0 %v3822
    %3844 = vmatprep.subr.bf16.mxu0 0
    %3845 = vmatpush1.bf16.msra.mxu0 %v3823
    %3846 = vmatprep.subr.bf16.mxu0 0
    %3847 = vmatpush1.bf16.msra.mxu0 %v3824
    %3848 = vmatprep.subr.bf16.mxu0 0
    %3849 = vmatpush1.bf16.msra.mxu0 %v3825
    %3850 = vmatprep.subr.bf16.mxu0 0
    %3851 = vmatpush1.bf16.msra.mxu0 0
    %3852 = vmatprep.subr.bf16.mxu0 0
    %3853 = vmatpush1.bf16.msra.mxu0 0
    %3854 = vmatprep.subr.bf16.mxu0 0
    %3855 = vmatpush1.bf16.msra.mxu0 0
    %3856 = vmatprep.subr.bf16.mxu0 0
    %3857 = vmatpush1.bf16.msra.mxu0 0
    %3858 = vmatprep.subr.bf16.mxu0 0
    %3859 = vmatpush1.bf16.msra.mxu0 0
    %3860 = vmatprep.subr.bf16.mxu0 0
    %3861 = vmatpush1.bf16.msra.mxu0 0
    %3862 = vmatprep.subr.bf16.mxu0 0
    %3863 = vmatpush1.bf16.msra.mxu0 0
    %3864 = vmatprep.subr.bf16.mxu0 0
    %3865 = vmatpush1.bf16.msra.mxu0 0
    %3866 = vmatprep.mubr.bf16.mxu0 0
    %3867 = vmatmul.mubr.bf16.gmra.mrb[0].mxu0 %v3751
    %v3868 = vpop.f32.mrb[0].mxu0
    %v3869 = vadd.f32 0.0, %v3868
    %v3870 = vpop.f32.mrb[0].mxu0
    %v3871 = vpop.f32.mrb[0].mxu0
    %v3872 = vpop.f32.mrb[0].mxu0
    %3873 = vdwg.mxu0
    %v3890 = vunpack.c.l.b16 %v3754
    %v3891 = vunpack.c.l.b16 %v3755
    %v3892 = vunpack.c.l.b16 %v3756
    %v3893 = vunpack.c.l.b16 %v3757
    %v3894 = vunpack.c.l.b16 %v3758
    %v3895 = vunpack.c.l.b16 %v3759
    %v3896 = vunpack.c.l.b16 %v3760
    %v3897 = vunpack.c.l.b16 %v3761
    %v3898 = vunpack.c.l.b16 %v3762
    %v3899 = vunpack.c.l.b16 %v3763
    %v3900 = vunpack.c.l.b16 %v3764
    %v3901 = vunpack.c.l.b16 %v3765
    %v3902 = vunpack.c.l.b16 %v3766
    %v3903 = vunpack.c.l.b16 %v3767
    %v3904 = vunpack.c.l.b16 %v3768
    %v3905 = vunpack.c.l.b16 %v3769
    %v3906 = vpack.c.b16 %v3891, %v3890
    %v3907 = vpack.c.b16 %v3893, %v3892
    %v3908 = vpack.c.b16 %v3895, %v3894
    %v3909 = vpack.c.b16 %v3897, %v3896
    %v3910 = vpack.c.b16 %v3899, %v3898
    %v3911 = vpack.c.b16 %v3901, %v3900
    %v3912 = vpack.c.b16 %v3903, %v3902
    %v3913 = vpack.c.b16 %v3905, %v3904
    %3922 = vmatprep.subr.bf16.mxu0 0
    %3923 = vmatpush1.bf16.msra.mxu0 %v3906
    %3924 = vmatprep.subr.bf16.mxu0 0
    %3925 = vmatpush1.bf16.msra.mxu0 %v3907
    %3926 = vmatprep.subr.bf16.mxu0 0
    %3927 = vmatpush1.bf16.msra.mxu0 %v3908
    %3928 = vmatprep.subr.bf16.mxu0 0
    %3929 = vmatpush1.bf16.msra.mxu0 %v3909
    %3930 = vmatprep.subr.bf16.mxu0 0
    %3931 = vmatpush1.bf16.msra.mxu0 %v3910
    %3932 = vmatprep.subr.bf16.mxu0 0
    %3933 = vmatpush1.bf16.msra.mxu0 %v3911
    %3934 = vmatprep.subr.bf16.mxu0 0
    %3935 = vmatpush1.bf16.msra.mxu0 %v3912
    %3936 = vmatprep.subr.bf16.mxu0 0
    %3937 = vmatpush1.bf16.msra.mxu0 %v3913
    %3938 = vmatprep.subr.bf16.mxu0 0
    %3939 = vmatpush1.bf16.msra.mxu0 0
    %3940 = vmatprep.subr.bf16.mxu0 0
    %3941 = vmatpush1.bf16.msra.mxu0 0
    %3942 = vmatprep.subr.bf16.mxu0 0
    %3943 = vmatpush1.bf16.msra.mxu0 0
    %3944 = vmatprep.subr.bf16.mxu0 0
    %3945 = vmatpush1.bf16.msra.mxu0 0
    %3946 = vmatprep.subr.bf16.mxu0 0
    %3947 = vmatpush1.bf16.msra.mxu0 0
    %3948 = vmatprep.subr.bf16.mxu0 0
    %3949 = vmatpush1.bf16.msra.mxu0 0
    %3950 = vmatprep.subr.bf16.mxu0 0
    %3951 = vmatpush1.bf16.msra.mxu0 0
    %3952 = vmatprep.subr.bf16.mxu0 0
    %3953 = vmatpush1.bf16.msra.mxu0 0
    %3954 = vmatprep.mubr.bf16.mxu0 0
    %3955 = vmatmul.mubr.bf16.gmra.mrb[0].mxu0 %v3750
    %v3956 = vpop.f32.mrb[0].mxu0
    %v3957 = vadd.f32 %v3869, %v3956
    %v3958 = vpop.f32.mrb[0].mxu0
    %v3959 = vpop.f32.mrb[0].mxu0
    %v3960 = vpop.f32.mrb[0].mxu0
    %3961 = vdwg.mxu0
    %v3962 = vld [vmem:[#allocation6 + $0x80] sm:$0xf]
    %v3963 = vld [vmem:[#allocation6 + $0x84] sm:$0xf]
    %v3964 = vld [vmem:[#allocation6 + $0x88] sm:$0xf]
    %v3965 = vld [vmem:[#allocation6 + $0x8c] sm:$0xf]
    %v3966 = vld [vmem:[#allocation6 + $0x90] sm:$0xf]
    %v3967 = vld [vmem:[#allocation6 + $0x94] sm:$0xf]
    %v3968 = vld [vmem:[#allocation6 + $0x98] sm:$0xf]
    %v3969 = vld [vmem:[#allocation6 + $0x9c] sm:$0xf]
    %v3970 = vld [vmem:[#allocation6 + $0xa0] sm:$0xf]
    %v3971 = vld [vmem:[#allocation6 + $0xa4] sm:$0xf]
    %v3972 = vld [vmem:[#allocation6 + $0xa8] sm:$0xf]
    %v3973 = vld [vmem:[#allocation6 + $0xac] sm:$0xf]
    %v3974 = vld [vmem:[#allocation6 + $0xb0] sm:$0xf]
    %v3975 = vld [vmem:[#allocation6 + $0xb4] sm:$0xf]
    %v3976 = vld [vmem:[#allocation6 + $0xb8] sm:$0xf]
    %v3977 = vld [vmem:[#allocation6 + $0xbc] sm:$0xf]
    %v3994 = vunpack.c.l.b16 %v3962
    %v3995 = vunpack.c.l.b16 %v3963
    %v3996 = vunpack.c.l.b16 %v3964
    %v3997 = vunpack.c.l.b16 %v3965
    %v3998 = vunpack.c.l.b16 %v3966
    %v3999 = vunpack.c.l.b16 %v3967
    %v4000 = vunpack.c.l.b16 %v3968
    %v4001 = vunpack.c.l.b16 %v3969
    %v4002 = vunpack.c.l.b16 %v3970
    %v4003 = vunpack.c.l.b16 %v3971
    %v4004 = vunpack.c.l.b16 %v3972
    %v4005 = vunpack.c.l.b16 %v3973
    %v4006 = vunpack.c.l.b16 %v3974
    %v4007 = vunpack.c.l.b16 %v3975
    %v4008 = vunpack.c.l.b16 %v3976
    %v4009 = vunpack.c.l.b16 %v3977
    %v4010 = vpack.c.b16 %v3995, %v3994
    %v4011 = vpack.c.b16 %v3997, %v3996
    %v4012 = vpack.c.b16 %v3999, %v3998
    %v4013 = vpack.c.b16 %v4001, %v4000
    %v4014 = vpack.c.b16 %v4003, %v4002
    %v4015 = vpack.c.b16 %v4005, %v4004
    %v4016 = vpack.c.b16 %v4007, %v4006
    %v4017 = vpack.c.b16 %v4009, %v4008
    %4026 = vmatprep.subr.bf16.mxu0 0
    %4027 = vmatpush1.bf16.msra.mxu0 %v4010
    %4028 = vmatprep.subr.bf16.mxu0 0
    %4029 = vmatpush1.bf16.msra.mxu0 %v4011
    %4030 = vmatprep.subr.bf16.mxu0 0
    %4031 = vmatpush1.bf16.msra.mxu0 %v4012
    %4032 = vmatprep.subr.bf16.mxu0 0
    %4033 = vmatpush1.bf16.msra.mxu0 %v4013
    %4034 = vmatprep.subr.bf16.mxu0 0
    %4035 = vmatpush1.bf16.msra.mxu0 %v4014
    %4036 = vmatprep.subr.bf16.mxu0 0
    %4037 = vmatpush1.bf16.msra.mxu0 %v4015
    %4038 = vmatprep.subr.bf16.mxu0 0
    %4039 = vmatpush1.bf16.msra.mxu0 %v4016
    %4040 = vmatprep.subr.bf16.mxu0 0
    %4041 = vmatpush1.bf16.msra.mxu0 %v4017
    %4042 = vmatprep.subr.bf16.mxu0 0
    %4043 = vmatpush1.bf16.msra.mxu0 0
    %4044 = vmatprep.subr.bf16.mxu0 0
    %4045 = vmatpush1.bf16.msra.mxu0 0
    %4046 = vmatprep.subr.bf16.mxu0 0
    %4047 = vmatpush1.bf16.msra.mxu0 0
    %4048 = vmatprep.subr.bf16.mxu0 0
    %4049 = vmatpush1.bf16.msra.mxu0 0
    %4050 = vmatprep.subr.bf16.mxu0 0
    %4051 = vmatpush1.bf16.msra.mxu0 0
    %4052 = vmatprep.subr.bf16.mxu0 0
    %4053 = vmatpush1.bf16.msra.mxu0 0
    %4054 = vmatprep.subr.bf16.mxu0 0
    %4055 = vmatpush1.bf16.msra.mxu0 0
    %4056 = vmatprep.subr.bf16.mxu0 0
    %4057 = vmatpush1.bf16.msra.mxu0 0
    %4058 = vmatprep.mubr.bf16.mxu0 0
    %4059 = vmatmul.mubr.bf16.gmra.mrb[0].mxu0 %v3752
    %v4060 = vpop.f32.mrb[0].mxu0
    %v4061 = vadd.f32 0.0, %v4060
    %v4062 = vpop.f32.mrb[0].mxu0
    %v4063 = vpop.f32.mrb[0].mxu0
    %v4064 = vpop.f32.mrb[0].mxu0
    %4065 = vdwg.mxu0
    %v4066 = vadd.f32 %v3957, %v4061
    %v4067 = vld [vmem:[#allocation6 + $0xc0] sm:$0xf]
    %v4068 = vld [vmem:[#allocation6 + $0xc4] sm:$0xf]
    %v4069 = vld [vmem:[#allocation6 + $0xc8] sm:$0xf]
    %v4070 = vld [vmem:[#allocation6 + $0xcc] sm:$0xf]
    %v4071 = vld [vmem:[#allocation6 + $0xd0] sm:$0xf]
    %v4072 = vld [vmem:[#allocation6 + $0xd4] sm:$0xf]
    %v4073 = vld [vmem:[#allocation6 + $0xd8] sm:$0xf]
    %v4074 = vld [vmem:[#allocation6 + $0xdc] sm:$0xf]
    %v4075 = vld [vmem:[#allocation6 + $0xe0] sm:$0xf]
    %v4076 = vld [vmem:[#allocation6 + $0xe4] sm:$0xf]
    %v4077 = vld [vmem:[#allocation6 + $0xe8] sm:$0xf]
    %v4078 = vld [vmem:[#allocation6 + $0xec] sm:$0xf]
    %v4079 = vld [vmem:[#allocation6 + $0xf0] sm:$0xf]
    %v4080 = vld [vmem:[#allocation6 + $0xf4] sm:$0xf]
    %v4081 = vld [vmem:[#allocation6 + $0xf8] sm:$0xf]
    %v4082 = vld [vmem:[#allocation6 + $0xfc] sm:$0xf]
    %v4099 = vunpack.c.l.b16 %v4067
    %v4100 = vunpack.c.l.b16 %v4068
    %v4101 = vunpack.c.l.b16 %v4069
    %v4102 = vunpack.c.l.b16 %v4070
    %v4103 = vunpack.c.l.b16 %v4071
    %v4104 = vunpack.c.l.b16 %v4072
    %v4105 = vunpack.c.l.b16 %v4073
    %v4106 = vunpack.c.l.b16 %v4074
    %v4107 = vunpack.c.l.b16 %v4075
    %v4108 = vunpack.c.l.b16 %v4076
    %v4109 = vunpack.c.l.b16 %v4077
    %v4110 = vunpack.c.l.b16 %v4078
    %v4111 = vunpack.c.l.b16 %v4079
    %v4112 = vunpack.c.l.b16 %v4080
    %v4113 = vunpack.c.l.b16 %v4081
    %v4114 = vunpack.c.l.b16 %v4082
    %v4115 = vpack.c.b16 %v4100, %v4099
    %v4116 = vpack.c.b16 %v4102, %v4101
    %v4117 = vpack.c.b16 %v4104, %v4103
    %v4118 = vpack.c.b16 %v4106, %v4105
    %v4119 = vpack.c.b16 %v4108, %v4107
    %v4120 = vpack.c.b16 %v4110, %v4109
    %v4121 = vpack.c.b16 %v4112, %v4111
    %v4122 = vpack.c.b16 %v4114, %v4113
    %4131 = vmatprep.subr.bf16.mxu0 0
    %4132 = vmatpush1.bf16.msra.mxu0 %v4115
    %4133 = vmatprep.subr.bf16.mxu0 0
    %4134 = vmatpush1.bf16.msra.mxu0 %v4116
    %4135 = vmatprep.subr.bf16.mxu0 0
    %4136 = vmatpush1.bf16.msra.mxu0 %v4117
    %4137 = vmatprep.subr.bf16.mxu0 0
    %4138 = vmatpush1.bf16.msra.mxu0 %v4118
    %4139 = vmatprep.subr.bf16.mxu0 0
    %4140 = vmatpush1.bf16.msra.mxu0 %v4119
    %4141 = vmatprep.subr.bf16.mxu0 0
    %4142 = vmatpush1.bf16.msra.mxu0 %v4120
    %4143 = vmatprep.subr.bf16.mxu0 0
    %4144 = vmatpush1.bf16.msra.mxu0 %v4121
    %4145 = vmatprep.subr.bf16.mxu0 0
    %4146 = vmatpush1.bf16.msra.mxu0 %v4122
    %4147 = vmatprep.subr.bf16.mxu0 0
    %4148 = vmatpush1.bf16.msra.mxu0 0
    %4149 = vmatprep.subr.bf16.mxu0 0
    %4150 = vmatpush1.bf16.msra.mxu0 0
    %4151 = vmatprep.subr.bf16.mxu0 0
    %4152 = vmatpush1.bf16.msra.mxu0 0
    %4153 = vmatprep.subr.bf16.mxu0 0
    %4154 = vmatpush1.bf16.msra.mxu0 0
    %4155 = vmatprep.subr.bf16.mxu0 0
    %4156 = vmatpush1.bf16.msra.mxu0 0
    %4157 = vmatprep.subr.bf16.mxu0 0
    %4158 = vmatpush1.bf16.msra.mxu0 0
    %4159 = vmatprep.subr.bf16.mxu0 0
    %4160 = vmatpush1.bf16.msra.mxu0 0
    %4161 = vmatprep.subr.bf16.mxu0 0
    %4162 = vmatpush1.bf16.msra.mxu0 0
    %4163 = vmatprep.mubr.bf16.mxu0 0
    %4164 = vmatmul.mubr.bf16.gmra.mrb[0].mxu0 %v3753
    %v4165 = vpop.f32.mrb[0].mxu0
    %v4166 = vadd.f32 0.0, %v4165
    %v4167 = vpop.f32.mrb[0].mxu0
    %v4168 = vpop.f32.mrb[0].mxu0
    %v4169 = vpop.f32.mrb[0].mxu0
    %4170 = vdwg.mxu0
    %v4171 = vadd.f32 %v4066, %v4166
    %v4172 = vld [vmem:[%s6] sm:$0x1]
    %v4174 = vlaneseq
    %v4175 = vshrl.u32 %v4174, 7
    %v4176 = vsub.s32 0, %v4175
    %v4177 = vrot.slane %v4172, %v4176
    %v4179 = vadd.f32 %v4171, %v4177
    %4180 = vst [vmem:[%s7] sm:$0xff] %v4179
    // Predicated region
    $region42: #{cnn_model_binary_forward.1} parent=1 // pred_check
      _
    $region43: #{cnn_model_binary_forward.1} parent=1 // pred_check_branch
      %4182 = sbr.rel (0) target = $region45
    $region44: #{cnn_model_binary_forward.1} parent=1 // pred_region
      _
    $region45: #{cnn_model_binary_forward.1} parent=1 // pred_fallthru
      _
    // Predicated region
    $region46: #{cnn_model_binary_forward.1} parent=1 // pred_check
      _
    $region47: #{cnn_model_binary_forward.1} parent=1 // pred_check_branch
      %4184 = sbr.rel (0) target = $region49
    $region48: #{cnn_model_binary_forward.1} parent=1 // pred_region
      _
    $region49: #{cnn_model_binary_forward.1} parent=1 // pred_fallthru
      _
    %4185 = vsyncpa [#allocation3], 1
    %4186 = vsyncpa [#allocation5], 1

</llo_original>
